<compile_context>
chip_gen: v7x
topology: tpu7x:2x2x1
jax: 0.10.0
libtpu: 0.0.40
codegen_flags: <defaults>
</compile_context>

<pallas_src>
import jax
import jax.numpy as jnp
from jax.experimental import pallas as pl
from jax.experimental.pallas import tpu as pltpu


# ---------------------------------------------------------------------------
# In-kernel helpers (operate on traced values; everything stays in VMEM/vregs).
# ---------------------------------------------------------------------------
def _pad_hw1(x):
    """Zero-pad H and W by 1 on each side: (N, H, W, C) -> (N, H+2, W+2, C)."""
    N, H, W, C = x.shape
    zrow = jnp.zeros((N, 1, W, C), x.dtype)
    x = jnp.concatenate([zrow, x, zrow], axis=1)
    zcol = jnp.zeros((N, H + 2, 1, C), x.dtype)
    return jnp.concatenate([zcol, x, zcol], axis=2)


def _conv3x3(x, w_bf16, b_f32, *, pre_relu):
    """3x3 conv (padding=1) as ONE im2col matmul on the MXU.

    x      : (N, H, W, Cin) float32 activations
    w_bf16 : (9*Cin, Cout) bfloat16 weights, rows ordered (dy, dx, cin) [HWIO flattened]
    b_f32  : (1, Cout) float32 bias
    """
    N, H, W, Cin = x.shape
    Cout = w_bf16.shape[-1]
    if pre_relu:
        # relu(0) == 0, so relu-then-pad is exactly pad-then-relu.
        x = jnp.maximum(x, 0.0)
    xp = _pad_hw1(x)
    cols = []
    for dy in range(3):
        for dx in range(3):
            cols.append(xp[:, dy:dy + H, dx:dx + W, :])           # (N, H, W, Cin)
    patches = jnp.concatenate(cols, axis=-1)                      # (N, H, W, 9*Cin)
    patches = patches.reshape(N * H * W, 9 * Cin).astype(jnp.bfloat16)
    y = jnp.dot(patches, w_bf16, preferred_element_type=jnp.float32)   # (N*H*W, Cout)
    y = y + b_f32
    return y.reshape(N, H, W, Cout)


def _avgpool2(x):
    """nn.AvgPool2d(kernel_size=2): (N, H, W, C) -> (N, H//2, W//2, C)."""
    N, H, W, C = x.shape
    x = x.reshape(N, H // 2, 2, W, C)
    xh = x[:, :, 0] + x[:, :, 1]                                  # pool over H
    xw = xh.reshape(N, H // 2, W // 2, 2, C)
    return (xw[:, :, :, 0] + xw[:, :, :, 1]) * 0.25               # pool over W


# ---------------------------------------------------------------------------
# Single fused kernel: block1 -> block4 -> head.
# ---------------------------------------------------------------------------
def _discriminator_kernel(x_ref,
                          w1c1_ref, b1c1_ref, w1c2_ref, b1c2_ref,
                          w1sc_ref, b1sc_ref,
                          w4c1_ref, b4c1_ref, w4c2_ref, b4c2_ref,
                          l5_ref,
                          o_ref):
    x = x_ref[...]                                                # (N, H, W, Cin) f32

    # --- block1: OptimizedDisBlock(channels -> ch) ---
    r = _conv3x3(x, w1c1_ref[...], b1c1_ref[...], pre_relu=False)   # c1
    r = _conv3x3(r, w1c2_ref[...], b1c2_ref[...], pre_relu=True)    # relu + c2
    r = _avgpool2(r)                                                # AvgPool2d(2)
    xs = _avgpool2(x)                                               # shortcut pool
    N, Hh, Wh, Cin = xs.shape
    Cout = w1sc_ref.shape[-1]
    sc = jnp.dot(xs.reshape(N * Hh * Wh, Cin).astype(jnp.bfloat16), w1sc_ref[...],
                 preferred_element_type=jnp.float32) + b1sc_ref[...]
    h = r + sc.reshape(N, Hh, Wh, Cout)                             # residual + shortcut

    # --- block4: DisBlock(ch, ch, downsample=False), identity shortcut ---
    r4 = _conv3x3(h, w4c1_ref[...], b4c1_ref[...], pre_relu=True)   # relu + c1
    r4 = _conv3x3(r4, w4c2_ref[...], b4c2_ref[...], pre_relu=True)  # relu + c2
    h = h + r4                                                      # fused residual add

    # --- head: ReLU -> sum over spatial dims -> Linear(ch, 1, bias=False) ---
    s = jnp.sum(jnp.maximum(h, 0.0), axis=(1, 2))                   # (N, ch)
    o_ref[...] = jnp.dot(s, l5_ref[...], preferred_element_type=jnp.float32)


# ---------------------------------------------------------------------------
# Public entry point (accepts NCHW like PyTorch).
# ---------------------------------------------------------------------------
def discriminator_forward(x_nchw, p):
    # Layout boundary: NCHW -> NHWC (the only op outside the fused kernel; 8 KB input).
    x = jnp.transpose(x_nchw, (0, 2, 3, 1)).astype(jnp.float32)
    N = x.shape[0]

    args = (x,
            p["b1_c1_w"], p["b1_c1_b"],
            p["b1_c2_w"], p["b1_c2_b"],
            p["b1_sc_w"], p["b1_sc_b"],
            p["b4_c1_w"], p["b4_c1_b"],
            p["b4_c2_w"], p["b4_c2_b"],
            p["l5_w"])

    return pl.pallas_call(
        _discriminator_kernel,
        out_shape=jax.ShapeDtypeStruct((N, 1), jnp.float32),
        in_specs=[pl.BlockSpec(memory_space=pltpu.MemorySpace.VMEM) for _ in args],
        out_specs=pl.BlockSpec(memory_space=pltpu.MemorySpace.VMEM),
    )(*args)


# ---------------------------------------------------------------------------
# Deterministic synthetic parameters.
# Conv weights are HWIO flattened to (9*Cin, Cout) (row order dy, dx, cin) and stored
# in bf16 for the MXU; biases stay f32 (accumulation/bias/residual math is f32).
# ---------------------------------------------------------------------------
def init_params(key, channels, ch):
    ks = jax.random.split(key, 9)
    n = lambda k, shp: 0.05 * jax.random.normal(k, shp, jnp.float32)

    def conv_w(k, cin, cout):
        return n(k, (3, 3, cin, cout)).reshape(9 * cin, cout).astype(jnp.bfloat16)

    return {
        "b1_c1_w": conv_w(ks[0], channels, ch), "b1_c1_b": n(ks[1], (1, ch)),
        "b1_c2_w": conv_w(ks[2], ch, ch),       "b1_c2_b": n(ks[3], (1, ch)),
        "b1_sc_w": n(ks[4], (channels, ch)).astype(jnp.bfloat16),
        "b1_sc_b": n(ks[5], (1, ch)),
        "b4_c1_w": conv_w(ks[6], ch, ch),       "b4_c1_b": jnp.zeros((1, ch), jnp.float32),
        "b4_c2_w": conv_w(ks[7], ch, ch),       "b4_c2_b": jnp.zeros((1, ch), jnp.float32),
        "l5_w":    n(ks[8], (ch, 1)),
    }


if __name__ == "__main__":
    key = jax.random.PRNGKey(0)
    N, C_in, H, W = 2, 4, 16, 16     # batch=2, channels=4, spatial=16
    ch = 32                          # df_dim
    kx, kp = jax.random.split(key)
    x = jax.random.normal(kx, (N, C_in, H, W), jnp.float32)   # NCHW like PyTorch
    params = init_params(kp, C_in, ch)

    fwd = jax.jit(discriminator_forward)
    out = jax.block_until_ready(fwd(x, params))
    assert out.shape == (N, 1) and out.dtype == jnp.float32
    print("KERNEL_OK")
</pallas_src>

<mosaic_0001>
module attributes {stable_mosaic.version = 11 : i64} {
  func.func @_discriminator_kernel(%arg0: memref<2x16x16x4xf32, #tpu.memory_space<vmem>>, %arg1: memref<36x32xbf16, #tpu.memory_space<vmem>>, %arg2: memref<1x32xf32, #tpu.memory_space<vmem>>, %arg3: memref<288x32xbf16, #tpu.memory_space<vmem>>, %arg4: memref<1x32xf32, #tpu.memory_space<vmem>>, %arg5: memref<4x32xbf16, #tpu.memory_space<vmem>>, %arg6: memref<1x32xf32, #tpu.memory_space<vmem>>, %arg7: memref<288x32xbf16, #tpu.memory_space<vmem>>, %arg8: memref<1x32xf32, #tpu.memory_space<vmem>>, %arg9: memref<288x32xbf16, #tpu.memory_space<vmem>>, %arg10: memref<1x32xf32, #tpu.memory_space<vmem>>, %arg11: memref<32x1xf32, #tpu.memory_space<vmem>>, %arg12: memref<2x1xf32, #tpu.memory_space<vmem>>) attributes {dimension_semantics = [], scalar_prefetch = 0 : i64, scratch_operands = 0 : i64, tpu.core_type = #tpu.core_type<tc>} {
    %c0 = arith.constant 0 : index
    %c0_0 = arith.constant 0 : index
    %c0_1 = arith.constant 0 : index
    %c0_2 = arith.constant 0 : index
    %0 = vector.load %arg0[%c0, %c0_0, %c0_1, %c0_2] : memref<2x16x16x4xf32, #tpu.memory_space<vmem>>, vector<2x16x16x4xf32>
    %c0_3 = arith.constant 0 : index
    %c0_4 = arith.constant 0 : index
    %1 = vector.load %arg1[%c0_3, %c0_4] : memref<36x32xbf16, #tpu.memory_space<vmem>>, vector<36x32xbf16>
    %c0_5 = arith.constant 0 : index
    %c0_6 = arith.constant 0 : index
    %2 = vector.load %arg2[%c0_5, %c0_6] : memref<1x32xf32, #tpu.memory_space<vmem>>, vector<1x32xf32>
    %cst = arith.constant 0.000000e+00 : f32
    %3 = vector.broadcast %cst : f32 to vector<2x1x16x4xf32>
    %4 = tpu.concatenate %3, %0, %3 in 1 : vector<2x1x16x4xf32>, vector<2x16x16x4xf32>, vector<2x1x16x4xf32> -> vector<2x18x16x4xf32>
    %cst_7 = arith.constant 0.000000e+00 : f32
    %5 = vector.broadcast %cst_7 : f32 to vector<2x18x1x4xf32>
    %6 = tpu.concatenate %5, %4, %5 in 2 : vector<2x18x1x4xf32>, vector<2x18x16x4xf32>, vector<2x18x1x4xf32> -> vector<2x18x18x4xf32>
    %7 = vector.extract_strided_slice %6 {offsets = [0, 0, 0, 0], sizes = [2, 16, 16, 4], strides = [1, 1, 1, 1]} : vector<2x18x18x4xf32> to vector<2x16x16x4xf32>
    %8 = vector.extract_strided_slice %6 {offsets = [0, 0, 1, 0], sizes = [2, 16, 16, 4], strides = [1, 1, 1, 1]} : vector<2x18x18x4xf32> to vector<2x16x16x4xf32>
    %9 = vector.extract_strided_slice %6 {offsets = [0, 0, 2, 0], sizes = [2, 16, 16, 4], strides = [1, 1, 1, 1]} : vector<2x18x18x4xf32> to vector<2x16x16x4xf32>
    %10 = vector.extract_strided_slice %6 {offsets = [0, 1, 0, 0], sizes = [2, 16, 16, 4], strides = [1, 1, 1, 1]} : vector<2x18x18x4xf32> to vector<2x16x16x4xf32>
    %11 = vector.extract_strided_slice %6 {offsets = [0, 1, 1, 0], sizes = [2, 16, 16, 4], strides = [1, 1, 1, 1]} : vector<2x18x18x4xf32> to vector<2x16x16x4xf32>
    %12 = vector.extract_strided_slice %6 {offsets = [0, 1, 2, 0], sizes = [2, 16, 16, 4], strides = [1, 1, 1, 1]} : vector<2x18x18x4xf32> to vector<2x16x16x4xf32>
    %13 = vector.extract_strided_slice %6 {offsets = [0, 2, 0, 0], sizes = [2, 16, 16, 4], strides = [1, 1, 1, 1]} : vector<2x18x18x4xf32> to vector<2x16x16x4xf32>
    %14 = vector.extract_strided_slice %6 {offsets = [0, 2, 1, 0], sizes = [2, 16, 16, 4], strides = [1, 1, 1, 1]} : vector<2x18x18x4xf32> to vector<2x16x16x4xf32>
    %15 = vector.extract_strided_slice %6 {offsets = [0, 2, 2, 0], sizes = [2, 16, 16, 4], strides = [1, 1, 1, 1]} : vector<2x18x18x4xf32> to vector<2x16x16x4xf32>
    %16 = tpu.concatenate %7, %8, %9, %10, %11, %12, %13, %14, %15 in 3 : vector<2x16x16x4xf32>, vector<2x16x16x4xf32>, vector<2x16x16x4xf32>, vector<2x16x16x4xf32>, vector<2x16x16x4xf32>, vector<2x16x16x4xf32>, vector<2x16x16x4xf32>, vector<2x16x16x4xf32>, vector<2x16x16x4xf32> -> vector<2x16x16x36xf32>
    %17 = vector.shape_cast %16 : vector<2x16x16x36xf32> to vector<512x36xf32>
    %18 = arith.truncf %17 : vector<512x36xf32> to vector<512x36xbf16>
    %cst_8 = arith.constant dense<0.000000e+00> : vector<512x32xf32>
    %19 = tpu.matmul %18, %1, %cst_8 {dimension_numbers = #tpu.dot_dimension_numbers<[1], [0], [0], [1], [0, 0, 1, 1], [], []>} : vector<512x36xbf16>, vector<36x32xbf16>, vector<512x32xf32> -> vector<512x32xf32>
    %20 = vector.broadcast %2 : vector<1x32xf32> to vector<512x32xf32>
    %21 = arith.addf %19, %20 : vector<512x32xf32>
    %22 = vector.shape_cast %21 : vector<512x32xf32> to vector<2x16x16x32xf32>
    %c0_9 = arith.constant 0 : index
    %c0_10 = arith.constant 0 : index
    %23 = vector.load %arg3[%c0_9, %c0_10] : memref<288x32xbf16, #tpu.memory_space<vmem>>, vector<288x32xbf16>
    %c0_11 = arith.constant 0 : index
    %c0_12 = arith.constant 0 : index
    %24 = vector.load %arg4[%c0_11, %c0_12] : memref<1x32xf32, #tpu.memory_space<vmem>>, vector<1x32xf32>
    %cst_13 = arith.constant 0.000000e+00 : f32
    %25 = vector.broadcast %cst_13 : f32 to vector<2x16x16x32xf32>
    %26 = arith.maximumf %22, %25 : vector<2x16x16x32xf32>
    %cst_14 = arith.constant 0.000000e+00 : f32
    %27 = vector.broadcast %cst_14 : f32 to vector<2x1x16x32xf32>
    %28 = tpu.concatenate %27, %26, %27 in 1 : vector<2x1x16x32xf32>, vector<2x16x16x32xf32>, vector<2x1x16x32xf32> -> vector<2x18x16x32xf32>
    %cst_15 = arith.constant 0.000000e+00 : f32
    %29 = vector.broadcast %cst_15 : f32 to vector<2x18x1x32xf32>
    %30 = tpu.concatenate %29, %28, %29 in 2 : vector<2x18x1x32xf32>, vector<2x18x16x32xf32>, vector<2x18x1x32xf32> -> vector<2x18x18x32xf32>
    %31 = vector.extract_strided_slice %30 {offsets = [0, 0, 0, 0], sizes = [2, 16, 16, 32], strides = [1, 1, 1, 1]} : vector<2x18x18x32xf32> to vector<2x16x16x32xf32>
    %32 = vector.extract_strided_slice %30 {offsets = [0, 0, 1, 0], sizes = [2, 16, 16, 32], strides = [1, 1, 1, 1]} : vector<2x18x18x32xf32> to vector<2x16x16x32xf32>
    %33 = vector.extract_strided_slice %30 {offsets = [0, 0, 2, 0], sizes = [2, 16, 16, 32], strides = [1, 1, 1, 1]} : vector<2x18x18x32xf32> to vector<2x16x16x32xf32>
    %34 = vector.extract_strided_slice %30 {offsets = [0, 1, 0, 0], sizes = [2, 16, 16, 32], strides = [1, 1, 1, 1]} : vector<2x18x18x32xf32> to vector<2x16x16x32xf32>
    %35 = vector.extract_strided_slice %30 {offsets = [0, 1, 1, 0], sizes = [2, 16, 16, 32], strides = [1, 1, 1, 1]} : vector<2x18x18x32xf32> to vector<2x16x16x32xf32>
    %36 = vector.extract_strided_slice %30 {offsets = [0, 1, 2, 0], sizes = [2, 16, 16, 32], strides = [1, 1, 1, 1]} : vector<2x18x18x32xf32> to vector<2x16x16x32xf32>
    %37 = vector.extract_strided_slice %30 {offsets = [0, 2, 0, 0], sizes = [2, 16, 16, 32], strides = [1, 1, 1, 1]} : vector<2x18x18x32xf32> to vector<2x16x16x32xf32>
    %38 = vector.extract_strided_slice %30 {offsets = [0, 2, 1, 0], sizes = [2, 16, 16, 32], strides = [1, 1, 1, 1]} : vector<2x18x18x32xf32> to vector<2x16x16x32xf32>
    %39 = vector.extract_strided_slice %30 {offsets = [0, 2, 2, 0], sizes = [2, 16, 16, 32], strides = [1, 1, 1, 1]} : vector<2x18x18x32xf32> to vector<2x16x16x32xf32>
    %40 = tpu.concatenate %31, %32, %33, %34, %35, %36, %37, %38, %39 in 3 : vector<2x16x16x32xf32>, vector<2x16x16x32xf32>, vector<2x16x16x32xf32>, vector<2x16x16x32xf32>, vector<2x16x16x32xf32>, vector<2x16x16x32xf32>, vector<2x16x16x32xf32>, vector<2x16x16x32xf32>, vector<2x16x16x32xf32> -> vector<2x16x16x288xf32>
    %41 = vector.shape_cast %40 : vector<2x16x16x288xf32> to vector<512x288xf32>
    %42 = arith.truncf %41 : vector<512x288xf32> to vector<512x288xbf16>
    %cst_16 = arith.constant dense<0.000000e+00> : vector<512x32xf32>
    %43 = tpu.matmul %42, %23, %cst_16 {dimension_numbers = #tpu.dot_dimension_numbers<[1], [0], [0], [1], [0, 0, 1, 1], [], []>} : vector<512x288xbf16>, vector<288x32xbf16>, vector<512x32xf32> -> vector<512x32xf32>
    %44 = vector.broadcast %24 : vector<1x32xf32> to vector<512x32xf32>
    %45 = arith.addf %43, %44 : vector<512x32xf32>
    %46 = vector.shape_cast %45 : vector<512x32xf32> to vector<2x16x16x32xf32>
    %47 = vector.shape_cast %46 : vector<2x16x16x32xf32> to vector<2x8x2x16x32xf32>
    %48 = vector.extract_strided_slice %47 {offsets = [0, 0, 0, 0, 0], sizes = [2, 8, 1, 16, 32], strides = [1, 1, 1, 1, 1]} : vector<2x8x2x16x32xf32> to vector<2x8x1x16x32xf32>
    %49 = vector.shape_cast %48 : vector<2x8x1x16x32xf32> to vector<2x8x16x32xf32>
    %50 = vector.extract_strided_slice %47 {offsets = [0, 0, 1, 0, 0], sizes = [2, 8, 1, 16, 32], strides = [1, 1, 1, 1, 1]} : vector<2x8x2x16x32xf32> to vector<2x8x1x16x32xf32>
    %51 = vector.shape_cast %50 : vector<2x8x1x16x32xf32> to vector<2x8x16x32xf32>
    %52 = arith.addf %49, %51 : vector<2x8x16x32xf32>
    %53 = vector.shape_cast %52 : vector<2x8x16x32xf32> to vector<2x8x8x2x32xf32>
    %54 = vector.extract_strided_slice %53 {offsets = [0, 0, 0, 0, 0], sizes = [2, 8, 8, 1, 32], strides = [1, 1, 1, 1, 1]} : vector<2x8x8x2x32xf32> to vector<2x8x8x1x32xf32>
    %55 = vector.shape_cast %54 : vector<2x8x8x1x32xf32> to vector<2x8x8x32xf32>
    %56 = vector.extract_strided_slice %53 {offsets = [0, 0, 0, 1, 0], sizes = [2, 8, 8, 1, 32], strides = [1, 1, 1, 1, 1]} : vector<2x8x8x2x32xf32> to vector<2x8x8x1x32xf32>
    %57 = vector.shape_cast %56 : vector<2x8x8x1x32xf32> to vector<2x8x8x32xf32>
    %58 = arith.addf %55, %57 : vector<2x8x8x32xf32>
    %cst_17 = arith.constant 2.500000e-01 : f32
    %59 = vector.broadcast %cst_17 : f32 to vector<2x8x8x32xf32>
    %60 = arith.mulf %58, %59 : vector<2x8x8x32xf32>
    %61 = vector.shape_cast %0 : vector<2x16x16x4xf32> to vector<2x8x2x16x4xf32>
    %62 = vector.extract_strided_slice %61 {offsets = [0, 0, 0, 0, 0], sizes = [2, 8, 1, 16, 4], strides = [1, 1, 1, 1, 1]} : vector<2x8x2x16x4xf32> to vector<2x8x1x16x4xf32>
    %63 = vector.shape_cast %62 : vector<2x8x1x16x4xf32> to vector<2x8x16x4xf32>
    %64 = vector.extract_strided_slice %61 {offsets = [0, 0, 1, 0, 0], sizes = [2, 8, 1, 16, 4], strides = [1, 1, 1, 1, 1]} : vector<2x8x2x16x4xf32> to vector<2x8x1x16x4xf32>
    %65 = vector.shape_cast %64 : vector<2x8x1x16x4xf32> to vector<2x8x16x4xf32>
    %66 = arith.addf %63, %65 : vector<2x8x16x4xf32>
    %67 = vector.shape_cast %66 : vector<2x8x16x4xf32> to vector<2x8x8x2x4xf32>
    %68 = vector.extract_strided_slice %67 {offsets = [0, 0, 0, 0, 0], sizes = [2, 8, 8, 1, 4], strides = [1, 1, 1, 1, 1]} : vector<2x8x8x2x4xf32> to vector<2x8x8x1x4xf32>
    %69 = vector.shape_cast %68 : vector<2x8x8x1x4xf32> to vector<2x8x8x4xf32>
    %70 = vector.extract_strided_slice %67 {offsets = [0, 0, 0, 1, 0], sizes = [2, 8, 8, 1, 4], strides = [1, 1, 1, 1, 1]} : vector<2x8x8x2x4xf32> to vector<2x8x8x1x4xf32>
    %71 = vector.shape_cast %70 : vector<2x8x8x1x4xf32> to vector<2x8x8x4xf32>
    %72 = arith.addf %69, %71 : vector<2x8x8x4xf32>
    %cst_18 = arith.constant 2.500000e-01 : f32
    %73 = vector.broadcast %cst_18 : f32 to vector<2x8x8x4xf32>
    %74 = arith.mulf %72, %73 : vector<2x8x8x4xf32>
    %75 = vector.shape_cast %74 : vector<2x8x8x4xf32> to vector<128x4xf32>
    %76 = arith.truncf %75 : vector<128x4xf32> to vector<128x4xbf16>
    %c0_19 = arith.constant 0 : index
    %c0_20 = arith.constant 0 : index
    %77 = vector.load %arg5[%c0_19, %c0_20] : memref<4x32xbf16, #tpu.memory_space<vmem>>, vector<4x32xbf16>
    %cst_21 = arith.constant dense<0.000000e+00> : vector<128x32xf32>
    %78 = tpu.matmul %76, %77, %cst_21 {dimension_numbers = #tpu.dot_dimension_numbers<[1], [0], [0], [1], [0, 0, 1, 1], [], []>} : vector<128x4xbf16>, vector<4x32xbf16>, vector<128x32xf32> -> vector<128x32xf32>
    %c0_22 = arith.constant 0 : index
    %c0_23 = arith.constant 0 : index
    %79 = vector.load %arg6[%c0_22, %c0_23] : memref<1x32xf32, #tpu.memory_space<vmem>>, vector<1x32xf32>
    %80 = vector.broadcast %79 : vector<1x32xf32> to vector<128x32xf32>
    %81 = arith.addf %78, %80 : vector<128x32xf32>
    %82 = vector.shape_cast %81 : vector<128x32xf32> to vector<2x8x8x32xf32>
    %83 = arith.addf %60, %82 : vector<2x8x8x32xf32>
    %c0_24 = arith.constant 0 : index
    %c0_25 = arith.constant 0 : index
    %84 = vector.load %arg7[%c0_24, %c0_25] : memref<288x32xbf16, #tpu.memory_space<vmem>>, vector<288x32xbf16>
    %c0_26 = arith.constant 0 : index
    %c0_27 = arith.constant 0 : index
    %85 = vector.load %arg8[%c0_26, %c0_27] : memref<1x32xf32, #tpu.memory_space<vmem>>, vector<1x32xf32>
    %cst_28 = arith.constant 0.000000e+00 : f32
    %86 = vector.broadcast %cst_28 : f32 to vector<2x8x8x32xf32>
    %87 = arith.maximumf %83, %86 : vector<2x8x8x32xf32>
    %cst_29 = arith.constant 0.000000e+00 : f32
    %88 = vector.broadcast %cst_29 : f32 to vector<2x1x8x32xf32>
    %89 = tpu.concatenate %88, %87, %88 in 1 : vector<2x1x8x32xf32>, vector<2x8x8x32xf32>, vector<2x1x8x32xf32> -> vector<2x10x8x32xf32>
    %cst_30 = arith.constant 0.000000e+00 : f32
    %90 = vector.broadcast %cst_30 : f32 to vector<2x10x1x32xf32>
    %91 = tpu.concatenate %90, %89, %90 in 2 : vector<2x10x1x32xf32>, vector<2x10x8x32xf32>, vector<2x10x1x32xf32> -> vector<2x10x10x32xf32>
    %92 = vector.extract_strided_slice %91 {offsets = [0, 0, 0, 0], sizes = [2, 8, 8, 32], strides = [1, 1, 1, 1]} : vector<2x10x10x32xf32> to vector<2x8x8x32xf32>
    %93 = vector.extract_strided_slice %91 {offsets = [0, 0, 1, 0], sizes = [2, 8, 8, 32], strides = [1, 1, 1, 1]} : vector<2x10x10x32xf32> to vector<2x8x8x32xf32>
    %94 = vector.extract_strided_slice %91 {offsets = [0, 0, 2, 0], sizes = [2, 8, 8, 32], strides = [1, 1, 1, 1]} : vector<2x10x10x32xf32> to vector<2x8x8x32xf32>
    %95 = vector.extract_strided_slice %91 {offsets = [0, 1, 0, 0], sizes = [2, 8, 8, 32], strides = [1, 1, 1, 1]} : vector<2x10x10x32xf32> to vector<2x8x8x32xf32>
    %96 = vector.extract_strided_slice %91 {offsets = [0, 1, 1, 0], sizes = [2, 8, 8, 32], strides = [1, 1, 1, 1]} : vector<2x10x10x32xf32> to vector<2x8x8x32xf32>
    %97 = vector.extract_strided_slice %91 {offsets = [0, 1, 2, 0], sizes = [2, 8, 8, 32], strides = [1, 1, 1, 1]} : vector<2x10x10x32xf32> to vector<2x8x8x32xf32>
    %98 = vector.extract_strided_slice %91 {offsets = [0, 2, 0, 0], sizes = [2, 8, 8, 32], strides = [1, 1, 1, 1]} : vector<2x10x10x32xf32> to vector<2x8x8x32xf32>
    %99 = vector.extract_strided_slice %91 {offsets = [0, 2, 1, 0], sizes = [2, 8, 8, 32], strides = [1, 1, 1, 1]} : vector<2x10x10x32xf32> to vector<2x8x8x32xf32>
    %100 = vector.extract_strided_slice %91 {offsets = [0, 2, 2, 0], sizes = [2, 8, 8, 32], strides = [1, 1, 1, 1]} : vector<2x10x10x32xf32> to vector<2x8x8x32xf32>
    %101 = tpu.concatenate %92, %93, %94, %95, %96, %97, %98, %99, %100 in 3 : vector<2x8x8x32xf32>, vector<2x8x8x32xf32>, vector<2x8x8x32xf32>, vector<2x8x8x32xf32>, vector<2x8x8x32xf32>, vector<2x8x8x32xf32>, vector<2x8x8x32xf32>, vector<2x8x8x32xf32>, vector<2x8x8x32xf32> -> vector<2x8x8x288xf32>
    %102 = vector.shape_cast %101 : vector<2x8x8x288xf32> to vector<128x288xf32>
    %103 = arith.truncf %102 : vector<128x288xf32> to vector<128x288xbf16>
    %cst_31 = arith.constant dense<0.000000e+00> : vector<128x32xf32>
    %104 = tpu.matmul %103, %84, %cst_31 {dimension_numbers = #tpu.dot_dimension_numbers<[1], [0], [0], [1], [0, 0, 1, 1], [], []>} : vector<128x288xbf16>, vector<288x32xbf16>, vector<128x32xf32> -> vector<128x32xf32>
    %105 = vector.broadcast %85 : vector<1x32xf32> to vector<128x32xf32>
    %106 = arith.addf %104, %105 : vector<128x32xf32>
    %107 = vector.shape_cast %106 : vector<128x32xf32> to vector<2x8x8x32xf32>
    %c0_32 = arith.constant 0 : index
    %c0_33 = arith.constant 0 : index
    %108 = vector.load %arg9[%c0_32, %c0_33] : memref<288x32xbf16, #tpu.memory_space<vmem>>, vector<288x32xbf16>
    %c0_34 = arith.constant 0 : index
    %c0_35 = arith.constant 0 : index
    %109 = vector.load %arg10[%c0_34, %c0_35] : memref<1x32xf32, #tpu.memory_space<vmem>>, vector<1x32xf32>
    %cst_36 = arith.constant 0.000000e+00 : f32
    %110 = vector.broadcast %cst_36 : f32 to vector<2x8x8x32xf32>
    %111 = arith.maximumf %107, %110 : vector<2x8x8x32xf32>
    %cst_37 = arith.constant 0.000000e+00 : f32
    %112 = vector.broadcast %cst_37 : f32 to vector<2x1x8x32xf32>
    %113 = tpu.concatenate %112, %111, %112 in 1 : vector<2x1x8x32xf32>, vector<2x8x8x32xf32>, vector<2x1x8x32xf32> -> vector<2x10x8x32xf32>
    %cst_38 = arith.constant 0.000000e+00 : f32
    %114 = vector.broadcast %cst_38 : f32 to vector<2x10x1x32xf32>
    %115 = tpu.concatenate %114, %113, %114 in 2 : vector<2x10x1x32xf32>, vector<2x10x8x32xf32>, vector<2x10x1x32xf32> -> vector<2x10x10x32xf32>
    %116 = vector.extract_strided_slice %115 {offsets = [0, 0, 0, 0], sizes = [2, 8, 8, 32], strides = [1, 1, 1, 1]} : vector<2x10x10x32xf32> to vector<2x8x8x32xf32>
    %117 = vector.extract_strided_slice %115 {offsets = [0, 0, 1, 0], sizes = [2, 8, 8, 32], strides = [1, 1, 1, 1]} : vector<2x10x10x32xf32> to vector<2x8x8x32xf32>
    %118 = vector.extract_strided_slice %115 {offsets = [0, 0, 2, 0], sizes = [2, 8, 8, 32], strides = [1, 1, 1, 1]} : vector<2x10x10x32xf32> to vector<2x8x8x32xf32>
    %119 = vector.extract_strided_slice %115 {offsets = [0, 1, 0, 0], sizes = [2, 8, 8, 32], strides = [1, 1, 1, 1]} : vector<2x10x10x32xf32> to vector<2x8x8x32xf32>
    %120 = vector.extract_strided_slice %115 {offsets = [0, 1, 1, 0], sizes = [2, 8, 8, 32], strides = [1, 1, 1, 1]} : vector<2x10x10x32xf32> to vector<2x8x8x32xf32>
    %121 = vector.extract_strided_slice %115 {offsets = [0, 1, 2, 0], sizes = [2, 8, 8, 32], strides = [1, 1, 1, 1]} : vector<2x10x10x32xf32> to vector<2x8x8x32xf32>
    %122 = vector.extract_strided_slice %115 {offsets = [0, 2, 0, 0], sizes = [2, 8, 8, 32], strides = [1, 1, 1, 1]} : vector<2x10x10x32xf32> to vector<2x8x8x32xf32>
    %123 = vector.extract_strided_slice %115 {offsets = [0, 2, 1, 0], sizes = [2, 8, 8, 32], strides = [1, 1, 1, 1]} : vector<2x10x10x32xf32> to vector<2x8x8x32xf32>
    %124 = vector.extract_strided_slice %115 {offsets = [0, 2, 2, 0], sizes = [2, 8, 8, 32], strides = [1, 1, 1, 1]} : vector<2x10x10x32xf32> to vector<2x8x8x32xf32>
    %125 = tpu.concatenate %116, %117, %118, %119, %120, %121, %122, %123, %124 in 3 : vector<2x8x8x32xf32>, vector<2x8x8x32xf32>, vector<2x8x8x32xf32>, vector<2x8x8x32xf32>, vector<2x8x8x32xf32>, vector<2x8x8x32xf32>, vector<2x8x8x32xf32>, vector<2x8x8x32xf32>, vector<2x8x8x32xf32> -> vector<2x8x8x288xf32>
    %126 = vector.shape_cast %125 : vector<2x8x8x288xf32> to vector<128x288xf32>
    %127 = arith.truncf %126 : vector<128x288xf32> to vector<128x288xbf16>
    %cst_39 = arith.constant dense<0.000000e+00> : vector<128x32xf32>
    %128 = tpu.matmul %127, %108, %cst_39 {dimension_numbers = #tpu.dot_dimension_numbers<[1], [0], [0], [1], [0, 0, 1, 1], [], []>} : vector<128x288xbf16>, vector<288x32xbf16>, vector<128x32xf32> -> vector<128x32xf32>
    %129 = vector.broadcast %109 : vector<1x32xf32> to vector<128x32xf32>
    %130 = arith.addf %128, %129 : vector<128x32xf32>
    %131 = vector.shape_cast %130 : vector<128x32xf32> to vector<2x8x8x32xf32>
    %132 = arith.addf %83, %131 : vector<2x8x8x32xf32>
    %cst_40 = arith.constant 0.000000e+00 : f32
    %133 = vector.broadcast %cst_40 : f32 to vector<2x8x8x32xf32>
    %134 = arith.maximumf %132, %133 : vector<2x8x8x32xf32>
    %cst_41 = arith.constant dense<0.000000e+00> : vector<2x32xf32>
    %135 = vector.multi_reduction <add>, %134, %cst_41 [1, 2] : vector<2x8x8x32xf32> to vector<2x32xf32>
    %c0_42 = arith.constant 0 : index
    %c0_43 = arith.constant 0 : index
    %136 = vector.load %arg11[%c0_42, %c0_43] : memref<32x1xf32, #tpu.memory_space<vmem>>, vector<32x1xf32>
    %cst_44 = arith.constant dense<0.000000e+00> : vector<2x1xf32>
    %137 = tpu.matmul %135, %136, %cst_44 {dimension_numbers = #tpu.dot_dimension_numbers<[1], [0], [0], [1], [0, 0, 1, 1], [], []>} : vector<2x32xf32>, vector<32x1xf32>, vector<2x1xf32> -> vector<2x1xf32>
    %c0_45 = arith.constant 0 : index
    %c0_46 = arith.constant 0 : index
    %138 = vector.load %arg12[%c0_45, %c0_46] : memref<2x1xf32, #tpu.memory_space<vmem>>, vector<2x1xf32>
    tpu.vector_store %arg12[%c0_45, %c0_46], %137 {strides = array<i32>} : memref<2x1xf32, #tpu.memory_space<vmem>>, vector<2x1xf32>,
    return
  }
}

</mosaic_0001>

<llo_original>
// kernel: discriminator_forward.1
$region0: #{discriminator_forward.1}
  #allocation0 [shape = 'u32[]', space=smem, size = 0x4, offset = 0x4, fixed_abs, tag = 'smem constant byte address 0x4 - core index']
  #allocation1 [shape = 'u32[144,128]{1,0:T(1,128)}', space=vmem, size = 0x12000, scoped, tag = 'internal scratch']
  %s0 = inlined_call_operand.vmem [shape: f32[2,16,16,4], index: 0, kind: input, shape index: {}]
  %s1 = inlined_call_operand.vmem [shape: bf16[36,32], index: 1, kind: input, shape index: {}]
  %s2 = inlined_call_operand.vmem [shape: f32[1,32], index: 2, kind: input, shape index: {}]
  %s3 = inlined_call_operand.vmem [shape: bf16[288,32], index: 3, kind: input, shape index: {}]
  %s4 = inlined_call_operand.vmem [shape: f32[1,32], index: 4, kind: input, shape index: {}]
  %s5 = inlined_call_operand.vmem [shape: bf16[4,32], index: 5, kind: input, shape index: {}]
  %s6 = inlined_call_operand.vmem [shape: f32[1,32], index: 6, kind: input, shape index: {}]
  %s7 = inlined_call_operand.vmem [shape: bf16[288,32], index: 7, kind: input, shape index: {}]
  %s8 = inlined_call_operand.vmem [shape: f32[1,32], index: 8, kind: input, shape index: {}]
  %s9 = inlined_call_operand.vmem [shape: bf16[288,32], index: 9, kind: input, shape index: {}]
  %s10 = inlined_call_operand.vmem [shape: f32[1,32], index: 10, kind: input, shape index: {}]
  %s11 = inlined_call_operand.vmem [shape: f32[32,1], index: 11, kind: input, shape index: {}]
  %s12 = inlined_call_operand.vmem [shape: f32[2,1], index: 12, kind: output, shape index: {}]
  %s13 = sld [smem:[#allocation0]]
  $region58: #{discriminator_forward.1} parent=0
    _
  %s15 = ssub.s32 1, %s13
  %s16 = scalar_select 0, %s15, %s13
  // Predicated region
  $region2: #{discriminator_forward.1} parent=0 // pred_check
    _
  $region3: #{discriminator_forward.1} parent=0 // pred_check_branch
    %18 = sbr.rel (0) target = $region5
  $region4: #{discriminator_forward.1} parent=0 // pred_region
    _
  $region5: #{discriminator_forward.1} parent=0 // pred_fallthru
    _
  // Predicated region
  $region6: #{discriminator_forward.1} parent=0 // pred_check
    _
  $region7: #{discriminator_forward.1} parent=0 // pred_check_branch
    %20 = sbr.rel (0) target = $region9
  $region8: #{discriminator_forward.1} parent=0 // pred_region
    _
  $region9: #{discriminator_forward.1} parent=0 // pred_fallthru
    _
  // Predicated region
  $region10: #{discriminator_forward.1} parent=0 // pred_check
    _
  $region11: #{discriminator_forward.1} parent=0 // pred_check_branch
    %22 = sbr.rel (0) target = $region13
  $region12: #{discriminator_forward.1} parent=0 // pred_region
    _
  $region13: #{discriminator_forward.1} parent=0 // pred_fallthru
    _
  // Predicated region
  $region14: #{discriminator_forward.1} parent=0 // pred_check
    _
  $region15: #{discriminator_forward.1} parent=0 // pred_check_branch
    %24 = sbr.rel (0) target = $region17
  $region16: #{discriminator_forward.1} parent=0 // pred_region
    _
  $region17: #{discriminator_forward.1} parent=0 // pred_fallthru
    _
  // Predicated region
  $region18: #{discriminator_forward.1} parent=0 // pred_check
    _
  $region19: #{discriminator_forward.1} parent=0 // pred_check_branch
    %26 = sbr.rel (0) target = $region21
  $region20: #{discriminator_forward.1} parent=0 // pred_region
    _
  $region21: #{discriminator_forward.1} parent=0 // pred_fallthru
    _
  // Predicated region
  $region22: #{discriminator_forward.1} parent=0 // pred_check
    _
  $region23: #{discriminator_forward.1} parent=0 // pred_check_branch
    %28 = sbr.rel (0) target = $region25
  $region24: #{discriminator_forward.1} parent=0 // pred_region
    _
  $region25: #{discriminator_forward.1} parent=0 // pred_fallthru
    _
  // Predicated region
  $region26: #{discriminator_forward.1} parent=0 // pred_check
    _
  $region27: #{discriminator_forward.1} parent=0 // pred_check_branch
    %30 = sbr.rel (0) target = $region29
  $region28: #{discriminator_forward.1} parent=0 // pred_region
    _
  $region29: #{discriminator_forward.1} parent=0 // pred_fallthru
    _
  // Predicated region
  $region30: #{discriminator_forward.1} parent=0 // pred_check
    _
  $region31: #{discriminator_forward.1} parent=0 // pred_check_branch
    %32 = sbr.rel (0) target = $region33
  $region32: #{discriminator_forward.1} parent=0 // pred_region
    _
  $region33: #{discriminator_forward.1} parent=0 // pred_fallthru
    _
  // Predicated region
  $region34: #{discriminator_forward.1} parent=0 // pred_check
    _
  $region35: #{discriminator_forward.1} parent=0 // pred_check_branch
    %34 = sbr.rel (0) target = $region37
  $region36: #{discriminator_forward.1} parent=0 // pred_region
    _
  $region37: #{discriminator_forward.1} parent=0 // pred_fallthru
    _
  // Predicated region
  $region38: #{discriminator_forward.1} parent=0 // pred_check
    _
  $region39: #{discriminator_forward.1} parent=0 // pred_check_branch
    %36 = sbr.rel (0) target = $region41
  $region40: #{discriminator_forward.1} parent=0 // pred_region
    _
  $region41: #{discriminator_forward.1} parent=0 // pred_fallthru
    _
  // Predicated region
  $region42: #{discriminator_forward.1} parent=0 // pred_check
    _
  $region43: #{discriminator_forward.1} parent=0 // pred_check_branch
    %38 = sbr.rel (0) target = $region45
  $region44: #{discriminator_forward.1} parent=0 // pred_region
    _
  $region45: #{discriminator_forward.1} parent=0 // pred_fallthru
    _
  // Predicated region
  $region46: #{discriminator_forward.1} parent=0 // pred_check
    _
  $region47: #{discriminator_forward.1} parent=0 // pred_check_branch
    %40 = sbr.rel (0) target = $region49
  $region48: #{discriminator_forward.1} parent=0 // pred_region
    _
  $region49: #{discriminator_forward.1} parent=0 // pred_fallthru
    _
  %v42 = vld [vmem:[%s0] sm:$0xff]
  %v43 = vld [vmem:[%s0 + $0x8] sm:$0xff]
  %v44 = vld [vmem:[%s0 + $0x10] sm:$0xff]
  %v45 = vld [vmem:[%s0 + $0x18] sm:$0xff]
  %v46 = vld [vmem:[%s0 + $0x20] sm:$0xff]
  %v47 = vld [vmem:[%s0 + $0x28] sm:$0xff]
  %v48 = vld [vmem:[%s0 + $0x30] sm:$0xff]
  %v49 = vld [vmem:[%s0 + $0x38] sm:$0xff]
  %v50 = vld [vmem:[%s0 + $0x40] sm:$0xff]
  %v51 = vld [vmem:[%s0 + $0x48] sm:$0xff]
  %v52 = vld [vmem:[%s0 + $0x50] sm:$0xff]
  %v53 = vld [vmem:[%s0 + $0x58] sm:$0xff]
  %v54 = vld [vmem:[%s0 + $0x60] sm:$0xff]
  %v55 = vld [vmem:[%s0 + $0x68] sm:$0xff]
  %v56 = vld [vmem:[%s0 + $0x70] sm:$0xff]
  %v57 = vld [vmem:[%s0 + $0x78] sm:$0xff]
  %v58 = vld [vmem:[%s0 + $0x80] sm:$0xff]
  %v59 = vld [vmem:[%s0 + $0x88] sm:$0xff]
  %v60 = vld [vmem:[%s0 + $0x90] sm:$0xff]
  %v61 = vld [vmem:[%s0 + $0x98] sm:$0xff]
  %v62 = vld [vmem:[%s0 + $0xa0] sm:$0xff]
  %v63 = vld [vmem:[%s0 + $0xa8] sm:$0xff]
  %v64 = vld [vmem:[%s0 + $0xb0] sm:$0xff]
  %v65 = vld [vmem:[%s0 + $0xb8] sm:$0xff]
  %v66 = vld [vmem:[%s0 + $0xc0] sm:$0xff]
  %v67 = vld [vmem:[%s0 + $0xc8] sm:$0xff]
  %v68 = vld [vmem:[%s0 + $0xd0] sm:$0xff]
  %v69 = vld [vmem:[%s0 + $0xd8] sm:$0xff]
  %v70 = vld [vmem:[%s0 + $0xe0] sm:$0xff]
  %v71 = vld [vmem:[%s0 + $0xe8] sm:$0xff]
  %v72 = vld [vmem:[%s0 + $0xf0] sm:$0xff]
  %v73 = vld [vmem:[%s0 + $0xf8] sm:$0xff]
  %v74 = vld [vmem:[%s0 + $0x100] sm:$0xff]
  %v75 = vld [vmem:[%s0 + $0x108] sm:$0xff]
  %v76 = vld [vmem:[%s0 + $0x110] sm:$0xff]
  %v77 = vld [vmem:[%s0 + $0x118] sm:$0xff]
  %v78 = vld [vmem:[%s0 + $0x120] sm:$0xff]
  %v79 = vld [vmem:[%s0 + $0x128] sm:$0xff]
  %v80 = vld [vmem:[%s0 + $0x130] sm:$0xff]
  %v81 = vld [vmem:[%s0 + $0x138] sm:$0xff]
  %v82 = vld [vmem:[%s0 + $0x140] sm:$0xff]
  %v83 = vld [vmem:[%s0 + $0x148] sm:$0xff]
  %v84 = vld [vmem:[%s0 + $0x150] sm:$0xff]
  %v85 = vld [vmem:[%s0 + $0x158] sm:$0xff]
  %v86 = vld [vmem:[%s0 + $0x160] sm:$0xff]
  %v87 = vld [vmem:[%s0 + $0x168] sm:$0xff]
  %v88 = vld [vmem:[%s0 + $0x170] sm:$0xff]
  %v89 = vld [vmem:[%s0 + $0x178] sm:$0xff]
  %v90 = vld [vmem:[%s0 + $0x180] sm:$0xff]
  %v91 = vld [vmem:[%s0 + $0x188] sm:$0xff]
  %v92 = vld [vmem:[%s0 + $0x190] sm:$0xff]
  %v93 = vld [vmem:[%s0 + $0x198] sm:$0xff]
  %v94 = vld [vmem:[%s0 + $0x1a0] sm:$0xff]
  %v95 = vld [vmem:[%s0 + $0x1a8] sm:$0xff]
  %v96 = vld [vmem:[%s0 + $0x1b0] sm:$0xff]
  %v97 = vld [vmem:[%s0 + $0x1b8] sm:$0xff]
  %v98 = vld [vmem:[%s0 + $0x1c0] sm:$0xff]
  %v99 = vld [vmem:[%s0 + $0x1c8] sm:$0xff]
  %v100 = vld [vmem:[%s0 + $0x1d0] sm:$0xff]
  %v101 = vld [vmem:[%s0 + $0x1d8] sm:$0xff]
  %v102 = vld [vmem:[%s0 + $0x1e0] sm:$0xff]
  %v103 = vld [vmem:[%s0 + $0x1e8] sm:$0xff]
  %v104 = vld [vmem:[%s0 + $0x1f0] sm:$0xff]
  %v105 = vld [vmem:[%s0 + $0x1f8] sm:$0xff]
  %v106 = vld [vmem:[%s1] sm:$0xf]
  %v107 = vld [vmem:[%s1 + $0x4] sm:$0xf]
  %v108 = vld [vmem:[%s1 + $0x8] sm:$0xf]
  %v109 = vld [vmem:[%s1 + $0xc] sm:$0xf]
  %v110 = vld [vmem:[%s1 + $0x10] sm:$0x3]
  %v111 = vld [vmem:[%s2] sm:$0x1]
  %vm177 = vcmask 1040384
  %v178 = vrot.slane 0.0, 7
  %v179 = vsel %vm177, %v178, %v178
  %v180 = vrot.slane %v42, 7
  %v181 = vrot.slane %v43, 7
  %v182 = vsel %vm177, %v180, %v181
  %v183 = vrot.slane %v44, 7
  %v184 = vrot.slane %v45, 7
  %v185 = vsel %vm177, %v183, %v184
  %v186 = vrot.slane %v46, 7
  %v187 = vrot.slane %v47, 7
  %v188 = vsel %vm177, %v186, %v187
  %v189 = vrot.slane %v48, 7
  %v190 = vrot.slane %v49, 7
  %v191 = vsel %vm177, %v189, %v190
  %v192 = vrot.slane %v50, 7
  %v193 = vrot.slane %v51, 7
  %v194 = vsel %vm177, %v192, %v193
  %v195 = vrot.slane %v52, 7
  %v196 = vrot.slane %v53, 7
  %v197 = vsel %vm177, %v195, %v196
  %v198 = vrot.slane %v54, 7
  %v199 = vrot.slane %v55, 7
  %v200 = vsel %vm177, %v198, %v199
  %v201 = vrot.slane %v56, 7
  %v202 = vrot.slane %v57, 7
  %v203 = vsel %vm177, %v201, %v202
  %v204 = vrot.slane %v58, 7
  %v205 = vrot.slane %v59, 7
  %v206 = vsel %vm177, %v204, %v205
  %v207 = vrot.slane %v60, 7
  %v208 = vrot.slane %v61, 7
  %v209 = vsel %vm177, %v207, %v208
  %v210 = vrot.slane %v62, 7
  %v211 = vrot.slane %v63, 7
  %v212 = vsel %vm177, %v210, %v211
  %v213 = vrot.slane %v64, 7
  %v214 = vrot.slane %v65, 7
  %v215 = vsel %vm177, %v213, %v214
  %v216 = vrot.slane %v66, 7
  %v217 = vrot.slane %v67, 7
  %v218 = vsel %vm177, %v216, %v217
  %v219 = vrot.slane %v68, 7
  %v220 = vrot.slane %v69, 7
  %v221 = vsel %vm177, %v219, %v220
  %v222 = vrot.slane %v70, 7
  %v223 = vrot.slane %v71, 7
  %v224 = vsel %vm177, %v222, %v223
  %v225 = vrot.slane %v72, 7
  %v226 = vrot.slane %v73, 7
  %v227 = vsel %vm177, %v225, %v226
  %v228 = vrot.slane %v74, 7
  %v229 = vrot.slane %v75, 7
  %v230 = vsel %vm177, %v228, %v229
  %v231 = vrot.slane %v76, 7
  %v232 = vrot.slane %v77, 7
  %v233 = vsel %vm177, %v231, %v232
  %v234 = vrot.slane %v78, 7
  %v235 = vrot.slane %v79, 7
  %v236 = vsel %vm177, %v234, %v235
  %v237 = vrot.slane %v80, 7
  %v238 = vrot.slane %v81, 7
  %v239 = vsel %vm177, %v237, %v238
  %v240 = vrot.slane %v82, 7
  %v241 = vrot.slane %v83, 7
  %v242 = vsel %vm177, %v240, %v241
  %v243 = vrot.slane %v84, 7
  %v244 = vrot.slane %v85, 7
  %v245 = vsel %vm177, %v243, %v244
  %v246 = vrot.slane %v86, 7
  %v247 = vrot.slane %v87, 7
  %v248 = vsel %vm177, %v246, %v247
  %v249 = vrot.slane %v88, 7
  %v250 = vrot.slane %v89, 7
  %v251 = vsel %vm177, %v249, %v250
  %v252 = vrot.slane %v90, 7
  %v253 = vrot.slane %v91, 7
  %v254 = vsel %vm177, %v252, %v253
  %v255 = vrot.slane %v92, 7
  %v256 = vrot.slane %v93, 7
  %v257 = vsel %vm177, %v255, %v256
  %v258 = vrot.slane %v94, 7
  %v259 = vrot.slane %v95, 7
  %v260 = vsel %vm177, %v258, %v259
  %v261 = vrot.slane %v96, 7
  %v262 = vrot.slane %v97, 7
  %v263 = vsel %vm177, %v261, %v262
  %v264 = vrot.slane %v98, 7
  %v265 = vrot.slane %v99, 7
  %v266 = vsel %vm177, %v264, %v265
  %v267 = vrot.slane %v100, 7
  %v268 = vrot.slane %v101, 7
  %v269 = vsel %vm177, %v267, %v268
  %v270 = vrot.slane %v102, 7
  %v271 = vrot.slane %v103, 7
  %v272 = vsel %vm177, %v270, %v271
  %v273 = vrot.slane %v104, 7
  %v274 = vrot.slane %v105, 7
  %v275 = vsel %vm177, %v273, %v274
  %v372 = vsel %vm177, 0.0, %v178
  %v373 = vsel %vm177, 0.0, %v180
  %v374 = vsel %vm177, 0.0, %v183
  %v375 = vsel %vm177, 0.0, %v186
  %v376 = vsel %vm177, 0.0, %v189
  %v377 = vsel %vm177, 0.0, %v192
  %v378 = vsel %vm177, 0.0, %v195
  %v379 = vsel %vm177, 0.0, %v198
  %v380 = vsel %vm177, 0.0, %v201
  %v381 = vsel %vm177, 0.0, %v204
  %v382 = vsel %vm177, 0.0, %v207
  %v383 = vsel %vm177, 0.0, %v210
  %v384 = vsel %vm177, 0.0, %v213
  %v385 = vsel %vm177, 0.0, %v216
  %v386 = vsel %vm177, 0.0, %v219
  %v387 = vsel %vm177, 0.0, %v222
  %v388 = vsel %vm177, 0.0, %v225
  %v389 = vsel %vm177, 0.0, %v228
  %v390 = vsel %vm177, 0.0, %v231
  %v391 = vsel %vm177, 0.0, %v234
  %v392 = vsel %vm177, 0.0, %v237
  %v393 = vsel %vm177, 0.0, %v240
  %v394 = vsel %vm177, 0.0, %v243
  %v395 = vsel %vm177, 0.0, %v246
  %v396 = vsel %vm177, 0.0, %v249
  %v397 = vsel %vm177, 0.0, %v252
  %v398 = vsel %vm177, 0.0, %v255
  %v399 = vsel %vm177, 0.0, %v258
  %v400 = vsel %vm177, 0.0, %v261
  %v401 = vsel %vm177, 0.0, %v264
  %v402 = vsel %vm177, 0.0, %v267
  %v403 = vsel %vm177, 0.0, %v270
  %v404 = vsel %vm177, 0.0, %v273
  %v405 = vsel %vm177, %v178, 0.0
  %v406 = vsel %vm177, %v181, 0.0
  %v407 = vsel %vm177, %v184, 0.0
  %v408 = vsel %vm177, %v187, 0.0
  %v409 = vsel %vm177, %v190, 0.0
  %v410 = vsel %vm177, %v193, 0.0
  %v411 = vsel %vm177, %v196, 0.0
  %v412 = vsel %vm177, %v199, 0.0
  %v413 = vsel %vm177, %v202, 0.0
  %v414 = vsel %vm177, %v205, 0.0
  %v415 = vsel %vm177, %v208, 0.0
  %v416 = vsel %vm177, %v211, 0.0
  %v417 = vsel %vm177, %v214, 0.0
  %v418 = vsel %vm177, %v217, 0.0
  %v419 = vsel %vm177, %v220, 0.0
  %v420 = vsel %vm177, %v223, 0.0
  %v421 = vsel %vm177, %v226, 0.0
  %v422 = vsel %vm177, %v229, 0.0
  %v423 = vsel %vm177, %v232, 0.0
  %v424 = vsel %vm177, %v235, 0.0
  %v425 = vsel %vm177, %v238, 0.0
  %v426 = vsel %vm177, %v241, 0.0
  %v427 = vsel %vm177, %v244, 0.0
  %v428 = vsel %vm177, %v247, 0.0
  %v429 = vsel %vm177, %v250, 0.0
  %v430 = vsel %vm177, %v253, 0.0
  %v431 = vsel %vm177, %v256, 0.0
  %v432 = vsel %vm177, %v259, 0.0
  %v433 = vsel %vm177, %v262, 0.0
  %v434 = vsel %vm177, %v265, 0.0
  %v435 = vsel %vm177, %v268, 0.0
  %v436 = vsel %vm177, %v271, 0.0
  %v437 = vsel %vm177, %v274, 0.0
  %vm500 = vcmask 1046528
  %v501 = vrot.slane %v372, 1
  %v502 = vrot.slane %v179, 1
  %v503 = vsel %vm500, %v501, %v502
  %v504 = vrot.slane %v405, 1
  %v505 = vsel %vm500, %v502, %v504
  %v506 = vrot.slane %v373, 1
  %v507 = vrot.slane %v182, 1
  %v508 = vsel %vm500, %v506, %v507
  %v509 = vrot.slane %v406, 1
  %v510 = vsel %vm500, %v507, %v509
  %v511 = vrot.slane %v374, 1
  %v512 = vrot.slane %v185, 1
  %v513 = vsel %vm500, %v511, %v512
  %v514 = vrot.slane %v407, 1
  %v515 = vsel %vm500, %v512, %v514
  %v516 = vrot.slane %v375, 1
  %v517 = vrot.slane %v188, 1
  %v518 = vsel %vm500, %v516, %v517
  %v519 = vrot.slane %v408, 1
  %v520 = vsel %vm500, %v517, %v519
  %v521 = vrot.slane %v376, 1
  %v522 = vrot.slane %v191, 1
  %v523 = vsel %vm500, %v521, %v522
  %v524 = vrot.slane %v409, 1
  %v525 = vsel %vm500, %v522, %v524
  %v526 = vrot.slane %v377, 1
  %v527 = vrot.slane %v194, 1
  %v528 = vsel %vm500, %v526, %v527
  %v529 = vrot.slane %v410, 1
  %v530 = vsel %vm500, %v527, %v529
  %v531 = vrot.slane %v378, 1
  %v532 = vrot.slane %v197, 1
  %v533 = vsel %vm500, %v531, %v532
  %v534 = vrot.slane %v411, 1
  %v535 = vsel %vm500, %v532, %v534
  %v536 = vrot.slane %v379, 1
  %v537 = vrot.slane %v200, 1
  %v538 = vsel %vm500, %v536, %v537
  %v539 = vrot.slane %v412, 1
  %v540 = vsel %vm500, %v537, %v539
  %v541 = vrot.slane %v380, 1
  %v542 = vrot.slane %v203, 1
  %v543 = vsel %vm500, %v541, %v542
  %v544 = vrot.slane %v413, 1
  %v545 = vsel %vm500, %v542, %v544
  %v546 = vrot.slane %v381, 1
  %v547 = vrot.slane %v206, 1
  %v548 = vsel %vm500, %v546, %v547
  %v549 = vrot.slane %v414, 1
  %v550 = vsel %vm500, %v547, %v549
  %v551 = vrot.slane %v382, 1
  %v552 = vrot.slane %v209, 1
  %v553 = vsel %vm500, %v551, %v552
  %v554 = vrot.slane %v415, 1
  %v555 = vsel %vm500, %v552, %v554
  %v556 = vrot.slane %v383, 1
  %v557 = vrot.slane %v212, 1
  %v558 = vsel %vm500, %v556, %v557
  %v559 = vrot.slane %v416, 1
  %v560 = vsel %vm500, %v557, %v559
  %v561 = vrot.slane %v384, 1
  %v562 = vrot.slane %v215, 1
  %v563 = vsel %vm500, %v561, %v562
  %v564 = vrot.slane %v417, 1
  %v565 = vsel %vm500, %v562, %v564
  %v566 = vrot.slane %v385, 1
  %v567 = vrot.slane %v218, 1
  %v568 = vsel %vm500, %v566, %v567
  %v569 = vrot.slane %v418, 1
  %v570 = vsel %vm500, %v567, %v569
  %v571 = vrot.slane %v386, 1
  %v572 = vrot.slane %v221, 1
  %v573 = vsel %vm500, %v571, %v572
  %v574 = vrot.slane %v419, 1
  %v575 = vsel %vm500, %v572, %v574
  %v576 = vrot.slane %v387, 1
  %v577 = vrot.slane %v224, 1
  %v578 = vsel %vm500, %v576, %v577
  %v579 = vrot.slane %v420, 1
  %v580 = vsel %vm500, %v577, %v579
  %v581 = vrot.slane %v389, 1
  %v582 = vrot.slane %v230, 1
  %v583 = vsel %vm500, %v581, %v582
  %v584 = vrot.slane %v422, 1
  %v585 = vsel %vm500, %v582, %v584
  %v586 = vrot.slane %v390, 1
  %v587 = vrot.slane %v233, 1
  %v588 = vsel %vm500, %v586, %v587
  %v589 = vrot.slane %v423, 1
  %v590 = vsel %vm500, %v587, %v589
  %v591 = vrot.slane %v391, 1
  %v592 = vrot.slane %v236, 1
  %v593 = vsel %vm500, %v591, %v592
  %v594 = vrot.slane %v424, 1
  %v595 = vsel %vm500, %v592, %v594
  %v596 = vrot.slane %v392, 1
  %v597 = vrot.slane %v239, 1
  %v598 = vsel %vm500, %v596, %v597
  %v599 = vrot.slane %v425, 1
  %v600 = vsel %vm500, %v597, %v599
  %v601 = vrot.slane %v393, 1
  %v602 = vrot.slane %v242, 1
  %v603 = vsel %vm500, %v601, %v602
  %v604 = vrot.slane %v426, 1
  %v605 = vsel %vm500, %v602, %v604
  %v606 = vrot.slane %v394, 1
  %v607 = vrot.slane %v245, 1
  %v608 = vsel %vm500, %v606, %v607
  %v609 = vrot.slane %v427, 1
  %v610 = vsel %vm500, %v607, %v609
  %v611 = vrot.slane %v395, 1
  %v612 = vrot.slane %v248, 1
  %v613 = vsel %vm500, %v611, %v612
  %v614 = vrot.slane %v428, 1
  %v615 = vsel %vm500, %v612, %v614
  %v616 = vrot.slane %v396, 1
  %v617 = vrot.slane %v251, 1
  %v618 = vsel %vm500, %v616, %v617
  %v619 = vrot.slane %v429, 1
  %v620 = vsel %vm500, %v617, %v619
  %v621 = vrot.slane %v397, 1
  %v622 = vrot.slane %v254, 1
  %v623 = vsel %vm500, %v621, %v622
  %v624 = vrot.slane %v430, 1
  %v625 = vsel %vm500, %v622, %v624
  %v626 = vrot.slane %v398, 1
  %v627 = vrot.slane %v257, 1
  %v628 = vsel %vm500, %v626, %v627
  %v629 = vrot.slane %v431, 1
  %v630 = vsel %vm500, %v627, %v629
  %v631 = vrot.slane %v399, 1
  %v632 = vrot.slane %v260, 1
  %v633 = vsel %vm500, %v631, %v632
  %v634 = vrot.slane %v432, 1
  %v635 = vsel %vm500, %v632, %v634
  %v636 = vrot.slane %v400, 1
  %v637 = vrot.slane %v263, 1
  %v638 = vsel %vm500, %v636, %v637
  %v639 = vrot.slane %v433, 1
  %v640 = vsel %vm500, %v637, %v639
  %v641 = vrot.slane %v401, 1
  %v642 = vrot.slane %v266, 1
  %v643 = vsel %vm500, %v641, %v642
  %v644 = vrot.slane %v434, 1
  %v645 = vsel %vm500, %v642, %v644
  %v646 = vrot.slane %v402, 1
  %v647 = vrot.slane %v269, 1
  %v648 = vsel %vm500, %v646, %v647
  %v649 = vrot.slane %v435, 1
  %v650 = vsel %vm500, %v647, %v649
  %v651 = vrot.slane %v403, 1
  %v652 = vrot.slane %v272, 1
  %v653 = vsel %vm500, %v651, %v652
  %v654 = vrot.slane %v436, 1
  %v655 = vsel %vm500, %v652, %v654
  %656 = vrot.lane.b32.xlu0 %v503, 4
  %v657 = vpop.permute.xlu0 %656
  %658 = vrot.lane.b32.xlu0 %v505, 4
  %v659 = vpop.permute.xlu0 %658
  %660 = vrot.lane.b32.xlu0 %v508, 4
  %v661 = vpop.permute.xlu0 %660
  %662 = vrot.lane.b32.xlu0 %v510, 4
  %v663 = vpop.permute.xlu0 %662
  %664 = vrot.lane.b32.xlu0 %v513, 4
  %v665 = vpop.permute.xlu0 %664
  %666 = vrot.lane.b32.xlu0 %v515, 4
  %v667 = vpop.permute.xlu0 %666
  %668 = vrot.lane.b32.xlu0 %v518, 4
  %v669 = vpop.permute.xlu0 %668
  %670 = vrot.lane.b32.xlu0 %v520, 4
  %v671 = vpop.permute.xlu0 %670
  %672 = vrot.lane.b32.xlu0 %v523, 4
  %v673 = vpop.permute.xlu0 %672
  %674 = vrot.lane.b32.xlu0 %v525, 4
  %v675 = vpop.permute.xlu0 %674
  %676 = vrot.lane.b32.xlu0 %v528, 4
  %v677 = vpop.permute.xlu0 %676
  %678 = vrot.lane.b32.xlu0 %v530, 4
  %v679 = vpop.permute.xlu0 %678
  %680 = vrot.lane.b32.xlu0 %v533, 4
  %v681 = vpop.permute.xlu0 %680
  %682 = vrot.lane.b32.xlu0 %v535, 4
  %v683 = vpop.permute.xlu0 %682
  %684 = vrot.lane.b32.xlu0 %v538, 4
  %v685 = vpop.permute.xlu0 %684
  %686 = vrot.lane.b32.xlu0 %v540, 4
  %v687 = vpop.permute.xlu0 %686
  %688 = vrot.lane.b32.xlu0 %v543, 4
  %v689 = vpop.permute.xlu0 %688
  %690 = vrot.lane.b32.xlu0 %v545, 4
  %v691 = vpop.permute.xlu0 %690
  %692 = vrot.lane.b32.xlu0 %v548, 4
  %v693 = vpop.permute.xlu0 %692
  %694 = vrot.lane.b32.xlu0 %v550, 4
  %v695 = vpop.permute.xlu0 %694
  %696 = vrot.lane.b32.xlu0 %v553, 4
  %v697 = vpop.permute.xlu0 %696
  %698 = vrot.lane.b32.xlu0 %v555, 4
  %v699 = vpop.permute.xlu0 %698
  %700 = vrot.lane.b32.xlu0 %v558, 4
  %v701 = vpop.permute.xlu0 %700
  %702 = vrot.lane.b32.xlu0 %v560, 4
  %v703 = vpop.permute.xlu0 %702
  %704 = vrot.lane.b32.xlu0 %v563, 4
  %v705 = vpop.permute.xlu0 %704
  %706 = vrot.lane.b32.xlu0 %v565, 4
  %v707 = vpop.permute.xlu0 %706
  %708 = vrot.lane.b32.xlu0 %v568, 4
  %v709 = vpop.permute.xlu0 %708
  %710 = vrot.lane.b32.xlu0 %v570, 4
  %v711 = vpop.permute.xlu0 %710
  %712 = vrot.lane.b32.xlu0 %v573, 4
  %v713 = vpop.permute.xlu0 %712
  %714 = vrot.lane.b32.xlu0 %v575, 4
  %v715 = vpop.permute.xlu0 %714
  %716 = vrot.lane.b32.xlu0 %v578, 4
  %v717 = vpop.permute.xlu0 %716
  %718 = vrot.lane.b32.xlu0 %v580, 4
  %v719 = vpop.permute.xlu0 %718
  %720 = vrot.lane.b32.xlu0 %v583, 4
  %v721 = vpop.permute.xlu0 %720
  %722 = vrot.lane.b32.xlu0 %v585, 4
  %v723 = vpop.permute.xlu0 %722
  %724 = vrot.lane.b32.xlu0 %v588, 4
  %v725 = vpop.permute.xlu0 %724
  %726 = vrot.lane.b32.xlu0 %v590, 4
  %v727 = vpop.permute.xlu0 %726
  %728 = vrot.lane.b32.xlu0 %v593, 4
  %v729 = vpop.permute.xlu0 %728
  %730 = vrot.lane.b32.xlu0 %v595, 4
  %v731 = vpop.permute.xlu0 %730
  %732 = vrot.lane.b32.xlu0 %v598, 4
  %v733 = vpop.permute.xlu0 %732
  %734 = vrot.lane.b32.xlu0 %v600, 4
  %v735 = vpop.permute.xlu0 %734
  %736 = vrot.lane.b32.xlu0 %v603, 4
  %v737 = vpop.permute.xlu0 %736
  %738 = vrot.lane.b32.xlu0 %v605, 4
  %v739 = vpop.permute.xlu0 %738
  %740 = vrot.lane.b32.xlu0 %v608, 4
  %v741 = vpop.permute.xlu0 %740
  %742 = vrot.lane.b32.xlu0 %v610, 4
  %v743 = vpop.permute.xlu0 %742
  %744 = vrot.lane.b32.xlu0 %v613, 4
  %v745 = vpop.permute.xlu0 %744
  %746 = vrot.lane.b32.xlu0 %v615, 4
  %v747 = vpop.permute.xlu0 %746
  %748 = vrot.lane.b32.xlu0 %v618, 4
  %v749 = vpop.permute.xlu0 %748
  %750 = vrot.lane.b32.xlu0 %v620, 4
  %v751 = vpop.permute.xlu0 %750
  %752 = vrot.lane.b32.xlu0 %v623, 4
  %v753 = vpop.permute.xlu0 %752
  %754 = vrot.lane.b32.xlu0 %v625, 4
  %v755 = vpop.permute.xlu0 %754
  %756 = vrot.lane.b32.xlu0 %v628, 4
  %v757 = vpop.permute.xlu0 %756
  %758 = vrot.lane.b32.xlu0 %v630, 4
  %v759 = vpop.permute.xlu0 %758
  %760 = vrot.lane.b32.xlu0 %v633, 4
  %v761 = vpop.permute.xlu0 %760
  %762 = vrot.lane.b32.xlu0 %v635, 4
  %v763 = vpop.permute.xlu0 %762
  %764 = vrot.lane.b32.xlu0 %v638, 4
  %v765 = vpop.permute.xlu0 %764
  %766 = vrot.lane.b32.xlu0 %v640, 4
  %v767 = vpop.permute.xlu0 %766
  %768 = vrot.lane.b32.xlu0 %v643, 4
  %v769 = vpop.permute.xlu0 %768
  %770 = vrot.lane.b32.xlu0 %v645, 4
  %v771 = vpop.permute.xlu0 %770
  %772 = vrot.lane.b32.xlu0 %v648, 4
  %v773 = vpop.permute.xlu0 %772
  %774 = vrot.lane.b32.xlu0 %v650, 4
  %v775 = vpop.permute.xlu0 %774
  %776 = vrot.lane.b32.xlu0 %v653, 4
  %v777 = vpop.permute.xlu0 %776
  %778 = vrot.lane.b32.xlu0 %v655, 4
  %v779 = vpop.permute.xlu0 %778
  %vm842 = vcmask 1045504
  %v843 = vrot.slane %v372, 2
  %v844 = vrot.slane %v179, 2
  %v845 = vsel %vm842, %v843, %v844
  %v846 = vrot.slane %v405, 2
  %v847 = vsel %vm842, %v844, %v846
  %v848 = vrot.slane %v373, 2
  %v849 = vrot.slane %v182, 2
  %v850 = vsel %vm842, %v848, %v849
  %v851 = vrot.slane %v406, 2
  %v852 = vsel %vm842, %v849, %v851
  %v853 = vrot.slane %v374, 2
  %v854 = vrot.slane %v185, 2
  %v855 = vsel %vm842, %v853, %v854
  %v856 = vrot.slane %v407, 2
  %v857 = vsel %vm842, %v854, %v856
  %v858 = vrot.slane %v375, 2
  %v859 = vrot.slane %v188, 2
  %v860 = vsel %vm842, %v858, %v859
  %v861 = vrot.slane %v408, 2
  %v862 = vsel %vm842, %v859, %v861
  %v863 = vrot.slane %v376, 2
  %v864 = vrot.slane %v191, 2
  %v865 = vsel %vm842, %v863, %v864
  %v866 = vrot.slane %v409, 2
  %v867 = vsel %vm842, %v864, %v866
  %v868 = vrot.slane %v377, 2
  %v869 = vrot.slane %v194, 2
  %v870 = vsel %vm842, %v868, %v869
  %v871 = vrot.slane %v410, 2
  %v872 = vsel %vm842, %v869, %v871
  %v873 = vrot.slane %v378, 2
  %v874 = vrot.slane %v197, 2
  %v875 = vsel %vm842, %v873, %v874
  %v876 = vrot.slane %v411, 2
  %v877 = vsel %vm842, %v874, %v876
  %v878 = vrot.slane %v379, 2
  %v879 = vrot.slane %v200, 2
  %v880 = vsel %vm842, %v878, %v879
  %v881 = vrot.slane %v412, 2
  %v882 = vsel %vm842, %v879, %v881
  %v883 = vrot.slane %v380, 2
  %v884 = vrot.slane %v203, 2
  %v885 = vsel %vm842, %v883, %v884
  %v886 = vrot.slane %v413, 2
  %v887 = vsel %vm842, %v884, %v886
  %v888 = vrot.slane %v381, 2
  %v889 = vrot.slane %v206, 2
  %v890 = vsel %vm842, %v888, %v889
  %v891 = vrot.slane %v414, 2
  %v892 = vsel %vm842, %v889, %v891
  %v893 = vrot.slane %v382, 2
  %v894 = vrot.slane %v209, 2
  %v895 = vsel %vm842, %v893, %v894
  %v896 = vrot.slane %v415, 2
  %v897 = vsel %vm842, %v894, %v896
  %v898 = vrot.slane %v383, 2
  %v899 = vrot.slane %v212, 2
  %v900 = vsel %vm842, %v898, %v899
  %v901 = vrot.slane %v416, 2
  %v902 = vsel %vm842, %v899, %v901
  %v903 = vrot.slane %v384, 2
  %v904 = vrot.slane %v215, 2
  %v905 = vsel %vm842, %v903, %v904
  %v906 = vrot.slane %v417, 2
  %v907 = vsel %vm842, %v904, %v906
  %v908 = vrot.slane %v385, 2
  %v909 = vrot.slane %v218, 2
  %v910 = vsel %vm842, %v908, %v909
  %v911 = vrot.slane %v418, 2
  %v912 = vsel %vm842, %v909, %v911
  %v913 = vrot.slane %v386, 2
  %v914 = vrot.slane %v221, 2
  %v915 = vsel %vm842, %v913, %v914
  %v916 = vrot.slane %v419, 2
  %v917 = vsel %vm842, %v914, %v916
  %v918 = vrot.slane %v387, 2
  %v919 = vrot.slane %v224, 2
  %v920 = vsel %vm842, %v918, %v919
  %v921 = vrot.slane %v420, 2
  %v922 = vsel %vm842, %v919, %v921
  %v923 = vrot.slane %v389, 2
  %v924 = vrot.slane %v230, 2
  %v925 = vsel %vm842, %v923, %v924
  %v926 = vrot.slane %v422, 2
  %v927 = vsel %vm842, %v924, %v926
  %v928 = vrot.slane %v390, 2
  %v929 = vrot.slane %v233, 2
  %v930 = vsel %vm842, %v928, %v929
  %v931 = vrot.slane %v423, 2
  %v932 = vsel %vm842, %v929, %v931
  %v933 = vrot.slane %v391, 2
  %v934 = vrot.slane %v236, 2
  %v935 = vsel %vm842, %v933, %v934
  %v936 = vrot.slane %v424, 2
  %v937 = vsel %vm842, %v934, %v936
  %v938 = vrot.slane %v392, 2
  %v939 = vrot.slane %v239, 2
  %v940 = vsel %vm842, %v938, %v939
  %v941 = vrot.slane %v425, 2
  %v942 = vsel %vm842, %v939, %v941
  %v943 = vrot.slane %v393, 2
  %v944 = vrot.slane %v242, 2
  %v945 = vsel %vm842, %v943, %v944
  %v946 = vrot.slane %v426, 2
  %v947 = vsel %vm842, %v944, %v946
  %v948 = vrot.slane %v394, 2
  %v949 = vrot.slane %v245, 2
  %v950 = vsel %vm842, %v948, %v949
  %v951 = vrot.slane %v427, 2
  %v952 = vsel %vm842, %v949, %v951
  %v953 = vrot.slane %v395, 2
  %v954 = vrot.slane %v248, 2
  %v955 = vsel %vm842, %v953, %v954
  %v956 = vrot.slane %v428, 2
  %v957 = vsel %vm842, %v954, %v956
  %v958 = vrot.slane %v396, 2
  %v959 = vrot.slane %v251, 2
  %v960 = vsel %vm842, %v958, %v959
  %v961 = vrot.slane %v429, 2
  %v962 = vsel %vm842, %v959, %v961
  %v963 = vrot.slane %v397, 2
  %v964 = vrot.slane %v254, 2
  %v965 = vsel %vm842, %v963, %v964
  %v966 = vrot.slane %v430, 2
  %v967 = vsel %vm842, %v964, %v966
  %v968 = vrot.slane %v398, 2
  %v969 = vrot.slane %v257, 2
  %v970 = vsel %vm842, %v968, %v969
  %v971 = vrot.slane %v431, 2
  %v972 = vsel %vm842, %v969, %v971
  %v973 = vrot.slane %v399, 2
  %v974 = vrot.slane %v260, 2
  %v975 = vsel %vm842, %v973, %v974
  %v976 = vrot.slane %v432, 2
  %v977 = vsel %vm842, %v974, %v976
  %v978 = vrot.slane %v400, 2
  %v979 = vrot.slane %v263, 2
  %v980 = vsel %vm842, %v978, %v979
  %v981 = vrot.slane %v433, 2
  %v982 = vsel %vm842, %v979, %v981
  %v983 = vrot.slane %v401, 2
  %v984 = vrot.slane %v266, 2
  %v985 = vsel %vm842, %v983, %v984
  %v986 = vrot.slane %v434, 2
  %v987 = vsel %vm842, %v984, %v986
  %v988 = vrot.slane %v402, 2
  %v989 = vrot.slane %v269, 2
  %v990 = vsel %vm842, %v988, %v989
  %v991 = vrot.slane %v435, 2
  %v992 = vsel %vm842, %v989, %v991
  %v993 = vrot.slane %v403, 2
  %v994 = vrot.slane %v272, 2
  %v995 = vsel %vm842, %v993, %v994
  %v996 = vrot.slane %v436, 2
  %v997 = vsel %vm842, %v994, %v996
  %998 = vrot.lane.b32.xlu0 %v845, 8
  %v999 = vpop.permute.xlu0 %998
  %1000 = vrot.lane.b32.xlu0 %v847, 8
  %v1001 = vpop.permute.xlu0 %1000
  %1002 = vrot.lane.b32.xlu0 %v850, 8
  %v1003 = vpop.permute.xlu0 %1002
  %1004 = vrot.lane.b32.xlu0 %v852, 8
  %v1005 = vpop.permute.xlu0 %1004
  %1006 = vrot.lane.b32.xlu0 %v855, 8
  %v1007 = vpop.permute.xlu0 %1006
  %1008 = vrot.lane.b32.xlu0 %v857, 8
  %v1009 = vpop.permute.xlu0 %1008
  %1010 = vrot.lane.b32.xlu0 %v860, 8
  %v1011 = vpop.permute.xlu0 %1010
  %1012 = vrot.lane.b32.xlu0 %v862, 8
  %v1013 = vpop.permute.xlu0 %1012
  %1014 = vrot.lane.b32.xlu0 %v865, 8
  %v1015 = vpop.permute.xlu0 %1014
  %1016 = vrot.lane.b32.xlu0 %v867, 8
  %v1017 = vpop.permute.xlu0 %1016
  %1018 = vrot.lane.b32.xlu0 %v870, 8
  %v1019 = vpop.permute.xlu0 %1018
  %1020 = vrot.lane.b32.xlu0 %v872, 8
  %v1021 = vpop.permute.xlu0 %1020
  %1022 = vrot.lane.b32.xlu0 %v875, 8
  %v1023 = vpop.permute.xlu0 %1022
  %1024 = vrot.lane.b32.xlu0 %v877, 8
  %v1025 = vpop.permute.xlu0 %1024
  %1026 = vrot.lane.b32.xlu0 %v880, 8
  %v1027 = vpop.permute.xlu0 %1026
  %1028 = vrot.lane.b32.xlu0 %v882, 8
  %v1029 = vpop.permute.xlu0 %1028
  %1030 = vrot.lane.b32.xlu0 %v885, 8
  %v1031 = vpop.permute.xlu0 %1030
  %1032 = vrot.lane.b32.xlu0 %v887, 8
  %v1033 = vpop.permute.xlu0 %1032
  %1034 = vrot.lane.b32.xlu0 %v890, 8
  %v1035 = vpop.permute.xlu0 %1034
  %1036 = vrot.lane.b32.xlu0 %v892, 8
  %v1037 = vpop.permute.xlu0 %1036
  %1038 = vrot.lane.b32.xlu0 %v895, 8
  %v1039 = vpop.permute.xlu0 %1038
  %1040 = vrot.lane.b32.xlu0 %v897, 8
  %v1041 = vpop.permute.xlu0 %1040
  %1042 = vrot.lane.b32.xlu0 %v900, 8
  %v1043 = vpop.permute.xlu0 %1042
  %1044 = vrot.lane.b32.xlu0 %v902, 8
  %v1045 = vpop.permute.xlu0 %1044
  %1046 = vrot.lane.b32.xlu0 %v905, 8
  %v1047 = vpop.permute.xlu0 %1046
  %1048 = vrot.lane.b32.xlu0 %v907, 8
  %v1049 = vpop.permute.xlu0 %1048
  %1050 = vrot.lane.b32.xlu0 %v910, 8
  %v1051 = vpop.permute.xlu0 %1050
  %1052 = vrot.lane.b32.xlu0 %v912, 8
  %v1053 = vpop.permute.xlu0 %1052
  %1054 = vrot.lane.b32.xlu0 %v915, 8
  %v1055 = vpop.permute.xlu0 %1054
  %1056 = vrot.lane.b32.xlu0 %v917, 8
  %v1057 = vpop.permute.xlu0 %1056
  %1058 = vrot.lane.b32.xlu0 %v920, 8
  %v1059 = vpop.permute.xlu0 %1058
  %1060 = vrot.lane.b32.xlu0 %v922, 8
  %v1061 = vpop.permute.xlu0 %1060
  %1062 = vrot.lane.b32.xlu0 %v925, 8
  %v1063 = vpop.permute.xlu0 %1062
  %1064 = vrot.lane.b32.xlu0 %v927, 8
  %v1065 = vpop.permute.xlu0 %1064
  %1066 = vrot.lane.b32.xlu0 %v930, 8
  %v1067 = vpop.permute.xlu0 %1066
  %1068 = vrot.lane.b32.xlu0 %v932, 8
  %v1069 = vpop.permute.xlu0 %1068
  %1070 = vrot.lane.b32.xlu0 %v935, 8
  %v1071 = vpop.permute.xlu0 %1070
  %1072 = vrot.lane.b32.xlu0 %v937, 8
  %v1073 = vpop.permute.xlu0 %1072
  %1074 = vrot.lane.b32.xlu0 %v940, 8
  %v1075 = vpop.permute.xlu0 %1074
  %1076 = vrot.lane.b32.xlu0 %v942, 8
  %v1077 = vpop.permute.xlu0 %1076
  %1078 = vrot.lane.b32.xlu0 %v945, 8
  %v1079 = vpop.permute.xlu0 %1078
  %1080 = vrot.lane.b32.xlu0 %v947, 8
  %v1081 = vpop.permute.xlu0 %1080
  %1082 = vrot.lane.b32.xlu0 %v950, 8
  %v1083 = vpop.permute.xlu0 %1082
  %1084 = vrot.lane.b32.xlu0 %v952, 8
  %v1085 = vpop.permute.xlu0 %1084
  %1086 = vrot.lane.b32.xlu0 %v955, 8
  %v1087 = vpop.permute.xlu0 %1086
  %1088 = vrot.lane.b32.xlu0 %v957, 8
  %v1089 = vpop.permute.xlu0 %1088
  %1090 = vrot.lane.b32.xlu0 %v960, 8
  %v1091 = vpop.permute.xlu0 %1090
  %1092 = vrot.lane.b32.xlu0 %v962, 8
  %v1093 = vpop.permute.xlu0 %1092
  %1094 = vrot.lane.b32.xlu0 %v965, 8
  %v1095 = vpop.permute.xlu0 %1094
  %1096 = vrot.lane.b32.xlu0 %v967, 8
  %v1097 = vpop.permute.xlu0 %1096
  %1098 = vrot.lane.b32.xlu0 %v970, 8
  %v1099 = vpop.permute.xlu0 %1098
  %1100 = vrot.lane.b32.xlu0 %v972, 8
  %v1101 = vpop.permute.xlu0 %1100
  %1102 = vrot.lane.b32.xlu0 %v975, 8
  %v1103 = vpop.permute.xlu0 %1102
  %1104 = vrot.lane.b32.xlu0 %v977, 8
  %v1105 = vpop.permute.xlu0 %1104
  %1106 = vrot.lane.b32.xlu0 %v980, 8
  %v1107 = vpop.permute.xlu0 %1106
  %1108 = vrot.lane.b32.xlu0 %v982, 8
  %v1109 = vpop.permute.xlu0 %1108
  %1110 = vrot.lane.b32.xlu0 %v985, 8
  %v1111 = vpop.permute.xlu0 %1110
  %1112 = vrot.lane.b32.xlu0 %v987, 8
  %v1113 = vpop.permute.xlu0 %1112
  %1114 = vrot.lane.b32.xlu0 %v990, 8
  %v1115 = vpop.permute.xlu0 %1114
  %1116 = vrot.lane.b32.xlu0 %v992, 8
  %v1117 = vpop.permute.xlu0 %1116
  %1118 = vrot.lane.b32.xlu0 %v995, 8
  %v1119 = vpop.permute.xlu0 %1118
  %1120 = vrot.lane.b32.xlu0 %v997, 8
  %v1121 = vpop.permute.xlu0 %1120
  %1186 = vrot.lane.b32.xlu0 %v373, 12
  %v1187 = vpop.permute.xlu0 %1186
  %1188 = vrot.lane.b32.xlu0 %v182, 12
  %v1189 = vpop.permute.xlu0 %1188
  %1190 = vrot.lane.b32.xlu0 %v374, 12
  %v1191 = vpop.permute.xlu0 %1190
  %1192 = vrot.lane.b32.xlu0 %v185, 12
  %v1193 = vpop.permute.xlu0 %1192
  %1194 = vrot.lane.b32.xlu0 %v375, 12
  %v1195 = vpop.permute.xlu0 %1194
  %1196 = vrot.lane.b32.xlu0 %v188, 12
  %v1197 = vpop.permute.xlu0 %1196
  %1198 = vrot.lane.b32.xlu0 %v376, 12
  %v1199 = vpop.permute.xlu0 %1198
  %1200 = vrot.lane.b32.xlu0 %v191, 12
  %v1201 = vpop.permute.xlu0 %1200
  %1202 = vrot.lane.b32.xlu0 %v377, 12
  %v1203 = vpop.permute.xlu0 %1202
  %1204 = vrot.lane.b32.xlu0 %v194, 12
  %v1205 = vpop.permute.xlu0 %1204
  %1206 = vrot.lane.b32.xlu0 %v378, 12
  %v1207 = vpop.permute.xlu0 %1206
  %1208 = vrot.lane.b32.xlu0 %v197, 12
  %v1209 = vpop.permute.xlu0 %1208
  %1210 = vrot.lane.b32.xlu0 %v379, 12
  %v1211 = vpop.permute.xlu0 %1210
  %1212 = vrot.lane.b32.xlu0 %v200, 12
  %v1213 = vpop.permute.xlu0 %1212
  %1214 = vrot.lane.b32.xlu0 %v380, 12
  %v1215 = vpop.permute.xlu0 %1214
  %1216 = vrot.lane.b32.xlu0 %v203, 12
  %v1217 = vpop.permute.xlu0 %1216
  %1218 = vrot.lane.b32.xlu0 %v381, 12
  %v1219 = vpop.permute.xlu0 %1218
  %1220 = vrot.lane.b32.xlu0 %v206, 12
  %v1221 = vpop.permute.xlu0 %1220
  %1222 = vrot.lane.b32.xlu0 %v382, 12
  %v1223 = vpop.permute.xlu0 %1222
  %1224 = vrot.lane.b32.xlu0 %v209, 12
  %v1225 = vpop.permute.xlu0 %1224
  %1226 = vrot.lane.b32.xlu0 %v383, 12
  %v1227 = vpop.permute.xlu0 %1226
  %1228 = vrot.lane.b32.xlu0 %v212, 12
  %v1229 = vpop.permute.xlu0 %1228
  %1230 = vrot.lane.b32.xlu0 %v384, 12
  %v1231 = vpop.permute.xlu0 %1230
  %1232 = vrot.lane.b32.xlu0 %v215, 12
  %v1233 = vpop.permute.xlu0 %1232
  %1234 = vrot.lane.b32.xlu0 %v385, 12
  %v1235 = vpop.permute.xlu0 %1234
  %1236 = vrot.lane.b32.xlu0 %v218, 12
  %v1237 = vpop.permute.xlu0 %1236
  %1238 = vrot.lane.b32.xlu0 %v386, 12
  %v1239 = vpop.permute.xlu0 %1238
  %1240 = vrot.lane.b32.xlu0 %v221, 12
  %v1241 = vpop.permute.xlu0 %1240
  %1242 = vrot.lane.b32.xlu0 %v387, 12
  %v1243 = vpop.permute.xlu0 %1242
  %1244 = vrot.lane.b32.xlu0 %v224, 12
  %v1245 = vpop.permute.xlu0 %1244
  %1246 = vrot.lane.b32.xlu0 %v388, 12
  %v1247 = vpop.permute.xlu0 %1246
  %1248 = vrot.lane.b32.xlu0 %v227, 12
  %v1249 = vpop.permute.xlu0 %1248
  %1250 = vrot.lane.b32.xlu0 %v389, 12
  %v1251 = vpop.permute.xlu0 %1250
  %1252 = vrot.lane.b32.xlu0 %v230, 12
  %v1253 = vpop.permute.xlu0 %1252
  %1254 = vrot.lane.b32.xlu0 %v390, 12
  %v1255 = vpop.permute.xlu0 %1254
  %1256 = vrot.lane.b32.xlu0 %v233, 12
  %v1257 = vpop.permute.xlu0 %1256
  %1258 = vrot.lane.b32.xlu0 %v391, 12
  %v1259 = vpop.permute.xlu0 %1258
  %1260 = vrot.lane.b32.xlu0 %v236, 12
  %v1261 = vpop.permute.xlu0 %1260
  %1262 = vrot.lane.b32.xlu0 %v392, 12
  %v1263 = vpop.permute.xlu0 %1262
  %1264 = vrot.lane.b32.xlu0 %v239, 12
  %v1265 = vpop.permute.xlu0 %1264
  %1266 = vrot.lane.b32.xlu0 %v393, 12
  %v1267 = vpop.permute.xlu0 %1266
  %1268 = vrot.lane.b32.xlu0 %v242, 12
  %v1269 = vpop.permute.xlu0 %1268
  %1270 = vrot.lane.b32.xlu0 %v394, 12
  %v1271 = vpop.permute.xlu0 %1270
  %1272 = vrot.lane.b32.xlu0 %v245, 12
  %v1273 = vpop.permute.xlu0 %1272
  %1274 = vrot.lane.b32.xlu0 %v395, 12
  %v1275 = vpop.permute.xlu0 %1274
  %1276 = vrot.lane.b32.xlu0 %v248, 12
  %v1277 = vpop.permute.xlu0 %1276
  %1278 = vrot.lane.b32.xlu0 %v396, 12
  %v1279 = vpop.permute.xlu0 %1278
  %1280 = vrot.lane.b32.xlu0 %v251, 12
  %v1281 = vpop.permute.xlu0 %1280
  %1282 = vrot.lane.b32.xlu0 %v397, 12
  %v1283 = vpop.permute.xlu0 %1282
  %1284 = vrot.lane.b32.xlu0 %v254, 12
  %v1285 = vpop.permute.xlu0 %1284
  %1286 = vrot.lane.b32.xlu0 %v398, 12
  %v1287 = vpop.permute.xlu0 %1286
  %1288 = vrot.lane.b32.xlu0 %v257, 12
  %v1289 = vpop.permute.xlu0 %1288
  %1290 = vrot.lane.b32.xlu0 %v399, 12
  %v1291 = vpop.permute.xlu0 %1290
  %1292 = vrot.lane.b32.xlu0 %v260, 12
  %v1293 = vpop.permute.xlu0 %1292
  %1294 = vrot.lane.b32.xlu0 %v400, 12
  %v1295 = vpop.permute.xlu0 %1294
  %1296 = vrot.lane.b32.xlu0 %v263, 12
  %v1297 = vpop.permute.xlu0 %1296
  %1298 = vrot.lane.b32.xlu0 %v401, 12
  %v1299 = vpop.permute.xlu0 %1298
  %1300 = vrot.lane.b32.xlu0 %v266, 12
  %v1301 = vpop.permute.xlu0 %1300
  %1302 = vrot.lane.b32.xlu0 %v402, 12
  %v1303 = vpop.permute.xlu0 %1302
  %1304 = vrot.lane.b32.xlu0 %v269, 12
  %v1305 = vpop.permute.xlu0 %1304
  %1306 = vrot.lane.b32.xlu0 %v403, 12
  %v1307 = vpop.permute.xlu0 %1306
  %1308 = vrot.lane.b32.xlu0 %v272, 12
  %v1309 = vpop.permute.xlu0 %1308
  %1310 = vrot.lane.b32.xlu0 %v404, 12
  %v1311 = vpop.permute.xlu0 %1310
  %1312 = vrot.lane.b32.xlu0 %v275, 12
  %v1313 = vpop.permute.xlu0 %1312
  %v1380 = vrot.slane %v388, 1
  %v1381 = vrot.slane %v227, 1
  %v1382 = vsel %vm500, %v1380, %v1381
  %v1383 = vrot.slane %v421, 1
  %v1384 = vsel %vm500, %v1381, %v1383
  %v1385 = vrot.slane %v404, 1
  %v1386 = vrot.slane %v275, 1
  %v1387 = vsel %vm500, %v1385, %v1386
  %v1388 = vrot.slane %v437, 1
  %v1389 = vsel %vm500, %v1386, %v1388
  %1390 = vrot.lane.b32.xlu0 %v508, 16
  %v1391 = vpop.permute.xlu0 %1390
  %1392 = vrot.lane.b32.xlu0 %v510, 16
  %v1393 = vpop.permute.xlu0 %1392
  %1394 = vrot.lane.b32.xlu0 %v513, 16
  %v1395 = vpop.permute.xlu0 %1394
  %1396 = vrot.lane.b32.xlu0 %v515, 16
  %v1397 = vpop.permute.xlu0 %1396
  %1398 = vrot.lane.b32.xlu0 %v518, 16
  %v1399 = vpop.permute.xlu0 %1398
  %1400 = vrot.lane.b32.xlu0 %v520, 16
  %v1401 = vpop.permute.xlu0 %1400
  %1402 = vrot.lane.b32.xlu0 %v523, 16
  %v1403 = vpop.permute.xlu0 %1402
  %1404 = vrot.lane.b32.xlu0 %v525, 16
  %v1405 = vpop.permute.xlu0 %1404
  %1406 = vrot.lane.b32.xlu0 %v528, 16
  %v1407 = vpop.permute.xlu0 %1406
  %1408 = vrot.lane.b32.xlu0 %v530, 16
  %v1409 = vpop.permute.xlu0 %1408
  %1410 = vrot.lane.b32.xlu0 %v533, 16
  %v1411 = vpop.permute.xlu0 %1410
  %1412 = vrot.lane.b32.xlu0 %v535, 16
  %v1413 = vpop.permute.xlu0 %1412
  %1414 = vrot.lane.b32.xlu0 %v538, 16
  %v1415 = vpop.permute.xlu0 %1414
  %1416 = vrot.lane.b32.xlu0 %v540, 16
  %v1417 = vpop.permute.xlu0 %1416
  %1418 = vrot.lane.b32.xlu0 %v543, 16
  %v1419 = vpop.permute.xlu0 %1418
  %1420 = vrot.lane.b32.xlu0 %v545, 16
  %v1421 = vpop.permute.xlu0 %1420
  %1422 = vrot.lane.b32.xlu0 %v548, 16
  %v1423 = vpop.permute.xlu0 %1422
  %1424 = vrot.lane.b32.xlu0 %v550, 16
  %v1425 = vpop.permute.xlu0 %1424
  %1426 = vrot.lane.b32.xlu0 %v553, 16
  %v1427 = vpop.permute.xlu0 %1426
  %1428 = vrot.lane.b32.xlu0 %v555, 16
  %v1429 = vpop.permute.xlu0 %1428
  %1430 = vrot.lane.b32.xlu0 %v558, 16
  %v1431 = vpop.permute.xlu0 %1430
  %1432 = vrot.lane.b32.xlu0 %v560, 16
  %v1433 = vpop.permute.xlu0 %1432
  %1434 = vrot.lane.b32.xlu0 %v563, 16
  %v1435 = vpop.permute.xlu0 %1434
  %1436 = vrot.lane.b32.xlu0 %v565, 16
  %v1437 = vpop.permute.xlu0 %1436
  %1438 = vrot.lane.b32.xlu0 %v568, 16
  %v1439 = vpop.permute.xlu0 %1438
  %1440 = vrot.lane.b32.xlu0 %v570, 16
  %v1441 = vpop.permute.xlu0 %1440
  %1442 = vrot.lane.b32.xlu0 %v573, 16
  %v1443 = vpop.permute.xlu0 %1442
  %1444 = vrot.lane.b32.xlu0 %v575, 16
  %v1445 = vpop.permute.xlu0 %1444
  %1446 = vrot.lane.b32.xlu0 %v578, 16
  %v1447 = vpop.permute.xlu0 %1446
  %1448 = vrot.lane.b32.xlu0 %v580, 16
  %v1449 = vpop.permute.xlu0 %1448
  %1450 = vrot.lane.b32.xlu0 %v1382, 16
  %v1451 = vpop.permute.xlu0 %1450
  %1452 = vrot.lane.b32.xlu0 %v1384, 16
  %v1453 = vpop.permute.xlu0 %1452
  %1454 = vrot.lane.b32.xlu0 %v583, 16
  %v1455 = vpop.permute.xlu0 %1454
  %1456 = vrot.lane.b32.xlu0 %v585, 16
  %v1457 = vpop.permute.xlu0 %1456
  %1458 = vrot.lane.b32.xlu0 %v588, 16
  %v1459 = vpop.permute.xlu0 %1458
  %1460 = vrot.lane.b32.xlu0 %v590, 16
  %v1461 = vpop.permute.xlu0 %1460
  %1462 = vrot.lane.b32.xlu0 %v593, 16
  %v1463 = vpop.permute.xlu0 %1462
  %1464 = vrot.lane.b32.xlu0 %v595, 16
  %v1465 = vpop.permute.xlu0 %1464
  %1466 = vrot.lane.b32.xlu0 %v598, 16
  %v1467 = vpop.permute.xlu0 %1466
  %1468 = vrot.lane.b32.xlu0 %v600, 16
  %v1469 = vpop.permute.xlu0 %1468
  %1470 = vrot.lane.b32.xlu0 %v603, 16
  %v1471 = vpop.permute.xlu0 %1470
  %1472 = vrot.lane.b32.xlu0 %v605, 16
  %v1473 = vpop.permute.xlu0 %1472
  %1474 = vrot.lane.b32.xlu0 %v608, 16
  %v1475 = vpop.permute.xlu0 %1474
  %1476 = vrot.lane.b32.xlu0 %v610, 16
  %v1477 = vpop.permute.xlu0 %1476
  %1478 = vrot.lane.b32.xlu0 %v613, 16
  %v1479 = vpop.permute.xlu0 %1478
  %1480 = vrot.lane.b32.xlu0 %v615, 16
  %v1481 = vpop.permute.xlu0 %1480
  %1482 = vrot.lane.b32.xlu0 %v618, 16
  %v1483 = vpop.permute.xlu0 %1482
  %1484 = vrot.lane.b32.xlu0 %v620, 16
  %v1485 = vpop.permute.xlu0 %1484
  %1486 = vrot.lane.b32.xlu0 %v623, 16
  %v1487 = vpop.permute.xlu0 %1486
  %1488 = vrot.lane.b32.xlu0 %v625, 16
  %v1489 = vpop.permute.xlu0 %1488
  %1490 = vrot.lane.b32.xlu0 %v628, 16
  %v1491 = vpop.permute.xlu0 %1490
  %1492 = vrot.lane.b32.xlu0 %v630, 16
  %v1493 = vpop.permute.xlu0 %1492
  %1494 = vrot.lane.b32.xlu0 %v633, 16
  %v1495 = vpop.permute.xlu0 %1494
  %1496 = vrot.lane.b32.xlu0 %v635, 16
  %v1497 = vpop.permute.xlu0 %1496
  %1498 = vrot.lane.b32.xlu0 %v638, 16
  %v1499 = vpop.permute.xlu0 %1498
  %1500 = vrot.lane.b32.xlu0 %v640, 16
  %v1501 = vpop.permute.xlu0 %1500
  %1502 = vrot.lane.b32.xlu0 %v643, 16
  %v1503 = vpop.permute.xlu0 %1502
  %1504 = vrot.lane.b32.xlu0 %v645, 16
  %v1505 = vpop.permute.xlu0 %1504
  %1506 = vrot.lane.b32.xlu0 %v648, 16
  %v1507 = vpop.permute.xlu0 %1506
  %1508 = vrot.lane.b32.xlu0 %v650, 16
  %v1509 = vpop.permute.xlu0 %1508
  %1510 = vrot.lane.b32.xlu0 %v653, 16
  %v1511 = vpop.permute.xlu0 %1510
  %1512 = vrot.lane.b32.xlu0 %v655, 16
  %v1513 = vpop.permute.xlu0 %1512
  %1514 = vrot.lane.b32.xlu0 %v1387, 16
  %v1515 = vpop.permute.xlu0 %1514
  %1516 = vrot.lane.b32.xlu0 %v1389, 16
  %v1517 = vpop.permute.xlu0 %1516
  %v1582 = vrot.slane %v388, 2
  %v1583 = vrot.slane %v227, 2
  %v1584 = vsel %vm842, %v1582, %v1583
  %v1585 = vrot.slane %v421, 2
  %v1586 = vsel %vm842, %v1583, %v1585
  %v1587 = vrot.slane %v404, 2
  %v1588 = vrot.slane %v275, 2
  %v1589 = vsel %vm842, %v1587, %v1588
  %v1590 = vrot.slane %v437, 2
  %v1591 = vsel %vm842, %v1588, %v1590
  %1592 = vrot.lane.b32.xlu0 %v850, 20
  %v1593 = vpop.permute.xlu0 %1592
  %1594 = vrot.lane.b32.xlu0 %v852, 20
  %v1595 = vpop.permute.xlu0 %1594
  %1596 = vrot.lane.b32.xlu0 %v855, 20
  %v1597 = vpop.permute.xlu0 %1596
  %1598 = vrot.lane.b32.xlu0 %v857, 20
  %v1599 = vpop.permute.xlu0 %1598
  %1600 = vrot.lane.b32.xlu0 %v860, 20
  %v1601 = vpop.permute.xlu0 %1600
  %1602 = vrot.lane.b32.xlu0 %v862, 20
  %v1603 = vpop.permute.xlu0 %1602
  %1604 = vrot.lane.b32.xlu0 %v865, 20
  %v1605 = vpop.permute.xlu0 %1604
  %1606 = vrot.lane.b32.xlu0 %v867, 20
  %v1607 = vpop.permute.xlu0 %1606
  %1608 = vrot.lane.b32.xlu0 %v870, 20
  %v1609 = vpop.permute.xlu0 %1608
  %1610 = vrot.lane.b32.xlu0 %v872, 20
  %v1611 = vpop.permute.xlu0 %1610
  %1612 = vrot.lane.b32.xlu0 %v875, 20
  %v1613 = vpop.permute.xlu0 %1612
  %1614 = vrot.lane.b32.xlu0 %v877, 20
  %v1615 = vpop.permute.xlu0 %1614
  %1616 = vrot.lane.b32.xlu0 %v880, 20
  %v1617 = vpop.permute.xlu0 %1616
  %1618 = vrot.lane.b32.xlu0 %v882, 20
  %v1619 = vpop.permute.xlu0 %1618
  %1620 = vrot.lane.b32.xlu0 %v885, 20
  %v1621 = vpop.permute.xlu0 %1620
  %1622 = vrot.lane.b32.xlu0 %v887, 20
  %v1623 = vpop.permute.xlu0 %1622
  %1624 = vrot.lane.b32.xlu0 %v890, 20
  %v1625 = vpop.permute.xlu0 %1624
  %1626 = vrot.lane.b32.xlu0 %v892, 20
  %v1627 = vpop.permute.xlu0 %1626
  %1628 = vrot.lane.b32.xlu0 %v895, 20
  %v1629 = vpop.permute.xlu0 %1628
  %1630 = vrot.lane.b32.xlu0 %v897, 20
  %v1631 = vpop.permute.xlu0 %1630
  %1632 = vrot.lane.b32.xlu0 %v900, 20
  %v1633 = vpop.permute.xlu0 %1632
  %1634 = vrot.lane.b32.xlu0 %v902, 20
  %v1635 = vpop.permute.xlu0 %1634
  %1636 = vrot.lane.b32.xlu0 %v905, 20
  %v1637 = vpop.permute.xlu0 %1636
  %1638 = vrot.lane.b32.xlu0 %v907, 20
  %v1639 = vpop.permute.xlu0 %1638
  %1640 = vrot.lane.b32.xlu0 %v910, 20
  %v1641 = vpop.permute.xlu0 %1640
  %1642 = vrot.lane.b32.xlu0 %v912, 20
  %v1643 = vpop.permute.xlu0 %1642
  %1644 = vrot.lane.b32.xlu0 %v915, 20
  %v1645 = vpop.permute.xlu0 %1644
  %1646 = vrot.lane.b32.xlu0 %v917, 20
  %v1647 = vpop.permute.xlu0 %1646
  %1648 = vrot.lane.b32.xlu0 %v920, 20
  %v1649 = vpop.permute.xlu0 %1648
  %1650 = vrot.lane.b32.xlu0 %v922, 20
  %v1651 = vpop.permute.xlu0 %1650
  %1652 = vrot.lane.b32.xlu0 %v1584, 20
  %v1653 = vpop.permute.xlu0 %1652
  %1654 = vrot.lane.b32.xlu0 %v1586, 20
  %v1655 = vpop.permute.xlu0 %1654
  %1656 = vrot.lane.b32.xlu0 %v925, 20
  %v1657 = vpop.permute.xlu0 %1656
  %1658 = vrot.lane.b32.xlu0 %v927, 20
  %v1659 = vpop.permute.xlu0 %1658
  %1660 = vrot.lane.b32.xlu0 %v930, 20
  %v1661 = vpop.permute.xlu0 %1660
  %1662 = vrot.lane.b32.xlu0 %v932, 20
  %v1663 = vpop.permute.xlu0 %1662
  %1664 = vrot.lane.b32.xlu0 %v935, 20
  %v1665 = vpop.permute.xlu0 %1664
  %1666 = vrot.lane.b32.xlu0 %v937, 20
  %v1667 = vpop.permute.xlu0 %1666
  %1668 = vrot.lane.b32.xlu0 %v940, 20
  %v1669 = vpop.permute.xlu0 %1668
  %1670 = vrot.lane.b32.xlu0 %v942, 20
  %v1671 = vpop.permute.xlu0 %1670
  %1672 = vrot.lane.b32.xlu0 %v945, 20
  %v1673 = vpop.permute.xlu0 %1672
  %1674 = vrot.lane.b32.xlu0 %v947, 20
  %v1675 = vpop.permute.xlu0 %1674
  %1676 = vrot.lane.b32.xlu0 %v950, 20
  %v1677 = vpop.permute.xlu0 %1676
  %1678 = vrot.lane.b32.xlu0 %v952, 20
  %v1679 = vpop.permute.xlu0 %1678
  %1680 = vrot.lane.b32.xlu0 %v955, 20
  %v1681 = vpop.permute.xlu0 %1680
  %1682 = vrot.lane.b32.xlu0 %v957, 20
  %v1683 = vpop.permute.xlu0 %1682
  %1684 = vrot.lane.b32.xlu0 %v960, 20
  %v1685 = vpop.permute.xlu0 %1684
  %1686 = vrot.lane.b32.xlu0 %v962, 20
  %v1687 = vpop.permute.xlu0 %1686
  %1688 = vrot.lane.b32.xlu0 %v965, 20
  %v1689 = vpop.permute.xlu0 %1688
  %1690 = vrot.lane.b32.xlu0 %v967, 20
  %v1691 = vpop.permute.xlu0 %1690
  %1692 = vrot.lane.b32.xlu0 %v970, 20
  %v1693 = vpop.permute.xlu0 %1692
  %1694 = vrot.lane.b32.xlu0 %v972, 20
  %v1695 = vpop.permute.xlu0 %1694
  %1696 = vrot.lane.b32.xlu0 %v975, 20
  %v1697 = vpop.permute.xlu0 %1696
  %1698 = vrot.lane.b32.xlu0 %v977, 20
  %v1699 = vpop.permute.xlu0 %1698
  %1700 = vrot.lane.b32.xlu0 %v980, 20
  %v1701 = vpop.permute.xlu0 %1700
  %1702 = vrot.lane.b32.xlu0 %v982, 20
  %v1703 = vpop.permute.xlu0 %1702
  %1704 = vrot.lane.b32.xlu0 %v985, 20
  %v1705 = vpop.permute.xlu0 %1704
  %1706 = vrot.lane.b32.xlu0 %v987, 20
  %v1707 = vpop.permute.xlu0 %1706
  %1708 = vrot.lane.b32.xlu0 %v990, 20
  %v1709 = vpop.permute.xlu0 %1708
  %1710 = vrot.lane.b32.xlu0 %v992, 20
  %v1711 = vpop.permute.xlu0 %1710
  %1712 = vrot.lane.b32.xlu0 %v995, 20
  %v1713 = vpop.permute.xlu0 %1712
  %1714 = vrot.lane.b32.xlu0 %v997, 20
  %v1715 = vpop.permute.xlu0 %1714
  %1716 = vrot.lane.b32.xlu0 %v1589, 20
  %v1717 = vpop.permute.xlu0 %1716
  %1718 = vrot.lane.b32.xlu0 %v1591, 20
  %v1719 = vpop.permute.xlu0 %1718
  %1784 = vrot.lane.b32.xlu0 %v374, 24
  %v1785 = vpop.permute.xlu0 %1784
  %1786 = vrot.lane.b32.xlu0 %v185, 24
  %v1787 = vpop.permute.xlu0 %1786
  %1788 = vrot.lane.b32.xlu0 %v375, 24
  %v1789 = vpop.permute.xlu0 %1788
  %1790 = vrot.lane.b32.xlu0 %v188, 24
  %v1791 = vpop.permute.xlu0 %1790
  %1792 = vrot.lane.b32.xlu0 %v376, 24
  %v1793 = vpop.permute.xlu0 %1792
  %1794 = vrot.lane.b32.xlu0 %v191, 24
  %v1795 = vpop.permute.xlu0 %1794
  %1796 = vrot.lane.b32.xlu0 %v377, 24
  %v1797 = vpop.permute.xlu0 %1796
  %1798 = vrot.lane.b32.xlu0 %v194, 24
  %v1799 = vpop.permute.xlu0 %1798
  %1800 = vrot.lane.b32.xlu0 %v378, 24
  %v1801 = vpop.permute.xlu0 %1800
  %1802 = vrot.lane.b32.xlu0 %v197, 24
  %v1803 = vpop.permute.xlu0 %1802
  %1804 = vrot.lane.b32.xlu0 %v379, 24
  %v1805 = vpop.permute.xlu0 %1804
  %1806 = vrot.lane.b32.xlu0 %v200, 24
  %v1807 = vpop.permute.xlu0 %1806
  %1808 = vrot.lane.b32.xlu0 %v380, 24
  %v1809 = vpop.permute.xlu0 %1808
  %1810 = vrot.lane.b32.xlu0 %v203, 24
  %v1811 = vpop.permute.xlu0 %1810
  %1812 = vrot.lane.b32.xlu0 %v381, 24
  %v1813 = vpop.permute.xlu0 %1812
  %1814 = vrot.lane.b32.xlu0 %v206, 24
  %v1815 = vpop.permute.xlu0 %1814
  %1816 = vrot.lane.b32.xlu0 %v382, 24
  %v1817 = vpop.permute.xlu0 %1816
  %1818 = vrot.lane.b32.xlu0 %v209, 24
  %v1819 = vpop.permute.xlu0 %1818
  %1820 = vrot.lane.b32.xlu0 %v383, 24
  %v1821 = vpop.permute.xlu0 %1820
  %1822 = vrot.lane.b32.xlu0 %v212, 24
  %v1823 = vpop.permute.xlu0 %1822
  %1824 = vrot.lane.b32.xlu0 %v384, 24
  %v1825 = vpop.permute.xlu0 %1824
  %1826 = vrot.lane.b32.xlu0 %v215, 24
  %v1827 = vpop.permute.xlu0 %1826
  %1828 = vrot.lane.b32.xlu0 %v385, 24
  %v1829 = vpop.permute.xlu0 %1828
  %1830 = vrot.lane.b32.xlu0 %v218, 24
  %v1831 = vpop.permute.xlu0 %1830
  %1832 = vrot.lane.b32.xlu0 %v386, 24
  %v1833 = vpop.permute.xlu0 %1832
  %1834 = vrot.lane.b32.xlu0 %v221, 24
  %v1835 = vpop.permute.xlu0 %1834
  %1836 = vrot.lane.b32.xlu0 %v387, 24
  %v1837 = vpop.permute.xlu0 %1836
  %1838 = vrot.lane.b32.xlu0 %v224, 24
  %v1839 = vpop.permute.xlu0 %1838
  %1840 = vrot.lane.b32.xlu0 %v388, 24
  %v1841 = vpop.permute.xlu0 %1840
  %1842 = vrot.lane.b32.xlu0 %v227, 24
  %v1843 = vpop.permute.xlu0 %1842
  %1844 = vrot.lane.b32.xlu0 %v372, 24
  %v1845 = vpop.permute.xlu0 %1844
  %1846 = vrot.lane.b32.xlu0 %v179, 24
  %v1847 = vpop.permute.xlu0 %1846
  %1848 = vrot.lane.b32.xlu0 %v390, 24
  %v1849 = vpop.permute.xlu0 %1848
  %1850 = vrot.lane.b32.xlu0 %v233, 24
  %v1851 = vpop.permute.xlu0 %1850
  %1852 = vrot.lane.b32.xlu0 %v391, 24
  %v1853 = vpop.permute.xlu0 %1852
  %1854 = vrot.lane.b32.xlu0 %v236, 24
  %v1855 = vpop.permute.xlu0 %1854
  %1856 = vrot.lane.b32.xlu0 %v392, 24
  %v1857 = vpop.permute.xlu0 %1856
  %1858 = vrot.lane.b32.xlu0 %v239, 24
  %v1859 = vpop.permute.xlu0 %1858
  %1860 = vrot.lane.b32.xlu0 %v393, 24
  %v1861 = vpop.permute.xlu0 %1860
  %1862 = vrot.lane.b32.xlu0 %v242, 24
  %v1863 = vpop.permute.xlu0 %1862
  %1864 = vrot.lane.b32.xlu0 %v394, 24
  %v1865 = vpop.permute.xlu0 %1864
  %1866 = vrot.lane.b32.xlu0 %v245, 24
  %v1867 = vpop.permute.xlu0 %1866
  %1868 = vrot.lane.b32.xlu0 %v395, 24
  %v1869 = vpop.permute.xlu0 %1868
  %1870 = vrot.lane.b32.xlu0 %v248, 24
  %v1871 = vpop.permute.xlu0 %1870
  %1872 = vrot.lane.b32.xlu0 %v396, 24
  %v1873 = vpop.permute.xlu0 %1872
  %1874 = vrot.lane.b32.xlu0 %v251, 24
  %v1875 = vpop.permute.xlu0 %1874
  %1876 = vrot.lane.b32.xlu0 %v397, 24
  %v1877 = vpop.permute.xlu0 %1876
  %1878 = vrot.lane.b32.xlu0 %v254, 24
  %v1879 = vpop.permute.xlu0 %1878
  %1880 = vrot.lane.b32.xlu0 %v398, 24
  %v1881 = vpop.permute.xlu0 %1880
  %1882 = vrot.lane.b32.xlu0 %v257, 24
  %v1883 = vpop.permute.xlu0 %1882
  %1884 = vrot.lane.b32.xlu0 %v399, 24
  %v1885 = vpop.permute.xlu0 %1884
  %1886 = vrot.lane.b32.xlu0 %v260, 24
  %v1887 = vpop.permute.xlu0 %1886
  %1888 = vrot.lane.b32.xlu0 %v400, 24
  %v1889 = vpop.permute.xlu0 %1888
  %1890 = vrot.lane.b32.xlu0 %v263, 24
  %v1891 = vpop.permute.xlu0 %1890
  %1892 = vrot.lane.b32.xlu0 %v401, 24
  %v1893 = vpop.permute.xlu0 %1892
  %1894 = vrot.lane.b32.xlu0 %v266, 24
  %v1895 = vpop.permute.xlu0 %1894
  %1896 = vrot.lane.b32.xlu0 %v402, 24
  %v1897 = vpop.permute.xlu0 %1896
  %1898 = vrot.lane.b32.xlu0 %v269, 24
  %v1899 = vpop.permute.xlu0 %1898
  %1900 = vrot.lane.b32.xlu0 %v403, 24
  %v1901 = vpop.permute.xlu0 %1900
  %1902 = vrot.lane.b32.xlu0 %v272, 24
  %v1903 = vpop.permute.xlu0 %1902
  %1904 = vrot.lane.b32.xlu0 %v404, 24
  %v1905 = vpop.permute.xlu0 %1904
  %1906 = vrot.lane.b32.xlu0 %v275, 24
  %v1907 = vpop.permute.xlu0 %1906
  %1970 = vrot.lane.b32.xlu0 %v513, 28
  %v1971 = vpop.permute.xlu0 %1970
  %1972 = vrot.lane.b32.xlu0 %v515, 28
  %v1973 = vpop.permute.xlu0 %1972
  %1974 = vrot.lane.b32.xlu0 %v518, 28
  %v1975 = vpop.permute.xlu0 %1974
  %1976 = vrot.lane.b32.xlu0 %v520, 28
  %v1977 = vpop.permute.xlu0 %1976
  %1978 = vrot.lane.b32.xlu0 %v523, 28
  %v1979 = vpop.permute.xlu0 %1978
  %1980 = vrot.lane.b32.xlu0 %v525, 28
  %v1981 = vpop.permute.xlu0 %1980
  %1982 = vrot.lane.b32.xlu0 %v528, 28
  %v1983 = vpop.permute.xlu0 %1982
  %1984 = vrot.lane.b32.xlu0 %v530, 28
  %v1985 = vpop.permute.xlu0 %1984
  %1986 = vrot.lane.b32.xlu0 %v533, 28
  %v1987 = vpop.permute.xlu0 %1986
  %1988 = vrot.lane.b32.xlu0 %v535, 28
  %v1989 = vpop.permute.xlu0 %1988
  %1990 = vrot.lane.b32.xlu0 %v538, 28
  %v1991 = vpop.permute.xlu0 %1990
  %1992 = vrot.lane.b32.xlu0 %v540, 28
  %v1993 = vpop.permute.xlu0 %1992
  %1994 = vrot.lane.b32.xlu0 %v543, 28
  %v1995 = vpop.permute.xlu0 %1994
  %1996 = vrot.lane.b32.xlu0 %v545, 28
  %v1997 = vpop.permute.xlu0 %1996
  %1998 = vrot.lane.b32.xlu0 %v548, 28
  %v1999 = vpop.permute.xlu0 %1998
  %2000 = vrot.lane.b32.xlu0 %v550, 28
  %v2001 = vpop.permute.xlu0 %2000
  %2002 = vrot.lane.b32.xlu0 %v553, 28
  %v2003 = vpop.permute.xlu0 %2002
  %2004 = vrot.lane.b32.xlu0 %v555, 28
  %v2005 = vpop.permute.xlu0 %2004
  %2006 = vrot.lane.b32.xlu0 %v558, 28
  %v2007 = vpop.permute.xlu0 %2006
  %2008 = vrot.lane.b32.xlu0 %v560, 28
  %v2009 = vpop.permute.xlu0 %2008
  %2010 = vrot.lane.b32.xlu0 %v563, 28
  %v2011 = vpop.permute.xlu0 %2010
  %2012 = vrot.lane.b32.xlu0 %v565, 28
  %v2013 = vpop.permute.xlu0 %2012
  %2014 = vrot.lane.b32.xlu0 %v568, 28
  %v2015 = vpop.permute.xlu0 %2014
  %2016 = vrot.lane.b32.xlu0 %v570, 28
  %v2017 = vpop.permute.xlu0 %2016
  %2018 = vrot.lane.b32.xlu0 %v573, 28
  %v2019 = vpop.permute.xlu0 %2018
  %2020 = vrot.lane.b32.xlu0 %v575, 28
  %v2021 = vpop.permute.xlu0 %2020
  %2022 = vrot.lane.b32.xlu0 %v578, 28
  %v2023 = vpop.permute.xlu0 %2022
  %2024 = vrot.lane.b32.xlu0 %v580, 28
  %v2025 = vpop.permute.xlu0 %2024
  %2026 = vrot.lane.b32.xlu0 %v1382, 28
  %v2027 = vpop.permute.xlu0 %2026
  %2028 = vrot.lane.b32.xlu0 %v1384, 28
  %v2029 = vpop.permute.xlu0 %2028
  %2030 = vrot.lane.b32.xlu0 %v503, 28
  %v2031 = vpop.permute.xlu0 %2030
  %2032 = vrot.lane.b32.xlu0 %v505, 28
  %v2033 = vpop.permute.xlu0 %2032
  %2034 = vrot.lane.b32.xlu0 %v588, 28
  %v2035 = vpop.permute.xlu0 %2034
  %2036 = vrot.lane.b32.xlu0 %v590, 28
  %v2037 = vpop.permute.xlu0 %2036
  %2038 = vrot.lane.b32.xlu0 %v593, 28
  %v2039 = vpop.permute.xlu0 %2038
  %2040 = vrot.lane.b32.xlu0 %v595, 28
  %v2041 = vpop.permute.xlu0 %2040
  %2042 = vrot.lane.b32.xlu0 %v598, 28
  %v2043 = vpop.permute.xlu0 %2042
  %2044 = vrot.lane.b32.xlu0 %v600, 28
  %v2045 = vpop.permute.xlu0 %2044
  %2046 = vrot.lane.b32.xlu0 %v603, 28
  %v2047 = vpop.permute.xlu0 %2046
  %2048 = vrot.lane.b32.xlu0 %v605, 28
  %v2049 = vpop.permute.xlu0 %2048
  %2050 = vrot.lane.b32.xlu0 %v608, 28
  %v2051 = vpop.permute.xlu0 %2050
  %2052 = vrot.lane.b32.xlu0 %v610, 28
  %v2053 = vpop.permute.xlu0 %2052
  %2054 = vrot.lane.b32.xlu0 %v613, 28
  %v2055 = vpop.permute.xlu0 %2054
  %2056 = vrot.lane.b32.xlu0 %v615, 28
  %v2057 = vpop.permute.xlu0 %2056
  %2058 = vrot.lane.b32.xlu0 %v618, 28
  %v2059 = vpop.permute.xlu0 %2058
  %2060 = vrot.lane.b32.xlu0 %v620, 28
  %v2061 = vpop.permute.xlu0 %2060
  %2062 = vrot.lane.b32.xlu0 %v623, 28
  %v2063 = vpop.permute.xlu0 %2062
  %2064 = vrot.lane.b32.xlu0 %v625, 28
  %v2065 = vpop.permute.xlu0 %2064
  %2066 = vrot.lane.b32.xlu0 %v628, 28
  %v2067 = vpop.permute.xlu0 %2066
  %2068 = vrot.lane.b32.xlu0 %v630, 28
  %v2069 = vpop.permute.xlu0 %2068
  %2070 = vrot.lane.b32.xlu0 %v633, 28
  %v2071 = vpop.permute.xlu0 %2070
  %2072 = vrot.lane.b32.xlu0 %v635, 28
  %v2073 = vpop.permute.xlu0 %2072
  %2074 = vrot.lane.b32.xlu0 %v638, 28
  %v2075 = vpop.permute.xlu0 %2074
  %2076 = vrot.lane.b32.xlu0 %v640, 28
  %v2077 = vpop.permute.xlu0 %2076
  %2078 = vrot.lane.b32.xlu0 %v643, 28
  %v2079 = vpop.permute.xlu0 %2078
  %2080 = vrot.lane.b32.xlu0 %v645, 28
  %v2081 = vpop.permute.xlu0 %2080
  %2082 = vrot.lane.b32.xlu0 %v648, 28
  %v2083 = vpop.permute.xlu0 %2082
  %2084 = vrot.lane.b32.xlu0 %v650, 28
  %v2085 = vpop.permute.xlu0 %2084
  %2086 = vrot.lane.b32.xlu0 %v653, 28
  %v2087 = vpop.permute.xlu0 %2086
  %2088 = vrot.lane.b32.xlu0 %v655, 28
  %v2089 = vpop.permute.xlu0 %2088
  %2090 = vrot.lane.b32.xlu0 %v1387, 28
  %v2091 = vpop.permute.xlu0 %2090
  %2092 = vrot.lane.b32.xlu0 %v1389, 28
  %v2093 = vpop.permute.xlu0 %2092
  %2156 = vrot.lane.b32.xlu0 %v855, 32
  %v2157 = vpop.permute.xlu0 %2156
  %2158 = vrot.lane.b32.xlu0 %v857, 32
  %v2159 = vpop.permute.xlu0 %2158
  %2160 = vrot.lane.b32.xlu0 %v860, 32
  %v2161 = vpop.permute.xlu0 %2160
  %2162 = vrot.lane.b32.xlu0 %v862, 32
  %v2163 = vpop.permute.xlu0 %2162
  %2164 = vrot.lane.b32.xlu0 %v865, 32
  %v2165 = vpop.permute.xlu0 %2164
  %2166 = vrot.lane.b32.xlu0 %v867, 32
  %v2167 = vpop.permute.xlu0 %2166
  %2168 = vrot.lane.b32.xlu0 %v870, 32
  %v2169 = vpop.permute.xlu0 %2168
  %2170 = vrot.lane.b32.xlu0 %v872, 32
  %v2171 = vpop.permute.xlu0 %2170
  %2172 = vrot.lane.b32.xlu0 %v875, 32
  %v2173 = vpop.permute.xlu0 %2172
  %2174 = vrot.lane.b32.xlu0 %v877, 32
  %v2175 = vpop.permute.xlu0 %2174
  %2176 = vrot.lane.b32.xlu0 %v880, 32
  %v2177 = vpop.permute.xlu0 %2176
  %2178 = vrot.lane.b32.xlu0 %v882, 32
  %v2179 = vpop.permute.xlu0 %2178
  %2180 = vrot.lane.b32.xlu0 %v885, 32
  %v2181 = vpop.permute.xlu0 %2180
  %2182 = vrot.lane.b32.xlu0 %v887, 32
  %v2183 = vpop.permute.xlu0 %2182
  %2184 = vrot.lane.b32.xlu0 %v890, 32
  %v2185 = vpop.permute.xlu0 %2184
  %2186 = vrot.lane.b32.xlu0 %v892, 32
  %v2187 = vpop.permute.xlu0 %2186
  %2188 = vrot.lane.b32.xlu0 %v895, 32
  %v2189 = vpop.permute.xlu0 %2188
  %2190 = vrot.lane.b32.xlu0 %v897, 32
  %v2191 = vpop.permute.xlu0 %2190
  %2192 = vrot.lane.b32.xlu0 %v900, 32
  %v2193 = vpop.permute.xlu0 %2192
  %2194 = vrot.lane.b32.xlu0 %v902, 32
  %v2195 = vpop.permute.xlu0 %2194
  %2196 = vrot.lane.b32.xlu0 %v905, 32
  %v2197 = vpop.permute.xlu0 %2196
  %2198 = vrot.lane.b32.xlu0 %v907, 32
  %v2199 = vpop.permute.xlu0 %2198
  %2200 = vrot.lane.b32.xlu0 %v910, 32
  %v2201 = vpop.permute.xlu0 %2200
  %2202 = vrot.lane.b32.xlu0 %v912, 32
  %v2203 = vpop.permute.xlu0 %2202
  %2204 = vrot.lane.b32.xlu0 %v915, 32
  %v2205 = vpop.permute.xlu0 %2204
  %2206 = vrot.lane.b32.xlu0 %v917, 32
  %v2207 = vpop.permute.xlu0 %2206
  %2208 = vrot.lane.b32.xlu0 %v920, 32
  %v2209 = vpop.permute.xlu0 %2208
  %2210 = vrot.lane.b32.xlu0 %v922, 32
  %v2211 = vpop.permute.xlu0 %2210
  %2212 = vrot.lane.b32.xlu0 %v1584, 32
  %v2213 = vpop.permute.xlu0 %2212
  %2214 = vrot.lane.b32.xlu0 %v1586, 32
  %v2215 = vpop.permute.xlu0 %2214
  %2216 = vrot.lane.b32.xlu0 %v845, 32
  %v2217 = vpop.permute.xlu0 %2216
  %2218 = vrot.lane.b32.xlu0 %v847, 32
  %v2219 = vpop.permute.xlu0 %2218
  %2220 = vrot.lane.b32.xlu0 %v930, 32
  %v2221 = vpop.permute.xlu0 %2220
  %2222 = vrot.lane.b32.xlu0 %v932, 32
  %v2223 = vpop.permute.xlu0 %2222
  %2224 = vrot.lane.b32.xlu0 %v935, 32
  %v2225 = vpop.permute.xlu0 %2224
  %2226 = vrot.lane.b32.xlu0 %v937, 32
  %v2227 = vpop.permute.xlu0 %2226
  %2228 = vrot.lane.b32.xlu0 %v940, 32
  %v2229 = vpop.permute.xlu0 %2228
  %2230 = vrot.lane.b32.xlu0 %v942, 32
  %v2231 = vpop.permute.xlu0 %2230
  %2232 = vrot.lane.b32.xlu0 %v945, 32
  %v2233 = vpop.permute.xlu0 %2232
  %2234 = vrot.lane.b32.xlu0 %v947, 32
  %v2235 = vpop.permute.xlu0 %2234
  %2236 = vrot.lane.b32.xlu0 %v950, 32
  %v2237 = vpop.permute.xlu0 %2236
  %2238 = vrot.lane.b32.xlu0 %v952, 32
  %v2239 = vpop.permute.xlu0 %2238
  %2240 = vrot.lane.b32.xlu0 %v955, 32
  %v2241 = vpop.permute.xlu0 %2240
  %2242 = vrot.lane.b32.xlu0 %v957, 32
  %v2243 = vpop.permute.xlu0 %2242
  %2244 = vrot.lane.b32.xlu0 %v960, 32
  %v2245 = vpop.permute.xlu0 %2244
  %2246 = vrot.lane.b32.xlu0 %v962, 32
  %v2247 = vpop.permute.xlu0 %2246
  %2248 = vrot.lane.b32.xlu0 %v965, 32
  %v2249 = vpop.permute.xlu0 %2248
  %2250 = vrot.lane.b32.xlu0 %v967, 32
  %v2251 = vpop.permute.xlu0 %2250
  %2252 = vrot.lane.b32.xlu0 %v970, 32
  %v2253 = vpop.permute.xlu0 %2252
  %2254 = vrot.lane.b32.xlu0 %v972, 32
  %v2255 = vpop.permute.xlu0 %2254
  %2256 = vrot.lane.b32.xlu0 %v975, 32
  %v2257 = vpop.permute.xlu0 %2256
  %2258 = vrot.lane.b32.xlu0 %v977, 32
  %v2259 = vpop.permute.xlu0 %2258
  %2260 = vrot.lane.b32.xlu0 %v980, 32
  %v2261 = vpop.permute.xlu0 %2260
  %2262 = vrot.lane.b32.xlu0 %v982, 32
  %v2263 = vpop.permute.xlu0 %2262
  %2264 = vrot.lane.b32.xlu0 %v985, 32
  %v2265 = vpop.permute.xlu0 %2264
  %2266 = vrot.lane.b32.xlu0 %v987, 32
  %v2267 = vpop.permute.xlu0 %2266
  %2268 = vrot.lane.b32.xlu0 %v990, 32
  %v2269 = vpop.permute.xlu0 %2268
  %2270 = vrot.lane.b32.xlu0 %v992, 32
  %v2271 = vpop.permute.xlu0 %2270
  %2272 = vrot.lane.b32.xlu0 %v995, 32
  %v2273 = vpop.permute.xlu0 %2272
  %2274 = vrot.lane.b32.xlu0 %v997, 32
  %v2275 = vpop.permute.xlu0 %2274
  %2276 = vrot.lane.b32.xlu0 %v1589, 32
  %v2277 = vpop.permute.xlu0 %2276
  %2278 = vrot.lane.b32.xlu0 %v1591, 32
  %v2279 = vpop.permute.xlu0 %2278
  %vm2342 = vcmask 31744
  %v2343 = vsel %vm2342, %v372, %v657
  %v2344 = vsel %vm2342, %v179, %v659
  %v2345 = vsel %vm2342, %v373, %v661
  %v2346 = vsel %vm2342, %v182, %v663
  %v2347 = vsel %vm2342, %v374, %v665
  %v2348 = vsel %vm2342, %v185, %v667
  %v2349 = vsel %vm2342, %v375, %v669
  %v2350 = vsel %vm2342, %v188, %v671
  %v2351 = vsel %vm2342, %v376, %v673
  %v2352 = vsel %vm2342, %v191, %v675
  %v2353 = vsel %vm2342, %v377, %v677
  %v2354 = vsel %vm2342, %v194, %v679
  %v2355 = vsel %vm2342, %v378, %v681
  %v2356 = vsel %vm2342, %v197, %v683
  %v2357 = vsel %vm2342, %v379, %v685
  %v2358 = vsel %vm2342, %v200, %v687
  %v2359 = vsel %vm2342, %v380, %v689
  %v2360 = vsel %vm2342, %v203, %v691
  %v2361 = vsel %vm2342, %v381, %v693
  %v2362 = vsel %vm2342, %v206, %v695
  %v2363 = vsel %vm2342, %v382, %v697
  %v2364 = vsel %vm2342, %v209, %v699
  %v2365 = vsel %vm2342, %v383, %v701
  %v2366 = vsel %vm2342, %v212, %v703
  %v2367 = vsel %vm2342, %v384, %v705
  %v2368 = vsel %vm2342, %v215, %v707
  %v2369 = vsel %vm2342, %v385, %v709
  %v2370 = vsel %vm2342, %v218, %v711
  %v2371 = vsel %vm2342, %v386, %v713
  %v2372 = vsel %vm2342, %v221, %v715
  %v2373 = vsel %vm2342, %v387, %v717
  %v2374 = vsel %vm2342, %v224, %v719
  %v2375 = vsel %vm2342, %v389, %v721
  %v2376 = vsel %vm2342, %v230, %v723
  %v2377 = vsel %vm2342, %v390, %v725
  %v2378 = vsel %vm2342, %v233, %v727
  %v2379 = vsel %vm2342, %v391, %v729
  %v2380 = vsel %vm2342, %v236, %v731
  %v2381 = vsel %vm2342, %v392, %v733
  %v2382 = vsel %vm2342, %v239, %v735
  %v2383 = vsel %vm2342, %v393, %v737
  %v2384 = vsel %vm2342, %v242, %v739
  %v2385 = vsel %vm2342, %v394, %v741
  %v2386 = vsel %vm2342, %v245, %v743
  %v2387 = vsel %vm2342, %v395, %v745
  %v2388 = vsel %vm2342, %v248, %v747
  %v2389 = vsel %vm2342, %v396, %v749
  %v2390 = vsel %vm2342, %v251, %v751
  %v2391 = vsel %vm2342, %v397, %v753
  %v2392 = vsel %vm2342, %v254, %v755
  %v2393 = vsel %vm2342, %v398, %v757
  %v2394 = vsel %vm2342, %v257, %v759
  %v2395 = vsel %vm2342, %v399, %v761
  %v2396 = vsel %vm2342, %v260, %v763
  %v2397 = vsel %vm2342, %v400, %v765
  %v2398 = vsel %vm2342, %v263, %v767
  %v2399 = vsel %vm2342, %v401, %v769
  %v2400 = vsel %vm2342, %v266, %v771
  %v2401 = vsel %vm2342, %v402, %v773
  %v2402 = vsel %vm2342, %v269, %v775
  %v2403 = vsel %vm2342, %v403, %v777
  %v2404 = vsel %vm2342, %v272, %v779
  %vm2405 = vcmask 64512
  %v2406 = vsel %vm2405, %v2343, %v999
  %v2407 = vsel %vm2405, %v2344, %v1001
  %v2408 = vsel %vm2405, %v2345, %v1003
  %v2409 = vsel %vm2405, %v2346, %v1005
  %v2410 = vsel %vm2405, %v2347, %v1007
  %v2411 = vsel %vm2405, %v2348, %v1009
  %v2412 = vsel %vm2405, %v2349, %v1011
  %v2413 = vsel %vm2405, %v2350, %v1013
  %v2414 = vsel %vm2405, %v2351, %v1015
  %v2415 = vsel %vm2405, %v2352, %v1017
  %v2416 = vsel %vm2405, %v2353, %v1019
  %v2417 = vsel %vm2405, %v2354, %v1021
  %v2418 = vsel %vm2405, %v2355, %v1023
  %v2419 = vsel %vm2405, %v2356, %v1025
  %v2420 = vsel %vm2405, %v2357, %v1027
  %v2421 = vsel %vm2405, %v2358, %v1029
  %v2422 = vsel %vm2405, %v2359, %v1031
  %v2423 = vsel %vm2405, %v2360, %v1033
  %v2424 = vsel %vm2405, %v2361, %v1035
  %v2425 = vsel %vm2405, %v2362, %v1037
  %v2426 = vsel %vm2405, %v2363, %v1039
  %v2427 = vsel %vm2405, %v2364, %v1041
  %v2428 = vsel %vm2405, %v2365, %v1043
  %v2429 = vsel %vm2405, %v2366, %v1045
  %v2430 = vsel %vm2405, %v2367, %v1047
  %v2431 = vsel %vm2405, %v2368, %v1049
  %v2432 = vsel %vm2405, %v2369, %v1051
  %v2433 = vsel %vm2405, %v2370, %v1053
  %v2434 = vsel %vm2405, %v2371, %v1055
  %v2435 = vsel %vm2405, %v2372, %v1057
  %v2436 = vsel %vm2405, %v2373, %v1059
  %v2437 = vsel %vm2405, %v2374, %v1061
  %v2438 = vsel %vm2405, %v2375, %v1063
  %v2439 = vsel %vm2405, %v2376, %v1065
  %v2440 = vsel %vm2405, %v2377, %v1067
  %v2441 = vsel %vm2405, %v2378, %v1069
  %v2442 = vsel %vm2405, %v2379, %v1071
  %v2443 = vsel %vm2405, %v2380, %v1073
  %v2444 = vsel %vm2405, %v2381, %v1075
  %v2445 = vsel %vm2405, %v2382, %v1077
  %v2446 = vsel %vm2405, %v2383, %v1079
  %v2447 = vsel %vm2405, %v2384, %v1081
  %v2448 = vsel %vm2405, %v2385, %v1083
  %v2449 = vsel %vm2405, %v2386, %v1085
  %v2450 = vsel %vm2405, %v2387, %v1087
  %v2451 = vsel %vm2405, %v2388, %v1089
  %v2452 = vsel %vm2405, %v2389, %v1091
  %v2453 = vsel %vm2405, %v2390, %v1093
  %v2454 = vsel %vm2405, %v2391, %v1095
  %v2455 = vsel %vm2405, %v2392, %v1097
  %v2456 = vsel %vm2405, %v2393, %v1099
  %v2457 = vsel %vm2405, %v2394, %v1101
  %v2458 = vsel %vm2405, %v2395, %v1103
  %v2459 = vsel %vm2405, %v2396, %v1105
  %v2460 = vsel %vm2405, %v2397, %v1107
  %v2461 = vsel %vm2405, %v2398, %v1109
  %v2462 = vsel %vm2405, %v2399, %v1111
  %v2463 = vsel %vm2405, %v2400, %v1113
  %v2464 = vsel %vm2405, %v2401, %v1115
  %v2465 = vsel %vm2405, %v2402, %v1117
  %v2466 = vsel %vm2405, %v2403, %v1119
  %v2467 = vsel %vm2405, %v2404, %v1121
  %vm2468 = vcmask 97280
  %v2469 = vsel %vm2468, %v2406, %v1187
  %v2470 = vsel %vm2468, %v2407, %v1189
  %v2471 = vsel %vm2468, %v2408, %v1191
  %v2472 = vsel %vm2468, %v2409, %v1193
  %v2473 = vsel %vm2468, %v2410, %v1195
  %v2474 = vsel %vm2468, %v2411, %v1197
  %v2475 = vsel %vm2468, %v2412, %v1199
  %v2476 = vsel %vm2468, %v2413, %v1201
  %v2477 = vsel %vm2468, %v2414, %v1203
  %v2478 = vsel %vm2468, %v2415, %v1205
  %v2479 = vsel %vm2468, %v2416, %v1207
  %v2480 = vsel %vm2468, %v2417, %v1209
  %v2481 = vsel %vm2468, %v2418, %v1211
  %v2482 = vsel %vm2468, %v2419, %v1213
  %v2483 = vsel %vm2468, %v2420, %v1215
  %v2484 = vsel %vm2468, %v2421, %v1217
  %v2485 = vsel %vm2468, %v2422, %v1219
  %v2486 = vsel %vm2468, %v2423, %v1221
  %v2487 = vsel %vm2468, %v2424, %v1223
  %v2488 = vsel %vm2468, %v2425, %v1225
  %v2489 = vsel %vm2468, %v2426, %v1227
  %v2490 = vsel %vm2468, %v2427, %v1229
  %v2491 = vsel %vm2468, %v2428, %v1231
  %v2492 = vsel %vm2468, %v2429, %v1233
  %v2493 = vsel %vm2468, %v2430, %v1235
  %v2494 = vsel %vm2468, %v2431, %v1237
  %v2495 = vsel %vm2468, %v2432, %v1239
  %v2496 = vsel %vm2468, %v2433, %v1241
  %v2497 = vsel %vm2468, %v2434, %v1243
  %v2498 = vsel %vm2468, %v2435, %v1245
  %v2499 = vsel %vm2468, %v2436, %v1247
  %v2500 = vsel %vm2468, %v2437, %v1249
  %v2501 = vsel %vm2468, %v2406, %v1251
  %v2502 = vsel %vm2468, %v2407, %v1253
  %v2503 = vsel %vm2468, %v2438, %v1255
  %v2504 = vsel %vm2468, %v2439, %v1257
  %v2505 = vsel %vm2468, %v2440, %v1259
  %v2506 = vsel %vm2468, %v2441, %v1261
  %v2507 = vsel %vm2468, %v2442, %v1263
  %v2508 = vsel %vm2468, %v2443, %v1265
  %v2509 = vsel %vm2468, %v2444, %v1267
  %v2510 = vsel %vm2468, %v2445, %v1269
  %v2511 = vsel %vm2468, %v2446, %v1271
  %v2512 = vsel %vm2468, %v2447, %v1273
  %v2513 = vsel %vm2468, %v2448, %v1275
  %v2514 = vsel %vm2468, %v2449, %v1277
  %v2515 = vsel %vm2468, %v2450, %v1279
  %v2516 = vsel %vm2468, %v2451, %v1281
  %v2517 = vsel %vm2468, %v2452, %v1283
  %v2518 = vsel %vm2468, %v2453, %v1285
  %v2519 = vsel %vm2468, %v2454, %v1287
  %v2520 = vsel %vm2468, %v2455, %v1289
  %v2521 = vsel %vm2468, %v2456, %v1291
  %v2522 = vsel %vm2468, %v2457, %v1293
  %v2523 = vsel %vm2468, %v2458, %v1295
  %v2524 = vsel %vm2468, %v2459, %v1297
  %v2525 = vsel %vm2468, %v2460, %v1299
  %v2526 = vsel %vm2468, %v2461, %v1301
  %v2527 = vsel %vm2468, %v2462, %v1303
  %v2528 = vsel %vm2468, %v2463, %v1305
  %v2529 = vsel %vm2468, %v2464, %v1307
  %v2530 = vsel %vm2468, %v2465, %v1309
  %v2531 = vsel %vm2468, %v2466, %v1311
  %v2532 = vsel %vm2468, %v2467, %v1313
  %vm2533 = vcmask 130048
  %v2534 = vsel %vm2533, %v2469, %v1391
  %v2535 = vsel %vm2533, %v2470, %v1393
  %v2536 = vsel %vm2533, %v2471, %v1395
  %v2537 = vsel %vm2533, %v2472, %v1397
  %v2538 = vsel %vm2533, %v2473, %v1399
  %v2539 = vsel %vm2533, %v2474, %v1401
  %v2540 = vsel %vm2533, %v2475, %v1403
  %v2541 = vsel %vm2533, %v2476, %v1405
  %v2542 = vsel %vm2533, %v2477, %v1407
  %v2543 = vsel %vm2533, %v2478, %v1409
  %v2544 = vsel %vm2533, %v2479, %v1411
  %v2545 = vsel %vm2533, %v2480, %v1413
  %v2546 = vsel %vm2533, %v2481, %v1415
  %v2547 = vsel %vm2533, %v2482, %v1417
  %v2548 = vsel %vm2533, %v2483, %v1419
  %v2549 = vsel %vm2533, %v2484, %v1421
  %v2550 = vsel %vm2533, %v2485, %v1423
  %v2551 = vsel %vm2533, %v2486, %v1425
  %v2552 = vsel %vm2533, %v2487, %v1427
  %v2553 = vsel %vm2533, %v2488, %v1429
  %v2554 = vsel %vm2533, %v2489, %v1431
  %v2555 = vsel %vm2533, %v2490, %v1433
  %v2556 = vsel %vm2533, %v2491, %v1435
  %v2557 = vsel %vm2533, %v2492, %v1437
  %v2558 = vsel %vm2533, %v2493, %v1439
  %v2559 = vsel %vm2533, %v2494, %v1441
  %v2560 = vsel %vm2533, %v2495, %v1443
  %v2561 = vsel %vm2533, %v2496, %v1445
  %v2562 = vsel %vm2533, %v2497, %v1447
  %v2563 = vsel %vm2533, %v2498, %v1449
  %v2564 = vsel %vm2533, %v2499, %v1451
  %v2565 = vsel %vm2533, %v2500, %v1453
  %v2566 = vsel %vm2533, %v2501, %v1455
  %v2567 = vsel %vm2533, %v2502, %v1457
  %v2568 = vsel %vm2533, %v2503, %v1459
  %v2569 = vsel %vm2533, %v2504, %v1461
  %v2570 = vsel %vm2533, %v2505, %v1463
  %v2571 = vsel %vm2533, %v2506, %v1465
  %v2572 = vsel %vm2533, %v2507, %v1467
  %v2573 = vsel %vm2533, %v2508, %v1469
  %v2574 = vsel %vm2533, %v2509, %v1471
  %v2575 = vsel %vm2533, %v2510, %v1473
  %v2576 = vsel %vm2533, %v2511, %v1475
  %v2577 = vsel %vm2533, %v2512, %v1477
  %v2578 = vsel %vm2533, %v2513, %v1479
  %v2579 = vsel %vm2533, %v2514, %v1481
  %v2580 = vsel %vm2533, %v2515, %v1483
  %v2581 = vsel %vm2533, %v2516, %v1485
  %v2582 = vsel %vm2533, %v2517, %v1487
  %v2583 = vsel %vm2533, %v2518, %v1489
  %v2584 = vsel %vm2533, %v2519, %v1491
  %v2585 = vsel %vm2533, %v2520, %v1493
  %v2586 = vsel %vm2533, %v2521, %v1495
  %v2587 = vsel %vm2533, %v2522, %v1497
  %v2588 = vsel %vm2533, %v2523, %v1499
  %v2589 = vsel %vm2533, %v2524, %v1501
  %v2590 = vsel %vm2533, %v2525, %v1503
  %v2591 = vsel %vm2533, %v2526, %v1505
  %v2592 = vsel %vm2533, %v2527, %v1507
  %v2593 = vsel %vm2533, %v2528, %v1509
  %v2594 = vsel %vm2533, %v2529, %v1511
  %v2595 = vsel %vm2533, %v2530, %v1513
  %v2596 = vsel %vm2533, %v2531, %v1515
  %v2597 = vsel %vm2533, %v2532, %v1517
  %vm2598 = vcmask 162816
  %v2599 = vsel %vm2598, %v2534, %v1593
  %v2600 = vsel %vm2598, %v2535, %v1595
  %v2601 = vsel %vm2598, %v2536, %v1597
  %v2602 = vsel %vm2598, %v2537, %v1599
  %v2603 = vsel %vm2598, %v2538, %v1601
  %v2604 = vsel %vm2598, %v2539, %v1603
  %v2605 = vsel %vm2598, %v2540, %v1605
  %v2606 = vsel %vm2598, %v2541, %v1607
  %v2607 = vsel %vm2598, %v2542, %v1609
  %v2608 = vsel %vm2598, %v2543, %v1611
  %v2609 = vsel %vm2598, %v2544, %v1613
  %v2610 = vsel %vm2598, %v2545, %v1615
  %v2611 = vsel %vm2598, %v2546, %v1617
  %v2612 = vsel %vm2598, %v2547, %v1619
  %v2613 = vsel %vm2598, %v2548, %v1621
  %v2614 = vsel %vm2598, %v2549, %v1623
  %v2615 = vsel %vm2598, %v2550, %v1625
  %v2616 = vsel %vm2598, %v2551, %v1627
  %v2617 = vsel %vm2598, %v2552, %v1629
  %v2618 = vsel %vm2598, %v2553, %v1631
  %v2619 = vsel %vm2598, %v2554, %v1633
  %v2620 = vsel %vm2598, %v2555, %v1635
  %v2621 = vsel %vm2598, %v2556, %v1637
  %v2622 = vsel %vm2598, %v2557, %v1639
  %v2623 = vsel %vm2598, %v2558, %v1641
  %v2624 = vsel %vm2598, %v2559, %v1643
  %v2625 = vsel %vm2598, %v2560, %v1645
  %v2626 = vsel %vm2598, %v2561, %v1647
  %v2627 = vsel %vm2598, %v2562, %v1649
  %v2628 = vsel %vm2598, %v2563, %v1651
  %v2629 = vsel %vm2598, %v2564, %v1653
  %v2630 = vsel %vm2598, %v2565, %v1655
  %v2631 = vsel %vm2598, %v2566, %v1657
  %v2632 = vsel %vm2598, %v2567, %v1659
  %v2633 = vsel %vm2598, %v2568, %v1661
  %v2634 = vsel %vm2598, %v2569, %v1663
  %v2635 = vsel %vm2598, %v2570, %v1665
  %v2636 = vsel %vm2598, %v2571, %v1667
  %v2637 = vsel %vm2598, %v2572, %v1669
  %v2638 = vsel %vm2598, %v2573, %v1671
  %v2639 = vsel %vm2598, %v2574, %v1673
  %v2640 = vsel %vm2598, %v2575, %v1675
  %v2641 = vsel %vm2598, %v2576, %v1677
  %v2642 = vsel %vm2598, %v2577, %v1679
  %v2643 = vsel %vm2598, %v2578, %v1681
  %v2644 = vsel %vm2598, %v2579, %v1683
  %v2645 = vsel %vm2598, %v2580, %v1685
  %v2646 = vsel %vm2598, %v2581, %v1687
  %v2647 = vsel %vm2598, %v2582, %v1689
  %v2648 = vsel %vm2598, %v2583, %v1691
  %v2649 = vsel %vm2598, %v2584, %v1693
  %v2650 = vsel %vm2598, %v2585, %v1695
  %v2651 = vsel %vm2598, %v2586, %v1697
  %v2652 = vsel %vm2598, %v2587, %v1699
  %v2653 = vsel %vm2598, %v2588, %v1701
  %v2654 = vsel %vm2598, %v2589, %v1703
  %v2655 = vsel %vm2598, %v2590, %v1705
  %v2656 = vsel %vm2598, %v2591, %v1707
  %v2657 = vsel %vm2598, %v2592, %v1709
  %v2658 = vsel %vm2598, %v2593, %v1711
  %v2659 = vsel %vm2598, %v2594, %v1713
  %v2660 = vsel %vm2598, %v2595, %v1715
  %v2661 = vsel %vm2598, %v2596, %v1717
  %v2662 = vsel %vm2598, %v2597, %v1719
  %vm2663 = vcmask 195584
  %v2664 = vsel %vm2663, %v2599, %v1785
  %v2665 = vsel %vm2663, %v2600, %v1787
  %v2666 = vsel %vm2663, %v2601, %v1789
  %v2667 = vsel %vm2663, %v2602, %v1791
  %v2668 = vsel %vm2663, %v2603, %v1793
  %v2669 = vsel %vm2663, %v2604, %v1795
  %v2670 = vsel %vm2663, %v2605, %v1797
  %v2671 = vsel %vm2663, %v2606, %v1799
  %v2672 = vsel %vm2663, %v2607, %v1801
  %v2673 = vsel %vm2663, %v2608, %v1803
  %v2674 = vsel %vm2663, %v2609, %v1805
  %v2675 = vsel %vm2663, %v2610, %v1807
  %v2676 = vsel %vm2663, %v2611, %v1809
  %v2677 = vsel %vm2663, %v2612, %v1811
  %v2678 = vsel %vm2663, %v2613, %v1813
  %v2679 = vsel %vm2663, %v2614, %v1815
  %v2680 = vsel %vm2663, %v2615, %v1817
  %v2681 = vsel %vm2663, %v2616, %v1819
  %v2682 = vsel %vm2663, %v2617, %v1821
  %v2683 = vsel %vm2663, %v2618, %v1823
  %v2684 = vsel %vm2663, %v2619, %v1825
  %v2685 = vsel %vm2663, %v2620, %v1827
  %v2686 = vsel %vm2663, %v2621, %v1829
  %v2687 = vsel %vm2663, %v2622, %v1831
  %v2688 = vsel %vm2663, %v2623, %v1833
  %v2689 = vsel %vm2663, %v2624, %v1835
  %v2690 = vsel %vm2663, %v2625, %v1837
  %v2691 = vsel %vm2663, %v2626, %v1839
  %v2692 = vsel %vm2663, %v2627, %v1841
  %v2693 = vsel %vm2663, %v2628, %v1843
  %v2694 = vsel %vm2663, %v2629, %v1845
  %v2695 = vsel %vm2663, %v2630, %v1847
  %v2696 = vsel %vm2663, %v2631, %v1849
  %v2697 = vsel %vm2663, %v2632, %v1851
  %v2698 = vsel %vm2663, %v2633, %v1853
  %v2699 = vsel %vm2663, %v2634, %v1855
  %v2700 = vsel %vm2663, %v2635, %v1857
  %v2701 = vsel %vm2663, %v2636, %v1859
  %v2702 = vsel %vm2663, %v2637, %v1861
  %v2703 = vsel %vm2663, %v2638, %v1863
  %v2704 = vsel %vm2663, %v2639, %v1865
  %v2705 = vsel %vm2663, %v2640, %v1867
  %v2706 = vsel %vm2663, %v2641, %v1869
  %v2707 = vsel %vm2663, %v2642, %v1871
  %v2708 = vsel %vm2663, %v2643, %v1873
  %v2709 = vsel %vm2663, %v2644, %v1875
  %v2710 = vsel %vm2663, %v2645, %v1877
  %v2711 = vsel %vm2663, %v2646, %v1879
  %v2712 = vsel %vm2663, %v2647, %v1881
  %v2713 = vsel %vm2663, %v2648, %v1883
  %v2714 = vsel %vm2663, %v2649, %v1885
  %v2715 = vsel %vm2663, %v2650, %v1887
  %v2716 = vsel %vm2663, %v2651, %v1889
  %v2717 = vsel %vm2663, %v2652, %v1891
  %v2718 = vsel %vm2663, %v2653, %v1893
  %v2719 = vsel %vm2663, %v2654, %v1895
  %v2720 = vsel %vm2663, %v2655, %v1897
  %v2721 = vsel %vm2663, %v2656, %v1899
  %v2722 = vsel %vm2663, %v2657, %v1901
  %v2723 = vsel %vm2663, %v2658, %v1903
  %v2724 = vsel %vm2663, %v2659, %v1905
  %v2725 = vsel %vm2663, %v2660, %v1907
  %v2726 = vsel %vm2663, %v2661, %v1845
  %v2727 = vsel %vm2663, %v2662, %v1847
  %vm2728 = vcmask 228352
  %v2729 = vsel %vm2728, %v2664, %v1971
  %v2730 = vsel %vm2728, %v2665, %v1973
  %v2731 = vsel %vm2728, %v2666, %v1975
  %v2732 = vsel %vm2728, %v2667, %v1977
  %v2733 = vsel %vm2728, %v2668, %v1979
  %v2734 = vsel %vm2728, %v2669, %v1981
  %v2735 = vsel %vm2728, %v2670, %v1983
  %v2736 = vsel %vm2728, %v2671, %v1985
  %v2737 = vsel %vm2728, %v2672, %v1987
  %v2738 = vsel %vm2728, %v2673, %v1989
  %v2739 = vsel %vm2728, %v2674, %v1991
  %v2740 = vsel %vm2728, %v2675, %v1993
  %v2741 = vsel %vm2728, %v2676, %v1995
  %v2742 = vsel %vm2728, %v2677, %v1997
  %v2743 = vsel %vm2728, %v2678, %v1999
  %v2744 = vsel %vm2728, %v2679, %v2001
  %v2745 = vsel %vm2728, %v2680, %v2003
  %v2746 = vsel %vm2728, %v2681, %v2005
  %v2747 = vsel %vm2728, %v2682, %v2007
  %v2748 = vsel %vm2728, %v2683, %v2009
  %v2749 = vsel %vm2728, %v2684, %v2011
  %v2750 = vsel %vm2728, %v2685, %v2013
  %v2751 = vsel %vm2728, %v2686, %v2015
  %v2752 = vsel %vm2728, %v2687, %v2017
  %v2753 = vsel %vm2728, %v2688, %v2019
  %v2754 = vsel %vm2728, %v2689, %v2021
  %v2755 = vsel %vm2728, %v2690, %v2023
  %v2756 = vsel %vm2728, %v2691, %v2025
  %v2757 = vsel %vm2728, %v2692, %v2027
  %v2758 = vsel %vm2728, %v2693, %v2029
  %v2759 = vsel %vm2728, %v2694, %v2031
  %v2760 = vsel %vm2728, %v2695, %v2033
  %v2761 = vsel %vm2728, %v2696, %v2035
  %v2762 = vsel %vm2728, %v2697, %v2037
  %v2763 = vsel %vm2728, %v2698, %v2039
  %v2764 = vsel %vm2728, %v2699, %v2041
  %v2765 = vsel %vm2728, %v2700, %v2043
  %v2766 = vsel %vm2728, %v2701, %v2045
  %v2767 = vsel %vm2728, %v2702, %v2047
  %v2768 = vsel %vm2728, %v2703, %v2049
  %v2769 = vsel %vm2728, %v2704, %v2051
  %v2770 = vsel %vm2728, %v2705, %v2053
  %v2771 = vsel %vm2728, %v2706, %v2055
  %v2772 = vsel %vm2728, %v2707, %v2057
  %v2773 = vsel %vm2728, %v2708, %v2059
  %v2774 = vsel %vm2728, %v2709, %v2061
  %v2775 = vsel %vm2728, %v2710, %v2063
  %v2776 = vsel %vm2728, %v2711, %v2065
  %v2777 = vsel %vm2728, %v2712, %v2067
  %v2778 = vsel %vm2728, %v2713, %v2069
  %v2779 = vsel %vm2728, %v2714, %v2071
  %v2780 = vsel %vm2728, %v2715, %v2073
  %v2781 = vsel %vm2728, %v2716, %v2075
  %v2782 = vsel %vm2728, %v2717, %v2077
  %v2783 = vsel %vm2728, %v2718, %v2079
  %v2784 = vsel %vm2728, %v2719, %v2081
  %v2785 = vsel %vm2728, %v2720, %v2083
  %v2786 = vsel %vm2728, %v2721, %v2085
  %v2787 = vsel %vm2728, %v2722, %v2087
  %v2788 = vsel %vm2728, %v2723, %v2089
  %v2789 = vsel %vm2728, %v2724, %v2091
  %v2790 = vsel %vm2728, %v2725, %v2093
  %v2791 = vsel %vm2728, %v2726, %v2031
  %v2792 = vsel %vm2728, %v2727, %v2033
  %vm2793 = vcmask 261120
  %v2794 = vsel %vm2793, %v2729, %v2157
  %v2795 = vsel %vm2793, %v2730, %v2159
  %v2796 = vsel %vm2793, %v2731, %v2161
  %v2797 = vsel %vm2793, %v2732, %v2163
  %v2798 = vsel %vm2793, %v2733, %v2165
  %v2799 = vsel %vm2793, %v2734, %v2167
  %v2800 = vsel %vm2793, %v2735, %v2169
  %v2801 = vsel %vm2793, %v2736, %v2171
  %v2802 = vsel %vm2793, %v2737, %v2173
  %v2803 = vsel %vm2793, %v2738, %v2175
  %v2804 = vsel %vm2793, %v2739, %v2177
  %v2805 = vsel %vm2793, %v2740, %v2179
  %v2806 = vsel %vm2793, %v2741, %v2181
  %v2807 = vsel %vm2793, %v2742, %v2183
  %v2808 = vsel %vm2793, %v2743, %v2185
  %v2809 = vsel %vm2793, %v2744, %v2187
  %v2810 = vsel %vm2793, %v2745, %v2189
  %v2811 = vsel %vm2793, %v2746, %v2191
  %v2812 = vsel %vm2793, %v2747, %v2193
  %v2813 = vsel %vm2793, %v2748, %v2195
  %v2814 = vsel %vm2793, %v2749, %v2197
  %v2815 = vsel %vm2793, %v2750, %v2199
  %v2816 = vsel %vm2793, %v2751, %v2201
  %v2817 = vsel %vm2793, %v2752, %v2203
  %v2818 = vsel %vm2793, %v2753, %v2205
  %v2819 = vsel %vm2793, %v2754, %v2207
  %v2820 = vsel %vm2793, %v2755, %v2209
  %v2821 = vsel %vm2793, %v2756, %v2211
  %v2822 = vsel %vm2793, %v2757, %v2213
  %v2823 = vsel %vm2793, %v2758, %v2215
  %v2824 = vsel %vm2793, %v2759, %v2217
  %v2825 = vsel %vm2793, %v2760, %v2219
  %v2826 = vsel %vm2793, %v2761, %v2221
  %v2827 = vsel %vm2793, %v2762, %v2223
  %v2828 = vsel %vm2793, %v2763, %v2225
  %v2829 = vsel %vm2793, %v2764, %v2227
  %v2830 = vsel %vm2793, %v2765, %v2229
  %v2831 = vsel %vm2793, %v2766, %v2231
  %v2832 = vsel %vm2793, %v2767, %v2233
  %v2833 = vsel %vm2793, %v2768, %v2235
  %v2834 = vsel %vm2793, %v2769, %v2237
  %v2835 = vsel %vm2793, %v2770, %v2239
  %v2836 = vsel %vm2793, %v2771, %v2241
  %v2837 = vsel %vm2793, %v2772, %v2243
  %v2838 = vsel %vm2793, %v2773, %v2245
  %v2839 = vsel %vm2793, %v2774, %v2247
  %v2840 = vsel %vm2793, %v2775, %v2249
  %v2841 = vsel %vm2793, %v2776, %v2251
  %v2842 = vsel %vm2793, %v2777, %v2253
  %v2843 = vsel %vm2793, %v2778, %v2255
  %v2844 = vsel %vm2793, %v2779, %v2257
  %v2845 = vsel %vm2793, %v2780, %v2259
  %v2846 = vsel %vm2793, %v2781, %v2261
  %v2847 = vsel %vm2793, %v2782, %v2263
  %v2848 = vsel %vm2793, %v2783, %v2265
  %v2849 = vsel %vm2793, %v2784, %v2267
  %v2850 = vsel %vm2793, %v2785, %v2269
  %v2851 = vsel %vm2793, %v2786, %v2271
  %v2852 = vsel %vm2793, %v2787, %v2273
  %v2853 = vsel %vm2793, %v2788, %v2275
  %v2854 = vsel %vm2793, %v2789, %v2277
  %v2855 = vsel %vm2793, %v2790, %v2279
  %v2856 = vsel %vm2793, %v2791, %v2217
  %v2857 = vsel %vm2793, %v2792, %v2219
  %v2858 = vpack.c.bf16 %v2795, %v2794
  %v2859 = vpack.c.bf16 %v2797, %v2796
  %v2860 = vpack.c.bf16 %v2799, %v2798
  %v2861 = vpack.c.bf16 %v2801, %v2800
  %v2862 = vpack.c.bf16 %v2803, %v2802
  %v2863 = vpack.c.bf16 %v2805, %v2804
  %v2864 = vpack.c.bf16 %v2807, %v2806
  %v2865 = vpack.c.bf16 %v2809, %v2808
  %v2866 = vpack.c.bf16 %v2811, %v2810
  %v2867 = vpack.c.bf16 %v2813, %v2812
  %v2868 = vpack.c.bf16 %v2815, %v2814
  %v2869 = vpack.c.bf16 %v2817, %v2816
  %v2870 = vpack.c.bf16 %v2819, %v2818
  %v2871 = vpack.c.bf16 %v2821, %v2820
  %v2872 = vpack.c.bf16 %v2823, %v2822
  %v2873 = vpack.c.bf16 %v2825, %v2824
  %v2874 = vpack.c.bf16 %v2827, %v2826
  %v2875 = vpack.c.bf16 %v2829, %v2828
  %v2876 = vpack.c.bf16 %v2831, %v2830
  %v2877 = vpack.c.bf16 %v2833, %v2832
  %v2878 = vpack.c.bf16 %v2835, %v2834
  %v2879 = vpack.c.bf16 %v2837, %v2836
  %v2880 = vpack.c.bf16 %v2839, %v2838
  %v2881 = vpack.c.bf16 %v2841, %v2840
  %v2882 = vpack.c.bf16 %v2843, %v2842
  %v2883 = vpack.c.bf16 %v2845, %v2844
  %v2884 = vpack.c.bf16 %v2847, %v2846
  %v2885 = vpack.c.bf16 %v2849, %v2848
  %v2886 = vpack.c.bf16 %v2851, %v2850
  %v2887 = vpack.c.bf16 %v2853, %v2852
  %v2888 = vpack.c.bf16 %v2855, %v2854
  %v2889 = vpack.c.bf16 %v2857, %v2856
  %v2891 = vlaneseq
  %v2892 = vshrl.u32 %v2891, 7
  %v2893 = vsub.s32 0, %v2892
  %v2894 = vrot.slane %v111, %v2893
  %v2901 = vunpack.c.l.b16 %v106
  %v2902 = vunpack.c.l.b16 %v107
  %v2903 = vunpack.c.l.b16 %v108
  %v2904 = vunpack.c.l.b16 %v109
  %v2905 = vunpack.c.l.b16 %v110
  %v2906 = vpack.c.b16 %v2902, %v2901
  %v2907 = vpack.c.b16 %v2904, %v2903
  %v2908 = vpack.c.b16 %v2905, %v2905
  %vm2911 = vcmask 293888
  %v2913 = vsel %vm2911, %v2858, 0
  %v2916 = vsel %vm2911, %v2859, 0
  %v2919 = vsel %vm2911, %v2860, 0
  %v2922 = vsel %vm2911, %v2861, 0
  %v2925 = vsel %vm2911, %v2862, 0
  %v2928 = vsel %vm2911, %v2863, 0
  %v2931 = vsel %vm2911, %v2864, 0
  %v2934 = vsel %vm2911, %v2865, 0
  %v2937 = vsel %vm2911, %v2866, 0
  %v2940 = vsel %vm2911, %v2867, 0
  %v2943 = vsel %vm2911, %v2868, 0
  %v2946 = vsel %vm2911, %v2869, 0
  %v2949 = vsel %vm2911, %v2870, 0
  %v2952 = vsel %vm2911, %v2871, 0
  %v2955 = vsel %vm2911, %v2872, 0
  %v2958 = vsel %vm2911, %v2873, 0
  %v2961 = vsel %vm2911, %v2874, 0
  %v2964 = vsel %vm2911, %v2875, 0
  %v2967 = vsel %vm2911, %v2876, 0
  %v2970 = vsel %vm2911, %v2877, 0
  %v2973 = vsel %vm2911, %v2878, 0
  %v2976 = vsel %vm2911, %v2879, 0
  %v2979 = vsel %vm2911, %v2880, 0
  %v2982 = vsel %vm2911, %v2881, 0
  %v2985 = vsel %vm2911, %v2882, 0
  %v2988 = vsel %vm2911, %v2883, 0
  %v2991 = vsel %vm2911, %v2884, 0
  %v2994 = vsel %vm2911, %v2885, 0
  %v2997 = vsel %vm2911, %v2886, 0
  %v3000 = vsel %vm2911, %v2887, 0
  %v3003 = vsel %vm2911, %v2888, 0
  %v3006 = vsel %vm2911, %v2889, 0
  %vm3008 = vcmask 1041408
  %v3010 = vsel %vm3008, %v2908, 0
  %3012 = vmatprep.subr.bf16.mxu0 0
  %3013 = vmatpush1.bf16.msra.mxu0 %v2906
  %3014 = vmatprep.subr.bf16.mxu0 0
  %3015 = vmatpush1.bf16.msra.mxu0 %v2907
  %3016 = vmatprep.subr.bf16.mxu0 0
  %3017 = vmatpush1.bf16.msra.mxu0 %v3010
  %3018 = vmatprep.subr.bf16.mxu0 0
  %3019 = vmatpush1.bf16.msra.mxu0 0
  %3020 = vmatprep.subr.bf16.mxu0 0
  %3021 = vmatpush1.bf16.msra.mxu0 0
  %3022 = vmatprep.subr.bf16.mxu0 0
  %3023 = vmatpush1.bf16.msra.mxu0 0
  %3024 = vmatprep.subr.bf16.mxu0 0
  %3025 = vmatpush1.bf16.msra.mxu0 0
  %3026 = vmatprep.subr.bf16.mxu0 0
  %3027 = vmatpush1.bf16.msra.mxu0 0
  %3028 = vmatprep.subr.bf16.mxu0 0
  %3029 = vmatpush1.bf16.msra.mxu0 0
  %3030 = vmatprep.subr.bf16.mxu0 0
  %3031 = vmatpush1.bf16.msra.mxu0 0
  %3032 = vmatprep.subr.bf16.mxu0 0
  %3033 = vmatpush1.bf16.msra.mxu0 0
  %3034 = vmatprep.subr.bf16.mxu0 0
  %3035 = vmatpush1.bf16.msra.mxu0 0
  %3036 = vmatprep.subr.bf16.mxu0 0
  %3037 = vmatpush1.bf16.msra.mxu0 0
  %3038 = vmatprep.subr.bf16.mxu0 0
  %3039 = vmatpush1.bf16.msra.mxu0 0
  %3040 = vmatprep.subr.bf16.mxu0 0
  %3041 = vmatpush1.bf16.msra.mxu0 0
  %3042 = vmatprep.subr.bf16.mxu0 0
  %3043 = vmatpush1.bf16.msra.mxu0 0
  %3044 = vmatprep.mubr.bf16.mxu0 0
  %3045 = vmatmul.mubr.bf16.gmra.mrb[0].mxu0 %v2913
  %v3046 = vpop.f32.mrb[0].mxu0
  %v3047 = vadd.f32 %v2894, %v3046
  %v3048 = vpop.f32.mrb[0].mxu0
  %v3049 = vpop.f32.mrb[0].mxu0
  %v3050 = vadd.f32 %v2894, %v3049
  %v3051 = vpop.f32.mrb[0].mxu0
  %3052 = vmatprep.mubr.bf16.mxu0 0
  %3053 = vmatmul.mubr.bf16.gmra.mrb[0].mxu0 %v2916
  %v3054 = vpop.f32.mrb[0].mxu0
  %v3055 = vadd.f32 %v2894, %v3054
  %v3056 = vpop.f32.mrb[0].mxu0
  %v3057 = vpop.f32.mrb[0].mxu0
  %v3058 = vadd.f32 %v2894, %v3057
  %v3059 = vpop.f32.mrb[0].mxu0
  %3060 = vmatprep.mubr.bf16.mxu0 0
  %3061 = vmatmul.mubr.bf16.gmra.mrb[0].mxu0 %v2919
  %v3062 = vpop.f32.mrb[0].mxu0
  %v3063 = vadd.f32 %v2894, %v3062
  %v3064 = vpop.f32.mrb[0].mxu0
  %v3065 = vpop.f32.mrb[0].mxu0
  %v3066 = vadd.f32 %v2894, %v3065
  %v3067 = vpop.f32.mrb[0].mxu0
  %3068 = vmatprep.mubr.bf16.mxu0 0
  %3069 = vmatmul.mubr.bf16.gmra.mrb[0].mxu0 %v2922
  %v3070 = vpop.f32.mrb[0].mxu0
  %v3071 = vadd.f32 %v2894, %v3070
  %v3072 = vpop.f32.mrb[0].mxu0
  %v3073 = vpop.f32.mrb[0].mxu0
  %v3074 = vadd.f32 %v2894, %v3073
  %v3075 = vpop.f32.mrb[0].mxu0
  %3076 = vmatprep.mubr.bf16.mxu0 0
  %3077 = vmatmul.mubr.bf16.gmra.mrb[0].mxu0 %v2925
  %v3078 = vpop.f32.mrb[0].mxu0
  %v3079 = vadd.f32 %v2894, %v3078
  %v3080 = vpop.f32.mrb[0].mxu0
  %v3081 = vpop.f32.mrb[0].mxu0
  %v3082 = vadd.f32 %v2894, %v3081
  %v3083 = vpop.f32.mrb[0].mxu0
  %3084 = vmatprep.mubr.bf16.mxu0 0
  %3085 = vmatmul.mubr.bf16.gmra.mrb[0].mxu0 %v2928
  %v3086 = vpop.f32.mrb[0].mxu0
  %v3087 = vadd.f32 %v2894, %v3086
  %v3088 = vpop.f32.mrb[0].mxu0
  %v3089 = vpop.f32.mrb[0].mxu0
  %v3090 = vadd.f32 %v2894, %v3089
  %v3091 = vpop.f32.mrb[0].mxu0
  %3092 = vmatprep.mubr.bf16.mxu0 0
  %3093 = vmatmul.mubr.bf16.gmra.mrb[0].mxu0 %v2931
  %v3094 = vpop.f32.mrb[0].mxu0
  %v3095 = vadd.f32 %v2894, %v3094
  %v3096 = vpop.f32.mrb[0].mxu0
  %v3097 = vpop.f32.mrb[0].mxu0
  %v3098 = vadd.f32 %v2894, %v3097
  %v3099 = vpop.f32.mrb[0].mxu0
  %3100 = vmatprep.mubr.bf16.mxu0 0
  %3101 = vmatmul.mubr.bf16.gmra.mrb[0].mxu0 %v2934
  %v3102 = vpop.f32.mrb[0].mxu0
  %v3103 = vadd.f32 %v2894, %v3102
  %v3104 = vpop.f32.mrb[0].mxu0
  %v3105 = vpop.f32.mrb[0].mxu0
  %v3106 = vadd.f32 %v2894, %v3105
  %v3107 = vpop.f32.mrb[0].mxu0
  %3108 = vmatprep.mubr.bf16.mxu0 0
  %3109 = vmatmul.mubr.bf16.gmra.mrb[0].mxu0 %v2937
  %v3110 = vpop.f32.mrb[0].mxu0
  %v3111 = vadd.f32 %v2894, %v3110
  %v3112 = vpop.f32.mrb[0].mxu0
  %v3113 = vpop.f32.mrb[0].mxu0
  %v3114 = vadd.f32 %v2894, %v3113
  %v3115 = vpop.f32.mrb[0].mxu0
  %3116 = vmatprep.mubr.bf16.mxu0 0
  %3117 = vmatmul.mubr.bf16.gmra.mrb[0].mxu0 %v2940
  %v3118 = vpop.f32.mrb[0].mxu0
  %v3119 = vadd.f32 %v2894, %v3118
  %v3120 = vpop.f32.mrb[0].mxu0
  %v3121 = vpop.f32.mrb[0].mxu0
  %v3122 = vadd.f32 %v2894, %v3121
  %v3123 = vpop.f32.mrb[0].mxu0
  %3124 = vmatprep.mubr.bf16.mxu0 0
  %3125 = vmatmul.mubr.bf16.gmra.mrb[0].mxu0 %v2943
  %v3126 = vpop.f32.mrb[0].mxu0
  %v3127 = vadd.f32 %v2894, %v3126
  %v3128 = vpop.f32.mrb[0].mxu0
  %v3129 = vpop.f32.mrb[0].mxu0
  %v3130 = vadd.f32 %v2894, %v3129
  %v3131 = vpop.f32.mrb[0].mxu0
  %3132 = vmatprep.mubr.bf16.mxu0 0
  %3133 = vmatmul.mubr.bf16.gmra.mrb[0].mxu0 %v2946
  %v3134 = vpop.f32.mrb[0].mxu0
  %v3135 = vadd.f32 %v2894, %v3134
  %v3136 = vpop.f32.mrb[0].mxu0
  %v3137 = vpop.f32.mrb[0].mxu0
  %v3138 = vadd.f32 %v2894, %v3137
  %v3139 = vpop.f32.mrb[0].mxu0
  %3140 = vmatprep.mubr.bf16.mxu0 0
  %3141 = vmatmul.mubr.bf16.gmra.mrb[0].mxu0 %v2949
  %v3142 = vpop.f32.mrb[0].mxu0
  %v3143 = vadd.f32 %v2894, %v3142
  %v3144 = vpop.f32.mrb[0].mxu0
  %v3145 = vpop.f32.mrb[0].mxu0
  %v3146 = vadd.f32 %v2894, %v3145
  %v3147 = vpop.f32.mrb[0].mxu0
  %3148 = vmatprep.mubr.bf16.mxu0 0
  %3149 = vmatmul.mubr.bf16.gmra.mrb[0].mxu0 %v2952
  %v3150 = vpop.f32.mrb[0].mxu0
  %v3151 = vadd.f32 %v2894, %v3150
  %v3152 = vpop.f32.mrb[0].mxu0
  %v3153 = vpop.f32.mrb[0].mxu0
  %v3154 = vadd.f32 %v2894, %v3153
  %v3155 = vpop.f32.mrb[0].mxu0
  %3156 = vmatprep.mubr.bf16.mxu0 0
  %3157 = vmatmul.mubr.bf16.gmra.mrb[0].mxu0 %v2955
  %v3158 = vpop.f32.mrb[0].mxu0
  %v3159 = vadd.f32 %v2894, %v3158
  %v3160 = vpop.f32.mrb[0].mxu0
  %v3161 = vpop.f32.mrb[0].mxu0
  %v3162 = vadd.f32 %v2894, %v3161
  %v3163 = vpop.f32.mrb[0].mxu0
  %3164 = vmatprep.mubr.bf16.mxu0 0
  %3165 = vmatmul.mubr.bf16.gmra.mrb[0].mxu0 %v2958
  %v3166 = vpop.f32.mrb[0].mxu0
  %v3167 = vadd.f32 %v2894, %v3166
  %v3168 = vpop.f32.mrb[0].mxu0
  %v3169 = vpop.f32.mrb[0].mxu0
  %v3170 = vadd.f32 %v2894, %v3169
  %v3171 = vpop.f32.mrb[0].mxu0
  %3172 = vmatprep.mubr.bf16.mxu0 0
  %3173 = vmatmul.mubr.bf16.gmra.mrb[0].mxu0 %v2961
  %v3174 = vpop.f32.mrb[0].mxu0
  %v3175 = vadd.f32 %v2894, %v3174
  %v3176 = vpop.f32.mrb[0].mxu0
  %v3177 = vpop.f32.mrb[0].mxu0
  %v3178 = vadd.f32 %v2894, %v3177
  %v3179 = vpop.f32.mrb[0].mxu0
  %3180 = vmatprep.mubr.bf16.mxu0 0
  %3181 = vmatmul.mubr.bf16.gmra.mrb[0].mxu0 %v2964
  %v3182 = vpop.f32.mrb[0].mxu0
  %v3183 = vadd.f32 %v2894, %v3182
  %v3184 = vpop.f32.mrb[0].mxu0
  %v3185 = vpop.f32.mrb[0].mxu0
  %v3186 = vadd.f32 %v2894, %v3185
  %v3187 = vpop.f32.mrb[0].mxu0
  %3188 = vmatprep.mubr.bf16.mxu0 0
  %3189 = vmatmul.mubr.bf16.gmra.mrb[0].mxu0 %v2967
  %v3190 = vpop.f32.mrb[0].mxu0
  %v3191 = vadd.f32 %v2894, %v3190
  %v3192 = vpop.f32.mrb[0].mxu0
  %v3193 = vpop.f32.mrb[0].mxu0
  %v3194 = vadd.f32 %v2894, %v3193
  %v3195 = vpop.f32.mrb[0].mxu0
  %3196 = vmatprep.mubr.bf16.mxu0 0
  %3197 = vmatmul.mubr.bf16.gmra.mrb[0].mxu0 %v2970
  %v3198 = vpop.f32.mrb[0].mxu0
  %v3199 = vadd.f32 %v2894, %v3198
  %v3200 = vpop.f32.mrb[0].mxu0
  %v3201 = vpop.f32.mrb[0].mxu0
  %v3202 = vadd.f32 %v2894, %v3201
  %v3203 = vpop.f32.mrb[0].mxu0
  %3204 = vmatprep.mubr.bf16.mxu0 0
  %3205 = vmatmul.mubr.bf16.gmra.mrb[0].mxu0 %v2973
  %v3206 = vpop.f32.mrb[0].mxu0
  %v3207 = vadd.f32 %v2894, %v3206
  %v3208 = vpop.f32.mrb[0].mxu0
  %v3209 = vpop.f32.mrb[0].mxu0
  %v3210 = vadd.f32 %v2894, %v3209
  %v3211 = vpop.f32.mrb[0].mxu0
  %3212 = vmatprep.mubr.bf16.mxu0 0
  %3213 = vmatmul.mubr.bf16.gmra.mrb[0].mxu0 %v2976
  %v3214 = vpop.f32.mrb[0].mxu0
  %v3215 = vadd.f32 %v2894, %v3214
  %v3216 = vpop.f32.mrb[0].mxu0
  %v3217 = vpop.f32.mrb[0].mxu0
  %v3218 = vadd.f32 %v2894, %v3217
  %v3219 = vpop.f32.mrb[0].mxu0
  %3220 = vmatprep.mubr.bf16.mxu0 0
  %3221 = vmatmul.mubr.bf16.gmra.mrb[0].mxu0 %v2979
  %v3222 = vpop.f32.mrb[0].mxu0
  %v3223 = vadd.f32 %v2894, %v3222
  %v3224 = vpop.f32.mrb[0].mxu0
  %v3225 = vpop.f32.mrb[0].mxu0
  %v3226 = vadd.f32 %v2894, %v3225
  %v3227 = vpop.f32.mrb[0].mxu0
  %3228 = vmatprep.mubr.bf16.mxu0 0
  %3229 = vmatmul.mubr.bf16.gmra.mrb[0].mxu0 %v2982
  %v3230 = vpop.f32.mrb[0].mxu0
  %v3231 = vadd.f32 %v2894, %v3230
  %v3232 = vpop.f32.mrb[0].mxu0
  %v3233 = vpop.f32.mrb[0].mxu0
  %v3234 = vadd.f32 %v2894, %v3233
  %v3235 = vpop.f32.mrb[0].mxu0
  %3236 = vmatprep.mubr.bf16.mxu0 0
  %3237 = vmatmul.mubr.bf16.gmra.mrb[0].mxu0 %v2985
  %v3238 = vpop.f32.mrb[0].mxu0
  %v3239 = vadd.f32 %v2894, %v3238
  %v3240 = vpop.f32.mrb[0].mxu0
  %v3241 = vpop.f32.mrb[0].mxu0
  %v3242 = vadd.f32 %v2894, %v3241
  %v3243 = vpop.f32.mrb[0].mxu0
  %3244 = vmatprep.mubr.bf16.mxu0 0
  %3245 = vmatmul.mubr.bf16.gmra.mrb[0].mxu0 %v2988
  %v3246 = vpop.f32.mrb[0].mxu0
  %v3247 = vadd.f32 %v2894, %v3246
  %v3248 = vpop.f32.mrb[0].mxu0
  %v3249 = vpop.f32.mrb[0].mxu0
  %v3250 = vadd.f32 %v2894, %v3249
  %v3251 = vpop.f32.mrb[0].mxu0
  %3252 = vmatprep.mubr.bf16.mxu0 0
  %3253 = vmatmul.mubr.bf16.gmra.mrb[0].mxu0 %v2991
  %v3254 = vpop.f32.mrb[0].mxu0
  %v3255 = vadd.f32 %v2894, %v3254
  %v3256 = vpop.f32.mrb[0].mxu0
  %v3257 = vpop.f32.mrb[0].mxu0
  %v3258 = vadd.f32 %v2894, %v3257
  %v3259 = vpop.f32.mrb[0].mxu0
  %3260 = vmatprep.mubr.bf16.mxu0 0
  %3261 = vmatmul.mubr.bf16.gmra.mrb[0].mxu0 %v2994
  %v3262 = vpop.f32.mrb[0].mxu0
  %v3263 = vadd.f32 %v2894, %v3262
  %v3264 = vpop.f32.mrb[0].mxu0
  %v3265 = vpop.f32.mrb[0].mxu0
  %v3266 = vadd.f32 %v2894, %v3265
  %v3267 = vpop.f32.mrb[0].mxu0
  %3268 = vmatprep.mubr.bf16.mxu0 0
  %3269 = vmatmul.mubr.bf16.gmra.mrb[0].mxu0 %v2997
  %v3270 = vpop.f32.mrb[0].mxu0
  %v3271 = vadd.f32 %v2894, %v3270
  %v3272 = vpop.f32.mrb[0].mxu0
  %v3273 = vpop.f32.mrb[0].mxu0
  %v3274 = vadd.f32 %v2894, %v3273
  %v3275 = vpop.f32.mrb[0].mxu0
  %3276 = vmatprep.mubr.bf16.mxu0 0
  %3277 = vmatmul.mubr.bf16.gmra.mrb[0].mxu0 %v3000
  %v3278 = vpop.f32.mrb[0].mxu0
  %v3279 = vadd.f32 %v2894, %v3278
  %v3280 = vpop.f32.mrb[0].mxu0
  %v3281 = vpop.f32.mrb[0].mxu0
  %v3282 = vadd.f32 %v2894, %v3281
  %v3283 = vpop.f32.mrb[0].mxu0
  %3284 = vmatprep.mubr.bf16.mxu0 0
  %3285 = vmatmul.mubr.bf16.gmra.mrb[0].mxu0 %v3003
  %v3286 = vpop.f32.mrb[0].mxu0
  %v3287 = vadd.f32 %v2894, %v3286
  %v3288 = vpop.f32.mrb[0].mxu0
  %v3289 = vpop.f32.mrb[0].mxu0
  %v3290 = vadd.f32 %v2894, %v3289
  %v3291 = vpop.f32.mrb[0].mxu0
  %3292 = vmatprep.mubr.bf16.mxu0 0
  %3293 = vmatmul.mubr.bf16.gmra.mrb[0].mxu0 %v3006
  %v3294 = vpop.f32.mrb[0].mxu0
  %v3295 = vadd.f32 %v2894, %v3294
  %v3296 = vpop.f32.mrb[0].mxu0
  %v3297 = vpop.f32.mrb[0].mxu0
  %v3298 = vadd.f32 %v2894, %v3297
  %v3299 = vpop.f32.mrb[0].mxu0
  %3300 = vdwg.mxu0
  %v3301 = vld [vmem:[%s3] sm:$0xf]
  %v3302 = vld [vmem:[%s3 + $0x4] sm:$0xf]
  %v3303 = vld [vmem:[%s3 + $0x8] sm:$0xf]
  %v3304 = vld [vmem:[%s3 + $0xc] sm:$0xf]
  %v3305 = vld [vmem:[%s3 + $0x10] sm:$0xf]
  %v3306 = vld [vmem:[%s3 + $0x14] sm:$0xf]
  %v3307 = vld [vmem:[%s3 + $0x18] sm:$0xf]
  %v3308 = vld [vmem:[%s3 + $0x1c] sm:$0xf]
  %v3309 = vld [vmem:[%s3 + $0x20] sm:$0xf]
  %v3310 = vld [vmem:[%s3 + $0x24] sm:$0xf]
  %v3311 = vld [vmem:[%s3 + $0x28] sm:$0xf]
  %v3312 = vld [vmem:[%s3 + $0x2c] sm:$0xf]
  %v3313 = vld [vmem:[%s3 + $0x30] sm:$0xf]
  %v3314 = vld [vmem:[%s3 + $0x34] sm:$0xf]
  %v3315 = vld [vmem:[%s3 + $0x38] sm:$0xf]
  %v3316 = vld [vmem:[%s3 + $0x3c] sm:$0xf]
  %v3317 = vld [vmem:[%s3 + $0x40] sm:$0xf]
  %v3318 = vld [vmem:[%s3 + $0x44] sm:$0xf]
  %v3319 = vld [vmem:[%s3 + $0x48] sm:$0xf]
  %v3320 = vld [vmem:[%s3 + $0x4c] sm:$0xf]
  %v3321 = vld [vmem:[%s3 + $0x50] sm:$0xf]
  %v3322 = vld [vmem:[%s3 + $0x54] sm:$0xf]
  %v3323 = vld [vmem:[%s3 + $0x58] sm:$0xf]
  %v3324 = vld [vmem:[%s3 + $0x5c] sm:$0xf]
  %v3325 = vld [vmem:[%s3 + $0x60] sm:$0xf]
  %v3326 = vld [vmem:[%s3 + $0x64] sm:$0xf]
  %v3327 = vld [vmem:[%s3 + $0x68] sm:$0xf]
  %v3328 = vld [vmem:[%s3 + $0x6c] sm:$0xf]
  %v3329 = vld [vmem:[%s3 + $0x70] sm:$0xf]
  %v3330 = vld [vmem:[%s3 + $0x74] sm:$0xf]
  %v3331 = vld [vmem:[%s3 + $0x78] sm:$0xf]
  %v3332 = vld [vmem:[%s3 + $0x7c] sm:$0xf]
  %v3333 = vld [vmem:[%s3 + $0x80] sm:$0xf]
  %v3334 = vld [vmem:[%s3 + $0x84] sm:$0xf]
  %v3335 = vld [vmem:[%s3 + $0x88] sm:$0xf]
  %v3336 = vld [vmem:[%s3 + $0x8c] sm:$0xf]
  %v3337 = vld [vmem:[%s4] sm:$0x1]
  %v3338 = vmax.f32 %v3047, 0.0
  %v3339 = vmax.f32 %v3050, 0.0
  %v3340 = vmax.f32 %v3055, 0.0
  %v3341 = vmax.f32 %v3058, 0.0
  %v3342 = vmax.f32 %v3063, 0.0
  %v3343 = vmax.f32 %v3066, 0.0
  %v3344 = vmax.f32 %v3071, 0.0
  %v3345 = vmax.f32 %v3074, 0.0
  %v3346 = vmax.f32 %v3079, 0.0
  %v3347 = vmax.f32 %v3082, 0.0
  %v3348 = vmax.f32 %v3087, 0.0
  %v3349 = vmax.f32 %v3090, 0.0
  %v3350 = vmax.f32 %v3095, 0.0
  %v3351 = vmax.f32 %v3098, 0.0
  %v3352 = vmax.f32 %v3103, 0.0
  %v3353 = vmax.f32 %v3106, 0.0
  %v3354 = vmax.f32 %v3111, 0.0
  %v3355 = vmax.f32 %v3114, 0.0
  %v3356 = vmax.f32 %v3119, 0.0
  %v3357 = vmax.f32 %v3122, 0.0
  %v3358 = vmax.f32 %v3127, 0.0
  %v3359 = vmax.f32 %v3130, 0.0
  %v3360 = vmax.f32 %v3135, 0.0
  %v3361 = vmax.f32 %v3138, 0.0
  %v3362 = vmax.f32 %v3143, 0.0
  %v3363 = vmax.f32 %v3146, 0.0
  %v3364 = vmax.f32 %v3151, 0.0
  %v3365 = vmax.f32 %v3154, 0.0
  %v3366 = vmax.f32 %v3159, 0.0
  %v3367 = vmax.f32 %v3162, 0.0
  %v3368 = vmax.f32 %v3167, 0.0
  %v3369 = vmax.f32 %v3170, 0.0
  %v3370 = vmax.f32 %v3175, 0.0
  %v3371 = vmax.f32 %v3178, 0.0
  %v3372 = vmax.f32 %v3183, 0.0
  %v3373 = vmax.f32 %v3186, 0.0
  %v3374 = vmax.f32 %v3191, 0.0
  %v3375 = vmax.f32 %v3194, 0.0
  %v3376 = vmax.f32 %v3199, 0.0
  %v3377 = vmax.f32 %v3202, 0.0
  %v3378 = vmax.f32 %v3207, 0.0
  %v3379 = vmax.f32 %v3210, 0.0
  %v3380 = vmax.f32 %v3215, 0.0
  %v3381 = vmax.f32 %v3218, 0.0
  %v3382 = vmax.f32 %v3223, 0.0
  %v3383 = vmax.f32 %v3226, 0.0
  %v3384 = vmax.f32 %v3231, 0.0
  %v3385 = vmax.f32 %v3234, 0.0
  %v3386 = vmax.f32 %v3239, 0.0
  %v3387 = vmax.f32 %v3242, 0.0
  %v3388 = vmax.f32 %v3247, 0.0
  %v3389 = vmax.f32 %v3250, 0.0
  %v3390 = vmax.f32 %v3255, 0.0
  %v3391 = vmax.f32 %v3258, 0.0
  %v3392 = vmax.f32 %v3263, 0.0
  %v3393 = vmax.f32 %v3266, 0.0
  %v3394 = vmax.f32 %v3271, 0.0
  %v3395 = vmax.f32 %v3274, 0.0
  %v3396 = vmax.f32 %v3279, 0.0
  %v3397 = vmax.f32 %v3282, 0.0
  %v3398 = vmax.f32 %v3287, 0.0
  %v3399 = vmax.f32 %v3290, 0.0
  %v3400 = vmax.f32 %v3295, 0.0
  %v3401 = vmax.f32 %v3298, 0.0
  %v3466 = vrot.slane %v3338, 7
  %v3467 = vrot.slane %v3339, 7
  %v3468 = vsel %vm177, %v3466, %v3467
  %v3469 = vrot.slane %v3340, 7
  %v3470 = vrot.slane %v3341, 7
  %v3471 = vsel %vm177, %v3469, %v3470
  %v3472 = vrot.slane %v3342, 7
  %v3473 = vrot.slane %v3343, 7
  %v3474 = vsel %vm177, %v3472, %v3473
  %v3475 = vrot.slane %v3344, 7
  %v3476 = vrot.slane %v3345, 7
  %v3477 = vsel %vm177, %v3475, %v3476
  %v3478 = vrot.slane %v3346, 7
  %v3479 = vrot.slane %v3347, 7
  %v3480 = vsel %vm177, %v3478, %v3479
  %v3481 = vrot.slane %v3348, 7
  %v3482 = vrot.slane %v3349, 7
  %v3483 = vsel %vm177, %v3481, %v3482
  %v3484 = vrot.slane %v3350, 7
  %v3485 = vrot.slane %v3351, 7
  %v3486 = vsel %vm177, %v3484, %v3485
  %v3487 = vrot.slane %v3352, 7
  %v3488 = vrot.slane %v3353, 7
  %v3489 = vsel %vm177, %v3487, %v3488
  %v3490 = vrot.slane %v3354, 7
  %v3491 = vrot.slane %v3355, 7
  %v3492 = vsel %vm177, %v3490, %v3491
  %v3493 = vrot.slane %v3356, 7
  %v3494 = vrot.slane %v3357, 7
  %v3495 = vsel %vm177, %v3493, %v3494
  %v3496 = vrot.slane %v3358, 7
  %v3497 = vrot.slane %v3359, 7
  %v3498 = vsel %vm177, %v3496, %v3497
  %v3499 = vrot.slane %v3360, 7
  %v3500 = vrot.slane %v3361, 7
  %v3501 = vsel %vm177, %v3499, %v3500
  %v3502 = vrot.slane %v3362, 7
  %v3503 = vrot.slane %v3363, 7
  %v3504 = vsel %vm177, %v3502, %v3503
  %v3505 = vrot.slane %v3364, 7
  %v3506 = vrot.slane %v3365, 7
  %v3507 = vsel %vm177, %v3505, %v3506
  %v3508 = vrot.slane %v3366, 7
  %v3509 = vrot.slane %v3367, 7
  %v3510 = vsel %vm177, %v3508, %v3509
  %v3511 = vrot.slane %v3368, 7
  %v3512 = vrot.slane %v3369, 7
  %v3513 = vsel %vm177, %v3511, %v3512
  %v3514 = vrot.slane %v3370, 7
  %v3515 = vrot.slane %v3371, 7
  %v3516 = vsel %vm177, %v3514, %v3515
  %v3517 = vrot.slane %v3372, 7
  %v3518 = vrot.slane %v3373, 7
  %v3519 = vsel %vm177, %v3517, %v3518
  %v3520 = vrot.slane %v3374, 7
  %v3521 = vrot.slane %v3375, 7
  %v3522 = vsel %vm177, %v3520, %v3521
  %v3523 = vrot.slane %v3376, 7
  %v3524 = vrot.slane %v3377, 7
  %v3525 = vsel %vm177, %v3523, %v3524
  %v3526 = vrot.slane %v3378, 7
  %v3527 = vrot.slane %v3379, 7
  %v3528 = vsel %vm177, %v3526, %v3527
  %v3529 = vrot.slane %v3380, 7
  %v3530 = vrot.slane %v3381, 7
  %v3531 = vsel %vm177, %v3529, %v3530
  %v3532 = vrot.slane %v3382, 7
  %v3533 = vrot.slane %v3383, 7
  %v3534 = vsel %vm177, %v3532, %v3533
  %v3535 = vrot.slane %v3384, 7
  %v3536 = vrot.slane %v3385, 7
  %v3537 = vsel %vm177, %v3535, %v3536
  %v3538 = vrot.slane %v3386, 7
  %v3539 = vrot.slane %v3387, 7
  %v3540 = vsel %vm177, %v3538, %v3539
  %v3541 = vrot.slane %v3388, 7
  %v3542 = vrot.slane %v3389, 7
  %v3543 = vsel %vm177, %v3541, %v3542
  %v3544 = vrot.slane %v3390, 7
  %v3545 = vrot.slane %v3391, 7
  %v3546 = vsel %vm177, %v3544, %v3545
  %v3547 = vrot.slane %v3392, 7
  %v3548 = vrot.slane %v3393, 7
  %v3549 = vsel %vm177, %v3547, %v3548
  %v3550 = vrot.slane %v3394, 7
  %v3551 = vrot.slane %v3395, 7
  %v3552 = vsel %vm177, %v3550, %v3551
  %v3553 = vrot.slane %v3396, 7
  %v3554 = vrot.slane %v3397, 7
  %v3555 = vsel %vm177, %v3553, %v3554
  %v3556 = vrot.slane %v3398, 7
  %v3557 = vrot.slane %v3399, 7
  %v3558 = vsel %vm177, %v3556, %v3557
  %v3559 = vrot.slane %v3400, 7
  %v3560 = vrot.slane %v3401, 7
  %v3561 = vsel %vm177, %v3559, %v3560
  %v3656 = vsel %vm177, 0.0, %v3466
  %v3657 = vsel %vm177, 0.0, %v3469
  %v3658 = vsel %vm177, 0.0, %v3472
  %v3659 = vsel %vm177, 0.0, %v3475
  %v3660 = vsel %vm177, 0.0, %v3478
  %v3661 = vsel %vm177, 0.0, %v3481
  %v3662 = vsel %vm177, 0.0, %v3484
  %v3663 = vsel %vm177, 0.0, %v3487
  %v3664 = vsel %vm177, 0.0, %v3490
  %v3665 = vsel %vm177, 0.0, %v3493
  %v3666 = vsel %vm177, 0.0, %v3496
  %v3667 = vsel %vm177, 0.0, %v3499
  %v3668 = vsel %vm177, 0.0, %v3502
  %v3669 = vsel %vm177, 0.0, %v3505
  %v3670 = vsel %vm177, 0.0, %v3508
  %v3671 = vsel %vm177, 0.0, %v3511
  %v3672 = vsel %vm177, 0.0, %v3514
  %v3673 = vsel %vm177, 0.0, %v3517
  %v3674 = vsel %vm177, 0.0, %v3520
  %v3675 = vsel %vm177, 0.0, %v3523
  %v3676 = vsel %vm177, 0.0, %v3526
  %v3677 = vsel %vm177, 0.0, %v3529
  %v3678 = vsel %vm177, 0.0, %v3532
  %v3679 = vsel %vm177, 0.0, %v3535
  %v3680 = vsel %vm177, 0.0, %v3538
  %v3681 = vsel %vm177, 0.0, %v3541
  %v3682 = vsel %vm177, 0.0, %v3544
  %v3683 = vsel %vm177, 0.0, %v3547
  %v3684 = vsel %vm177, 0.0, %v3550
  %v3685 = vsel %vm177, 0.0, %v3553
  %v3686 = vsel %vm177, 0.0, %v3556
  %v3687 = vsel %vm177, 0.0, %v3559
  %v3688 = vsel %vm177, %v3467, 0.0
  %v3689 = vsel %vm177, %v3470, 0.0
  %v3690 = vsel %vm177, %v3473, 0.0
  %v3691 = vsel %vm177, %v3476, 0.0
  %v3692 = vsel %vm177, %v3479, 0.0
  %v3693 = vsel %vm177, %v3482, 0.0
  %v3694 = vsel %vm177, %v3485, 0.0
  %v3695 = vsel %vm177, %v3488, 0.0
  %v3696 = vsel %vm177, %v3491, 0.0
  %v3697 = vsel %vm177, %v3494, 0.0
  %v3698 = vsel %vm177, %v3497, 0.0
  %v3699 = vsel %vm177, %v3500, 0.0
  %v3700 = vsel %vm177, %v3503, 0.0
  %v3701 = vsel %vm177, %v3506, 0.0
  %v3702 = vsel %vm177, %v3509, 0.0
  %v3703 = vsel %vm177, %v3512, 0.0
  %v3704 = vsel %vm177, %v3515, 0.0
  %v3705 = vsel %vm177, %v3518, 0.0
  %v3706 = vsel %vm177, %v3521, 0.0
  %v3707 = vsel %vm177, %v3524, 0.0
  %v3708 = vsel %vm177, %v3527, 0.0
  %v3709 = vsel %vm177, %v3530, 0.0
  %v3710 = vsel %vm177, %v3533, 0.0
  %v3711 = vsel %vm177, %v3536, 0.0
  %v3712 = vsel %vm177, %v3539, 0.0
  %v3713 = vsel %vm177, %v3542, 0.0
  %v3714 = vsel %vm177, %v3545, 0.0
  %v3715 = vsel %vm177, %v3548, 0.0
  %v3716 = vsel %vm177, %v3551, 0.0
  %v3717 = vsel %vm177, %v3554, 0.0
  %v3718 = vsel %vm177, %v3557, 0.0
  %v3719 = vsel %vm177, %v3560, 0.0
  %v3780 = vrot.slane %v3656, 1
  %v3781 = vrot.slane %v3468, 1
  %v3782 = vsel %vm500, %v3780, %v3781
  %v3783 = vrot.slane %v3688, 1
  %v3784 = vsel %vm500, %v3781, %v3783
  %v3785 = vrot.slane %v3657, 1
  %v3786 = vrot.slane %v3471, 1
  %v3787 = vsel %vm500, %v3785, %v3786
  %v3788 = vrot.slane %v3689, 1
  %v3789 = vsel %vm500, %v3786, %v3788
  %v3790 = vrot.slane %v3658, 1
  %v3791 = vrot.slane %v3474, 1
  %v3792 = vsel %vm500, %v3790, %v3791
  %v3793 = vrot.slane %v3690, 1
  %v3794 = vsel %vm500, %v3791, %v3793
  %v3795 = vrot.slane %v3659, 1
  %v3796 = vrot.slane %v3477, 1
  %v3797 = vsel %vm500, %v3795, %v3796
  %v3798 = vrot.slane %v3691, 1
  %v3799 = vsel %vm500, %v3796, %v3798
  %v3800 = vrot.slane %v3660, 1
  %v3801 = vrot.slane %v3480, 1
  %v3802 = vsel %vm500, %v3800, %v3801
  %v3803 = vrot.slane %v3692, 1
  %v3804 = vsel %vm500, %v3801, %v3803
  %v3805 = vrot.slane %v3661, 1
  %v3806 = vrot.slane %v3483, 1
  %v3807 = vsel %vm500, %v3805, %v3806
  %v3808 = vrot.slane %v3693, 1
  %v3809 = vsel %vm500, %v3806, %v3808
  %v3810 = vrot.slane %v3662, 1
  %v3811 = vrot.slane %v3486, 1
  %v3812 = vsel %vm500, %v3810, %v3811
  %v3813 = vrot.slane %v3694, 1
  %v3814 = vsel %vm500, %v3811, %v3813
  %v3815 = vrot.slane %v3663, 1
  %v3816 = vrot.slane %v3489, 1
  %v3817 = vsel %vm500, %v3815, %v3816
  %v3818 = vrot.slane %v3695, 1
  %v3819 = vsel %vm500, %v3816, %v3818
  %v3820 = vrot.slane %v3664, 1
  %v3821 = vrot.slane %v3492, 1
  %v3822 = vsel %vm500, %v3820, %v3821
  %v3823 = vrot.slane %v3696, 1
  %v3824 = vsel %vm500, %v3821, %v3823
  %v3825 = vrot.slane %v3665, 1
  %v3826 = vrot.slane %v3495, 1
  %v3827 = vsel %vm500, %v3825, %v3826
  %v3828 = vrot.slane %v3697, 1
  %v3829 = vsel %vm500, %v3826, %v3828
  %v3830 = vrot.slane %v3666, 1
  %v3831 = vrot.slane %v3498, 1
  %v3832 = vsel %vm500, %v3830, %v3831
  %v3833 = vrot.slane %v3698, 1
  %v3834 = vsel %vm500, %v3831, %v3833
  %v3835 = vrot.slane %v3667, 1
  %v3836 = vrot.slane %v3501, 1
  %v3837 = vsel %vm500, %v3835, %v3836
  %v3838 = vrot.slane %v3699, 1
  %v3839 = vsel %vm500, %v3836, %v3838
  %v3840 = vrot.slane %v3668, 1
  %v3841 = vrot.slane %v3504, 1
  %v3842 = vsel %vm500, %v3840, %v3841
  %v3843 = vrot.slane %v3700, 1
  %v3844 = vsel %vm500, %v3841, %v3843
  %v3845 = vrot.slane %v3669, 1
  %v3846 = vrot.slane %v3507, 1
  %v3847 = vsel %vm500, %v3845, %v3846
  %v3848 = vrot.slane %v3701, 1
  %v3849 = vsel %vm500, %v3846, %v3848
  %v3850 = vrot.slane %v3670, 1
  %v3851 = vrot.slane %v3510, 1
  %v3852 = vsel %vm500, %v3850, %v3851
  %v3853 = vrot.slane %v3702, 1
  %v3854 = vsel %vm500, %v3851, %v3853
  %v3855 = vrot.slane %v3672, 1
  %v3856 = vrot.slane %v3516, 1
  %v3857 = vsel %vm500, %v3855, %v3856
  %v3858 = vrot.slane %v3704, 1
  %v3859 = vsel %vm500, %v3856, %v3858
  %v3860 = vrot.slane %v3673, 1
  %v3861 = vrot.slane %v3519, 1
  %v3862 = vsel %vm500, %v3860, %v3861
  %v3863 = vrot.slane %v3705, 1
  %v3864 = vsel %vm500, %v3861, %v3863
  %v3865 = vrot.slane %v3674, 1
  %v3866 = vrot.slane %v3522, 1
  %v3867 = vsel %vm500, %v3865, %v3866
  %v3868 = vrot.slane %v3706, 1
  %v3869 = vsel %vm500, %v3866, %v3868
  %v3870 = vrot.slane %v3675, 1
  %v3871 = vrot.slane %v3525, 1
  %v3872 = vsel %vm500, %v3870, %v3871
  %v3873 = vrot.slane %v3707, 1
  %v3874 = vsel %vm500, %v3871, %v3873
  %v3875 = vrot.slane %v3676, 1
  %v3876 = vrot.slane %v3528, 1
  %v3877 = vsel %vm500, %v3875, %v3876
  %v3878 = vrot.slane %v3708, 1
  %v3879 = vsel %vm500, %v3876, %v3878
  %v3880 = vrot.slane %v3677, 1
  %v3881 = vrot.slane %v3531, 1
  %v3882 = vsel %vm500, %v3880, %v3881
  %v3883 = vrot.slane %v3709, 1
  %v3884 = vsel %vm500, %v3881, %v3883
  %v3885 = vrot.slane %v3678, 1
  %v3886 = vrot.slane %v3534, 1
  %v3887 = vsel %vm500, %v3885, %v3886
  %v3888 = vrot.slane %v3710, 1
  %v3889 = vsel %vm500, %v3886, %v3888
  %v3890 = vrot.slane %v3679, 1
  %v3891 = vrot.slane %v3537, 1
  %v3892 = vsel %vm500, %v3890, %v3891
  %v3893 = vrot.slane %v3711, 1
  %v3894 = vsel %vm500, %v3891, %v3893
  %v3895 = vrot.slane %v3680, 1
  %v3896 = vrot.slane %v3540, 1
  %v3897 = vsel %vm500, %v3895, %v3896
  %v3898 = vrot.slane %v3712, 1
  %v3899 = vsel %vm500, %v3896, %v3898
  %v3900 = vrot.slane %v3681, 1
  %v3901 = vrot.slane %v3543, 1
  %v3902 = vsel %vm500, %v3900, %v3901
  %v3903 = vrot.slane %v3713, 1
  %v3904 = vsel %vm500, %v3901, %v3903
  %v3905 = vrot.slane %v3682, 1
  %v3906 = vrot.slane %v3546, 1
  %v3907 = vsel %vm500, %v3905, %v3906
  %v3908 = vrot.slane %v3714, 1
  %v3909 = vsel %vm500, %v3906, %v3908
  %v3910 = vrot.slane %v3683, 1
  %v3911 = vrot.slane %v3549, 1
  %v3912 = vsel %vm500, %v3910, %v3911
  %v3913 = vrot.slane %v3715, 1
  %v3914 = vsel %vm500, %v3911, %v3913
  %v3915 = vrot.slane %v3684, 1
  %v3916 = vrot.slane %v3552, 1
  %v3917 = vsel %vm500, %v3915, %v3916
  %v3918 = vrot.slane %v3716, 1
  %v3919 = vsel %vm500, %v3916, %v3918
  %v3920 = vrot.slane %v3685, 1
  %v3921 = vrot.slane %v3555, 1
  %v3922 = vsel %vm500, %v3920, %v3921
  %v3923 = vrot.slane %v3717, 1
  %v3924 = vsel %vm500, %v3921, %v3923
  %v3925 = vrot.slane %v3686, 1
  %v3926 = vrot.slane %v3558, 1
  %v3927 = vsel %vm500, %v3925, %v3926
  %v3928 = vrot.slane %v3718, 1
  %v3929 = vsel %vm500, %v3926, %v3928
  %3930 = vrot.lane.b32.xlu0 %v503, 32
  %v3931 = vpop.permute.xlu0 %3930
  %3932 = vrot.lane.b32.xlu0 %v505, 32
  %v3933 = vpop.permute.xlu0 %3932
  %3934 = vrot.lane.b32.xlu0 %v3782, 32
  %v3935 = vpop.permute.xlu0 %3934
  %3936 = vrot.lane.b32.xlu0 %v3784, 32
  %v3937 = vpop.permute.xlu0 %3936
  %3938 = vrot.lane.b32.xlu0 %v3787, 32
  %v3939 = vpop.permute.xlu0 %3938
  %3940 = vrot.lane.b32.xlu0 %v3789, 32
  %v3941 = vpop.permute.xlu0 %3940
  %3942 = vrot.lane.b32.xlu0 %v3792, 32
  %v3943 = vpop.permute.xlu0 %3942
  %3944 = vrot.lane.b32.xlu0 %v3794, 32
  %v3945 = vpop.permute.xlu0 %3944
  %3946 = vrot.lane.b32.xlu0 %v3797, 32
  %v3947 = vpop.permute.xlu0 %3946
  %3948 = vrot.lane.b32.xlu0 %v3799, 32
  %v3949 = vpop.permute.xlu0 %3948
  %3950 = vrot.lane.b32.xlu0 %v3802, 32
  %v3951 = vpop.permute.xlu0 %3950
  %3952 = vrot.lane.b32.xlu0 %v3804, 32
  %v3953 = vpop.permute.xlu0 %3952
  %3954 = vrot.lane.b32.xlu0 %v3807, 32
  %v3955 = vpop.permute.xlu0 %3954
  %3956 = vrot.lane.b32.xlu0 %v3809, 32
  %v3957 = vpop.permute.xlu0 %3956
  %3958 = vrot.lane.b32.xlu0 %v3812, 32
  %v3959 = vpop.permute.xlu0 %3958
  %3960 = vrot.lane.b32.xlu0 %v3814, 32
  %v3961 = vpop.permute.xlu0 %3960
  %3962 = vrot.lane.b32.xlu0 %v3817, 32
  %v3963 = vpop.permute.xlu0 %3962
  %3964 = vrot.lane.b32.xlu0 %v3819, 32
  %v3965 = vpop.permute.xlu0 %3964
  %3966 = vrot.lane.b32.xlu0 %v3822, 32
  %v3967 = vpop.permute.xlu0 %3966
  %3968 = vrot.lane.b32.xlu0 %v3824, 32
  %v3969 = vpop.permute.xlu0 %3968
  %3970 = vrot.lane.b32.xlu0 %v3827, 32
  %v3971 = vpop.permute.xlu0 %3970
  %3972 = vrot.lane.b32.xlu0 %v3829, 32
  %v3973 = vpop.permute.xlu0 %3972
  %3974 = vrot.lane.b32.xlu0 %v3832, 32
  %v3975 = vpop.permute.xlu0 %3974
  %3976 = vrot.lane.b32.xlu0 %v3834, 32
  %v3977 = vpop.permute.xlu0 %3976
  %3978 = vrot.lane.b32.xlu0 %v3837, 32
  %v3979 = vpop.permute.xlu0 %3978
  %3980 = vrot.lane.b32.xlu0 %v3839, 32
  %v3981 = vpop.permute.xlu0 %3980
  %3982 = vrot.lane.b32.xlu0 %v3842, 32
  %v3983 = vpop.permute.xlu0 %3982
  %3984 = vrot.lane.b32.xlu0 %v3844, 32
  %v3985 = vpop.permute.xlu0 %3984
  %3986 = vrot.lane.b32.xlu0 %v3847, 32
  %v3987 = vpop.permute.xlu0 %3986
  %3988 = vrot.lane.b32.xlu0 %v3849, 32
  %v3989 = vpop.permute.xlu0 %3988
  %3990 = vrot.lane.b32.xlu0 %v3852, 32
  %v3991 = vpop.permute.xlu0 %3990
  %3992 = vrot.lane.b32.xlu0 %v3854, 32
  %v3993 = vpop.permute.xlu0 %3992
  %3994 = vrot.lane.b32.xlu0 %v3857, 32
  %v3995 = vpop.permute.xlu0 %3994
  %3996 = vrot.lane.b32.xlu0 %v3859, 32
  %v3997 = vpop.permute.xlu0 %3996
  %3998 = vrot.lane.b32.xlu0 %v3862, 32
  %v3999 = vpop.permute.xlu0 %3998
  %4000 = vrot.lane.b32.xlu0 %v3864, 32
  %v4001 = vpop.permute.xlu0 %4000
  %4002 = vrot.lane.b32.xlu0 %v3867, 32
  %v4003 = vpop.permute.xlu0 %4002
  %4004 = vrot.lane.b32.xlu0 %v3869, 32
  %v4005 = vpop.permute.xlu0 %4004
  %4006 = vrot.lane.b32.xlu0 %v3872, 32
  %v4007 = vpop.permute.xlu0 %4006
  %4008 = vrot.lane.b32.xlu0 %v3874, 32
  %v4009 = vpop.permute.xlu0 %4008
  %4010 = vrot.lane.b32.xlu0 %v3877, 32
  %v4011 = vpop.permute.xlu0 %4010
  %4012 = vrot.lane.b32.xlu0 %v3879, 32
  %v4013 = vpop.permute.xlu0 %4012
  %4014 = vrot.lane.b32.xlu0 %v3882, 32
  %v4015 = vpop.permute.xlu0 %4014
  %4016 = vrot.lane.b32.xlu0 %v3884, 32
  %v4017 = vpop.permute.xlu0 %4016
  %4018 = vrot.lane.b32.xlu0 %v3887, 32
  %v4019 = vpop.permute.xlu0 %4018
  %4020 = vrot.lane.b32.xlu0 %v3889, 32
  %v4021 = vpop.permute.xlu0 %4020
  %4022 = vrot.lane.b32.xlu0 %v3892, 32
  %v4023 = vpop.permute.xlu0 %4022
  %4024 = vrot.lane.b32.xlu0 %v3894, 32
  %v4025 = vpop.permute.xlu0 %4024
  %4026 = vrot.lane.b32.xlu0 %v3897, 32
  %v4027 = vpop.permute.xlu0 %4026
  %4028 = vrot.lane.b32.xlu0 %v3899, 32
  %v4029 = vpop.permute.xlu0 %4028
  %4030 = vrot.lane.b32.xlu0 %v3902, 32
  %v4031 = vpop.permute.xlu0 %4030
  %4032 = vrot.lane.b32.xlu0 %v3904, 32
  %v4033 = vpop.permute.xlu0 %4032
  %4034 = vrot.lane.b32.xlu0 %v3907, 32
  %v4035 = vpop.permute.xlu0 %4034
  %4036 = vrot.lane.b32.xlu0 %v3909, 32
  %v4037 = vpop.permute.xlu0 %4036
  %4038 = vrot.lane.b32.xlu0 %v3912, 32
  %v4039 = vpop.permute.xlu0 %4038
  %4040 = vrot.lane.b32.xlu0 %v3914, 32
  %v4041 = vpop.permute.xlu0 %4040
  %4042 = vrot.lane.b32.xlu0 %v3917, 32
  %v4043 = vpop.permute.xlu0 %4042
  %4044 = vrot.lane.b32.xlu0 %v3919, 32
  %v4045 = vpop.permute.xlu0 %4044
  %4046 = vrot.lane.b32.xlu0 %v3922, 32
  %v4047 = vpop.permute.xlu0 %4046
  %4048 = vrot.lane.b32.xlu0 %v3924, 32
  %v4049 = vpop.permute.xlu0 %4048
  %4050 = vrot.lane.b32.xlu0 %v3927, 32
  %v4051 = vpop.permute.xlu0 %4050
  %4052 = vrot.lane.b32.xlu0 %v3929, 32
  %v4053 = vpop.permute.xlu0 %4052
  %v4116 = vrot.slane %v3656, 2
  %v4117 = vrot.slane %v3468, 2
  %v4118 = vsel %vm842, %v4116, %v4117
  %v4119 = vrot.slane %v3688, 2
  %v4120 = vsel %vm842, %v4117, %v4119
  %v4121 = vrot.slane %v3657, 2
  %v4122 = vrot.slane %v3471, 2
  %v4123 = vsel %vm842, %v4121, %v4122
  %v4124 = vrot.slane %v3689, 2
  %v4125 = vsel %vm842, %v4122, %v4124
  %v4126 = vrot.slane %v3658, 2
  %v4127 = vrot.slane %v3474, 2
  %v4128 = vsel %vm842, %v4126, %v4127
  %v4129 = vrot.slane %v3690, 2
  %v4130 = vsel %vm842, %v4127, %v4129
  %v4131 = vrot.slane %v3659, 2
  %v4132 = vrot.slane %v3477, 2
  %v4133 = vsel %vm842, %v4131, %v4132
  %v4134 = vrot.slane %v3691, 2
  %v4135 = vsel %vm842, %v4132, %v4134
  %v4136 = vrot.slane %v3660, 2
  %v4137 = vrot.slane %v3480, 2
  %v4138 = vsel %vm842, %v4136, %v4137
  %v4139 = vrot.slane %v3692, 2
  %v4140 = vsel %vm842, %v4137, %v4139
  %v4141 = vrot.slane %v3661, 2
  %v4142 = vrot.slane %v3483, 2
  %v4143 = vsel %vm842, %v4141, %v4142
  %v4144 = vrot.slane %v3693, 2
  %v4145 = vsel %vm842, %v4142, %v4144
  %v4146 = vrot.slane %v3662, 2
  %v4147 = vrot.slane %v3486, 2
  %v4148 = vsel %vm842, %v4146, %v4147
  %v4149 = vrot.slane %v3694, 2
  %v4150 = vsel %vm842, %v4147, %v4149
  %v4151 = vrot.slane %v3663, 2
  %v4152 = vrot.slane %v3489, 2
  %v4153 = vsel %vm842, %v4151, %v4152
  %v4154 = vrot.slane %v3695, 2
  %v4155 = vsel %vm842, %v4152, %v4154
  %v4156 = vrot.slane %v3664, 2
  %v4157 = vrot.slane %v3492, 2
  %v4158 = vsel %vm842, %v4156, %v4157
  %v4159 = vrot.slane %v3696, 2
  %v4160 = vsel %vm842, %v4157, %v4159
  %v4161 = vrot.slane %v3665, 2
  %v4162 = vrot.slane %v3495, 2
  %v4163 = vsel %vm842, %v4161, %v4162
  %v4164 = vrot.slane %v3697, 2
  %v4165 = vsel %vm842, %v4162, %v4164
  %v4166 = vrot.slane %v3666, 2
  %v4167 = vrot.slane %v3498, 2
  %v4168 = vsel %vm842, %v4166, %v4167
  %v4169 = vrot.slane %v3698, 2
  %v4170 = vsel %vm842, %v4167, %v4169
  %v4171 = vrot.slane %v3667, 2
  %v4172 = vrot.slane %v3501, 2
  %v4173 = vsel %vm842, %v4171, %v4172
  %v4174 = vrot.slane %v3699, 2
  %v4175 = vsel %vm842, %v4172, %v4174
  %v4176 = vrot.slane %v3668, 2
  %v4177 = vrot.slane %v3504, 2
  %v4178 = vsel %vm842, %v4176, %v4177
  %v4179 = vrot.slane %v3700, 2
  %v4180 = vsel %vm842, %v4177, %v4179
  %v4181 = vrot.slane %v3669, 2
  %v4182 = vrot.slane %v3507, 2
  %v4183 = vsel %vm842, %v4181, %v4182
  %v4184 = vrot.slane %v3701, 2
  %v4185 = vsel %vm842, %v4182, %v4184
  %v4186 = vrot.slane %v3670, 2
  %v4187 = vrot.slane %v3510, 2
  %v4188 = vsel %vm842, %v4186, %v4187
  %v4189 = vrot.slane %v3702, 2
  %v4190 = vsel %vm842, %v4187, %v4189
  %v4191 = vrot.slane %v3672, 2
  %v4192 = vrot.slane %v3516, 2
  %v4193 = vsel %vm842, %v4191, %v4192
  %v4194 = vrot.slane %v3704, 2
  %v4195 = vsel %vm842, %v4192, %v4194
  %v4196 = vrot.slane %v3673, 2
  %v4197 = vrot.slane %v3519, 2
  %v4198 = vsel %vm842, %v4196, %v4197
  %v4199 = vrot.slane %v3705, 2
  %v4200 = vsel %vm842, %v4197, %v4199
  %v4201 = vrot.slane %v3674, 2
  %v4202 = vrot.slane %v3522, 2
  %v4203 = vsel %vm842, %v4201, %v4202
  %v4204 = vrot.slane %v3706, 2
  %v4205 = vsel %vm842, %v4202, %v4204
  %v4206 = vrot.slane %v3675, 2
  %v4207 = vrot.slane %v3525, 2
  %v4208 = vsel %vm842, %v4206, %v4207
  %v4209 = vrot.slane %v3707, 2
  %v4210 = vsel %vm842, %v4207, %v4209
  %v4211 = vrot.slane %v3676, 2
  %v4212 = vrot.slane %v3528, 2
  %v4213 = vsel %vm842, %v4211, %v4212
  %v4214 = vrot.slane %v3708, 2
  %v4215 = vsel %vm842, %v4212, %v4214
  %v4216 = vrot.slane %v3677, 2
  %v4217 = vrot.slane %v3531, 2
  %v4218 = vsel %vm842, %v4216, %v4217
  %v4219 = vrot.slane %v3709, 2
  %v4220 = vsel %vm842, %v4217, %v4219
  %v4221 = vrot.slane %v3678, 2
  %v4222 = vrot.slane %v3534, 2
  %v4223 = vsel %vm842, %v4221, %v4222
  %v4224 = vrot.slane %v3710, 2
  %v4225 = vsel %vm842, %v4222, %v4224
  %v4226 = vrot.slane %v3679, 2
  %v4227 = vrot.slane %v3537, 2
  %v4228 = vsel %vm842, %v4226, %v4227
  %v4229 = vrot.slane %v3711, 2
  %v4230 = vsel %vm842, %v4227, %v4229
  %v4231 = vrot.slane %v3680, 2
  %v4232 = vrot.slane %v3540, 2
  %v4233 = vsel %vm842, %v4231, %v4232
  %v4234 = vrot.slane %v3712, 2
  %v4235 = vsel %vm842, %v4232, %v4234
  %v4236 = vrot.slane %v3681, 2
  %v4237 = vrot.slane %v3543, 2
  %v4238 = vsel %vm842, %v4236, %v4237
  %v4239 = vrot.slane %v3713, 2
  %v4240 = vsel %vm842, %v4237, %v4239
  %v4241 = vrot.slane %v3682, 2
  %v4242 = vrot.slane %v3546, 2
  %v4243 = vsel %vm842, %v4241, %v4242
  %v4244 = vrot.slane %v3714, 2
  %v4245 = vsel %vm842, %v4242, %v4244
  %v4246 = vrot.slane %v3683, 2
  %v4247 = vrot.slane %v3549, 2
  %v4248 = vsel %vm842, %v4246, %v4247
  %v4249 = vrot.slane %v3715, 2
  %v4250 = vsel %vm842, %v4247, %v4249
  %v4251 = vrot.slane %v3684, 2
  %v4252 = vrot.slane %v3552, 2
  %v4253 = vsel %vm842, %v4251, %v4252
  %v4254 = vrot.slane %v3716, 2
  %v4255 = vsel %vm842, %v4252, %v4254
  %v4256 = vrot.slane %v3685, 2
  %v4257 = vrot.slane %v3555, 2
  %v4258 = vsel %vm842, %v4256, %v4257
  %v4259 = vrot.slane %v3717, 2
  %v4260 = vsel %vm842, %v4257, %v4259
  %v4261 = vrot.slane %v3686, 2
  %v4262 = vrot.slane %v3558, 2
  %v4263 = vsel %vm842, %v4261, %v4262
  %v4264 = vrot.slane %v3718, 2
  %v4265 = vsel %vm842, %v4262, %v4264
  %4266 = vrot.lane.b32.xlu0 %v845, 64
  %v4267 = vpop.permute.xlu0 %4266
  %4268 = vrot.lane.b32.xlu0 %v847, 64
  %v4269 = vpop.permute.xlu0 %4268
  %4270 = vrot.lane.b32.xlu0 %v4118, 64
  %v4271 = vpop.permute.xlu0 %4270
  %4272 = vrot.lane.b32.xlu0 %v4120, 64
  %v4273 = vpop.permute.xlu0 %4272
  %4274 = vrot.lane.b32.xlu0 %v4123, 64
  %v4275 = vpop.permute.xlu0 %4274
  %4276 = vrot.lane.b32.xlu0 %v4125, 64
  %v4277 = vpop.permute.xlu0 %4276
  %4278 = vrot.lane.b32.xlu0 %v4128, 64
  %v4279 = vpop.permute.xlu0 %4278
  %4280 = vrot.lane.b32.xlu0 %v4130, 64
  %v4281 = vpop.permute.xlu0 %4280
  %4282 = vrot.lane.b32.xlu0 %v4133, 64
  %v4283 = vpop.permute.xlu0 %4282
  %4284 = vrot.lane.b32.xlu0 %v4135, 64
  %v4285 = vpop.permute.xlu0 %4284
  %4286 = vrot.lane.b32.xlu0 %v4138, 64
  %v4287 = vpop.permute.xlu0 %4286
  %4288 = vrot.lane.b32.xlu0 %v4140, 64
  %v4289 = vpop.permute.xlu0 %4288
  %4290 = vrot.lane.b32.xlu0 %v4143, 64
  %v4291 = vpop.permute.xlu0 %4290
  %4292 = vrot.lane.b32.xlu0 %v4145, 64
  %v4293 = vpop.permute.xlu0 %4292
  %4294 = vrot.lane.b32.xlu0 %v4148, 64
  %v4295 = vpop.permute.xlu0 %4294
  %4296 = vrot.lane.b32.xlu0 %v4150, 64
  %v4297 = vpop.permute.xlu0 %4296
  %4298 = vrot.lane.b32.xlu0 %v4153, 64
  %v4299 = vpop.permute.xlu0 %4298
  %4300 = vrot.lane.b32.xlu0 %v4155, 64
  %v4301 = vpop.permute.xlu0 %4300
  %4302 = vrot.lane.b32.xlu0 %v4158, 64
  %v4303 = vpop.permute.xlu0 %4302
  %4304 = vrot.lane.b32.xlu0 %v4160, 64
  %v4305 = vpop.permute.xlu0 %4304
  %4306 = vrot.lane.b32.xlu0 %v4163, 64
  %v4307 = vpop.permute.xlu0 %4306
  %4308 = vrot.lane.b32.xlu0 %v4165, 64
  %v4309 = vpop.permute.xlu0 %4308
  %4310 = vrot.lane.b32.xlu0 %v4168, 64
  %v4311 = vpop.permute.xlu0 %4310
  %4312 = vrot.lane.b32.xlu0 %v4170, 64
  %v4313 = vpop.permute.xlu0 %4312
  %4314 = vrot.lane.b32.xlu0 %v4173, 64
  %v4315 = vpop.permute.xlu0 %4314
  %4316 = vrot.lane.b32.xlu0 %v4175, 64
  %v4317 = vpop.permute.xlu0 %4316
  %4318 = vrot.lane.b32.xlu0 %v4178, 64
  %v4319 = vpop.permute.xlu0 %4318
  %4320 = vrot.lane.b32.xlu0 %v4180, 64
  %v4321 = vpop.permute.xlu0 %4320
  %4322 = vrot.lane.b32.xlu0 %v4183, 64
  %v4323 = vpop.permute.xlu0 %4322
  %4324 = vrot.lane.b32.xlu0 %v4185, 64
  %v4325 = vpop.permute.xlu0 %4324
  %4326 = vrot.lane.b32.xlu0 %v4188, 64
  %v4327 = vpop.permute.xlu0 %4326
  %4328 = vrot.lane.b32.xlu0 %v4190, 64
  %v4329 = vpop.permute.xlu0 %4328
  %4330 = vrot.lane.b32.xlu0 %v4193, 64
  %v4331 = vpop.permute.xlu0 %4330
  %4332 = vrot.lane.b32.xlu0 %v4195, 64
  %v4333 = vpop.permute.xlu0 %4332
  %4334 = vrot.lane.b32.xlu0 %v4198, 64
  %v4335 = vpop.permute.xlu0 %4334
  %4336 = vrot.lane.b32.xlu0 %v4200, 64
  %v4337 = vpop.permute.xlu0 %4336
  %4338 = vrot.lane.b32.xlu0 %v4203, 64
  %v4339 = vpop.permute.xlu0 %4338
  %4340 = vrot.lane.b32.xlu0 %v4205, 64
  %v4341 = vpop.permute.xlu0 %4340
  %4342 = vrot.lane.b32.xlu0 %v4208, 64
  %v4343 = vpop.permute.xlu0 %4342
  %4344 = vrot.lane.b32.xlu0 %v4210, 64
  %v4345 = vpop.permute.xlu0 %4344
  %4346 = vrot.lane.b32.xlu0 %v4213, 64
  %v4347 = vpop.permute.xlu0 %4346
  %4348 = vrot.lane.b32.xlu0 %v4215, 64
  %v4349 = vpop.permute.xlu0 %4348
  %4350 = vrot.lane.b32.xlu0 %v4218, 64
  %v4351 = vpop.permute.xlu0 %4350
  %4352 = vrot.lane.b32.xlu0 %v4220, 64
  %v4353 = vpop.permute.xlu0 %4352
  %4354 = vrot.lane.b32.xlu0 %v4223, 64
  %v4355 = vpop.permute.xlu0 %4354
  %4356 = vrot.lane.b32.xlu0 %v4225, 64
  %v4357 = vpop.permute.xlu0 %4356
  %4358 = vrot.lane.b32.xlu0 %v4228, 64
  %v4359 = vpop.permute.xlu0 %4358
  %4360 = vrot.lane.b32.xlu0 %v4230, 64
  %v4361 = vpop.permute.xlu0 %4360
  %4362 = vrot.lane.b32.xlu0 %v4233, 64
  %v4363 = vpop.permute.xlu0 %4362
  %4364 = vrot.lane.b32.xlu0 %v4235, 64
  %v4365 = vpop.permute.xlu0 %4364
  %4366 = vrot.lane.b32.xlu0 %v4238, 64
  %v4367 = vpop.permute.xlu0 %4366
  %4368 = vrot.lane.b32.xlu0 %v4240, 64
  %v4369 = vpop.permute.xlu0 %4368
  %4370 = vrot.lane.b32.xlu0 %v4243, 64
  %v4371 = vpop.permute.xlu0 %4370
  %4372 = vrot.lane.b32.xlu0 %v4245, 64
  %v4373 = vpop.permute.xlu0 %4372
  %4374 = vrot.lane.b32.xlu0 %v4248, 64
  %v4375 = vpop.permute.xlu0 %4374
  %4376 = vrot.lane.b32.xlu0 %v4250, 64
  %v4377 = vpop.permute.xlu0 %4376
  %4378 = vrot.lane.b32.xlu0 %v4253, 64
  %v4379 = vpop.permute.xlu0 %4378
  %4380 = vrot.lane.b32.xlu0 %v4255, 64
  %v4381 = vpop.permute.xlu0 %4380
  %4382 = vrot.lane.b32.xlu0 %v4258, 64
  %v4383 = vpop.permute.xlu0 %4382
  %4384 = vrot.lane.b32.xlu0 %v4260, 64
  %v4385 = vpop.permute.xlu0 %4384
  %4386 = vrot.lane.b32.xlu0 %v4263, 64
  %v4387 = vpop.permute.xlu0 %4386
  %4388 = vrot.lane.b32.xlu0 %v4265, 64
  %v4389 = vpop.permute.xlu0 %4388
  %4454 = vrot.lane.b32.xlu0 %v3656, 96
  %v4455 = vpop.permute.xlu0 %4454
  %4456 = vrot.lane.b32.xlu0 %v3468, 96
  %v4457 = vpop.permute.xlu0 %4456
  %4458 = vrot.lane.b32.xlu0 %v3657, 96
  %v4459 = vpop.permute.xlu0 %4458
  %4460 = vrot.lane.b32.xlu0 %v3471, 96
  %v4461 = vpop.permute.xlu0 %4460
  %4462 = vrot.lane.b32.xlu0 %v3658, 96
  %v4463 = vpop.permute.xlu0 %4462
  %4464 = vrot.lane.b32.xlu0 %v3474, 96
  %v4465 = vpop.permute.xlu0 %4464
  %4466 = vrot.lane.b32.xlu0 %v3659, 96
  %v4467 = vpop.permute.xlu0 %4466
  %4468 = vrot.lane.b32.xlu0 %v3477, 96
  %v4469 = vpop.permute.xlu0 %4468
  %4470 = vrot.lane.b32.xlu0 %v3660, 96
  %v4471 = vpop.permute.xlu0 %4470
  %4472 = vrot.lane.b32.xlu0 %v3480, 96
  %v4473 = vpop.permute.xlu0 %4472
  %4474 = vrot.lane.b32.xlu0 %v3661, 96
  %v4475 = vpop.permute.xlu0 %4474
  %4476 = vrot.lane.b32.xlu0 %v3483, 96
  %v4477 = vpop.permute.xlu0 %4476
  %4478 = vrot.lane.b32.xlu0 %v3662, 96
  %v4479 = vpop.permute.xlu0 %4478
  %4480 = vrot.lane.b32.xlu0 %v3486, 96
  %v4481 = vpop.permute.xlu0 %4480
  %4482 = vrot.lane.b32.xlu0 %v3663, 96
  %v4483 = vpop.permute.xlu0 %4482
  %4484 = vrot.lane.b32.xlu0 %v3489, 96
  %v4485 = vpop.permute.xlu0 %4484
  %4486 = vrot.lane.b32.xlu0 %v3664, 96
  %v4487 = vpop.permute.xlu0 %4486
  %4488 = vrot.lane.b32.xlu0 %v3492, 96
  %v4489 = vpop.permute.xlu0 %4488
  %4490 = vrot.lane.b32.xlu0 %v3665, 96
  %v4491 = vpop.permute.xlu0 %4490
  %4492 = vrot.lane.b32.xlu0 %v3495, 96
  %v4493 = vpop.permute.xlu0 %4492
  %4494 = vrot.lane.b32.xlu0 %v3666, 96
  %v4495 = vpop.permute.xlu0 %4494
  %4496 = vrot.lane.b32.xlu0 %v3498, 96
  %v4497 = vpop.permute.xlu0 %4496
  %4498 = vrot.lane.b32.xlu0 %v3667, 96
  %v4499 = vpop.permute.xlu0 %4498
  %4500 = vrot.lane.b32.xlu0 %v3501, 96
  %v4501 = vpop.permute.xlu0 %4500
  %4502 = vrot.lane.b32.xlu0 %v3668, 96
  %v4503 = vpop.permute.xlu0 %4502
  %4504 = vrot.lane.b32.xlu0 %v3504, 96
  %v4505 = vpop.permute.xlu0 %4504
  %4506 = vrot.lane.b32.xlu0 %v3669, 96
  %v4507 = vpop.permute.xlu0 %4506
  %4508 = vrot.lane.b32.xlu0 %v3507, 96
  %v4509 = vpop.permute.xlu0 %4508
  %4510 = vrot.lane.b32.xlu0 %v3670, 96
  %v4511 = vpop.permute.xlu0 %4510
  %4512 = vrot.lane.b32.xlu0 %v3510, 96
  %v4513 = vpop.permute.xlu0 %4512
  %4514 = vrot.lane.b32.xlu0 %v3671, 96
  %v4515 = vpop.permute.xlu0 %4514
  %4516 = vrot.lane.b32.xlu0 %v3513, 96
  %v4517 = vpop.permute.xlu0 %4516
  %4518 = vrot.lane.b32.xlu0 %v3672, 96
  %v4519 = vpop.permute.xlu0 %4518
  %4520 = vrot.lane.b32.xlu0 %v3516, 96
  %v4521 = vpop.permute.xlu0 %4520
  %4522 = vrot.lane.b32.xlu0 %v3673, 96
  %v4523 = vpop.permute.xlu0 %4522
  %4524 = vrot.lane.b32.xlu0 %v3519, 96
  %v4525 = vpop.permute.xlu0 %4524
  %4526 = vrot.lane.b32.xlu0 %v3674, 96
  %v4527 = vpop.permute.xlu0 %4526
  %4528 = vrot.lane.b32.xlu0 %v3522, 96
  %v4529 = vpop.permute.xlu0 %4528
  %4530 = vrot.lane.b32.xlu0 %v3675, 96
  %v4531 = vpop.permute.xlu0 %4530
  %4532 = vrot.lane.b32.xlu0 %v3525, 96
  %v4533 = vpop.permute.xlu0 %4532
  %4534 = vrot.lane.b32.xlu0 %v3676, 96
  %v4535 = vpop.permute.xlu0 %4534
  %4536 = vrot.lane.b32.xlu0 %v3528, 96
  %v4537 = vpop.permute.xlu0 %4536
  %4538 = vrot.lane.b32.xlu0 %v3677, 96
  %v4539 = vpop.permute.xlu0 %4538
  %4540 = vrot.lane.b32.xlu0 %v3531, 96
  %v4541 = vpop.permute.xlu0 %4540
  %4542 = vrot.lane.b32.xlu0 %v3678, 96
  %v4543 = vpop.permute.xlu0 %4542
  %4544 = vrot.lane.b32.xlu0 %v3534, 96
  %v4545 = vpop.permute.xlu0 %4544
  %4546 = vrot.lane.b32.xlu0 %v3679, 96
  %v4547 = vpop.permute.xlu0 %4546
  %4548 = vrot.lane.b32.xlu0 %v3537, 96
  %v4549 = vpop.permute.xlu0 %4548
  %4550 = vrot.lane.b32.xlu0 %v3680, 96
  %v4551 = vpop.permute.xlu0 %4550
  %4552 = vrot.lane.b32.xlu0 %v3540, 96
  %v4553 = vpop.permute.xlu0 %4552
  %4554 = vrot.lane.b32.xlu0 %v3681, 96
  %v4555 = vpop.permute.xlu0 %4554
  %4556 = vrot.lane.b32.xlu0 %v3543, 96
  %v4557 = vpop.permute.xlu0 %4556
  %4558 = vrot.lane.b32.xlu0 %v3682, 96
  %v4559 = vpop.permute.xlu0 %4558
  %4560 = vrot.lane.b32.xlu0 %v3546, 96
  %v4561 = vpop.permute.xlu0 %4560
  %4562 = vrot.lane.b32.xlu0 %v3683, 96
  %v4563 = vpop.permute.xlu0 %4562
  %4564 = vrot.lane.b32.xlu0 %v3549, 96
  %v4565 = vpop.permute.xlu0 %4564
  %4566 = vrot.lane.b32.xlu0 %v3684, 96
  %v4567 = vpop.permute.xlu0 %4566
  %4568 = vrot.lane.b32.xlu0 %v3552, 96
  %v4569 = vpop.permute.xlu0 %4568
  %4570 = vrot.lane.b32.xlu0 %v3685, 96
  %v4571 = vpop.permute.xlu0 %4570
  %4572 = vrot.lane.b32.xlu0 %v3555, 96
  %v4573 = vpop.permute.xlu0 %4572
  %4574 = vrot.lane.b32.xlu0 %v3686, 96
  %v4575 = vpop.permute.xlu0 %4574
  %4576 = vrot.lane.b32.xlu0 %v3558, 96
  %v4577 = vpop.permute.xlu0 %4576
  %4578 = vrot.lane.b32.xlu0 %v3687, 96
  %v4579 = vpop.permute.xlu0 %4578
  %4580 = vrot.lane.b32.xlu0 %v3561, 96
  %v4581 = vpop.permute.xlu0 %4580
  %v4648 = vrot.slane %v3671, 1
  %v4649 = vrot.slane %v3513, 1
  %v4650 = vsel %vm500, %v4648, %v4649
  %v4651 = vrot.slane %v3703, 1
  %v4652 = vsel %vm500, %v4649, %v4651
  %v4653 = vrot.slane %v3687, 1
  %v4654 = vrot.slane %v3561, 1
  %v4655 = vsel %vm500, %v4653, %v4654
  %v4656 = vrot.slane %v3719, 1
  %v4657 = vsel %vm500, %v4654, %v4656
  %v4722 = vrot.slane %v3671, 2
  %v4723 = vrot.slane %v3513, 2
  %v4724 = vsel %vm842, %v4722, %v4723
  %v4725 = vrot.slane %v3703, 2
  %v4726 = vsel %vm842, %v4723, %v4725
  %v4727 = vrot.slane %v3687, 2
  %v4728 = vrot.slane %v3561, 2
  %v4729 = vsel %vm842, %v4727, %v4728
  %v4730 = vrot.slane %v3719, 2
  %v4731 = vsel %vm842, %v4728, %v4730
  %4732 = vrot.lane.b32.xlu0 %v4118, 32
  %v4733 = vpop.permute.xlu0 %4732
  %4734 = vrot.lane.b32.xlu0 %v4120, 32
  %v4735 = vpop.permute.xlu0 %4734
  %4736 = vrot.lane.b32.xlu0 %v4123, 32
  %v4737 = vpop.permute.xlu0 %4736
  %4738 = vrot.lane.b32.xlu0 %v4125, 32
  %v4739 = vpop.permute.xlu0 %4738
  %4740 = vrot.lane.b32.xlu0 %v4128, 32
  %v4741 = vpop.permute.xlu0 %4740
  %4742 = vrot.lane.b32.xlu0 %v4130, 32
  %v4743 = vpop.permute.xlu0 %4742
  %4744 = vrot.lane.b32.xlu0 %v4133, 32
  %v4745 = vpop.permute.xlu0 %4744
  %4746 = vrot.lane.b32.xlu0 %v4135, 32
  %v4747 = vpop.permute.xlu0 %4746
  %4748 = vrot.lane.b32.xlu0 %v4138, 32
  %v4749 = vpop.permute.xlu0 %4748
  %4750 = vrot.lane.b32.xlu0 %v4140, 32
  %v4751 = vpop.permute.xlu0 %4750
  %4752 = vrot.lane.b32.xlu0 %v4143, 32
  %v4753 = vpop.permute.xlu0 %4752
  %4754 = vrot.lane.b32.xlu0 %v4145, 32
  %v4755 = vpop.permute.xlu0 %4754
  %4756 = vrot.lane.b32.xlu0 %v4148, 32
  %v4757 = vpop.permute.xlu0 %4756
  %4758 = vrot.lane.b32.xlu0 %v4150, 32
  %v4759 = vpop.permute.xlu0 %4758
  %4760 = vrot.lane.b32.xlu0 %v4153, 32
  %v4761 = vpop.permute.xlu0 %4760
  %4762 = vrot.lane.b32.xlu0 %v4155, 32
  %v4763 = vpop.permute.xlu0 %4762
  %4764 = vrot.lane.b32.xlu0 %v4158, 32
  %v4765 = vpop.permute.xlu0 %4764
  %4766 = vrot.lane.b32.xlu0 %v4160, 32
  %v4767 = vpop.permute.xlu0 %4766
  %4768 = vrot.lane.b32.xlu0 %v4163, 32
  %v4769 = vpop.permute.xlu0 %4768
  %4770 = vrot.lane.b32.xlu0 %v4165, 32
  %v4771 = vpop.permute.xlu0 %4770
  %4772 = vrot.lane.b32.xlu0 %v4168, 32
  %v4773 = vpop.permute.xlu0 %4772
  %4774 = vrot.lane.b32.xlu0 %v4170, 32
  %v4775 = vpop.permute.xlu0 %4774
  %4776 = vrot.lane.b32.xlu0 %v4173, 32
  %v4777 = vpop.permute.xlu0 %4776
  %4778 = vrot.lane.b32.xlu0 %v4175, 32
  %v4779 = vpop.permute.xlu0 %4778
  %4780 = vrot.lane.b32.xlu0 %v4178, 32
  %v4781 = vpop.permute.xlu0 %4780
  %4782 = vrot.lane.b32.xlu0 %v4180, 32
  %v4783 = vpop.permute.xlu0 %4782
  %4784 = vrot.lane.b32.xlu0 %v4183, 32
  %v4785 = vpop.permute.xlu0 %4784
  %4786 = vrot.lane.b32.xlu0 %v4185, 32
  %v4787 = vpop.permute.xlu0 %4786
  %4788 = vrot.lane.b32.xlu0 %v4188, 32
  %v4789 = vpop.permute.xlu0 %4788
  %4790 = vrot.lane.b32.xlu0 %v4190, 32
  %v4791 = vpop.permute.xlu0 %4790
  %4792 = vrot.lane.b32.xlu0 %v4724, 32
  %v4793 = vpop.permute.xlu0 %4792
  %4794 = vrot.lane.b32.xlu0 %v4726, 32
  %v4795 = vpop.permute.xlu0 %4794
  %4796 = vrot.lane.b32.xlu0 %v4193, 32
  %v4797 = vpop.permute.xlu0 %4796
  %4798 = vrot.lane.b32.xlu0 %v4195, 32
  %v4799 = vpop.permute.xlu0 %4798
  %4800 = vrot.lane.b32.xlu0 %v4198, 32
  %v4801 = vpop.permute.xlu0 %4800
  %4802 = vrot.lane.b32.xlu0 %v4200, 32
  %v4803 = vpop.permute.xlu0 %4802
  %4804 = vrot.lane.b32.xlu0 %v4203, 32
  %v4805 = vpop.permute.xlu0 %4804
  %4806 = vrot.lane.b32.xlu0 %v4205, 32
  %v4807 = vpop.permute.xlu0 %4806
  %4808 = vrot.lane.b32.xlu0 %v4208, 32
  %v4809 = vpop.permute.xlu0 %4808
  %4810 = vrot.lane.b32.xlu0 %v4210, 32
  %v4811 = vpop.permute.xlu0 %4810
  %4812 = vrot.lane.b32.xlu0 %v4213, 32
  %v4813 = vpop.permute.xlu0 %4812
  %4814 = vrot.lane.b32.xlu0 %v4215, 32
  %v4815 = vpop.permute.xlu0 %4814
  %4816 = vrot.lane.b32.xlu0 %v4218, 32
  %v4817 = vpop.permute.xlu0 %4816
  %4818 = vrot.lane.b32.xlu0 %v4220, 32
  %v4819 = vpop.permute.xlu0 %4818
  %4820 = vrot.lane.b32.xlu0 %v4223, 32
  %v4821 = vpop.permute.xlu0 %4820
  %4822 = vrot.lane.b32.xlu0 %v4225, 32
  %v4823 = vpop.permute.xlu0 %4822
  %4824 = vrot.lane.b32.xlu0 %v4228, 32
  %v4825 = vpop.permute.xlu0 %4824
  %4826 = vrot.lane.b32.xlu0 %v4230, 32
  %v4827 = vpop.permute.xlu0 %4826
  %4828 = vrot.lane.b32.xlu0 %v4233, 32
  %v4829 = vpop.permute.xlu0 %4828
  %4830 = vrot.lane.b32.xlu0 %v4235, 32
  %v4831 = vpop.permute.xlu0 %4830
  %4832 = vrot.lane.b32.xlu0 %v4238, 32
  %v4833 = vpop.permute.xlu0 %4832
  %4834 = vrot.lane.b32.xlu0 %v4240, 32
  %v4835 = vpop.permute.xlu0 %4834
  %4836 = vrot.lane.b32.xlu0 %v4243, 32
  %v4837 = vpop.permute.xlu0 %4836
  %4838 = vrot.lane.b32.xlu0 %v4245, 32
  %v4839 = vpop.permute.xlu0 %4838
  %4840 = vrot.lane.b32.xlu0 %v4248, 32
  %v4841 = vpop.permute.xlu0 %4840
  %4842 = vrot.lane.b32.xlu0 %v4250, 32
  %v4843 = vpop.permute.xlu0 %4842
  %4844 = vrot.lane.b32.xlu0 %v4253, 32
  %v4845 = vpop.permute.xlu0 %4844
  %4846 = vrot.lane.b32.xlu0 %v4255, 32
  %v4847 = vpop.permute.xlu0 %4846
  %4848 = vrot.lane.b32.xlu0 %v4258, 32
  %v4849 = vpop.permute.xlu0 %4848
  %4850 = vrot.lane.b32.xlu0 %v4260, 32
  %v4851 = vpop.permute.xlu0 %4850
  %4852 = vrot.lane.b32.xlu0 %v4263, 32
  %v4853 = vpop.permute.xlu0 %4852
  %4854 = vrot.lane.b32.xlu0 %v4265, 32
  %v4855 = vpop.permute.xlu0 %4854
  %4856 = vrot.lane.b32.xlu0 %v4729, 32
  %v4857 = vpop.permute.xlu0 %4856
  %4858 = vrot.lane.b32.xlu0 %v4731, 32
  %v4859 = vpop.permute.xlu0 %4858
  %4924 = vrot.lane.b32.xlu0 %v3657, 64
  %v4925 = vpop.permute.xlu0 %4924
  %4926 = vrot.lane.b32.xlu0 %v3471, 64
  %v4927 = vpop.permute.xlu0 %4926
  %4928 = vrot.lane.b32.xlu0 %v3658, 64
  %v4929 = vpop.permute.xlu0 %4928
  %4930 = vrot.lane.b32.xlu0 %v3474, 64
  %v4931 = vpop.permute.xlu0 %4930
  %4932 = vrot.lane.b32.xlu0 %v3659, 64
  %v4933 = vpop.permute.xlu0 %4932
  %4934 = vrot.lane.b32.xlu0 %v3477, 64
  %v4935 = vpop.permute.xlu0 %4934
  %4936 = vrot.lane.b32.xlu0 %v3660, 64
  %v4937 = vpop.permute.xlu0 %4936
  %4938 = vrot.lane.b32.xlu0 %v3480, 64
  %v4939 = vpop.permute.xlu0 %4938
  %4940 = vrot.lane.b32.xlu0 %v3661, 64
  %v4941 = vpop.permute.xlu0 %4940
  %4942 = vrot.lane.b32.xlu0 %v3483, 64
  %v4943 = vpop.permute.xlu0 %4942
  %4944 = vrot.lane.b32.xlu0 %v3662, 64
  %v4945 = vpop.permute.xlu0 %4944
  %4946 = vrot.lane.b32.xlu0 %v3486, 64
  %v4947 = vpop.permute.xlu0 %4946
  %4948 = vrot.lane.b32.xlu0 %v3663, 64
  %v4949 = vpop.permute.xlu0 %4948
  %4950 = vrot.lane.b32.xlu0 %v3489, 64
  %v4951 = vpop.permute.xlu0 %4950
  %4952 = vrot.lane.b32.xlu0 %v3664, 64
  %v4953 = vpop.permute.xlu0 %4952
  %4954 = vrot.lane.b32.xlu0 %v3492, 64
  %v4955 = vpop.permute.xlu0 %4954
  %4956 = vrot.lane.b32.xlu0 %v3665, 64
  %v4957 = vpop.permute.xlu0 %4956
  %4958 = vrot.lane.b32.xlu0 %v3495, 64
  %v4959 = vpop.permute.xlu0 %4958
  %4960 = vrot.lane.b32.xlu0 %v3666, 64
  %v4961 = vpop.permute.xlu0 %4960
  %4962 = vrot.lane.b32.xlu0 %v3498, 64
  %v4963 = vpop.permute.xlu0 %4962
  %4964 = vrot.lane.b32.xlu0 %v3667, 64
  %v4965 = vpop.permute.xlu0 %4964
  %4966 = vrot.lane.b32.xlu0 %v3501, 64
  %v4967 = vpop.permute.xlu0 %4966
  %4968 = vrot.lane.b32.xlu0 %v3668, 64
  %v4969 = vpop.permute.xlu0 %4968
  %4970 = vrot.lane.b32.xlu0 %v3504, 64
  %v4971 = vpop.permute.xlu0 %4970
  %4972 = vrot.lane.b32.xlu0 %v3669, 64
  %v4973 = vpop.permute.xlu0 %4972
  %4974 = vrot.lane.b32.xlu0 %v3507, 64
  %v4975 = vpop.permute.xlu0 %4974
  %4976 = vrot.lane.b32.xlu0 %v3670, 64
  %v4977 = vpop.permute.xlu0 %4976
  %4978 = vrot.lane.b32.xlu0 %v3510, 64
  %v4979 = vpop.permute.xlu0 %4978
  %4980 = vrot.lane.b32.xlu0 %v3671, 64
  %v4981 = vpop.permute.xlu0 %4980
  %4982 = vrot.lane.b32.xlu0 %v3513, 64
  %v4983 = vpop.permute.xlu0 %4982
  %4984 = vrot.lane.b32.xlu0 %v372, 64
  %v4985 = vpop.permute.xlu0 %4984
  %4986 = vrot.lane.b32.xlu0 %v179, 64
  %v4987 = vpop.permute.xlu0 %4986
  %4988 = vrot.lane.b32.xlu0 %v3673, 64
  %v4989 = vpop.permute.xlu0 %4988
  %4990 = vrot.lane.b32.xlu0 %v3519, 64
  %v4991 = vpop.permute.xlu0 %4990
  %4992 = vrot.lane.b32.xlu0 %v3674, 64
  %v4993 = vpop.permute.xlu0 %4992
  %4994 = vrot.lane.b32.xlu0 %v3522, 64
  %v4995 = vpop.permute.xlu0 %4994
  %4996 = vrot.lane.b32.xlu0 %v3675, 64
  %v4997 = vpop.permute.xlu0 %4996
  %4998 = vrot.lane.b32.xlu0 %v3525, 64
  %v4999 = vpop.permute.xlu0 %4998
  %5000 = vrot.lane.b32.xlu0 %v3676, 64
  %v5001 = vpop.permute.xlu0 %5000
  %5002 = vrot.lane.b32.xlu0 %v3528, 64
  %v5003 = vpop.permute.xlu0 %5002
  %5004 = vrot.lane.b32.xlu0 %v3677, 64
  %v5005 = vpop.permute.xlu0 %5004
  %5006 = vrot.lane.b32.xlu0 %v3531, 64
  %v5007 = vpop.permute.xlu0 %5006
  %5008 = vrot.lane.b32.xlu0 %v3678, 64
  %v5009 = vpop.permute.xlu0 %5008
  %5010 = vrot.lane.b32.xlu0 %v3534, 64
  %v5011 = vpop.permute.xlu0 %5010
  %5012 = vrot.lane.b32.xlu0 %v3679, 64
  %v5013 = vpop.permute.xlu0 %5012
  %5014 = vrot.lane.b32.xlu0 %v3537, 64
  %v5015 = vpop.permute.xlu0 %5014
  %5016 = vrot.lane.b32.xlu0 %v3680, 64
  %v5017 = vpop.permute.xlu0 %5016
  %5018 = vrot.lane.b32.xlu0 %v3540, 64
  %v5019 = vpop.permute.xlu0 %5018
  %5020 = vrot.lane.b32.xlu0 %v3681, 64
  %v5021 = vpop.permute.xlu0 %5020
  %5022 = vrot.lane.b32.xlu0 %v3543, 64
  %v5023 = vpop.permute.xlu0 %5022
  %5024 = vrot.lane.b32.xlu0 %v3682, 64
  %v5025 = vpop.permute.xlu0 %5024
  %5026 = vrot.lane.b32.xlu0 %v3546, 64
  %v5027 = vpop.permute.xlu0 %5026
  %5028 = vrot.lane.b32.xlu0 %v3683, 64
  %v5029 = vpop.permute.xlu0 %5028
  %5030 = vrot.lane.b32.xlu0 %v3549, 64
  %v5031 = vpop.permute.xlu0 %5030
  %5032 = vrot.lane.b32.xlu0 %v3684, 64
  %v5033 = vpop.permute.xlu0 %5032
  %5034 = vrot.lane.b32.xlu0 %v3552, 64
  %v5035 = vpop.permute.xlu0 %5034
  %5036 = vrot.lane.b32.xlu0 %v3685, 64
  %v5037 = vpop.permute.xlu0 %5036
  %5038 = vrot.lane.b32.xlu0 %v3555, 64
  %v5039 = vpop.permute.xlu0 %5038
  %5040 = vrot.lane.b32.xlu0 %v3686, 64
  %v5041 = vpop.permute.xlu0 %5040
  %5042 = vrot.lane.b32.xlu0 %v3558, 64
  %v5043 = vpop.permute.xlu0 %5042
  %5044 = vrot.lane.b32.xlu0 %v3687, 64
  %v5045 = vpop.permute.xlu0 %5044
  %5046 = vrot.lane.b32.xlu0 %v3561, 64
  %v5047 = vpop.permute.xlu0 %5046
  %5110 = vrot.lane.b32.xlu0 %v3787, 96
  %v5111 = vpop.permute.xlu0 %5110
  %5112 = vrot.lane.b32.xlu0 %v3789, 96
  %v5113 = vpop.permute.xlu0 %5112
  %5114 = vrot.lane.b32.xlu0 %v3792, 96
  %v5115 = vpop.permute.xlu0 %5114
  %5116 = vrot.lane.b32.xlu0 %v3794, 96
  %v5117 = vpop.permute.xlu0 %5116
  %5118 = vrot.lane.b32.xlu0 %v3797, 96
  %v5119 = vpop.permute.xlu0 %5118
  %5120 = vrot.lane.b32.xlu0 %v3799, 96
  %v5121 = vpop.permute.xlu0 %5120
  %5122 = vrot.lane.b32.xlu0 %v3802, 96
  %v5123 = vpop.permute.xlu0 %5122
  %5124 = vrot.lane.b32.xlu0 %v3804, 96
  %v5125 = vpop.permute.xlu0 %5124
  %5126 = vrot.lane.b32.xlu0 %v3807, 96
  %v5127 = vpop.permute.xlu0 %5126
  %5128 = vrot.lane.b32.xlu0 %v3809, 96
  %v5129 = vpop.permute.xlu0 %5128
  %5130 = vrot.lane.b32.xlu0 %v3812, 96
  %v5131 = vpop.permute.xlu0 %5130
  %5132 = vrot.lane.b32.xlu0 %v3814, 96
  %v5133 = vpop.permute.xlu0 %5132
  %5134 = vrot.lane.b32.xlu0 %v3817, 96
  %v5135 = vpop.permute.xlu0 %5134
  %5136 = vrot.lane.b32.xlu0 %v3819, 96
  %v5137 = vpop.permute.xlu0 %5136
  %5138 = vrot.lane.b32.xlu0 %v3822, 96
  %v5139 = vpop.permute.xlu0 %5138
  %5140 = vrot.lane.b32.xlu0 %v3824, 96
  %v5141 = vpop.permute.xlu0 %5140
  %5142 = vrot.lane.b32.xlu0 %v3827, 96
  %v5143 = vpop.permute.xlu0 %5142
  %5144 = vrot.lane.b32.xlu0 %v3829, 96
  %v5145 = vpop.permute.xlu0 %5144
  %5146 = vrot.lane.b32.xlu0 %v3832, 96
  %v5147 = vpop.permute.xlu0 %5146
  %5148 = vrot.lane.b32.xlu0 %v3834, 96
  %v5149 = vpop.permute.xlu0 %5148
  %5150 = vrot.lane.b32.xlu0 %v3837, 96
  %v5151 = vpop.permute.xlu0 %5150
  %5152 = vrot.lane.b32.xlu0 %v3839, 96
  %v5153 = vpop.permute.xlu0 %5152
  %5154 = vrot.lane.b32.xlu0 %v3842, 96
  %v5155 = vpop.permute.xlu0 %5154
  %5156 = vrot.lane.b32.xlu0 %v3844, 96
  %v5157 = vpop.permute.xlu0 %5156
  %5158 = vrot.lane.b32.xlu0 %v3847, 96
  %v5159 = vpop.permute.xlu0 %5158
  %5160 = vrot.lane.b32.xlu0 %v3849, 96
  %v5161 = vpop.permute.xlu0 %5160
  %5162 = vrot.lane.b32.xlu0 %v3852, 96
  %v5163 = vpop.permute.xlu0 %5162
  %5164 = vrot.lane.b32.xlu0 %v3854, 96
  %v5165 = vpop.permute.xlu0 %5164
  %5166 = vrot.lane.b32.xlu0 %v4650, 96
  %v5167 = vpop.permute.xlu0 %5166
  %5168 = vrot.lane.b32.xlu0 %v4652, 96
  %v5169 = vpop.permute.xlu0 %5168
  %5170 = vrot.lane.b32.xlu0 %v503, 96
  %v5171 = vpop.permute.xlu0 %5170
  %5172 = vrot.lane.b32.xlu0 %v505, 96
  %v5173 = vpop.permute.xlu0 %5172
  %5174 = vrot.lane.b32.xlu0 %v3862, 96
  %v5175 = vpop.permute.xlu0 %5174
  %5176 = vrot.lane.b32.xlu0 %v3864, 96
  %v5177 = vpop.permute.xlu0 %5176
  %5178 = vrot.lane.b32.xlu0 %v3867, 96
  %v5179 = vpop.permute.xlu0 %5178
  %5180 = vrot.lane.b32.xlu0 %v3869, 96
  %v5181 = vpop.permute.xlu0 %5180
  %5182 = vrot.lane.b32.xlu0 %v3872, 96
  %v5183 = vpop.permute.xlu0 %5182
  %5184 = vrot.lane.b32.xlu0 %v3874, 96
  %v5185 = vpop.permute.xlu0 %5184
  %5186 = vrot.lane.b32.xlu0 %v3877, 96
  %v5187 = vpop.permute.xlu0 %5186
  %5188 = vrot.lane.b32.xlu0 %v3879, 96
  %v5189 = vpop.permute.xlu0 %5188
  %5190 = vrot.lane.b32.xlu0 %v3882, 96
  %v5191 = vpop.permute.xlu0 %5190
  %5192 = vrot.lane.b32.xlu0 %v3884, 96
  %v5193 = vpop.permute.xlu0 %5192
  %5194 = vrot.lane.b32.xlu0 %v3887, 96
  %v5195 = vpop.permute.xlu0 %5194
  %5196 = vrot.lane.b32.xlu0 %v3889, 96
  %v5197 = vpop.permute.xlu0 %5196
  %5198 = vrot.lane.b32.xlu0 %v3892, 96
  %v5199 = vpop.permute.xlu0 %5198
  %5200 = vrot.lane.b32.xlu0 %v3894, 96
  %v5201 = vpop.permute.xlu0 %5200
  %5202 = vrot.lane.b32.xlu0 %v3897, 96
  %v5203 = vpop.permute.xlu0 %5202
  %5204 = vrot.lane.b32.xlu0 %v3899, 96
  %v5205 = vpop.permute.xlu0 %5204
  %5206 = vrot.lane.b32.xlu0 %v3902, 96
  %v5207 = vpop.permute.xlu0 %5206
  %5208 = vrot.lane.b32.xlu0 %v3904, 96
  %v5209 = vpop.permute.xlu0 %5208
  %5210 = vrot.lane.b32.xlu0 %v3907, 96
  %v5211 = vpop.permute.xlu0 %5210
  %5212 = vrot.lane.b32.xlu0 %v3909, 96
  %v5213 = vpop.permute.xlu0 %5212
  %5214 = vrot.lane.b32.xlu0 %v3912, 96
  %v5215 = vpop.permute.xlu0 %5214
  %5216 = vrot.lane.b32.xlu0 %v3914, 96
  %v5217 = vpop.permute.xlu0 %5216
  %5218 = vrot.lane.b32.xlu0 %v3917, 96
  %v5219 = vpop.permute.xlu0 %5218
  %5220 = vrot.lane.b32.xlu0 %v3919, 96
  %v5221 = vpop.permute.xlu0 %5220
  %5222 = vrot.lane.b32.xlu0 %v3922, 96
  %v5223 = vpop.permute.xlu0 %5222
  %5224 = vrot.lane.b32.xlu0 %v3924, 96
  %v5225 = vpop.permute.xlu0 %5224
  %5226 = vrot.lane.b32.xlu0 %v3927, 96
  %v5227 = vpop.permute.xlu0 %5226
  %5228 = vrot.lane.b32.xlu0 %v3929, 96
  %v5229 = vpop.permute.xlu0 %5228
  %5230 = vrot.lane.b32.xlu0 %v4655, 96
  %v5231 = vpop.permute.xlu0 %5230
  %5232 = vrot.lane.b32.xlu0 %v4657, 96
  %v5233 = vpop.permute.xlu0 %5232
  %v5358 = vsel %vm2793, %v372, %v3931
  %v5359 = vsel %vm2793, %v179, %v3933
  %v5360 = vsel %vm2793, %v3656, %v3935
  %v5361 = vsel %vm2793, %v3468, %v3937
  %v5362 = vsel %vm2793, %v3657, %v3939
  %v5363 = vsel %vm2793, %v3471, %v3941
  %v5364 = vsel %vm2793, %v3658, %v3943
  %v5365 = vsel %vm2793, %v3474, %v3945
  %v5366 = vsel %vm2793, %v3659, %v3947
  %v5367 = vsel %vm2793, %v3477, %v3949
  %v5368 = vsel %vm2793, %v3660, %v3951
  %v5369 = vsel %vm2793, %v3480, %v3953
  %v5370 = vsel %vm2793, %v3661, %v3955
  %v5371 = vsel %vm2793, %v3483, %v3957
  %v5372 = vsel %vm2793, %v3662, %v3959
  %v5373 = vsel %vm2793, %v3486, %v3961
  %v5374 = vsel %vm2793, %v3663, %v3963
  %v5375 = vsel %vm2793, %v3489, %v3965
  %v5376 = vsel %vm2793, %v3664, %v3967
  %v5377 = vsel %vm2793, %v3492, %v3969
  %v5378 = vsel %vm2793, %v3665, %v3971
  %v5379 = vsel %vm2793, %v3495, %v3973
  %v5380 = vsel %vm2793, %v3666, %v3975
  %v5381 = vsel %vm2793, %v3498, %v3977
  %v5382 = vsel %vm2793, %v3667, %v3979
  %v5383 = vsel %vm2793, %v3501, %v3981
  %v5384 = vsel %vm2793, %v3668, %v3983
  %v5385 = vsel %vm2793, %v3504, %v3985
  %v5386 = vsel %vm2793, %v3669, %v3987
  %v5387 = vsel %vm2793, %v3507, %v3989
  %v5388 = vsel %vm2793, %v3670, %v3991
  %v5389 = vsel %vm2793, %v3510, %v3993
  %v5390 = vsel %vm2793, %v3672, %v3995
  %v5391 = vsel %vm2793, %v3516, %v3997
  %v5392 = vsel %vm2793, %v3673, %v3999
  %v5393 = vsel %vm2793, %v3519, %v4001
  %v5394 = vsel %vm2793, %v3674, %v4003
  %v5395 = vsel %vm2793, %v3522, %v4005
  %v5396 = vsel %vm2793, %v3675, %v4007
  %v5397 = vsel %vm2793, %v3525, %v4009
  %v5398 = vsel %vm2793, %v3676, %v4011
  %v5399 = vsel %vm2793, %v3528, %v4013
  %v5400 = vsel %vm2793, %v3677, %v4015
  %v5401 = vsel %vm2793, %v3531, %v4017
  %v5402 = vsel %vm2793, %v3678, %v4019
  %v5403 = vsel %vm2793, %v3534, %v4021
  %v5404 = vsel %vm2793, %v3679, %v4023
  %v5405 = vsel %vm2793, %v3537, %v4025
  %v5406 = vsel %vm2793, %v3680, %v4027
  %v5407 = vsel %vm2793, %v3540, %v4029
  %v5408 = vsel %vm2793, %v3681, %v4031
  %v5409 = vsel %vm2793, %v3543, %v4033
  %v5410 = vsel %vm2793, %v3682, %v4035
  %v5411 = vsel %vm2793, %v3546, %v4037
  %v5412 = vsel %vm2793, %v3683, %v4039
  %v5413 = vsel %vm2793, %v3549, %v4041
  %v5414 = vsel %vm2793, %v3684, %v4043
  %v5415 = vsel %vm2793, %v3552, %v4045
  %v5416 = vsel %vm2793, %v3685, %v4047
  %v5417 = vsel %vm2793, %v3555, %v4049
  %v5418 = vsel %vm2793, %v3686, %v4051
  %v5419 = vsel %vm2793, %v3558, %v4053
  %vm5420 = vcmask 523264
  %v5421 = vsel %vm5420, %v5358, %v4267
  %v5422 = vsel %vm5420, %v5359, %v4269
  %v5423 = vsel %vm5420, %v5360, %v4271
  %v5424 = vsel %vm5420, %v5361, %v4273
  %v5425 = vsel %vm5420, %v5362, %v4275
  %v5426 = vsel %vm5420, %v5363, %v4277
  %v5427 = vsel %vm5420, %v5364, %v4279
  %v5428 = vsel %vm5420, %v5365, %v4281
  %v5429 = vsel %vm5420, %v5366, %v4283
  %v5430 = vsel %vm5420, %v5367, %v4285
  %v5431 = vsel %vm5420, %v5368, %v4287
  %v5432 = vsel %vm5420, %v5369, %v4289
  %v5433 = vsel %vm5420, %v5370, %v4291
  %v5434 = vsel %vm5420, %v5371, %v4293
  %v5435 = vsel %vm5420, %v5372, %v4295
  %v5436 = vsel %vm5420, %v5373, %v4297
  %v5437 = vsel %vm5420, %v5374, %v4299
  %v5438 = vsel %vm5420, %v5375, %v4301
  %v5439 = vsel %vm5420, %v5376, %v4303
  %v5440 = vsel %vm5420, %v5377, %v4305
  %v5441 = vsel %vm5420, %v5378, %v4307
  %v5442 = vsel %vm5420, %v5379, %v4309
  %v5443 = vsel %vm5420, %v5380, %v4311
  %v5444 = vsel %vm5420, %v5381, %v4313
  %v5445 = vsel %vm5420, %v5382, %v4315
  %v5446 = vsel %vm5420, %v5383, %v4317
  %v5447 = vsel %vm5420, %v5384, %v4319
  %v5448 = vsel %vm5420, %v5385, %v4321
  %v5449 = vsel %vm5420, %v5386, %v4323
  %v5450 = vsel %vm5420, %v5387, %v4325
  %v5451 = vsel %vm5420, %v5388, %v4327
  %v5452 = vsel %vm5420, %v5389, %v4329
  %v5453 = vsel %vm5420, %v5390, %v4331
  %v5454 = vsel %vm5420, %v5391, %v4333
  %v5455 = vsel %vm5420, %v5392, %v4335
  %v5456 = vsel %vm5420, %v5393, %v4337
  %v5457 = vsel %vm5420, %v5394, %v4339
  %v5458 = vsel %vm5420, %v5395, %v4341
  %v5459 = vsel %vm5420, %v5396, %v4343
  %v5460 = vsel %vm5420, %v5397, %v4345
  %v5461 = vsel %vm5420, %v5398, %v4347
  %v5462 = vsel %vm5420, %v5399, %v4349
  %v5463 = vsel %vm5420, %v5400, %v4351
  %v5464 = vsel %vm5420, %v5401, %v4353
  %v5465 = vsel %vm5420, %v5402, %v4355
  %v5466 = vsel %vm5420, %v5403, %v4357
  %v5467 = vsel %vm5420, %v5404, %v4359
  %v5468 = vsel %vm5420, %v5405, %v4361
  %v5469 = vsel %vm5420, %v5406, %v4363
  %v5470 = vsel %vm5420, %v5407, %v4365
  %v5471 = vsel %vm5420, %v5408, %v4367
  %v5472 = vsel %vm5420, %v5409, %v4369
  %v5473 = vsel %vm5420, %v5410, %v4371
  %v5474 = vsel %vm5420, %v5411, %v4373
  %v5475 = vsel %vm5420, %v5412, %v4375
  %v5476 = vsel %vm5420, %v5413, %v4377
  %v5477 = vsel %vm5420, %v5414, %v4379
  %v5478 = vsel %vm5420, %v5415, %v4381
  %v5479 = vsel %vm5420, %v5416, %v4383
  %v5480 = vsel %vm5420, %v5417, %v4385
  %v5481 = vsel %vm5420, %v5418, %v4387
  %v5482 = vsel %vm5420, %v5419, %v4389
  %vm5483 = vcmask 785408
  %v5484 = vsel %vm5483, %v5421, %v4455
  %v5485 = vsel %vm5483, %v5422, %v4457
  %v5486 = vsel %vm5483, %v5423, %v4459
  %v5487 = vsel %vm5483, %v5424, %v4461
  %v5488 = vsel %vm5483, %v5425, %v4463
  %v5489 = vsel %vm5483, %v5426, %v4465
  %v5490 = vsel %vm5483, %v5427, %v4467
  %v5491 = vsel %vm5483, %v5428, %v4469
  %v5492 = vsel %vm5483, %v5429, %v4471
  %v5493 = vsel %vm5483, %v5430, %v4473
  %v5494 = vsel %vm5483, %v5431, %v4475
  %v5495 = vsel %vm5483, %v5432, %v4477
  %v5496 = vsel %vm5483, %v5433, %v4479
  %v5497 = vsel %vm5483, %v5434, %v4481
  %v5498 = vsel %vm5483, %v5435, %v4483
  %v5499 = vsel %vm5483, %v5436, %v4485
  %v5500 = vsel %vm5483, %v5437, %v4487
  %v5501 = vsel %vm5483, %v5438, %v4489
  %v5502 = vsel %vm5483, %v5439, %v4491
  %v5503 = vsel %vm5483, %v5440, %v4493
  %v5504 = vsel %vm5483, %v5441, %v4495
  %v5505 = vsel %vm5483, %v5442, %v4497
  %v5506 = vsel %vm5483, %v5443, %v4499
  %v5507 = vsel %vm5483, %v5444, %v4501
  %v5508 = vsel %vm5483, %v5445, %v4503
  %v5509 = vsel %vm5483, %v5446, %v4505
  %v5510 = vsel %vm5483, %v5447, %v4507
  %v5511 = vsel %vm5483, %v5448, %v4509
  %v5512 = vsel %vm5483, %v5449, %v4511
  %v5513 = vsel %vm5483, %v5450, %v4513
  %v5514 = vsel %vm5483, %v5451, %v4515
  %v5515 = vsel %vm5483, %v5452, %v4517
  %v5516 = vsel %vm5483, %v5421, %v4519
  %v5517 = vsel %vm5483, %v5422, %v4521
  %v5518 = vsel %vm5483, %v5453, %v4523
  %v5519 = vsel %vm5483, %v5454, %v4525
  %v5520 = vsel %vm5483, %v5455, %v4527
  %v5521 = vsel %vm5483, %v5456, %v4529
  %v5522 = vsel %vm5483, %v5457, %v4531
  %v5523 = vsel %vm5483, %v5458, %v4533
  %v5524 = vsel %vm5483, %v5459, %v4535
  %v5525 = vsel %vm5483, %v5460, %v4537
  %v5526 = vsel %vm5483, %v5461, %v4539
  %v5527 = vsel %vm5483, %v5462, %v4541
  %v5528 = vsel %vm5483, %v5463, %v4543
  %v5529 = vsel %vm5483, %v5464, %v4545
  %v5530 = vsel %vm5483, %v5465, %v4547
  %v5531 = vsel %vm5483, %v5466, %v4549
  %v5532 = vsel %vm5483, %v5467, %v4551
  %v5533 = vsel %vm5483, %v5468, %v4553
  %v5534 = vsel %vm5483, %v5469, %v4555
  %v5535 = vsel %vm5483, %v5470, %v4557
  %v5536 = vsel %vm5483, %v5471, %v4559
  %v5537 = vsel %vm5483, %v5472, %v4561
  %v5538 = vsel %vm5483, %v5473, %v4563
  %v5539 = vsel %vm5483, %v5474, %v4565
  %v5540 = vsel %vm5483, %v5475, %v4567
  %v5541 = vsel %vm5483, %v5476, %v4569
  %v5542 = vsel %vm5483, %v5477, %v4571
  %v5543 = vsel %vm5483, %v5478, %v4573
  %v5544 = vsel %vm5483, %v5479, %v4575
  %v5545 = vsel %vm5483, %v5480, %v4577
  %v5546 = vsel %vm5483, %v5481, %v4579
  %v5547 = vsel %vm5483, %v5482, %v4581
  %v5548 = vsel %vm2793, %v3782, %v4733
  %v5549 = vsel %vm2793, %v3784, %v4735
  %v5550 = vsel %vm2793, %v3787, %v4737
  %v5551 = vsel %vm2793, %v3789, %v4739
  %v5552 = vsel %vm2793, %v3792, %v4741
  %v5553 = vsel %vm2793, %v3794, %v4743
  %v5554 = vsel %vm2793, %v3797, %v4745
  %v5555 = vsel %vm2793, %v3799, %v4747
  %v5556 = vsel %vm2793, %v3802, %v4749
  %v5557 = vsel %vm2793, %v3804, %v4751
  %v5558 = vsel %vm2793, %v3807, %v4753
  %v5559 = vsel %vm2793, %v3809, %v4755
  %v5560 = vsel %vm2793, %v3812, %v4757
  %v5561 = vsel %vm2793, %v3814, %v4759
  %v5562 = vsel %vm2793, %v3817, %v4761
  %v5563 = vsel %vm2793, %v3819, %v4763
  %v5564 = vsel %vm2793, %v3822, %v4765
  %v5565 = vsel %vm2793, %v3824, %v4767
  %v5566 = vsel %vm2793, %v3827, %v4769
  %v5567 = vsel %vm2793, %v3829, %v4771
  %v5568 = vsel %vm2793, %v3832, %v4773
  %v5569 = vsel %vm2793, %v3834, %v4775
  %v5570 = vsel %vm2793, %v3837, %v4777
  %v5571 = vsel %vm2793, %v3839, %v4779
  %v5572 = vsel %vm2793, %v3842, %v4781
  %v5573 = vsel %vm2793, %v3844, %v4783
  %v5574 = vsel %vm2793, %v3847, %v4785
  %v5575 = vsel %vm2793, %v3849, %v4787
  %v5576 = vsel %vm2793, %v3852, %v4789
  %v5577 = vsel %vm2793, %v3854, %v4791
  %v5578 = vsel %vm2793, %v4650, %v4793
  %v5579 = vsel %vm2793, %v4652, %v4795
  %v5580 = vsel %vm2793, %v3857, %v4797
  %v5581 = vsel %vm2793, %v3859, %v4799
  %v5582 = vsel %vm2793, %v3862, %v4801
  %v5583 = vsel %vm2793, %v3864, %v4803
  %v5584 = vsel %vm2793, %v3867, %v4805
  %v5585 = vsel %vm2793, %v3869, %v4807
  %v5586 = vsel %vm2793, %v3872, %v4809
  %v5587 = vsel %vm2793, %v3874, %v4811
  %v5588 = vsel %vm2793, %v3877, %v4813
  %v5589 = vsel %vm2793, %v3879, %v4815
  %v5590 = vsel %vm2793, %v3882, %v4817
  %v5591 = vsel %vm2793, %v3884, %v4819
  %v5592 = vsel %vm2793, %v3887, %v4821
  %v5593 = vsel %vm2793, %v3889, %v4823
  %v5594 = vsel %vm2793, %v3892, %v4825
  %v5595 = vsel %vm2793, %v3894, %v4827
  %v5596 = vsel %vm2793, %v3897, %v4829
  %v5597 = vsel %vm2793, %v3899, %v4831
  %v5598 = vsel %vm2793, %v3902, %v4833
  %v5599 = vsel %vm2793, %v3904, %v4835
  %v5600 = vsel %vm2793, %v3907, %v4837
  %v5601 = vsel %vm2793, %v3909, %v4839
  %v5602 = vsel %vm2793, %v3912, %v4841
  %v5603 = vsel %vm2793, %v3914, %v4843
  %v5604 = vsel %vm2793, %v3917, %v4845
  %v5605 = vsel %vm2793, %v3919, %v4847
  %v5606 = vsel %vm2793, %v3922, %v4849
  %v5607 = vsel %vm2793, %v3924, %v4851
  %v5608 = vsel %vm2793, %v3927, %v4853
  %v5609 = vsel %vm2793, %v3929, %v4855
  %v5610 = vsel %vm2793, %v4655, %v4857
  %v5611 = vsel %vm2793, %v4657, %v4859
  %v5612 = vsel %vm5420, %v5548, %v4925
  %v5613 = vsel %vm5420, %v5549, %v4927
  %v5614 = vsel %vm5420, %v5550, %v4929
  %v5615 = vsel %vm5420, %v5551, %v4931
  %v5616 = vsel %vm5420, %v5552, %v4933
  %v5617 = vsel %vm5420, %v5553, %v4935
  %v5618 = vsel %vm5420, %v5554, %v4937
  %v5619 = vsel %vm5420, %v5555, %v4939
  %v5620 = vsel %vm5420, %v5556, %v4941
  %v5621 = vsel %vm5420, %v5557, %v4943
  %v5622 = vsel %vm5420, %v5558, %v4945
  %v5623 = vsel %vm5420, %v5559, %v4947
  %v5624 = vsel %vm5420, %v5560, %v4949
  %v5625 = vsel %vm5420, %v5561, %v4951
  %v5626 = vsel %vm5420, %v5562, %v4953
  %v5627 = vsel %vm5420, %v5563, %v4955
  %v5628 = vsel %vm5420, %v5564, %v4957
  %v5629 = vsel %vm5420, %v5565, %v4959
  %v5630 = vsel %vm5420, %v5566, %v4961
  %v5631 = vsel %vm5420, %v5567, %v4963
  %v5632 = vsel %vm5420, %v5568, %v4965
  %v5633 = vsel %vm5420, %v5569, %v4967
  %v5634 = vsel %vm5420, %v5570, %v4969
  %v5635 = vsel %vm5420, %v5571, %v4971
  %v5636 = vsel %vm5420, %v5572, %v4973
  %v5637 = vsel %vm5420, %v5573, %v4975
  %v5638 = vsel %vm5420, %v5574, %v4977
  %v5639 = vsel %vm5420, %v5575, %v4979
  %v5640 = vsel %vm5420, %v5576, %v4981
  %v5641 = vsel %vm5420, %v5577, %v4983
  %v5642 = vsel %vm5420, %v5578, %v4985
  %v5643 = vsel %vm5420, %v5579, %v4987
  %v5644 = vsel %vm5420, %v5580, %v4989
  %v5645 = vsel %vm5420, %v5581, %v4991
  %v5646 = vsel %vm5420, %v5582, %v4993
  %v5647 = vsel %vm5420, %v5583, %v4995
  %v5648 = vsel %vm5420, %v5584, %v4997
  %v5649 = vsel %vm5420, %v5585, %v4999
  %v5650 = vsel %vm5420, %v5586, %v5001
  %v5651 = vsel %vm5420, %v5587, %v5003
  %v5652 = vsel %vm5420, %v5588, %v5005
  %v5653 = vsel %vm5420, %v5589, %v5007
  %v5654 = vsel %vm5420, %v5590, %v5009
  %v5655 = vsel %vm5420, %v5591, %v5011
  %v5656 = vsel %vm5420, %v5592, %v5013
  %v5657 = vsel %vm5420, %v5593, %v5015
  %v5658 = vsel %vm5420, %v5594, %v5017
  %v5659 = vsel %vm5420, %v5595, %v5019
  %v5660 = vsel %vm5420, %v5596, %v5021
  %v5661 = vsel %vm5420, %v5597, %v5023
  %v5662 = vsel %vm5420, %v5598, %v5025
  %v5663 = vsel %vm5420, %v5599, %v5027
  %v5664 = vsel %vm5420, %v5600, %v5029
  %v5665 = vsel %vm5420, %v5601, %v5031
  %v5666 = vsel %vm5420, %v5602, %v5033
  %v5667 = vsel %vm5420, %v5603, %v5035
  %v5668 = vsel %vm5420, %v5604, %v5037
  %v5669 = vsel %vm5420, %v5605, %v5039
  %v5670 = vsel %vm5420, %v5606, %v5041
  %v5671 = vsel %vm5420, %v5607, %v5043
  %v5672 = vsel %vm5420, %v5608, %v5045
  %v5673 = vsel %vm5420, %v5609, %v5047
  %v5674 = vsel %vm5420, %v5610, %v4985
  %v5675 = vsel %vm5420, %v5611, %v4987
  %v5676 = vsel %vm5483, %v5612, %v5111
  %v5677 = vsel %vm5483, %v5613, %v5113
  %v5678 = vsel %vm5483, %v5614, %v5115
  %v5679 = vsel %vm5483, %v5615, %v5117
  %v5680 = vsel %vm5483, %v5616, %v5119
  %v5681 = vsel %vm5483, %v5617, %v5121
  %v5682 = vsel %vm5483, %v5618, %v5123
  %v5683 = vsel %vm5483, %v5619, %v5125
  %v5684 = vsel %vm5483, %v5620, %v5127
  %v5685 = vsel %vm5483, %v5621, %v5129
  %v5686 = vsel %vm5483, %v5622, %v5131
  %v5687 = vsel %vm5483, %v5623, %v5133
  %v5688 = vsel %vm5483, %v5624, %v5135
  %v5689 = vsel %vm5483, %v5625, %v5137
  %v5690 = vsel %vm5483, %v5626, %v5139
  %v5691 = vsel %vm5483, %v5627, %v5141
  %v5692 = vsel %vm5483, %v5628, %v5143
  %v5693 = vsel %vm5483, %v5629, %v5145
  %v5694 = vsel %vm5483, %v5630, %v5147
  %v5695 = vsel %vm5483, %v5631, %v5149
  %v5696 = vsel %vm5483, %v5632, %v5151
  %v5697 = vsel %vm5483, %v5633, %v5153
  %v5698 = vsel %vm5483, %v5634, %v5155
  %v5699 = vsel %vm5483, %v5635, %v5157
  %v5700 = vsel %vm5483, %v5636, %v5159
  %v5701 = vsel %vm5483, %v5637, %v5161
  %v5702 = vsel %vm5483, %v5638, %v5163
  %v5703 = vsel %vm5483, %v5639, %v5165
  %v5704 = vsel %vm5483, %v5640, %v5167
  %v5705 = vsel %vm5483, %v5641, %v5169
  %v5706 = vsel %vm5483, %v5642, %v5171
  %v5707 = vsel %vm5483, %v5643, %v5173
  %v5708 = vsel %vm5483, %v5644, %v5175
  %v5709 = vsel %vm5483, %v5645, %v5177
  %v5710 = vsel %vm5483, %v5646, %v5179
  %v5711 = vsel %vm5483, %v5647, %v5181
  %v5712 = vsel %vm5483, %v5648, %v5183
  %v5713 = vsel %vm5483, %v5649, %v5185
  %v5714 = vsel %vm5483, %v5650, %v5187
  %v5715 = vsel %vm5483, %v5651, %v5189
  %v5716 = vsel %vm5483, %v5652, %v5191
  %v5717 = vsel %vm5483, %v5653, %v5193
  %v5718 = vsel %vm5483, %v5654, %v5195
  %v5719 = vsel %vm5483, %v5655, %v5197
  %v5720 = vsel %vm5483, %v5656, %v5199
  %v5721 = vsel %vm5483, %v5657, %v5201
  %v5722 = vsel %vm5483, %v5658, %v5203
  %v5723 = vsel %vm5483, %v5659, %v5205
  %v5724 = vsel %vm5483, %v5660, %v5207
  %v5725 = vsel %vm5483, %v5661, %v5209
  %v5726 = vsel %vm5483, %v5662, %v5211
  %v5727 = vsel %vm5483, %v5663, %v5213
  %v5728 = vsel %vm5483, %v5664, %v5215
  %v5729 = vsel %vm5483, %v5665, %v5217
  %v5730 = vsel %vm5483, %v5666, %v5219
  %v5731 = vsel %vm5483, %v5667, %v5221
  %v5732 = vsel %vm5483, %v5668, %v5223
  %v5733 = vsel %vm5483, %v5669, %v5225
  %v5734 = vsel %vm5483, %v5670, %v5227
  %v5735 = vsel %vm5483, %v5671, %v5229
  %v5736 = vsel %vm5483, %v5672, %v5231
  %v5737 = vsel %vm5483, %v5673, %v5233
  %v5738 = vsel %vm5483, %v5674, %v5171
  %v5739 = vsel %vm5483, %v5675, %v5173
  %v5740 = vpack.c.bf16 %v5485, %v5484
  %v5741 = vpack.c.bf16 %v5677, %v5676
  %v5742 = vpack.c.bf16 %v4125, %v4123
  %v5743 = vpack.c.bf16 %v5487, %v5486
  %v5744 = vpack.c.bf16 %v5679, %v5678
  %v5745 = vpack.c.bf16 %v4130, %v4128
  %v5746 = vpack.c.bf16 %v5489, %v5488
  %v5747 = vpack.c.bf16 %v5681, %v5680
  %v5748 = vpack.c.bf16 %v4135, %v4133
  %v5749 = vpack.c.bf16 %v5491, %v5490
  %v5750 = vpack.c.bf16 %v5683, %v5682
  %v5751 = vpack.c.bf16 %v4140, %v4138
  %v5752 = vpack.c.bf16 %v5493, %v5492
  %v5753 = vpack.c.bf16 %v5685, %v5684
  %v5754 = vpack.c.bf16 %v4145, %v4143
  %v5755 = vpack.c.bf16 %v5495, %v5494
  %v5756 = vpack.c.bf16 %v5687, %v5686
  %v5757 = vpack.c.bf16 %v4150, %v4148
  %v5758 = vpack.c.bf16 %v5497, %v5496
  %v5759 = vpack.c.bf16 %v5689, %v5688
  %v5760 = vpack.c.bf16 %v4155, %v4153
  %v5761 = vpack.c.bf16 %v5499, %v5498
  %v5762 = vpack.c.bf16 %v5691, %v5690
  %v5763 = vpack.c.bf16 %v4160, %v4158
  %v5764 = vpack.c.bf16 %v5501, %v5500
  %v5765 = vpack.c.bf16 %v5693, %v5692
  %v5766 = vpack.c.bf16 %v4165, %v4163
  %v5767 = vpack.c.bf16 %v5503, %v5502
  %v5768 = vpack.c.bf16 %v5695, %v5694
  %v5769 = vpack.c.bf16 %v4170, %v4168
  %v5770 = vpack.c.bf16 %v5505, %v5504
  %v5771 = vpack.c.bf16 %v5697, %v5696
  %v5772 = vpack.c.bf16 %v4175, %v4173
  %v5773 = vpack.c.bf16 %v5507, %v5506
  %v5774 = vpack.c.bf16 %v5699, %v5698
  %v5775 = vpack.c.bf16 %v4180, %v4178
  %v5776 = vpack.c.bf16 %v5509, %v5508
  %v5777 = vpack.c.bf16 %v5701, %v5700
  %v5778 = vpack.c.bf16 %v4185, %v4183
  %v5779 = vpack.c.bf16 %v5511, %v5510
  %v5780 = vpack.c.bf16 %v5703, %v5702
  %v5781 = vpack.c.bf16 %v4190, %v4188
  %v5782 = vpack.c.bf16 %v5513, %v5512
  %v5783 = vpack.c.bf16 %v5705, %v5704
  %v5784 = vpack.c.bf16 %v4726, %v4724
  %v5785 = vpack.c.bf16 %v5515, %v5514
  %v5786 = vpack.c.bf16 %v5707, %v5706
  %v5787 = vpack.c.bf16 %v847, %v845
  %v5788 = vpack.c.bf16 %v5517, %v5516
  %v5789 = vpack.c.bf16 %v5709, %v5708
  %v5790 = vpack.c.bf16 %v4200, %v4198
  %v5791 = vpack.c.bf16 %v5519, %v5518
  %v5792 = vpack.c.bf16 %v5711, %v5710
  %v5793 = vpack.c.bf16 %v4205, %v4203
  %v5794 = vpack.c.bf16 %v5521, %v5520
  %v5795 = vpack.c.bf16 %v5713, %v5712
  %v5796 = vpack.c.bf16 %v4210, %v4208
  %v5797 = vpack.c.bf16 %v5523, %v5522
  %v5798 = vpack.c.bf16 %v5715, %v5714
  %v5799 = vpack.c.bf16 %v4215, %v4213
  %v5800 = vpack.c.bf16 %v5525, %v5524
  %v5801 = vpack.c.bf16 %v5717, %v5716
  %v5802 = vpack.c.bf16 %v4220, %v4218
  %v5803 = vpack.c.bf16 %v5527, %v5526
  %v5804 = vpack.c.bf16 %v5719, %v5718
  %v5805 = vpack.c.bf16 %v4225, %v4223
  %v5806 = vpack.c.bf16 %v5529, %v5528
  %v5807 = vpack.c.bf16 %v5721, %v5720
  %v5808 = vpack.c.bf16 %v4230, %v4228
  %v5809 = vpack.c.bf16 %v5531, %v5530
  %v5810 = vpack.c.bf16 %v5723, %v5722
  %v5811 = vpack.c.bf16 %v4235, %v4233
  %v5812 = vpack.c.bf16 %v5533, %v5532
  %v5813 = vpack.c.bf16 %v5725, %v5724
  %v5814 = vpack.c.bf16 %v4240, %v4238
  %v5815 = vpack.c.bf16 %v5535, %v5534
  %v5816 = vpack.c.bf16 %v5727, %v5726
  %v5817 = vpack.c.bf16 %v4245, %v4243
  %v5818 = vpack.c.bf16 %v5537, %v5536
  %v5819 = vpack.c.bf16 %v5729, %v5728
  %v5820 = vpack.c.bf16 %v4250, %v4248
  %v5821 = vpack.c.bf16 %v5539, %v5538
  %v5822 = vpack.c.bf16 %v5731, %v5730
  %v5823 = vpack.c.bf16 %v4255, %v4253
  %v5824 = vpack.c.bf16 %v5541, %v5540
  %v5825 = vpack.c.bf16 %v5733, %v5732
  %v5826 = vpack.c.bf16 %v4260, %v4258
  %v5827 = vpack.c.bf16 %v5543, %v5542
  %v5828 = vpack.c.bf16 %v5735, %v5734
  %v5829 = vpack.c.bf16 %v4265, %v4263
  %v5830 = vpack.c.bf16 %v5545, %v5544
  %v5831 = vpack.c.bf16 %v5737, %v5736
  %v5832 = vpack.c.bf16 %v4731, %v4729
  %v5833 = vpack.c.bf16 %v5547, %v5546
  %v5834 = vpack.c.bf16 %v5739, %v5738
  %v5836 = vlaneseq
  %v5837 = vshrl.u32 %v5836, 7
  %v5838 = vsub.s32 0, %v5837
  %v5839 = vrot.slane %v3337, %v5838
  %v5877 = vunpack.c.l.b16 %v3301
  %v5878 = vunpack.c.l.b16 %v3302
  %v5879 = vunpack.c.l.b16 %v3303
  %v5880 = vunpack.c.l.b16 %v3304
  %v5881 = vunpack.c.l.b16 %v3305
  %v5882 = vunpack.c.l.b16 %v3306
  %v5883 = vunpack.c.l.b16 %v3307
  %v5884 = vunpack.c.l.b16 %v3308
  %v5885 = vunpack.c.l.b16 %v3309
  %v5886 = vunpack.c.l.b16 %v3310
  %v5887 = vunpack.c.l.b16 %v3311
  %v5888 = vunpack.c.l.b16 %v3312
  %v5889 = vunpack.c.l.b16 %v3313
  %v5890 = vunpack.c.l.b16 %v3314
  %v5891 = vunpack.c.l.b16 %v3315
  %v5892 = vunpack.c.l.b16 %v3316
  %v5893 = vunpack.c.l.b16 %v3317
  %v5894 = vunpack.c.l.b16 %v3318
  %v5895 = vunpack.c.l.b16 %v3319
  %v5896 = vunpack.c.l.b16 %v3320
  %v5897 = vunpack.c.l.b16 %v3321
  %v5898 = vunpack.c.l.b16 %v3322
  %v5899 = vunpack.c.l.b16 %v3323
  %v5900 = vunpack.c.l.b16 %v3324
  %v5901 = vunpack.c.l.b16 %v3325
  %v5902 = vunpack.c.l.b16 %v3326
  %v5903 = vunpack.c.l.b16 %v3327
  %v5904 = vunpack.c.l.b16 %v3328
  %v5905 = vunpack.c.l.b16 %v3329
  %v5906 = vunpack.c.l.b16 %v3330
  %v5907 = vunpack.c.l.b16 %v3331
  %v5908 = vunpack.c.l.b16 %v3332
  %v5909 = vunpack.c.l.b16 %v3333
  %v5910 = vunpack.c.l.b16 %v3334
  %v5911 = vunpack.c.l.b16 %v3335
  %v5912 = vunpack.c.l.b16 %v3336
  %v5913 = vpack.c.b16 %v5878, %v5877
  %v5914 = vpack.c.b16 %v5880, %v5879
  %v5915 = vpack.c.b16 %v5882, %v5881
  %v5916 = vpack.c.b16 %v5884, %v5883
  %v5917 = vpack.c.b16 %v5886, %v5885
  %v5918 = vpack.c.b16 %v5888, %v5887
  %v5919 = vpack.c.b16 %v5890, %v5889
  %v5920 = vpack.c.b16 %v5892, %v5891
  %v5921 = vpack.c.b16 %v5894, %v5893
  %v5922 = vpack.c.b16 %v5896, %v5895
  %v5923 = vpack.c.b16 %v5898, %v5897
  %v5924 = vpack.c.b16 %v5900, %v5899
  %v5925 = vpack.c.b16 %v5902, %v5901
  %v5926 = vpack.c.b16 %v5904, %v5903
  %v5927 = vpack.c.b16 %v5906, %v5905
  %v5928 = vpack.c.b16 %v5908, %v5907
  %v5929 = vpack.c.b16 %v5910, %v5909
  %v5930 = vpack.c.b16 %v5912, %v5911
  %v5950 = vsel %vm2793, %v5742, 0
  %v5953 = vsel %vm2793, %v5745, 0
  %v5956 = vsel %vm2793, %v5748, 0
  %v5959 = vsel %vm2793, %v5751, 0
  %v5962 = vsel %vm2793, %v5754, 0
  %v5965 = vsel %vm2793, %v5757, 0
  %v5968 = vsel %vm2793, %v5760, 0
  %v5971 = vsel %vm2793, %v5763, 0
  %v5974 = vsel %vm2793, %v5766, 0
  %v5977 = vsel %vm2793, %v5769, 0
  %v5980 = vsel %vm2793, %v5772, 0
  %v5983 = vsel %vm2793, %v5775, 0
  %v5986 = vsel %vm2793, %v5778, 0
  %v5989 = vsel %vm2793, %v5781, 0
  %v5992 = vsel %vm2793, %v5784, 0
  %v5995 = vsel %vm2793, %v5787, 0
  %v5998 = vsel %vm2793, %v5790, 0
  %v6001 = vsel %vm2793, %v5793, 0
  %v6004 = vsel %vm2793, %v5796, 0
  %v6007 = vsel %vm2793, %v5799, 0
  %v6010 = vsel %vm2793, %v5802, 0
  %v6013 = vsel %vm2793, %v5805, 0
  %v6016 = vsel %vm2793, %v5808, 0
  %v6019 = vsel %vm2793, %v5811, 0
  %v6022 = vsel %vm2793, %v5814, 0
  %v6025 = vsel %vm2793, %v5817, 0
  %v6028 = vsel %vm2793, %v5820, 0
  %v6031 = vsel %vm2793, %v5823, 0
  %v6034 = vsel %vm2793, %v5826, 0
  %v6037 = vsel %vm2793, %v5829, 0
  %v6040 = vsel %vm2793, %v5832, 0
  %6042 = vmatprep.subr.bf16.mxu0 0
  %6043 = vmatpush1.bf16.msra.mxu0 %v5913
  %6044 = vmatprep.subr.bf16.mxu0 0
  %6045 = vmatpush1.bf16.msra.mxu0 %v5914
  %6046 = vmatprep.subr.bf16.mxu0 0
  %6047 = vmatpush1.bf16.msra.mxu0 %v5915
  %6048 = vmatprep.subr.bf16.mxu0 0
  %6049 = vmatpush1.bf16.msra.mxu0 %v5916
  %6050 = vmatprep.subr.bf16.mxu0 0
  %6051 = vmatpush1.bf16.msra.mxu0 %v5917
  %6052 = vmatprep.subr.bf16.mxu0 0
  %6053 = vmatpush1.bf16.msra.mxu0 %v5918
  %6054 = vmatprep.subr.bf16.mxu0 0
  %6055 = vmatpush1.bf16.msra.mxu0 %v5919
  %6056 = vmatprep.subr.bf16.mxu0 0
  %6057 = vmatpush1.bf16.msra.mxu0 %v5920
  %6058 = vmatprep.subr.bf16.mxu0 0
  %6059 = vmatpush1.bf16.msra.mxu0 %v5921
  %6060 = vmatprep.subr.bf16.mxu0 0
  %6061 = vmatpush1.bf16.msra.mxu0 %v5922
  %6062 = vmatprep.subr.bf16.mxu0 0
  %6063 = vmatpush1.bf16.msra.mxu0 %v5923
  %6064 = vmatprep.subr.bf16.mxu0 0
  %6065 = vmatpush1.bf16.msra.mxu0 %v5924
  %6066 = vmatprep.subr.bf16.mxu0 0
  %6067 = vmatpush1.bf16.msra.mxu0 %v5925
  %6068 = vmatprep.subr.bf16.mxu0 0
  %6069 = vmatpush1.bf16.msra.mxu0 %v5926
  %6070 = vmatprep.subr.bf16.mxu0 0
  %6071 = vmatpush1.bf16.msra.mxu0 %v5927
  %6072 = vmatprep.subr.bf16.mxu0 0
  %6073 = vmatpush1.bf16.msra.mxu0 %v5928
  %6074 = vmatprep.mubr.bf16.mxu0 %v5741
  %6075 = vmatmul.mubr.bf16.gmra.mrb[0].mxu0 %v5740
  %v6076 = vpop.f32.mrb[0].mxu0
  %v6077 = vadd.f32 %v5839, %v6076
  %v6078 = vpop.f32.mrb[0].mxu0
  %v6079 = vpop.f32.mrb[0].mxu0
  %v6080 = vadd.f32 %v5839, %v6079
  %v6081 = vpop.f32.mrb[0].mxu0
  %6082 = vmatprep.mubr.bf16.mxu0 %v5744
  %6083 = vmatmul.mubr.bf16.gmra.mrb[0].mxu0 %v5743
  %v6084 = vpop.f32.mrb[0].mxu0
  %v6085 = vadd.f32 %v5839, %v6084
  %v6086 = vpop.f32.mrb[0].mxu0
  %v6087 = vpop.f32.mrb[0].mxu0
  %v6088 = vadd.f32 %v5839, %v6087
  %v6089 = vpop.f32.mrb[0].mxu0
  %6090 = vmatprep.mubr.bf16.mxu0 %v5747
  %6091 = vmatmul.mubr.bf16.gmra.mrb[0].mxu0 %v5746
  %v6092 = vpop.f32.mrb[0].mxu0
  %v6093 = vadd.f32 %v5839, %v6092
  %v6094 = vpop.f32.mrb[0].mxu0
  %v6095 = vpop.f32.mrb[0].mxu0
  %v6096 = vadd.f32 %v5839, %v6095
  %v6097 = vpop.f32.mrb[0].mxu0
  %6098 = vmatprep.mubr.bf16.mxu0 %v5750
  %6099 = vmatmul.mubr.bf16.gmra.mrb[0].mxu0 %v5749
  %v6100 = vpop.f32.mrb[0].mxu0
  %v6101 = vadd.f32 %v5839, %v6100
  %v6102 = vpop.f32.mrb[0].mxu0
  %v6103 = vpop.f32.mrb[0].mxu0
  %v6104 = vadd.f32 %v5839, %v6103
  %v6105 = vpop.f32.mrb[0].mxu0
  %6106 = vmatprep.mubr.bf16.mxu0 %v5753
  %6107 = vmatmul.mubr.bf16.gmra.mrb[0].mxu0 %v5752
  %v6108 = vpop.f32.mrb[0].mxu0
  %v6109 = vadd.f32 %v5839, %v6108
  %v6110 = vpop.f32.mrb[0].mxu0
  %v6111 = vpop.f32.mrb[0].mxu0
  %v6112 = vadd.f32 %v5839, %v6111
  %v6113 = vpop.f32.mrb[0].mxu0
  %6114 = vmatprep.mubr.bf16.mxu0 %v5756
  %6115 = vmatmul.mubr.bf16.gmra.mrb[0].mxu0 %v5755
  %v6116 = vpop.f32.mrb[0].mxu0
  %v6117 = vadd.f32 %v5839, %v6116
  %v6118 = vpop.f32.mrb[0].mxu0
  %v6119 = vpop.f32.mrb[0].mxu0
  %v6120 = vadd.f32 %v5839, %v6119
  %v6121 = vpop.f32.mrb[0].mxu0
  %6122 = vmatprep.mubr.bf16.mxu0 %v5759
  %6123 = vmatmul.mubr.bf16.gmra.mrb[0].mxu0 %v5758
  %v6124 = vpop.f32.mrb[0].mxu0
  %v6125 = vadd.f32 %v5839, %v6124
  %v6126 = vpop.f32.mrb[0].mxu0
  %v6127 = vpop.f32.mrb[0].mxu0
  %v6128 = vadd.f32 %v5839, %v6127
  %v6129 = vpop.f32.mrb[0].mxu0
  %6130 = vmatprep.mubr.bf16.mxu0 %v5762
  %6131 = vmatmul.mubr.bf16.gmra.mrb[0].mxu0 %v5761
  %v6132 = vpop.f32.mrb[0].mxu0
  %v6133 = vadd.f32 %v5839, %v6132
  %v6134 = vpop.f32.mrb[0].mxu0
  %v6135 = vpop.f32.mrb[0].mxu0
  %v6136 = vadd.f32 %v5839, %v6135
  %v6137 = vpop.f32.mrb[0].mxu0
  %6138 = vmatprep.mubr.bf16.mxu0 %v5765
  %6139 = vmatmul.mubr.bf16.gmra.mrb[0].mxu0 %v5764
  %v6140 = vpop.f32.mrb[0].mxu0
  %v6141 = vadd.f32 %v5839, %v6140
  %v6142 = vpop.f32.mrb[0].mxu0
  %v6143 = vpop.f32.mrb[0].mxu0
  %v6144 = vadd.f32 %v5839, %v6143
  %v6145 = vpop.f32.mrb[0].mxu0
  %6146 = vmatprep.mubr.bf16.mxu0 %v5768
  %6147 = vmatmul.mubr.bf16.gmra.mrb[0].mxu0 %v5767
  %v6148 = vpop.f32.mrb[0].mxu0
  %v6149 = vadd.f32 %v5839, %v6148
  %v6150 = vpop.f32.mrb[0].mxu0
  %v6151 = vpop.f32.mrb[0].mxu0
  %v6152 = vadd.f32 %v5839, %v6151
  %v6153 = vpop.f32.mrb[0].mxu0
  %6154 = vmatprep.mubr.bf16.mxu0 %v5771
  %6155 = vmatmul.mubr.bf16.gmra.mrb[0].mxu0 %v5770
  %v6156 = vpop.f32.mrb[0].mxu0
  %v6157 = vadd.f32 %v5839, %v6156
  %v6158 = vpop.f32.mrb[0].mxu0
  %v6159 = vpop.f32.mrb[0].mxu0
  %v6160 = vadd.f32 %v5839, %v6159
  %v6161 = vpop.f32.mrb[0].mxu0
  %6162 = vmatprep.mubr.bf16.mxu0 %v5774
  %6163 = vmatmul.mubr.bf16.gmra.mrb[0].mxu0 %v5773
  %v6164 = vpop.f32.mrb[0].mxu0
  %v6165 = vadd.f32 %v5839, %v6164
  %v6166 = vpop.f32.mrb[0].mxu0
  %v6167 = vpop.f32.mrb[0].mxu0
  %v6168 = vadd.f32 %v5839, %v6167
  %v6169 = vpop.f32.mrb[0].mxu0
  %6170 = vmatprep.mubr.bf16.mxu0 %v5777
  %6171 = vmatmul.mubr.bf16.gmra.mrb[0].mxu0 %v5776
  %v6172 = vpop.f32.mrb[0].mxu0
  %v6173 = vadd.f32 %v5839, %v6172
  %v6174 = vpop.f32.mrb[0].mxu0
  %v6175 = vpop.f32.mrb[0].mxu0
  %v6176 = vadd.f32 %v5839, %v6175
  %v6177 = vpop.f32.mrb[0].mxu0
  %6178 = vmatprep.mubr.bf16.mxu0 %v5780
  %6179 = vmatmul.mubr.bf16.gmra.mrb[0].mxu0 %v5779
  %v6180 = vpop.f32.mrb[0].mxu0
  %v6181 = vadd.f32 %v5839, %v6180
  %v6182 = vpop.f32.mrb[0].mxu0
  %v6183 = vpop.f32.mrb[0].mxu0
  %v6184 = vadd.f32 %v5839, %v6183
  %v6185 = vpop.f32.mrb[0].mxu0
  %6186 = vmatprep.mubr.bf16.mxu0 %v5783
  %6187 = vmatmul.mubr.bf16.gmra.mrb[0].mxu0 %v5782
  %v6188 = vpop.f32.mrb[0].mxu0
  %v6189 = vadd.f32 %v5839, %v6188
  %v6190 = vpop.f32.mrb[0].mxu0
  %v6191 = vpop.f32.mrb[0].mxu0
  %v6192 = vadd.f32 %v5839, %v6191
  %v6193 = vpop.f32.mrb[0].mxu0
  %6194 = vmatprep.mubr.bf16.mxu0 %v5786
  %6195 = vmatmul.mubr.bf16.gmra.mrb[0].mxu0 %v5785
  %v6196 = vpop.f32.mrb[0].mxu0
  %v6197 = vadd.f32 %v5839, %v6196
  %v6198 = vpop.f32.mrb[0].mxu0
  %v6199 = vpop.f32.mrb[0].mxu0
  %v6200 = vadd.f32 %v5839, %v6199
  %v6201 = vpop.f32.mrb[0].mxu0
  %6202 = vmatprep.mubr.bf16.mxu0 %v5789
  %6203 = vmatmul.mubr.bf16.gmra.mrb[0].mxu0 %v5788
  %v6204 = vpop.f32.mrb[0].mxu0
  %v6205 = vadd.f32 %v5839, %v6204
  %v6206 = vpop.f32.mrb[0].mxu0
  %v6207 = vpop.f32.mrb[0].mxu0
  %v6208 = vadd.f32 %v5839, %v6207
  %v6209 = vpop.f32.mrb[0].mxu0
  %6210 = vmatprep.mubr.bf16.mxu0 %v5792
  %6211 = vmatmul.mubr.bf16.gmra.mrb[0].mxu0 %v5791
  %v6212 = vpop.f32.mrb[0].mxu0
  %v6213 = vadd.f32 %v5839, %v6212
  %v6214 = vpop.f32.mrb[0].mxu0
  %v6215 = vpop.f32.mrb[0].mxu0
  %v6216 = vadd.f32 %v5839, %v6215
  %v6217 = vpop.f32.mrb[0].mxu0
  %6218 = vmatprep.mubr.bf16.mxu0 %v5795
  %6219 = vmatmul.mubr.bf16.gmra.mrb[0].mxu0 %v5794
  %v6220 = vpop.f32.mrb[0].mxu0
  %v6221 = vadd.f32 %v5839, %v6220
  %v6222 = vpop.f32.mrb[0].mxu0
  %v6223 = vpop.f32.mrb[0].mxu0
  %v6224 = vadd.f32 %v5839, %v6223
  %v6225 = vpop.f32.mrb[0].mxu0
  %6226 = vmatprep.mubr.bf16.mxu0 %v5798
  %6227 = vmatmul.mubr.bf16.gmra.mrb[0].mxu0 %v5797
  %v6228 = vpop.f32.mrb[0].mxu0
  %v6229 = vadd.f32 %v5839, %v6228
  %v6230 = vpop.f32.mrb[0].mxu0
  %v6231 = vpop.f32.mrb[0].mxu0
  %v6232 = vadd.f32 %v5839, %v6231
  %v6233 = vpop.f32.mrb[0].mxu0
  %6234 = vmatprep.mubr.bf16.mxu0 %v5801
  %6235 = vmatmul.mubr.bf16.gmra.mrb[0].mxu0 %v5800
  %v6236 = vpop.f32.mrb[0].mxu0
  %v6237 = vadd.f32 %v5839, %v6236
  %v6238 = vpop.f32.mrb[0].mxu0
  %v6239 = vpop.f32.mrb[0].mxu0
  %v6240 = vadd.f32 %v5839, %v6239
  %v6241 = vpop.f32.mrb[0].mxu0
  %6242 = vmatprep.mubr.bf16.mxu0 %v5804
  %6243 = vmatmul.mubr.bf16.gmra.mrb[0].mxu0 %v5803
  %v6244 = vpop.f32.mrb[0].mxu0
  %v6245 = vadd.f32 %v5839, %v6244
  %v6246 = vpop.f32.mrb[0].mxu0
  %v6247 = vpop.f32.mrb[0].mxu0
  %v6248 = vadd.f32 %v5839, %v6247
  %v6249 = vpop.f32.mrb[0].mxu0
  %6250 = vmatprep.mubr.bf16.mxu0 %v5807
  %6251 = vmatmul.mubr.bf16.gmra.mrb[0].mxu0 %v5806
  %v6252 = vpop.f32.mrb[0].mxu0
  %v6253 = vadd.f32 %v5839, %v6252
  %v6254 = vpop.f32.mrb[0].mxu0
  %v6255 = vpop.f32.mrb[0].mxu0
  %v6256 = vadd.f32 %v5839, %v6255
  %v6257 = vpop.f32.mrb[0].mxu0
  %6258 = vmatprep.mubr.bf16.mxu0 %v5810
  %6259 = vmatmul.mubr.bf16.gmra.mrb[0].mxu0 %v5809
  %v6260 = vpop.f32.mrb[0].mxu0
  %v6261 = vadd.f32 %v5839, %v6260
  %v6262 = vpop.f32.mrb[0].mxu0
  %v6263 = vpop.f32.mrb[0].mxu0
  %v6264 = vadd.f32 %v5839, %v6263
  %v6265 = vpop.f32.mrb[0].mxu0
  %6266 = vmatprep.mubr.bf16.mxu0 %v5813
  %6267 = vmatmul.mubr.bf16.gmra.mrb[0].mxu0 %v5812
  %v6268 = vpop.f32.mrb[0].mxu0
  %v6269 = vadd.f32 %v5839, %v6268
  %v6270 = vpop.f32.mrb[0].mxu0
  %v6271 = vpop.f32.mrb[0].mxu0
  %v6272 = vadd.f32 %v5839, %v6271
  %v6273 = vpop.f32.mrb[0].mxu0
  %6274 = vmatprep.mubr.bf16.mxu0 %v5816
  %6275 = vmatmul.mubr.bf16.gmra.mrb[0].mxu0 %v5815
  %v6276 = vpop.f32.mrb[0].mxu0
  %v6277 = vadd.f32 %v5839, %v6276
  %v6278 = vpop.f32.mrb[0].mxu0
  %v6279 = vpop.f32.mrb[0].mxu0
  %v6280 = vadd.f32 %v5839, %v6279
  %v6281 = vpop.f32.mrb[0].mxu0
  %6282 = vmatprep.mubr.bf16.mxu0 %v5819
  %6283 = vmatmul.mubr.bf16.gmra.mrb[0].mxu0 %v5818
  %v6284 = vpop.f32.mrb[0].mxu0
  %v6285 = vadd.f32 %v5839, %v6284
  %v6286 = vpop.f32.mrb[0].mxu0
  %v6287 = vpop.f32.mrb[0].mxu0
  %v6288 = vadd.f32 %v5839, %v6287
  %v6289 = vpop.f32.mrb[0].mxu0
  %6290 = vmatprep.mubr.bf16.mxu0 %v5822
  %6291 = vmatmul.mubr.bf16.gmra.mrb[0].mxu0 %v5821
  %v6292 = vpop.f32.mrb[0].mxu0
  %v6293 = vadd.f32 %v5839, %v6292
  %v6294 = vpop.f32.mrb[0].mxu0
  %v6295 = vpop.f32.mrb[0].mxu0
  %v6296 = vadd.f32 %v5839, %v6295
  %v6297 = vpop.f32.mrb[0].mxu0
  %6298 = vmatprep.mubr.bf16.mxu0 %v5825
  %6299 = vmatmul.mubr.bf16.gmra.mrb[0].mxu0 %v5824
  %v6300 = vpop.f32.mrb[0].mxu0
  %v6301 = vadd.f32 %v5839, %v6300
  %v6302 = vpop.f32.mrb[0].mxu0
  %v6303 = vpop.f32.mrb[0].mxu0
  %v6304 = vadd.f32 %v5839, %v6303
  %v6305 = vpop.f32.mrb[0].mxu0
  %6306 = vmatprep.mubr.bf16.mxu0 %v5828
  %6307 = vmatmul.mubr.bf16.gmra.mrb[0].mxu0 %v5827
  %v6308 = vpop.f32.mrb[0].mxu0
  %v6309 = vadd.f32 %v5839, %v6308
  %v6310 = vpop.f32.mrb[0].mxu0
  %v6311 = vpop.f32.mrb[0].mxu0
  %v6312 = vadd.f32 %v5839, %v6311
  %v6313 = vpop.f32.mrb[0].mxu0
  %6314 = vmatprep.mubr.bf16.mxu0 %v5831
  %6315 = vmatmul.mubr.bf16.gmra.mrb[0].mxu0 %v5830
  %v6316 = vpop.f32.mrb[0].mxu0
  %v6317 = vadd.f32 %v5839, %v6316
  %v6318 = vpop.f32.mrb[0].mxu0
  %v6319 = vpop.f32.mrb[0].mxu0
  %v6320 = vadd.f32 %v5839, %v6319
  %v6321 = vpop.f32.mrb[0].mxu0
  %6322 = vmatprep.mubr.bf16.mxu0 %v5834
  %6323 = vmatmul.mubr.bf16.gmra.mrb[0].mxu0 %v5833
  %v6324 = vpop.f32.mrb[0].mxu0
  %v6325 = vadd.f32 %v5839, %v6324
  %v6326 = vpop.f32.mrb[0].mxu0
  %v6327 = vpop.f32.mrb[0].mxu0
  %v6328 = vadd.f32 %v5839, %v6327
  %v6329 = vpop.f32.mrb[0].mxu0
  %6330 = vdwg.mxu0
  %6331 = vmatprep.subr.bf16.mxu0 0
  %6332 = vmatpush1.bf16.msra.mxu0 %v5929
  %6333 = vmatprep.subr.bf16.mxu0 0
  %6334 = vmatpush1.bf16.msra.mxu0 %v5930
  %6335 = vmatprep.subr.bf16.mxu0 0
  %6336 = vmatpush1.bf16.msra.mxu0 0
  %6337 = vmatprep.subr.bf16.mxu0 0
  %6338 = vmatpush1.bf16.msra.mxu0 0
  %6339 = vmatprep.subr.bf16.mxu0 0
  %6340 = vmatpush1.bf16.msra.mxu0 0
  %6341 = vmatprep.subr.bf16.mxu0 0
  %6342 = vmatpush1.bf16.msra.mxu0 0
  %6343 = vmatprep.subr.bf16.mxu0 0
  %6344 = vmatpush1.bf16.msra.mxu0 0
  %6345 = vmatprep.subr.bf16.mxu0 0
  %6346 = vmatpush1.bf16.msra.mxu0 0
  %6347 = vmatprep.subr.bf16.mxu0 0
  %6348 = vmatpush1.bf16.msra.mxu0 0
  %6349 = vmatprep.subr.bf16.mxu0 0
  %6350 = vmatpush1.bf16.msra.mxu0 0
  %6351 = vmatprep.subr.bf16.mxu0 0
  %6352 = vmatpush1.bf16.msra.mxu0 0
  %6353 = vmatprep.subr.bf16.mxu0 0
  %6354 = vmatpush1.bf16.msra.mxu0 0
  %6355 = vmatprep.subr.bf16.mxu0 0
  %6356 = vmatpush1.bf16.msra.mxu0 0
  %6357 = vmatprep.subr.bf16.mxu0 0
  %6358 = vmatpush1.bf16.msra.mxu0 0
  %6359 = vmatprep.subr.bf16.mxu0 0
  %6360 = vmatpush1.bf16.msra.mxu0 0
  %6361 = vmatprep.subr.bf16.mxu0 0
  %6362 = vmatpush1.bf16.msra.mxu0 0
  %6363 = vmatprep.mubr.bf16.mxu0 0
  %6364 = vmatmul.mubr.bf16.gmra.mrb[0].mxu0 %v5950
  %v6365 = vpop.f32.mrb[0].mxu0
  %v6366 = vadd.f32 %v6077, %v6365
  %v6367 = vpop.f32.mrb[0].mxu0
  %v6368 = vpop.f32.mrb[0].mxu0
  %v6369 = vadd.f32 %v6080, %v6368
  %v6370 = vpop.f32.mrb[0].mxu0
  %6371 = vmatprep.mubr.bf16.mxu0 0
  %6372 = vmatmul.mubr.bf16.gmra.mrb[0].mxu0 %v5953
  %v6373 = vpop.f32.mrb[0].mxu0
  %v6374 = vadd.f32 %v6085, %v6373
  %v6375 = vpop.f32.mrb[0].mxu0
  %v6376 = vpop.f32.mrb[0].mxu0
  %v6377 = vadd.f32 %v6088, %v6376
  %v6378 = vpop.f32.mrb[0].mxu0
  %6379 = vmatprep.mubr.bf16.mxu0 0
  %6380 = vmatmul.mubr.bf16.gmra.mrb[0].mxu0 %v5956
  %v6381 = vpop.f32.mrb[0].mxu0
  %v6382 = vadd.f32 %v6093, %v6381
  %v6383 = vpop.f32.mrb[0].mxu0
  %v6384 = vpop.f32.mrb[0].mxu0
  %v6385 = vadd.f32 %v6096, %v6384
  %v6386 = vpop.f32.mrb[0].mxu0
  %6387 = vmatprep.mubr.bf16.mxu0 0
  %6388 = vmatmul.mubr.bf16.gmra.mrb[0].mxu0 %v5959
  %v6389 = vpop.f32.mrb[0].mxu0
  %v6390 = vadd.f32 %v6101, %v6389
  %v6391 = vpop.f32.mrb[0].mxu0
  %v6392 = vpop.f32.mrb[0].mxu0
  %v6393 = vadd.f32 %v6104, %v6392
  %v6394 = vpop.f32.mrb[0].mxu0
  %6395 = vmatprep.mubr.bf16.mxu0 0
  %6396 = vmatmul.mubr.bf16.gmra.mrb[0].mxu0 %v5962
  %v6397 = vpop.f32.mrb[0].mxu0
  %v6398 = vadd.f32 %v6109, %v6397
  %v6399 = vpop.f32.mrb[0].mxu0
  %v6400 = vpop.f32.mrb[0].mxu0
  %v6401 = vadd.f32 %v6112, %v6400
  %v6402 = vpop.f32.mrb[0].mxu0
  %6403 = vmatprep.mubr.bf16.mxu0 0
  %6404 = vmatmul.mubr.bf16.gmra.mrb[0].mxu0 %v5965
  %v6405 = vpop.f32.mrb[0].mxu0
  %v6406 = vadd.f32 %v6117, %v6405
  %v6407 = vpop.f32.mrb[0].mxu0
  %v6408 = vpop.f32.mrb[0].mxu0
  %v6409 = vadd.f32 %v6120, %v6408
  %v6410 = vpop.f32.mrb[0].mxu0
  %6411 = vmatprep.mubr.bf16.mxu0 0
  %6412 = vmatmul.mubr.bf16.gmra.mrb[0].mxu0 %v5968
  %v6413 = vpop.f32.mrb[0].mxu0
  %v6414 = vadd.f32 %v6125, %v6413
  %v6415 = vpop.f32.mrb[0].mxu0
  %v6416 = vpop.f32.mrb[0].mxu0
  %v6417 = vadd.f32 %v6128, %v6416
  %v6418 = vpop.f32.mrb[0].mxu0
  %6419 = vmatprep.mubr.bf16.mxu0 0
  %6420 = vmatmul.mubr.bf16.gmra.mrb[0].mxu0 %v5971
  %v6421 = vpop.f32.mrb[0].mxu0
  %v6422 = vadd.f32 %v6133, %v6421
  %v6423 = vpop.f32.mrb[0].mxu0
  %v6424 = vpop.f32.mrb[0].mxu0
  %v6425 = vadd.f32 %v6136, %v6424
  %v6426 = vpop.f32.mrb[0].mxu0
  %6427 = vmatprep.mubr.bf16.mxu0 0
  %6428 = vmatmul.mubr.bf16.gmra.mrb[0].mxu0 %v5974
  %v6429 = vpop.f32.mrb[0].mxu0
  %v6430 = vadd.f32 %v6141, %v6429
  %v6431 = vpop.f32.mrb[0].mxu0
  %v6432 = vpop.f32.mrb[0].mxu0
  %v6433 = vadd.f32 %v6144, %v6432
  %v6434 = vpop.f32.mrb[0].mxu0
  %6435 = vmatprep.mubr.bf16.mxu0 0
  %6436 = vmatmul.mubr.bf16.gmra.mrb[0].mxu0 %v5977
  %v6437 = vpop.f32.mrb[0].mxu0
  %v6438 = vadd.f32 %v6149, %v6437
  %v6439 = vpop.f32.mrb[0].mxu0
  %v6440 = vpop.f32.mrb[0].mxu0
  %v6441 = vadd.f32 %v6152, %v6440
  %v6442 = vpop.f32.mrb[0].mxu0
  %6443 = vmatprep.mubr.bf16.mxu0 0
  %6444 = vmatmul.mubr.bf16.gmra.mrb[0].mxu0 %v5980
  %v6445 = vpop.f32.mrb[0].mxu0
  %v6446 = vadd.f32 %v6157, %v6445
  %v6447 = vpop.f32.mrb[0].mxu0
  %v6448 = vpop.f32.mrb[0].mxu0
  %v6449 = vadd.f32 %v6160, %v6448
  %v6450 = vpop.f32.mrb[0].mxu0
  %6451 = vmatprep.mubr.bf16.mxu0 0
  %6452 = vmatmul.mubr.bf16.gmra.mrb[0].mxu0 %v5983
  %v6453 = vpop.f32.mrb[0].mxu0
  %v6454 = vadd.f32 %v6165, %v6453
  %v6455 = vpop.f32.mrb[0].mxu0
  %v6456 = vpop.f32.mrb[0].mxu0
  %v6457 = vadd.f32 %v6168, %v6456
  %v6458 = vpop.f32.mrb[0].mxu0
  %6459 = vmatprep.mubr.bf16.mxu0 0
  %6460 = vmatmul.mubr.bf16.gmra.mrb[0].mxu0 %v5986
  %v6461 = vpop.f32.mrb[0].mxu0
  %v6462 = vadd.f32 %v6173, %v6461
  %v6463 = vpop.f32.mrb[0].mxu0
  %v6464 = vpop.f32.mrb[0].mxu0
  %v6465 = vadd.f32 %v6176, %v6464
  %v6466 = vpop.f32.mrb[0].mxu0
  %6467 = vmatprep.mubr.bf16.mxu0 0
  %6468 = vmatmul.mubr.bf16.gmra.mrb[0].mxu0 %v5989
  %v6469 = vpop.f32.mrb[0].mxu0
  %v6470 = vadd.f32 %v6181, %v6469
  %v6471 = vpop.f32.mrb[0].mxu0
  %v6472 = vpop.f32.mrb[0].mxu0
  %v6473 = vadd.f32 %v6184, %v6472
  %v6474 = vpop.f32.mrb[0].mxu0
  %6475 = vmatprep.mubr.bf16.mxu0 0
  %6476 = vmatmul.mubr.bf16.gmra.mrb[0].mxu0 %v5992
  %v6477 = vpop.f32.mrb[0].mxu0
  %v6478 = vadd.f32 %v6189, %v6477
  %v6479 = vpop.f32.mrb[0].mxu0
  %v6480 = vpop.f32.mrb[0].mxu0
  %v6481 = vadd.f32 %v6192, %v6480
  %v6482 = vpop.f32.mrb[0].mxu0
  %6483 = vmatprep.mubr.bf16.mxu0 0
  %6484 = vmatmul.mubr.bf16.gmra.mrb[0].mxu0 %v5995
  %v6485 = vpop.f32.mrb[0].mxu0
  %v6486 = vadd.f32 %v6197, %v6485
  %v6487 = vpop.f32.mrb[0].mxu0
  %v6488 = vpop.f32.mrb[0].mxu0
  %v6489 = vadd.f32 %v6200, %v6488
  %v6490 = vpop.f32.mrb[0].mxu0
  %6491 = vmatprep.mubr.bf16.mxu0 0
  %6492 = vmatmul.mubr.bf16.gmra.mrb[0].mxu0 %v5998
  %v6493 = vpop.f32.mrb[0].mxu0
  %v6494 = vadd.f32 %v6205, %v6493
  %v6495 = vpop.f32.mrb[0].mxu0
  %v6496 = vpop.f32.mrb[0].mxu0
  %v6497 = vadd.f32 %v6208, %v6496
  %v6498 = vpop.f32.mrb[0].mxu0
  %6499 = vmatprep.mubr.bf16.mxu0 0
  %6500 = vmatmul.mubr.bf16.gmra.mrb[0].mxu0 %v6001
  %v6501 = vpop.f32.mrb[0].mxu0
  %v6502 = vadd.f32 %v6213, %v6501
  %v6503 = vpop.f32.mrb[0].mxu0
  %v6504 = vpop.f32.mrb[0].mxu0
  %v6505 = vadd.f32 %v6216, %v6504
  %v6506 = vpop.f32.mrb[0].mxu0
  %6507 = vmatprep.mubr.bf16.mxu0 0
  %6508 = vmatmul.mubr.bf16.gmra.mrb[0].mxu0 %v6004
  %v6509 = vpop.f32.mrb[0].mxu0
  %v6510 = vadd.f32 %v6221, %v6509
  %v6511 = vpop.f32.mrb[0].mxu0
  %v6512 = vpop.f32.mrb[0].mxu0
  %v6513 = vadd.f32 %v6224, %v6512
  %v6514 = vpop.f32.mrb[0].mxu0
  %6515 = vmatprep.mubr.bf16.mxu0 0
  %6516 = vmatmul.mubr.bf16.gmra.mrb[0].mxu0 %v6007
  %v6517 = vpop.f32.mrb[0].mxu0
  %v6518 = vadd.f32 %v6229, %v6517
  %v6519 = vpop.f32.mrb[0].mxu0
  %v6520 = vpop.f32.mrb[0].mxu0
  %v6521 = vadd.f32 %v6232, %v6520
  %v6522 = vpop.f32.mrb[0].mxu0
  %6523 = vmatprep.mubr.bf16.mxu0 0
  %6524 = vmatmul.mubr.bf16.gmra.mrb[0].mxu0 %v6010
  %v6525 = vpop.f32.mrb[0].mxu0
  %v6526 = vadd.f32 %v6237, %v6525
  %v6527 = vpop.f32.mrb[0].mxu0
  %v6528 = vpop.f32.mrb[0].mxu0
  %v6529 = vadd.f32 %v6240, %v6528
  %v6530 = vpop.f32.mrb[0].mxu0
  %6531 = vmatprep.mubr.bf16.mxu0 0
  %6532 = vmatmul.mubr.bf16.gmra.mrb[0].mxu0 %v6013
  %v6533 = vpop.f32.mrb[0].mxu0
  %v6534 = vadd.f32 %v6245, %v6533
  %v6535 = vpop.f32.mrb[0].mxu0
  %v6536 = vpop.f32.mrb[0].mxu0
  %v6537 = vadd.f32 %v6248, %v6536
  %v6538 = vpop.f32.mrb[0].mxu0
  %6539 = vmatprep.mubr.bf16.mxu0 0
  %6540 = vmatmul.mubr.bf16.gmra.mrb[0].mxu0 %v6016
  %v6541 = vpop.f32.mrb[0].mxu0
  %v6542 = vadd.f32 %v6253, %v6541
  %v6543 = vpop.f32.mrb[0].mxu0
  %v6544 = vpop.f32.mrb[0].mxu0
  %v6545 = vadd.f32 %v6256, %v6544
  %v6546 = vpop.f32.mrb[0].mxu0
  %6547 = vmatprep.mubr.bf16.mxu0 0
  %6548 = vmatmul.mubr.bf16.gmra.mrb[0].mxu0 %v6019
  %v6549 = vpop.f32.mrb[0].mxu0
  %v6550 = vadd.f32 %v6261, %v6549
  %v6551 = vpop.f32.mrb[0].mxu0
  %v6552 = vpop.f32.mrb[0].mxu0
  %v6553 = vadd.f32 %v6264, %v6552
  %v6554 = vpop.f32.mrb[0].mxu0
  %6555 = vmatprep.mubr.bf16.mxu0 0
  %6556 = vmatmul.mubr.bf16.gmra.mrb[0].mxu0 %v6022
  %v6557 = vpop.f32.mrb[0].mxu0
  %v6558 = vadd.f32 %v6269, %v6557
  %v6559 = vpop.f32.mrb[0].mxu0
  %v6560 = vpop.f32.mrb[0].mxu0
  %v6561 = vadd.f32 %v6272, %v6560
  %v6562 = vpop.f32.mrb[0].mxu0
  %6563 = vmatprep.mubr.bf16.mxu0 0
  %6564 = vmatmul.mubr.bf16.gmra.mrb[0].mxu0 %v6025
  %v6565 = vpop.f32.mrb[0].mxu0
  %v6566 = vadd.f32 %v6277, %v6565
  %v6567 = vpop.f32.mrb[0].mxu0
  %v6568 = vpop.f32.mrb[0].mxu0
  %v6569 = vadd.f32 %v6280, %v6568
  %v6570 = vpop.f32.mrb[0].mxu0
  %6571 = vmatprep.mubr.bf16.mxu0 0
  %6572 = vmatmul.mubr.bf16.gmra.mrb[0].mxu0 %v6028
  %v6573 = vpop.f32.mrb[0].mxu0
  %v6574 = vadd.f32 %v6285, %v6573
  %v6575 = vpop.f32.mrb[0].mxu0
  %v6576 = vpop.f32.mrb[0].mxu0
  %v6577 = vadd.f32 %v6288, %v6576
  %v6578 = vpop.f32.mrb[0].mxu0
  %6579 = vmatprep.mubr.bf16.mxu0 0
  %6580 = vmatmul.mubr.bf16.gmra.mrb[0].mxu0 %v6031
  %v6581 = vpop.f32.mrb[0].mxu0
  %v6582 = vadd.f32 %v6293, %v6581
  %v6583 = vpop.f32.mrb[0].mxu0
  %v6584 = vpop.f32.mrb[0].mxu0
  %v6585 = vadd.f32 %v6296, %v6584
  %v6586 = vpop.f32.mrb[0].mxu0
  %6587 = vmatprep.mubr.bf16.mxu0 0
  %6588 = vmatmul.mubr.bf16.gmra.mrb[0].mxu0 %v6034
  %v6589 = vpop.f32.mrb[0].mxu0
  %v6590 = vadd.f32 %v6301, %v6589
  %v6591 = vpop.f32.mrb[0].mxu0
  %v6592 = vpop.f32.mrb[0].mxu0
  %v6593 = vadd.f32 %v6304, %v6592
  %v6594 = vpop.f32.mrb[0].mxu0
  %6595 = vmatprep.mubr.bf16.mxu0 0
  %6596 = vmatmul.mubr.bf16.gmra.mrb[0].mxu0 %v6037
  %v6597 = vpop.f32.mrb[0].mxu0
  %v6598 = vadd.f32 %v6309, %v6597
  %v6599 = vpop.f32.mrb[0].mxu0
  %v6600 = vpop.f32.mrb[0].mxu0
  %v6601 = vadd.f32 %v6312, %v6600
  %v6602 = vpop.f32.mrb[0].mxu0
  %6603 = vmatprep.mubr.bf16.mxu0 0
  %6604 = vmatmul.mubr.bf16.gmra.mrb[0].mxu0 %v6040
  %v6605 = vpop.f32.mrb[0].mxu0
  %v6606 = vadd.f32 %v6317, %v6605
  %v6607 = vpop.f32.mrb[0].mxu0
  %v6608 = vpop.f32.mrb[0].mxu0
  %v6609 = vadd.f32 %v6320, %v6608
  %v6610 = vpop.f32.mrb[0].mxu0
  %6611 = vmatprep.mubr.bf16.mxu0 0
  %6612 = vmatmul.mubr.bf16.gmra.mrb[0].mxu0 %v5995
  %v6613 = vpop.f32.mrb[0].mxu0
  %v6614 = vadd.f32 %v6325, %v6613
  %v6615 = vpop.f32.mrb[0].mxu0
  %v6616 = vpop.f32.mrb[0].mxu0
  %v6617 = vadd.f32 %v6328, %v6616
  %v6618 = vpop.f32.mrb[0].mxu0
  %6619 = vdwg.mxu0
  %v6620 = vadd.f32 %v6366, %v6374
  %v6621 = vadd.f32 %v6369, %v6377
  %v6622 = vadd.f32 %v6382, %v6390
  %v6623 = vadd.f32 %v6385, %v6393
  %v6624 = vadd.f32 %v6398, %v6406
  %v6625 = vadd.f32 %v6401, %v6409
  %v6626 = vadd.f32 %v6414, %v6422
  %v6627 = vadd.f32 %v6417, %v6425
  %v6628 = vadd.f32 %v6430, %v6438
  %v6629 = vadd.f32 %v6433, %v6441
  %v6630 = vadd.f32 %v6446, %v6454
  %v6631 = vadd.f32 %v6449, %v6457
  %v6632 = vadd.f32 %v6462, %v6470
  %v6633 = vadd.f32 %v6465, %v6473
  %v6634 = vadd.f32 %v6478, %v6486
  %v6635 = vadd.f32 %v6481, %v6489
  %v6636 = vadd.f32 %v6494, %v6502
  %v6637 = vadd.f32 %v6497, %v6505
  %v6638 = vadd.f32 %v6510, %v6518
  %v6639 = vadd.f32 %v6513, %v6521
  %v6640 = vadd.f32 %v6526, %v6534
  %v6641 = vadd.f32 %v6529, %v6537
  %v6642 = vadd.f32 %v6542, %v6550
  %v6643 = vadd.f32 %v6545, %v6553
  %v6644 = vadd.f32 %v6558, %v6566
  %v6645 = vadd.f32 %v6561, %v6569
  %v6646 = vadd.f32 %v6574, %v6582
  %v6647 = vadd.f32 %v6577, %v6585
  %v6648 = vadd.f32 %v6590, %v6598
  %v6649 = vadd.f32 %v6593, %v6601
  %v6650 = vadd.f32 %v6606, %v6614
  %v6651 = vadd.f32 %v6609, %v6617
  %v6684 = vcombine.high %v6620, %v6620
  %v6686 = vunpack.c.l.s4 1983009808
  %v6687 = vunpack.c.0.s8 %v6686
  %v6688 = vlaneseq
  %v6689 = vshrl.u32 %v6688, 7
  %v6690 = vsub.s32 %v6687, %v6689
  %v6691 = vrot.slane %v6620, %v6690
  %v6693 = vunpack.c.l.s4 1983009808
  %v6694 = vunpack.c.0.s8 %v6693
  %v6695 = vlaneseq
  %v6696 = vshrl.u32 %v6695, 7
  %v6697 = vsub.s32 %v6694, %v6696
  %v6698 = vrot.slane %v6684, %v6697
  %v6699 = vcombine.high %v6691, %v6691
  %v6700 = vcombine.high %v6698, %v6698
  %v6701 = vcombine.high %v6621, %v6621
  %v6703 = vunpack.c.l.s4 1983009808
  %v6704 = vunpack.c.0.s8 %v6703
  %v6705 = vlaneseq
  %v6706 = vshrl.u32 %v6705, 7
  %v6707 = vsub.s32 %v6704, %v6706
  %v6708 = vrot.slane %v6621, %v6707
  %v6710 = vunpack.c.l.s4 1983009808
  %v6711 = vunpack.c.0.s8 %v6710
  %v6712 = vlaneseq
  %v6713 = vshrl.u32 %v6712, 7
  %v6714 = vsub.s32 %v6711, %v6713
  %v6715 = vrot.slane %v6701, %v6714
  %v6716 = vcombine.high %v6708, %v6708
  %v6717 = vcombine.high %v6715, %v6715
  %v6718 = vcombine.high %v6622, %v6622
  %v6720 = vunpack.c.l.s4 1983009808
  %v6721 = vunpack.c.0.s8 %v6720
  %v6722 = vlaneseq
  %v6723 = vshrl.u32 %v6722, 7
  %v6724 = vsub.s32 %v6721, %v6723
  %v6725 = vrot.slane %v6622, %v6724
  %v6727 = vunpack.c.l.s4 1983009808
  %v6728 = vunpack.c.0.s8 %v6727
  %v6729 = vlaneseq
  %v6730 = vshrl.u32 %v6729, 7
  %v6731 = vsub.s32 %v6728, %v6730
  %v6732 = vrot.slane %v6718, %v6731
  %v6733 = vcombine.high %v6725, %v6725
  %v6734 = vcombine.high %v6732, %v6732
  %v6735 = vcombine.high %v6623, %v6623
  %v6737 = vunpack.c.l.s4 1983009808
  %v6738 = vunpack.c.0.s8 %v6737
  %v6739 = vlaneseq
  %v6740 = vshrl.u32 %v6739, 7
  %v6741 = vsub.s32 %v6738, %v6740
  %v6742 = vrot.slane %v6623, %v6741
  %v6744 = vunpack.c.l.s4 1983009808
  %v6745 = vunpack.c.0.s8 %v6744
  %v6746 = vlaneseq
  %v6747 = vshrl.u32 %v6746, 7
  %v6748 = vsub.s32 %v6745, %v6747
  %v6749 = vrot.slane %v6735, %v6748
  %v6750 = vcombine.high %v6742, %v6742
  %v6751 = vcombine.high %v6749, %v6749
  %v6752 = vcombine.high %v6624, %v6624
  %v6754 = vunpack.c.l.s4 1983009808
  %v6755 = vunpack.c.0.s8 %v6754
  %v6756 = vlaneseq
  %v6757 = vshrl.u32 %v6756, 7
  %v6758 = vsub.s32 %v6755, %v6757
  %v6759 = vrot.slane %v6624, %v6758
  %v6761 = vunpack.c.l.s4 1983009808
  %v6762 = vunpack.c.0.s8 %v6761
  %v6763 = vlaneseq
  %v6764 = vshrl.u32 %v6763, 7
  %v6765 = vsub.s32 %v6762, %v6764
  %v6766 = vrot.slane %v6752, %v6765
  %v6767 = vcombine.high %v6759, %v6759
  %v6768 = vcombine.high %v6766, %v6766
  %v6769 = vcombine.high %v6625, %v6625
  %v6771 = vunpack.c.l.s4 1983009808
  %v6772 = vunpack.c.0.s8 %v6771
  %v6773 = vlaneseq
  %v6774 = vshrl.u32 %v6773, 7
  %v6775 = vsub.s32 %v6772, %v6774
  %v6776 = vrot.slane %v6625, %v6775
  %v6778 = vunpack.c.l.s4 1983009808
  %v6779 = vunpack.c.0.s8 %v6778
  %v6780 = vlaneseq
  %v6781 = vshrl.u32 %v6780, 7
  %v6782 = vsub.s32 %v6779, %v6781
  %v6783 = vrot.slane %v6769, %v6782
  %v6784 = vcombine.high %v6776, %v6776
  %v6785 = vcombine.high %v6783, %v6783
  %v6786 = vcombine.high %v6626, %v6626
  %v6788 = vunpack.c.l.s4 1983009808
  %v6789 = vunpack.c.0.s8 %v6788
  %v6790 = vlaneseq
  %v6791 = vshrl.u32 %v6790, 7
  %v6792 = vsub.s32 %v6789, %v6791
  %v6793 = vrot.slane %v6626, %v6792
  %v6795 = vunpack.c.l.s4 1983009808
  %v6796 = vunpack.c.0.s8 %v6795
  %v6797 = vlaneseq
  %v6798 = vshrl.u32 %v6797, 7
  %v6799 = vsub.s32 %v6796, %v6798
  %v6800 = vrot.slane %v6786, %v6799
  %v6801 = vcombine.high %v6793, %v6793
  %v6802 = vcombine.high %v6800, %v6800
  %v6803 = vcombine.high %v6627, %v6627
  %v6805 = vunpack.c.l.s4 1983009808
  %v6806 = vunpack.c.0.s8 %v6805
  %v6807 = vlaneseq
  %v6808 = vshrl.u32 %v6807, 7
  %v6809 = vsub.s32 %v6806, %v6808
  %v6810 = vrot.slane %v6627, %v6809
  %v6812 = vunpack.c.l.s4 1983009808
  %v6813 = vunpack.c.0.s8 %v6812
  %v6814 = vlaneseq
  %v6815 = vshrl.u32 %v6814, 7
  %v6816 = vsub.s32 %v6813, %v6815
  %v6817 = vrot.slane %v6803, %v6816
  %v6818 = vcombine.high %v6810, %v6810
  %v6819 = vcombine.high %v6817, %v6817
  %v6820 = vcombine.high %v6628, %v6628
  %v6822 = vunpack.c.l.s4 1983009808
  %v6823 = vunpack.c.0.s8 %v6822
  %v6824 = vlaneseq
  %v6825 = vshrl.u32 %v6824, 7
  %v6826 = vsub.s32 %v6823, %v6825
  %v6827 = vrot.slane %v6628, %v6826
  %v6829 = vunpack.c.l.s4 1983009808
  %v6830 = vunpack.c.0.s8 %v6829
  %v6831 = vlaneseq
  %v6832 = vshrl.u32 %v6831, 7
  %v6833 = vsub.s32 %v6830, %v6832
  %v6834 = vrot.slane %v6820, %v6833
  %v6835 = vcombine.high %v6827, %v6827
  %v6836 = vcombine.high %v6834, %v6834
  %v6837 = vcombine.high %v6629, %v6629
  %v6839 = vunpack.c.l.s4 1983009808
  %v6840 = vunpack.c.0.s8 %v6839
  %v6841 = vlaneseq
  %v6842 = vshrl.u32 %v6841, 7
  %v6843 = vsub.s32 %v6840, %v6842
  %v6844 = vrot.slane %v6629, %v6843
  %v6846 = vunpack.c.l.s4 1983009808
  %v6847 = vunpack.c.0.s8 %v6846
  %v6848 = vlaneseq
  %v6849 = vshrl.u32 %v6848, 7
  %v6850 = vsub.s32 %v6847, %v6849
  %v6851 = vrot.slane %v6837, %v6850
  %v6852 = vcombine.high %v6844, %v6844
  %v6853 = vcombine.high %v6851, %v6851
  %v6854 = vcombine.high %v6630, %v6630
  %v6856 = vunpack.c.l.s4 1983009808
  %v6857 = vunpack.c.0.s8 %v6856
  %v6858 = vlaneseq
  %v6859 = vshrl.u32 %v6858, 7
  %v6860 = vsub.s32 %v6857, %v6859
  %v6861 = vrot.slane %v6630, %v6860
  %v6863 = vunpack.c.l.s4 1983009808
  %v6864 = vunpack.c.0.s8 %v6863
  %v6865 = vlaneseq
  %v6866 = vshrl.u32 %v6865, 7
  %v6867 = vsub.s32 %v6864, %v6866
  %v6868 = vrot.slane %v6854, %v6867
  %v6869 = vcombine.high %v6861, %v6861
  %v6870 = vcombine.high %v6868, %v6868
  %v6871 = vcombine.high %v6631, %v6631
  %v6873 = vunpack.c.l.s4 1983009808
  %v6874 = vunpack.c.0.s8 %v6873
  %v6875 = vlaneseq
  %v6876 = vshrl.u32 %v6875, 7
  %v6877 = vsub.s32 %v6874, %v6876
  %v6878 = vrot.slane %v6631, %v6877
  %v6880 = vunpack.c.l.s4 1983009808
  %v6881 = vunpack.c.0.s8 %v6880
  %v6882 = vlaneseq
  %v6883 = vshrl.u32 %v6882, 7
  %v6884 = vsub.s32 %v6881, %v6883
  %v6885 = vrot.slane %v6871, %v6884
  %v6886 = vcombine.high %v6878, %v6878
  %v6887 = vcombine.high %v6885, %v6885
  %v6888 = vcombine.high %v6632, %v6632
  %v6890 = vunpack.c.l.s4 1983009808
  %v6891 = vunpack.c.0.s8 %v6890
  %v6892 = vlaneseq
  %v6893 = vshrl.u32 %v6892, 7
  %v6894 = vsub.s32 %v6891, %v6893
  %v6895 = vrot.slane %v6632, %v6894
  %v6897 = vunpack.c.l.s4 1983009808
  %v6898 = vunpack.c.0.s8 %v6897
  %v6899 = vlaneseq
  %v6900 = vshrl.u32 %v6899, 7
  %v6901 = vsub.s32 %v6898, %v6900
  %v6902 = vrot.slane %v6888, %v6901
  %v6903 = vcombine.high %v6895, %v6895
  %v6904 = vcombine.high %v6902, %v6902
  %v6905 = vcombine.high %v6633, %v6633
  %v6907 = vunpack.c.l.s4 1983009808
  %v6908 = vunpack.c.0.s8 %v6907
  %v6909 = vlaneseq
  %v6910 = vshrl.u32 %v6909, 7
  %v6911 = vsub.s32 %v6908, %v6910
  %v6912 = vrot.slane %v6633, %v6911
  %v6914 = vunpack.c.l.s4 1983009808
  %v6915 = vunpack.c.0.s8 %v6914
  %v6916 = vlaneseq
  %v6917 = vshrl.u32 %v6916, 7
  %v6918 = vsub.s32 %v6915, %v6917
  %v6919 = vrot.slane %v6905, %v6918
  %v6920 = vcombine.high %v6912, %v6912
  %v6921 = vcombine.high %v6919, %v6919
  %v6922 = vcombine.high %v6634, %v6634
  %v6924 = vunpack.c.l.s4 1983009808
  %v6925 = vunpack.c.0.s8 %v6924
  %v6926 = vlaneseq
  %v6927 = vshrl.u32 %v6926, 7
  %v6928 = vsub.s32 %v6925, %v6927
  %v6929 = vrot.slane %v6634, %v6928
  %v6931 = vunpack.c.l.s4 1983009808
  %v6932 = vunpack.c.0.s8 %v6931
  %v6933 = vlaneseq
  %v6934 = vshrl.u32 %v6933, 7
  %v6935 = vsub.s32 %v6932, %v6934
  %v6936 = vrot.slane %v6922, %v6935
  %v6937 = vcombine.high %v6929, %v6929
  %v6938 = vcombine.high %v6936, %v6936
  %v6939 = vcombine.high %v6635, %v6635
  %v6941 = vunpack.c.l.s4 1983009808
  %v6942 = vunpack.c.0.s8 %v6941
  %v6943 = vlaneseq
  %v6944 = vshrl.u32 %v6943, 7
  %v6945 = vsub.s32 %v6942, %v6944
  %v6946 = vrot.slane %v6635, %v6945
  %v6948 = vunpack.c.l.s4 1983009808
  %v6949 = vunpack.c.0.s8 %v6948
  %v6950 = vlaneseq
  %v6951 = vshrl.u32 %v6950, 7
  %v6952 = vsub.s32 %v6949, %v6951
  %v6953 = vrot.slane %v6939, %v6952
  %v6954 = vcombine.high %v6946, %v6946
  %v6955 = vcombine.high %v6953, %v6953
  %v6956 = vcombine.high %v6636, %v6636
  %v6958 = vunpack.c.l.s4 1983009808
  %v6959 = vunpack.c.0.s8 %v6958
  %v6960 = vlaneseq
  %v6961 = vshrl.u32 %v6960, 7
  %v6962 = vsub.s32 %v6959, %v6961
  %v6963 = vrot.slane %v6636, %v6962
  %v6965 = vunpack.c.l.s4 1983009808
  %v6966 = vunpack.c.0.s8 %v6965
  %v6967 = vlaneseq
  %v6968 = vshrl.u32 %v6967, 7
  %v6969 = vsub.s32 %v6966, %v6968
  %v6970 = vrot.slane %v6956, %v6969
  %v6971 = vcombine.high %v6963, %v6963
  %v6972 = vcombine.high %v6970, %v6970
  %v6973 = vcombine.high %v6637, %v6637
  %v6975 = vunpack.c.l.s4 1983009808
  %v6976 = vunpack.c.0.s8 %v6975
  %v6977 = vlaneseq
  %v6978 = vshrl.u32 %v6977, 7
  %v6979 = vsub.s32 %v6976, %v6978
  %v6980 = vrot.slane %v6637, %v6979
  %v6982 = vunpack.c.l.s4 1983009808
  %v6983 = vunpack.c.0.s8 %v6982
  %v6984 = vlaneseq
  %v6985 = vshrl.u32 %v6984, 7
  %v6986 = vsub.s32 %v6983, %v6985
  %v6987 = vrot.slane %v6973, %v6986
  %v6988 = vcombine.high %v6980, %v6980
  %v6989 = vcombine.high %v6987, %v6987
  %v6990 = vcombine.high %v6638, %v6638
  %v6992 = vunpack.c.l.s4 1983009808
  %v6993 = vunpack.c.0.s8 %v6992
  %v6994 = vlaneseq
  %v6995 = vshrl.u32 %v6994, 7
  %v6996 = vsub.s32 %v6993, %v6995
  %v6997 = vrot.slane %v6638, %v6996
  %v6999 = vunpack.c.l.s4 1983009808
  %v7000 = vunpack.c.0.s8 %v6999
  %v7001 = vlaneseq
  %v7002 = vshrl.u32 %v7001, 7
  %v7003 = vsub.s32 %v7000, %v7002
  %v7004 = vrot.slane %v6990, %v7003
  %v7005 = vcombine.high %v6997, %v6997
  %v7006 = vcombine.high %v7004, %v7004
  %v7007 = vcombine.high %v6639, %v6639
  %v7009 = vunpack.c.l.s4 1983009808
  %v7010 = vunpack.c.0.s8 %v7009
  %v7011 = vlaneseq
  %v7012 = vshrl.u32 %v7011, 7
  %v7013 = vsub.s32 %v7010, %v7012
  %v7014 = vrot.slane %v6639, %v7013
  %v7016 = vunpack.c.l.s4 1983009808
  %v7017 = vunpack.c.0.s8 %v7016
  %v7018 = vlaneseq
  %v7019 = vshrl.u32 %v7018, 7
  %v7020 = vsub.s32 %v7017, %v7019
  %v7021 = vrot.slane %v7007, %v7020
  %v7022 = vcombine.high %v7014, %v7014
  %v7023 = vcombine.high %v7021, %v7021
  %v7024 = vcombine.high %v6640, %v6640
  %v7026 = vunpack.c.l.s4 1983009808
  %v7027 = vunpack.c.0.s8 %v7026
  %v7028 = vlaneseq
  %v7029 = vshrl.u32 %v7028, 7
  %v7030 = vsub.s32 %v7027, %v7029
  %v7031 = vrot.slane %v6640, %v7030
  %v7033 = vunpack.c.l.s4 1983009808
  %v7034 = vunpack.c.0.s8 %v7033
  %v7035 = vlaneseq
  %v7036 = vshrl.u32 %v7035, 7
  %v7037 = vsub.s32 %v7034, %v7036
  %v7038 = vrot.slane %v7024, %v7037
  %v7039 = vcombine.high %v7031, %v7031
  %v7040 = vcombine.high %v7038, %v7038
  %v7041 = vcombine.high %v6641, %v6641
  %v7043 = vunpack.c.l.s4 1983009808
  %v7044 = vunpack.c.0.s8 %v7043
  %v7045 = vlaneseq
  %v7046 = vshrl.u32 %v7045, 7
  %v7047 = vsub.s32 %v7044, %v7046
  %v7048 = vrot.slane %v6641, %v7047
  %v7050 = vunpack.c.l.s4 1983009808
  %v7051 = vunpack.c.0.s8 %v7050
  %v7052 = vlaneseq
  %v7053 = vshrl.u32 %v7052, 7
  %v7054 = vsub.s32 %v7051, %v7053
  %v7055 = vrot.slane %v7041, %v7054
  %v7056 = vcombine.high %v7048, %v7048
  %v7057 = vcombine.high %v7055, %v7055
  %v7058 = vcombine.high %v6642, %v6642
  %v7060 = vunpack.c.l.s4 1983009808
  %v7061 = vunpack.c.0.s8 %v7060
  %v7062 = vlaneseq
  %v7063 = vshrl.u32 %v7062, 7
  %v7064 = vsub.s32 %v7061, %v7063
  %v7065 = vrot.slane %v6642, %v7064
  %v7067 = vunpack.c.l.s4 1983009808
  %v7068 = vunpack.c.0.s8 %v7067
  %v7069 = vlaneseq
  %v7070 = vshrl.u32 %v7069, 7
  %v7071 = vsub.s32 %v7068, %v7070
  %v7072 = vrot.slane %v7058, %v7071
  %v7073 = vcombine.high %v7065, %v7065
  %v7074 = vcombine.high %v7072, %v7072
  %v7075 = vcombine.high %v6643, %v6643
  %v7077 = vunpack.c.l.s4 1983009808
  %v7078 = vunpack.c.0.s8 %v7077
  %v7079 = vlaneseq
  %v7080 = vshrl.u32 %v7079, 7
  %v7081 = vsub.s32 %v7078, %v7080
  %v7082 = vrot.slane %v6643, %v7081
  %v7084 = vunpack.c.l.s4 1983009808
  %v7085 = vunpack.c.0.s8 %v7084
  %v7086 = vlaneseq
  %v7087 = vshrl.u32 %v7086, 7
  %v7088 = vsub.s32 %v7085, %v7087
  %v7089 = vrot.slane %v7075, %v7088
  %v7090 = vcombine.high %v7082, %v7082
  %v7091 = vcombine.high %v7089, %v7089
  %v7092 = vcombine.high %v6644, %v6644
  %v7094 = vunpack.c.l.s4 1983009808
  %v7095 = vunpack.c.0.s8 %v7094
  %v7096 = vlaneseq
  %v7097 = vshrl.u32 %v7096, 7
  %v7098 = vsub.s32 %v7095, %v7097
  %v7099 = vrot.slane %v6644, %v7098
  %v7101 = vunpack.c.l.s4 1983009808
  %v7102 = vunpack.c.0.s8 %v7101
  %v7103 = vlaneseq
  %v7104 = vshrl.u32 %v7103, 7
  %v7105 = vsub.s32 %v7102, %v7104
  %v7106 = vrot.slane %v7092, %v7105
  %v7107 = vcombine.high %v7099, %v7099
  %v7108 = vcombine.high %v7106, %v7106
  %v7109 = vcombine.high %v6645, %v6645
  %v7111 = vunpack.c.l.s4 1983009808
  %v7112 = vunpack.c.0.s8 %v7111
  %v7113 = vlaneseq
  %v7114 = vshrl.u32 %v7113, 7
  %v7115 = vsub.s32 %v7112, %v7114
  %v7116 = vrot.slane %v6645, %v7115
  %v7118 = vunpack.c.l.s4 1983009808
  %v7119 = vunpack.c.0.s8 %v7118
  %v7120 = vlaneseq
  %v7121 = vshrl.u32 %v7120, 7
  %v7122 = vsub.s32 %v7119, %v7121
  %v7123 = vrot.slane %v7109, %v7122
  %v7124 = vcombine.high %v7116, %v7116
  %v7125 = vcombine.high %v7123, %v7123
  %v7126 = vcombine.high %v6646, %v6646
  %v7128 = vunpack.c.l.s4 1983009808
  %v7129 = vunpack.c.0.s8 %v7128
  %v7130 = vlaneseq
  %v7131 = vshrl.u32 %v7130, 7
  %v7132 = vsub.s32 %v7129, %v7131
  %v7133 = vrot.slane %v6646, %v7132
  %v7135 = vunpack.c.l.s4 1983009808
  %v7136 = vunpack.c.0.s8 %v7135
  %v7137 = vlaneseq
  %v7138 = vshrl.u32 %v7137, 7
  %v7139 = vsub.s32 %v7136, %v7138
  %v7140 = vrot.slane %v7126, %v7139
  %v7141 = vcombine.high %v7133, %v7133
  %v7142 = vcombine.high %v7140, %v7140
  %v7143 = vcombine.high %v6647, %v6647
  %v7145 = vunpack.c.l.s4 1983009808
  %v7146 = vunpack.c.0.s8 %v7145
  %v7147 = vlaneseq
  %v7148 = vshrl.u32 %v7147, 7
  %v7149 = vsub.s32 %v7146, %v7148
  %v7150 = vrot.slane %v6647, %v7149
  %v7152 = vunpack.c.l.s4 1983009808
  %v7153 = vunpack.c.0.s8 %v7152
  %v7154 = vlaneseq
  %v7155 = vshrl.u32 %v7154, 7
  %v7156 = vsub.s32 %v7153, %v7155
  %v7157 = vrot.slane %v7143, %v7156
  %v7158 = vcombine.high %v7150, %v7150
  %v7159 = vcombine.high %v7157, %v7157
  %v7160 = vcombine.high %v6648, %v6648
  %v7162 = vunpack.c.l.s4 1983009808
  %v7163 = vunpack.c.0.s8 %v7162
  %v7164 = vlaneseq
  %v7165 = vshrl.u32 %v7164, 7
  %v7166 = vsub.s32 %v7163, %v7165
  %v7167 = vrot.slane %v6648, %v7166
  %v7169 = vunpack.c.l.s4 1983009808
  %v7170 = vunpack.c.0.s8 %v7169
  %v7171 = vlaneseq
  %v7172 = vshrl.u32 %v7171, 7
  %v7173 = vsub.s32 %v7170, %v7172
  %v7174 = vrot.slane %v7160, %v7173
  %v7175 = vcombine.high %v7167, %v7167
  %v7176 = vcombine.high %v7174, %v7174
  %v7177 = vcombine.high %v6649, %v6649
  %v7179 = vunpack.c.l.s4 1983009808
  %v7180 = vunpack.c.0.s8 %v7179
  %v7181 = vlaneseq
  %v7182 = vshrl.u32 %v7181, 7
  %v7183 = vsub.s32 %v7180, %v7182
  %v7184 = vrot.slane %v6649, %v7183
  %v7186 = vunpack.c.l.s4 1983009808
  %v7187 = vunpack.c.0.s8 %v7186
  %v7188 = vlaneseq
  %v7189 = vshrl.u32 %v7188, 7
  %v7190 = vsub.s32 %v7187, %v7189
  %v7191 = vrot.slane %v7177, %v7190
  %v7192 = vcombine.high %v7184, %v7184
  %v7193 = vcombine.high %v7191, %v7191
  %v7194 = vcombine.high %v6650, %v6650
  %v7196 = vunpack.c.l.s4 1983009808
  %v7197 = vunpack.c.0.s8 %v7196
  %v7198 = vlaneseq
  %v7199 = vshrl.u32 %v7198, 7
  %v7200 = vsub.s32 %v7197, %v7199
  %v7201 = vrot.slane %v6650, %v7200
  %v7203 = vunpack.c.l.s4 1983009808
  %v7204 = vunpack.c.0.s8 %v7203
  %v7205 = vlaneseq
  %v7206 = vshrl.u32 %v7205, 7
  %v7207 = vsub.s32 %v7204, %v7206
  %v7208 = vrot.slane %v7194, %v7207
  %v7209 = vcombine.high %v7201, %v7201
  %v7210 = vcombine.high %v7208, %v7208
  %v7211 = vcombine.high %v6651, %v6651
  %v7213 = vunpack.c.l.s4 1983009808
  %v7214 = vunpack.c.0.s8 %v7213
  %v7215 = vlaneseq
  %v7216 = vshrl.u32 %v7215, 7
  %v7217 = vsub.s32 %v7214, %v7216
  %v7218 = vrot.slane %v6651, %v7217
  %v7220 = vunpack.c.l.s4 1983009808
  %v7221 = vunpack.c.0.s8 %v7220
  %v7222 = vlaneseq
  %v7223 = vshrl.u32 %v7222, 7
  %v7224 = vsub.s32 %v7221, %v7223
  %v7225 = vrot.slane %v7211, %v7224
  %v7226 = vcombine.high %v7218, %v7218
  %v7227 = vcombine.high %v7225, %v7225
  %v7356 = vrot.slane %v6691, 7
  %v7357 = vrot.slane %v7356, 2
  %v7358 = vrot.slane %v6699, 7
  %v7359 = vrot.slane %v7358, 2
  %v7360 = vrot.slane %v6698, 7
  %v7361 = vrot.slane %v7360, 2
  %v7362 = vrot.slane %v6700, 7
  %v7363 = vrot.slane %v7362, 2
  %v7364 = vrot.slane %v6708, 7
  %v7365 = vrot.slane %v7364, 2
  %v7366 = vrot.slane %v6716, 7
  %v7367 = vrot.slane %v7366, 2
  %v7368 = vrot.slane %v6715, 7
  %v7369 = vrot.slane %v7368, 2
  %v7370 = vrot.slane %v6717, 7
  %v7371 = vrot.slane %v7370, 2
  %v7372 = vrot.slane %v6725, 7
  %v7373 = vrot.slane %v7372, 2
  %v7374 = vrot.slane %v6733, 7
  %v7375 = vrot.slane %v7374, 2
  %v7376 = vrot.slane %v6732, 7
  %v7377 = vrot.slane %v7376, 2
  %v7378 = vrot.slane %v6734, 7
  %v7379 = vrot.slane %v7378, 2
  %v7380 = vrot.slane %v6742, 7
  %v7381 = vrot.slane %v7380, 2
  %v7382 = vrot.slane %v6750, 7
  %v7383 = vrot.slane %v7382, 2
  %v7384 = vrot.slane %v6749, 7
  %v7385 = vrot.slane %v7384, 2
  %v7386 = vrot.slane %v6751, 7
  %v7387 = vrot.slane %v7386, 2
  %v7388 = vrot.slane %v6759, 7
  %v7389 = vrot.slane %v7388, 2
  %v7390 = vrot.slane %v6767, 7
  %v7391 = vrot.slane %v7390, 2
  %v7392 = vrot.slane %v6766, 7
  %v7393 = vrot.slane %v7392, 2
  %v7394 = vrot.slane %v6768, 7
  %v7395 = vrot.slane %v7394, 2
  %v7396 = vrot.slane %v6776, 7
  %v7397 = vrot.slane %v7396, 2
  %v7398 = vrot.slane %v6784, 7
  %v7399 = vrot.slane %v7398, 2
  %v7400 = vrot.slane %v6783, 7
  %v7401 = vrot.slane %v7400, 2
  %v7402 = vrot.slane %v6785, 7
  %v7403 = vrot.slane %v7402, 2
  %v7404 = vrot.slane %v6793, 7
  %v7405 = vrot.slane %v7404, 2
  %v7406 = vrot.slane %v6801, 7
  %v7407 = vrot.slane %v7406, 2
  %v7408 = vrot.slane %v6800, 7
  %v7409 = vrot.slane %v7408, 2
  %v7410 = vrot.slane %v6802, 7
  %v7411 = vrot.slane %v7410, 2
  %v7412 = vrot.slane %v6810, 7
  %v7413 = vrot.slane %v7412, 2
  %v7414 = vrot.slane %v6818, 7
  %v7415 = vrot.slane %v7414, 2
  %v7416 = vrot.slane %v6817, 7
  %v7417 = vrot.slane %v7416, 2
  %v7418 = vrot.slane %v6819, 7
  %v7419 = vrot.slane %v7418, 2
  %v7420 = vrot.slane %v6827, 7
  %v7421 = vrot.slane %v7420, 2
  %v7422 = vrot.slane %v6835, 7
  %v7423 = vrot.slane %v7422, 2
  %v7424 = vrot.slane %v6834, 7
  %v7425 = vrot.slane %v7424, 2
  %v7426 = vrot.slane %v6836, 7
  %v7427 = vrot.slane %v7426, 2
  %v7428 = vrot.slane %v6844, 7
  %v7429 = vrot.slane %v7428, 2
  %v7430 = vrot.slane %v6852, 7
  %v7431 = vrot.slane %v7430, 2
  %v7432 = vrot.slane %v6851, 7
  %v7433 = vrot.slane %v7432, 2
  %v7434 = vrot.slane %v6853, 7
  %v7435 = vrot.slane %v7434, 2
  %v7436 = vrot.slane %v6861, 7
  %v7437 = vrot.slane %v7436, 2
  %v7438 = vrot.slane %v6869, 7
  %v7439 = vrot.slane %v7438, 2
  %v7440 = vrot.slane %v6868, 7
  %v7441 = vrot.slane %v7440, 2
  %v7442 = vrot.slane %v6870, 7
  %v7443 = vrot.slane %v7442, 2
  %v7444 = vrot.slane %v6878, 7
  %v7445 = vrot.slane %v7444, 2
  %v7446 = vrot.slane %v6886, 7
  %v7447 = vrot.slane %v7446, 2
  %v7448 = vrot.slane %v6885, 7
  %v7449 = vrot.slane %v7448, 2
  %v7450 = vrot.slane %v6887, 7
  %v7451 = vrot.slane %v7450, 2
  %v7452 = vrot.slane %v6895, 7
  %v7453 = vrot.slane %v7452, 2
  %v7454 = vrot.slane %v6903, 7
  %v7455 = vrot.slane %v7454, 2
  %v7456 = vrot.slane %v6902, 7
  %v7457 = vrot.slane %v7456, 2
  %v7458 = vrot.slane %v6904, 7
  %v7459 = vrot.slane %v7458, 2
  %v7460 = vrot.slane %v6912, 7
  %v7461 = vrot.slane %v7460, 2
  %v7462 = vrot.slane %v6920, 7
  %v7463 = vrot.slane %v7462, 2
  %v7464 = vrot.slane %v6919, 7
  %v7465 = vrot.slane %v7464, 2
  %v7466 = vrot.slane %v6921, 7
  %v7467 = vrot.slane %v7466, 2
  %v7468 = vrot.slane %v6929, 7
  %v7469 = vrot.slane %v7468, 2
  %v7470 = vrot.slane %v6937, 7
  %v7471 = vrot.slane %v7470, 2
  %v7472 = vrot.slane %v6936, 7
  %v7473 = vrot.slane %v7472, 2
  %v7474 = vrot.slane %v6938, 7
  %v7475 = vrot.slane %v7474, 2
  %v7476 = vrot.slane %v6946, 7
  %v7477 = vrot.slane %v7476, 2
  %v7478 = vrot.slane %v6954, 7
  %v7479 = vrot.slane %v7478, 2
  %v7480 = vrot.slane %v6953, 7
  %v7481 = vrot.slane %v7480, 2
  %v7482 = vrot.slane %v6955, 7
  %v7483 = vrot.slane %v7482, 2
  %v7484 = vrot.slane %v6963, 7
  %v7485 = vrot.slane %v7484, 2
  %v7486 = vrot.slane %v6971, 7
  %v7487 = vrot.slane %v7486, 2
  %v7488 = vrot.slane %v6970, 7
  %v7489 = vrot.slane %v7488, 2
  %v7490 = vrot.slane %v6972, 7
  %v7491 = vrot.slane %v7490, 2
  %v7492 = vrot.slane %v6980, 7
  %v7493 = vrot.slane %v7492, 2
  %v7494 = vrot.slane %v6988, 7
  %v7495 = vrot.slane %v7494, 2
  %v7496 = vrot.slane %v6987, 7
  %v7497 = vrot.slane %v7496, 2
  %v7498 = vrot.slane %v6989, 7
  %v7499 = vrot.slane %v7498, 2
  %v7500 = vrot.slane %v6997, 7
  %v7501 = vrot.slane %v7500, 2
  %v7502 = vrot.slane %v7005, 7
  %v7503 = vrot.slane %v7502, 2
  %v7504 = vrot.slane %v7004, 7
  %v7505 = vrot.slane %v7504, 2
  %v7506 = vrot.slane %v7006, 7
  %v7507 = vrot.slane %v7506, 2
  %v7508 = vrot.slane %v7014, 7
  %v7509 = vrot.slane %v7508, 2
  %v7510 = vrot.slane %v7022, 7
  %v7511 = vrot.slane %v7510, 2
  %v7512 = vrot.slane %v7021, 7
  %v7513 = vrot.slane %v7512, 2
  %v7514 = vrot.slane %v7023, 7
  %v7515 = vrot.slane %v7514, 2
  %v7516 = vrot.slane %v7031, 7
  %v7517 = vrot.slane %v7516, 2
  %v7518 = vrot.slane %v7039, 7
  %v7519 = vrot.slane %v7518, 2
  %v7520 = vrot.slane %v7038, 7
  %v7521 = vrot.slane %v7520, 2
  %v7522 = vrot.slane %v7040, 7
  %v7523 = vrot.slane %v7522, 2
  %v7524 = vrot.slane %v7048, 7
  %v7525 = vrot.slane %v7524, 2
  %v7526 = vrot.slane %v7056, 7
  %v7527 = vrot.slane %v7526, 2
  %v7528 = vrot.slane %v7055, 7
  %v7529 = vrot.slane %v7528, 2
  %v7530 = vrot.slane %v7057, 7
  %v7531 = vrot.slane %v7530, 2
  %v7532 = vrot.slane %v7065, 7
  %v7533 = vrot.slane %v7532, 2
  %v7534 = vrot.slane %v7073, 7
  %v7535 = vrot.slane %v7534, 2
  %v7536 = vrot.slane %v7072, 7
  %v7537 = vrot.slane %v7536, 2
  %v7538 = vrot.slane %v7074, 7
  %v7539 = vrot.slane %v7538, 2
  %v7540 = vrot.slane %v7082, 7
  %v7541 = vrot.slane %v7540, 2
  %v7542 = vrot.slane %v7090, 7
  %v7543 = vrot.slane %v7542, 2
  %v7544 = vrot.slane %v7089, 7
  %v7545 = vrot.slane %v7544, 2
  %v7546 = vrot.slane %v7091, 7
  %v7547 = vrot.slane %v7546, 2
  %v7548 = vrot.slane %v7099, 7
  %v7549 = vrot.slane %v7548, 2
  %v7550 = vrot.slane %v7107, 7
  %v7551 = vrot.slane %v7550, 2
  %v7552 = vrot.slane %v7106, 7
  %v7553 = vrot.slane %v7552, 2
  %v7554 = vrot.slane %v7108, 7
  %v7555 = vrot.slane %v7554, 2
  %v7556 = vrot.slane %v7116, 7
  %v7557 = vrot.slane %v7556, 2
  %v7558 = vrot.slane %v7124, 7
  %v7559 = vrot.slane %v7558, 2
  %v7560 = vrot.slane %v7123, 7
  %v7561 = vrot.slane %v7560, 2
  %v7562 = vrot.slane %v7125, 7
  %v7563 = vrot.slane %v7562, 2
  %v7564 = vrot.slane %v7133, 7
  %v7565 = vrot.slane %v7564, 2
  %v7566 = vrot.slane %v7141, 7
  %v7567 = vrot.slane %v7566, 2
  %v7568 = vrot.slane %v7140, 7
  %v7569 = vrot.slane %v7568, 2
  %v7570 = vrot.slane %v7142, 7
  %v7571 = vrot.slane %v7570, 2
  %v7572 = vrot.slane %v7150, 7
  %v7573 = vrot.slane %v7572, 2
  %v7574 = vrot.slane %v7158, 7
  %v7575 = vrot.slane %v7574, 2
  %v7576 = vrot.slane %v7157, 7
  %v7577 = vrot.slane %v7576, 2
  %v7578 = vrot.slane %v7159, 7
  %v7579 = vrot.slane %v7578, 2
  %v7580 = vrot.slane %v7167, 7
  %v7581 = vrot.slane %v7580, 2
  %v7582 = vrot.slane %v7175, 7
  %v7583 = vrot.slane %v7582, 2
  %v7584 = vrot.slane %v7174, 7
  %v7585 = vrot.slane %v7584, 2
  %v7586 = vrot.slane %v7176, 7
  %v7587 = vrot.slane %v7586, 2
  %v7588 = vrot.slane %v7184, 7
  %v7589 = vrot.slane %v7588, 2
  %v7590 = vrot.slane %v7192, 7
  %v7591 = vrot.slane %v7590, 2
  %v7592 = vrot.slane %v7191, 7
  %v7593 = vrot.slane %v7592, 2
  %v7594 = vrot.slane %v7193, 7
  %v7595 = vrot.slane %v7594, 2
  %v7596 = vrot.slane %v7201, 7
  %v7597 = vrot.slane %v7596, 2
  %v7598 = vrot.slane %v7209, 7
  %v7599 = vrot.slane %v7598, 2
  %v7600 = vrot.slane %v7208, 7
  %v7601 = vrot.slane %v7600, 2
  %v7602 = vrot.slane %v7210, 7
  %v7603 = vrot.slane %v7602, 2
  %v7604 = vrot.slane %v7218, 7
  %v7605 = vrot.slane %v7604, 2
  %v7606 = vrot.slane %v7226, 7
  %v7607 = vrot.slane %v7606, 2
  %v7608 = vrot.slane %v7225, 7
  %v7609 = vrot.slane %v7608, 2
  %v7610 = vrot.slane %v7227, 7
  %v7611 = vrot.slane %v7610, 2
  %v7740 = vadd.f32 %v6691, %v7357
  %v7741 = vadd.f32 %v6699, %v7359
  %v7742 = vadd.f32 %v6698, %v7361
  %v7743 = vadd.f32 %v6700, %v7363
  %v7744 = vadd.f32 %v6708, %v7365
  %v7745 = vadd.f32 %v6716, %v7367
  %v7746 = vadd.f32 %v6715, %v7369
  %v7747 = vadd.f32 %v6717, %v7371
  %v7748 = vadd.f32 %v6725, %v7373
  %v7749 = vadd.f32 %v6733, %v7375
  %v7750 = vadd.f32 %v6732, %v7377
  %v7751 = vadd.f32 %v6734, %v7379
  %v7752 = vadd.f32 %v6742, %v7381
  %v7753 = vadd.f32 %v6750, %v7383
  %v7754 = vadd.f32 %v6749, %v7385
  %v7755 = vadd.f32 %v6751, %v7387
  %v7756 = vadd.f32 %v6759, %v7389
  %v7757 = vadd.f32 %v6767, %v7391
  %v7758 = vadd.f32 %v6766, %v7393
  %v7759 = vadd.f32 %v6768, %v7395
  %v7760 = vadd.f32 %v6776, %v7397
  %v7761 = vadd.f32 %v6784, %v7399
  %v7762 = vadd.f32 %v6783, %v7401
  %v7763 = vadd.f32 %v6785, %v7403
  %v7764 = vadd.f32 %v6793, %v7405
  %v7765 = vadd.f32 %v6801, %v7407
  %v7766 = vadd.f32 %v6800, %v7409
  %v7767 = vadd.f32 %v6802, %v7411
  %v7768 = vadd.f32 %v6810, %v7413
  %v7769 = vadd.f32 %v6818, %v7415
  %v7770 = vadd.f32 %v6817, %v7417
  %v7771 = vadd.f32 %v6819, %v7419
  %v7772 = vadd.f32 %v6827, %v7421
  %v7773 = vadd.f32 %v6835, %v7423
  %v7774 = vadd.f32 %v6834, %v7425
  %v7775 = vadd.f32 %v6836, %v7427
  %v7776 = vadd.f32 %v6844, %v7429
  %v7777 = vadd.f32 %v6852, %v7431
  %v7778 = vadd.f32 %v6851, %v7433
  %v7779 = vadd.f32 %v6853, %v7435
  %v7780 = vadd.f32 %v6861, %v7437
  %v7781 = vadd.f32 %v6869, %v7439
  %v7782 = vadd.f32 %v6868, %v7441
  %v7783 = vadd.f32 %v6870, %v7443
  %v7784 = vadd.f32 %v6878, %v7445
  %v7785 = vadd.f32 %v6886, %v7447
  %v7786 = vadd.f32 %v6885, %v7449
  %v7787 = vadd.f32 %v6887, %v7451
  %v7788 = vadd.f32 %v6895, %v7453
  %v7789 = vadd.f32 %v6903, %v7455
  %v7790 = vadd.f32 %v6902, %v7457
  %v7791 = vadd.f32 %v6904, %v7459
  %v7792 = vadd.f32 %v6912, %v7461
  %v7793 = vadd.f32 %v6920, %v7463
  %v7794 = vadd.f32 %v6919, %v7465
  %v7795 = vadd.f32 %v6921, %v7467
  %v7796 = vadd.f32 %v6929, %v7469
  %v7797 = vadd.f32 %v6937, %v7471
  %v7798 = vadd.f32 %v6936, %v7473
  %v7799 = vadd.f32 %v6938, %v7475
  %v7800 = vadd.f32 %v6946, %v7477
  %v7801 = vadd.f32 %v6954, %v7479
  %v7802 = vadd.f32 %v6953, %v7481
  %v7803 = vadd.f32 %v6955, %v7483
  %v7804 = vadd.f32 %v6963, %v7485
  %v7805 = vadd.f32 %v6971, %v7487
  %v7806 = vadd.f32 %v6970, %v7489
  %v7807 = vadd.f32 %v6972, %v7491
  %v7808 = vadd.f32 %v6980, %v7493
  %v7809 = vadd.f32 %v6988, %v7495
  %v7810 = vadd.f32 %v6987, %v7497
  %v7811 = vadd.f32 %v6989, %v7499
  %v7812 = vadd.f32 %v6997, %v7501
  %v7813 = vadd.f32 %v7005, %v7503
  %v7814 = vadd.f32 %v7004, %v7505
  %v7815 = vadd.f32 %v7006, %v7507
  %v7816 = vadd.f32 %v7014, %v7509
  %v7817 = vadd.f32 %v7022, %v7511
  %v7818 = vadd.f32 %v7021, %v7513
  %v7819 = vadd.f32 %v7023, %v7515
  %v7820 = vadd.f32 %v7031, %v7517
  %v7821 = vadd.f32 %v7039, %v7519
  %v7822 = vadd.f32 %v7038, %v7521
  %v7823 = vadd.f32 %v7040, %v7523
  %v7824 = vadd.f32 %v7048, %v7525
  %v7825 = vadd.f32 %v7056, %v7527
  %v7826 = vadd.f32 %v7055, %v7529
  %v7827 = vadd.f32 %v7057, %v7531
  %v7828 = vadd.f32 %v7065, %v7533
  %v7829 = vadd.f32 %v7073, %v7535
  %v7830 = vadd.f32 %v7072, %v7537
  %v7831 = vadd.f32 %v7074, %v7539
  %v7832 = vadd.f32 %v7082, %v7541
  %v7833 = vadd.f32 %v7090, %v7543
  %v7834 = vadd.f32 %v7089, %v7545
  %v7835 = vadd.f32 %v7091, %v7547
  %v7836 = vadd.f32 %v7099, %v7549
  %v7837 = vadd.f32 %v7107, %v7551
  %v7838 = vadd.f32 %v7106, %v7553
  %v7839 = vadd.f32 %v7108, %v7555
  %v7840 = vadd.f32 %v7116, %v7557
  %v7841 = vadd.f32 %v7124, %v7559
  %v7842 = vadd.f32 %v7123, %v7561
  %v7843 = vadd.f32 %v7125, %v7563
  %v7844 = vadd.f32 %v7133, %v7565
  %v7845 = vadd.f32 %v7141, %v7567
  %v7846 = vadd.f32 %v7140, %v7569
  %v7847 = vadd.f32 %v7142, %v7571
  %v7848 = vadd.f32 %v7150, %v7573
  %v7849 = vadd.f32 %v7158, %v7575
  %v7850 = vadd.f32 %v7157, %v7577
  %v7851 = vadd.f32 %v7159, %v7579
  %v7852 = vadd.f32 %v7167, %v7581
  %v7853 = vadd.f32 %v7175, %v7583
  %v7854 = vadd.f32 %v7174, %v7585
  %v7855 = vadd.f32 %v7176, %v7587
  %v7856 = vadd.f32 %v7184, %v7589
  %v7857 = vadd.f32 %v7192, %v7591
  %v7858 = vadd.f32 %v7191, %v7593
  %v7859 = vadd.f32 %v7193, %v7595
  %v7860 = vadd.f32 %v7201, %v7597
  %v7861 = vadd.f32 %v7209, %v7599
  %v7862 = vadd.f32 %v7208, %v7601
  %v7863 = vadd.f32 %v7210, %v7603
  %v7864 = vadd.f32 %v7218, %v7605
  %v7865 = vadd.f32 %v7226, %v7607
  %v7866 = vadd.f32 %v7225, %v7609
  %v7867 = vadd.f32 %v7227, %v7611
  %v7868 = vmul.f32 %v7740, 0.25
  %v7869 = vmul.f32 %v7741, 0.25
  %v7870 = vmul.f32 %v7742, 0.25
  %v7871 = vmul.f32 %v7743, 0.25
  %v7872 = vmul.f32 %v7744, 0.25
  %v7873 = vmul.f32 %v7745, 0.25
  %v7874 = vmul.f32 %v7746, 0.25
  %v7875 = vmul.f32 %v7747, 0.25
  %v7876 = vmul.f32 %v7748, 0.25
  %v7877 = vmul.f32 %v7749, 0.25
  %v7878 = vmul.f32 %v7750, 0.25
  %v7879 = vmul.f32 %v7751, 0.25
  %v7880 = vmul.f32 %v7752, 0.25
  %v7881 = vmul.f32 %v7753, 0.25
  %v7882 = vmul.f32 %v7754, 0.25
  %v7883 = vmul.f32 %v7755, 0.25
  %v7884 = vmul.f32 %v7756, 0.25
  %v7885 = vmul.f32 %v7757, 0.25
  %v7886 = vmul.f32 %v7758, 0.25
  %v7887 = vmul.f32 %v7759, 0.25
  %v7888 = vmul.f32 %v7760, 0.25
  %v7889 = vmul.f32 %v7761, 0.25
  %v7890 = vmul.f32 %v7762, 0.25
  %v7891 = vmul.f32 %v7763, 0.25
  %v7892 = vmul.f32 %v7764, 0.25
  %v7893 = vmul.f32 %v7765, 0.25
  %v7894 = vmul.f32 %v7766, 0.25
  %v7895 = vmul.f32 %v7767, 0.25
  %v7896 = vmul.f32 %v7768, 0.25
  %v7897 = vmul.f32 %v7769, 0.25
  %v7898 = vmul.f32 %v7770, 0.25
  %v7899 = vmul.f32 %v7771, 0.25
  %v7900 = vmul.f32 %v7772, 0.25
  %v7901 = vmul.f32 %v7773, 0.25
  %v7902 = vmul.f32 %v7774, 0.25
  %v7903 = vmul.f32 %v7775, 0.25
  %v7904 = vmul.f32 %v7776, 0.25
  %v7905 = vmul.f32 %v7777, 0.25
  %v7906 = vmul.f32 %v7778, 0.25
  %v7907 = vmul.f32 %v7779, 0.25
  %v7908 = vmul.f32 %v7780, 0.25
  %v7909 = vmul.f32 %v7781, 0.25
  %v7910 = vmul.f32 %v7782, 0.25
  %v7911 = vmul.f32 %v7783, 0.25
  %v7912 = vmul.f32 %v7784, 0.25
  %v7913 = vmul.f32 %v7785, 0.25
  %v7914 = vmul.f32 %v7786, 0.25
  %v7915 = vmul.f32 %v7787, 0.25
  %v7916 = vmul.f32 %v7788, 0.25
  %v7917 = vmul.f32 %v7789, 0.25
  %v7918 = vmul.f32 %v7790, 0.25
  %v7919 = vmul.f32 %v7791, 0.25
  %v7920 = vmul.f32 %v7792, 0.25
  %v7921 = vmul.f32 %v7793, 0.25
  %v7922 = vmul.f32 %v7794, 0.25
  %v7923 = vmul.f32 %v7795, 0.25
  %v7924 = vmul.f32 %v7796, 0.25
  %v7925 = vmul.f32 %v7797, 0.25
  %v7926 = vmul.f32 %v7798, 0.25
  %v7927 = vmul.f32 %v7799, 0.25
  %v7928 = vmul.f32 %v7800, 0.25
  %v7929 = vmul.f32 %v7801, 0.25
  %v7930 = vmul.f32 %v7802, 0.25
  %v7931 = vmul.f32 %v7803, 0.25
  %v7932 = vmul.f32 %v7804, 0.25
  %v7933 = vmul.f32 %v7805, 0.25
  %v7934 = vmul.f32 %v7806, 0.25
  %v7935 = vmul.f32 %v7807, 0.25
  %v7936 = vmul.f32 %v7808, 0.25
  %v7937 = vmul.f32 %v7809, 0.25
  %v7938 = vmul.f32 %v7810, 0.25
  %v7939 = vmul.f32 %v7811, 0.25
  %v7940 = vmul.f32 %v7812, 0.25
  %v7941 = vmul.f32 %v7813, 0.25
  %v7942 = vmul.f32 %v7814, 0.25
  %v7943 = vmul.f32 %v7815, 0.25
  %v7944 = vmul.f32 %v7816, 0.25
  %v7945 = vmul.f32 %v7817, 0.25
  %v7946 = vmul.f32 %v7818, 0.25
  %v7947 = vmul.f32 %v7819, 0.25
  %v7948 = vmul.f32 %v7820, 0.25
  %v7949 = vmul.f32 %v7821, 0.25
  %v7950 = vmul.f32 %v7822, 0.25
  %v7951 = vmul.f32 %v7823, 0.25
  %v7952 = vmul.f32 %v7824, 0.25
  %v7953 = vmul.f32 %v7825, 0.25
  %v7954 = vmul.f32 %v7826, 0.25
  %v7955 = vmul.f32 %v7827, 0.25
  %v7956 = vmul.f32 %v7828, 0.25
  %v7957 = vmul.f32 %v7829, 0.25
  %v7958 = vmul.f32 %v7830, 0.25
  %v7959 = vmul.f32 %v7831, 0.25
  %v7960 = vmul.f32 %v7832, 0.25
  %v7961 = vmul.f32 %v7833, 0.25
  %v7962 = vmul.f32 %v7834, 0.25
  %v7963 = vmul.f32 %v7835, 0.25
  %v7964 = vmul.f32 %v7836, 0.25
  %v7965 = vmul.f32 %v7837, 0.25
  %v7966 = vmul.f32 %v7838, 0.25
  %v7967 = vmul.f32 %v7839, 0.25
  %v7968 = vmul.f32 %v7840, 0.25
  %v7969 = vmul.f32 %v7841, 0.25
  %v7970 = vmul.f32 %v7842, 0.25
  %v7971 = vmul.f32 %v7843, 0.25
  %v7972 = vmul.f32 %v7844, 0.25
  %v7973 = vmul.f32 %v7845, 0.25
  %v7974 = vmul.f32 %v7846, 0.25
  %v7975 = vmul.f32 %v7847, 0.25
  %v7976 = vmul.f32 %v7848, 0.25
  %v7977 = vmul.f32 %v7849, 0.25
  %v7978 = vmul.f32 %v7850, 0.25
  %v7979 = vmul.f32 %v7851, 0.25
  %v7980 = vmul.f32 %v7852, 0.25
  %v7981 = vmul.f32 %v7853, 0.25
  %v7982 = vmul.f32 %v7854, 0.25
  %v7983 = vmul.f32 %v7855, 0.25
  %v7984 = vmul.f32 %v7856, 0.25
  %v7985 = vmul.f32 %v7857, 0.25
  %v7986 = vmul.f32 %v7858, 0.25
  %v7987 = vmul.f32 %v7859, 0.25
  %v7988 = vmul.f32 %v7860, 0.25
  %v7989 = vmul.f32 %v7861, 0.25
  %v7990 = vmul.f32 %v7862, 0.25
  %v7991 = vmul.f32 %v7863, 0.25
  %v7992 = vmul.f32 %v7864, 0.25
  %v7993 = vmul.f32 %v7865, 0.25
  %v7994 = vmul.f32 %v7866, 0.25
  %v7995 = vmul.f32 %v7867, 0.25
  %v7996 = vadd.f32 %v42, %v44
  %v7997 = vadd.f32 %v43, %v45
  %v7998 = vadd.f32 %v46, %v48
  %v7999 = vadd.f32 %v47, %v49
  %v8000 = vadd.f32 %v50, %v52
  %v8001 = vadd.f32 %v51, %v53
  %v8002 = vadd.f32 %v54, %v56
  %v8003 = vadd.f32 %v55, %v57
  %v8004 = vadd.f32 %v58, %v60
  %v8005 = vadd.f32 %v59, %v61
  %v8006 = vadd.f32 %v62, %v64
  %v8007 = vadd.f32 %v63, %v65
  %v8008 = vadd.f32 %v66, %v68
  %v8009 = vadd.f32 %v67, %v69
  %v8010 = vadd.f32 %v70, %v72
  %v8011 = vadd.f32 %v71, %v73
  %v8012 = vadd.f32 %v74, %v76
  %v8013 = vadd.f32 %v75, %v77
  %v8014 = vadd.f32 %v78, %v80
  %v8015 = vadd.f32 %v79, %v81
  %v8016 = vadd.f32 %v82, %v84
  %v8017 = vadd.f32 %v83, %v85
  %v8018 = vadd.f32 %v86, %v88
  %v8019 = vadd.f32 %v87, %v89
  %v8020 = vadd.f32 %v90, %v92
  %v8021 = vadd.f32 %v91, %v93
  %v8022 = vadd.f32 %v94, %v96
  %v8023 = vadd.f32 %v95, %v97
  %v8024 = vadd.f32 %v98, %v100
  %v8025 = vadd.f32 %v99, %v101
  %v8026 = vadd.f32 %v102, %v104
  %v8027 = vadd.f32 %v103, %v105
  %v8060 = vcombine.high %v7996, %v7996
  %v8062 = vunpack.c.l.s4 1983009808
  %v8063 = vunpack.c.0.s8 %v8062
  %v8064 = vlaneseq
  %v8065 = vshrl.u32 %v8064, 7
  %v8066 = vsub.s32 %v8063, %v8065
  %v8067 = vrot.slane %v7996, %v8066
  %v8069 = vunpack.c.l.s4 1983009808
  %v8070 = vunpack.c.0.s8 %v8069
  %v8071 = vlaneseq
  %v8072 = vshrl.u32 %v8071, 7
  %v8073 = vsub.s32 %v8070, %v8072
  %v8074 = vrot.slane %v8060, %v8073
  %v8075 = vcombine.high %v8067, %v8067
  %v8076 = vcombine.high %v8074, %v8074
  %v8077 = vcombine.high %v7997, %v7997
  %v8079 = vunpack.c.l.s4 1983009808
  %v8080 = vunpack.c.0.s8 %v8079
  %v8081 = vlaneseq
  %v8082 = vshrl.u32 %v8081, 7
  %v8083 = vsub.s32 %v8080, %v8082
  %v8084 = vrot.slane %v7997, %v8083
  %v8086 = vunpack.c.l.s4 1983009808
  %v8087 = vunpack.c.0.s8 %v8086
  %v8088 = vlaneseq
  %v8089 = vshrl.u32 %v8088, 7
  %v8090 = vsub.s32 %v8087, %v8089
  %v8091 = vrot.slane %v8077, %v8090
  %v8092 = vcombine.high %v8084, %v8084
  %v8093 = vcombine.high %v8091, %v8091
  %v8094 = vcombine.high %v7998, %v7998
  %v8096 = vunpack.c.l.s4 1983009808
  %v8097 = vunpack.c.0.s8 %v8096
  %v8098 = vlaneseq
  %v8099 = vshrl.u32 %v8098, 7
  %v8100 = vsub.s32 %v8097, %v8099
  %v8101 = vrot.slane %v7998, %v8100
  %v8103 = vunpack.c.l.s4 1983009808
  %v8104 = vunpack.c.0.s8 %v8103
  %v8105 = vlaneseq
  %v8106 = vshrl.u32 %v8105, 7
  %v8107 = vsub.s32 %v8104, %v8106
  %v8108 = vrot.slane %v8094, %v8107
  %v8109 = vcombine.high %v8101, %v8101
  %v8110 = vcombine.high %v8108, %v8108
  %v8111 = vcombine.high %v7999, %v7999
  %v8113 = vunpack.c.l.s4 1983009808
  %v8114 = vunpack.c.0.s8 %v8113
  %v8115 = vlaneseq
  %v8116 = vshrl.u32 %v8115, 7
  %v8117 = vsub.s32 %v8114, %v8116
  %v8118 = vrot.slane %v7999, %v8117
  %v8120 = vunpack.c.l.s4 1983009808
  %v8121 = vunpack.c.0.s8 %v8120
  %v8122 = vlaneseq
  %v8123 = vshrl.u32 %v8122, 7
  %v8124 = vsub.s32 %v8121, %v8123
  %v8125 = vrot.slane %v8111, %v8124
  %v8126 = vcombine.high %v8118, %v8118
  %v8127 = vcombine.high %v8125, %v8125
  %v8128 = vcombine.high %v8000, %v8000
  %v8130 = vunpack.c.l.s4 1983009808
  %v8131 = vunpack.c.0.s8 %v8130
  %v8132 = vlaneseq
  %v8133 = vshrl.u32 %v8132, 7
  %v8134 = vsub.s32 %v8131, %v8133
  %v8135 = vrot.slane %v8000, %v8134
  %v8137 = vunpack.c.l.s4 1983009808
  %v8138 = vunpack.c.0.s8 %v8137
  %v8139 = vlaneseq
  %v8140 = vshrl.u32 %v8139, 7
  %v8141 = vsub.s32 %v8138, %v8140
  %v8142 = vrot.slane %v8128, %v8141
  %v8143 = vcombine.high %v8135, %v8135
  %v8144 = vcombine.high %v8142, %v8142
  %v8145 = vcombine.high %v8001, %v8001
  %v8147 = vunpack.c.l.s4 1983009808
  %v8148 = vunpack.c.0.s8 %v8147
  %v8149 = vlaneseq
  %v8150 = vshrl.u32 %v8149, 7
  %v8151 = vsub.s32 %v8148, %v8150
  %v8152 = vrot.slane %v8001, %v8151
  %v8154 = vunpack.c.l.s4 1983009808
  %v8155 = vunpack.c.0.s8 %v8154
  %v8156 = vlaneseq
  %v8157 = vshrl.u32 %v8156, 7
  %v8158 = vsub.s32 %v8155, %v8157
  %v8159 = vrot.slane %v8145, %v8158
  %v8160 = vcombine.high %v8152, %v8152
  %v8161 = vcombine.high %v8159, %v8159
  %v8162 = vcombine.high %v8002, %v8002
  %v8164 = vunpack.c.l.s4 1983009808
  %v8165 = vunpack.c.0.s8 %v8164
  %v8166 = vlaneseq
  %v8167 = vshrl.u32 %v8166, 7
  %v8168 = vsub.s32 %v8165, %v8167
  %v8169 = vrot.slane %v8002, %v8168
  %v8171 = vunpack.c.l.s4 1983009808
  %v8172 = vunpack.c.0.s8 %v8171
  %v8173 = vlaneseq
  %v8174 = vshrl.u32 %v8173, 7
  %v8175 = vsub.s32 %v8172, %v8174
  %v8176 = vrot.slane %v8162, %v8175
  %v8177 = vcombine.high %v8169, %v8169
  %v8178 = vcombine.high %v8176, %v8176
  %v8179 = vcombine.high %v8003, %v8003
  %v8181 = vunpack.c.l.s4 1983009808
  %v8182 = vunpack.c.0.s8 %v8181
  %v8183 = vlaneseq
  %v8184 = vshrl.u32 %v8183, 7
  %v8185 = vsub.s32 %v8182, %v8184
  %v8186 = vrot.slane %v8003, %v8185
  %v8188 = vunpack.c.l.s4 1983009808
  %v8189 = vunpack.c.0.s8 %v8188
  %v8190 = vlaneseq
  %v8191 = vshrl.u32 %v8190, 7
  %v8192 = vsub.s32 %v8189, %v8191
  %v8193 = vrot.slane %v8179, %v8192
  %v8194 = vcombine.high %v8186, %v8186
  %v8195 = vcombine.high %v8193, %v8193
  %v8196 = vcombine.high %v8004, %v8004
  %v8198 = vunpack.c.l.s4 1983009808
  %v8199 = vunpack.c.0.s8 %v8198
  %v8200 = vlaneseq
  %v8201 = vshrl.u32 %v8200, 7
  %v8202 = vsub.s32 %v8199, %v8201
  %v8203 = vrot.slane %v8004, %v8202
  %v8205 = vunpack.c.l.s4 1983009808
  %v8206 = vunpack.c.0.s8 %v8205
  %v8207 = vlaneseq
  %v8208 = vshrl.u32 %v8207, 7
  %v8209 = vsub.s32 %v8206, %v8208
  %v8210 = vrot.slane %v8196, %v8209
  %v8211 = vcombine.high %v8203, %v8203
  %v8212 = vcombine.high %v8210, %v8210
  %v8213 = vcombine.high %v8005, %v8005
  %v8215 = vunpack.c.l.s4 1983009808
  %v8216 = vunpack.c.0.s8 %v8215
  %v8217 = vlaneseq
  %v8218 = vshrl.u32 %v8217, 7
  %v8219 = vsub.s32 %v8216, %v8218
  %v8220 = vrot.slane %v8005, %v8219
  %v8222 = vunpack.c.l.s4 1983009808
  %v8223 = vunpack.c.0.s8 %v8222
  %v8224 = vlaneseq
  %v8225 = vshrl.u32 %v8224, 7
  %v8226 = vsub.s32 %v8223, %v8225
  %v8227 = vrot.slane %v8213, %v8226
  %v8228 = vcombine.high %v8220, %v8220
  %v8229 = vcombine.high %v8227, %v8227
  %v8230 = vcombine.high %v8006, %v8006
  %v8232 = vunpack.c.l.s4 1983009808
  %v8233 = vunpack.c.0.s8 %v8232
  %v8234 = vlaneseq
  %v8235 = vshrl.u32 %v8234, 7
  %v8236 = vsub.s32 %v8233, %v8235
  %v8237 = vrot.slane %v8006, %v8236
  %v8239 = vunpack.c.l.s4 1983009808
  %v8240 = vunpack.c.0.s8 %v8239
  %v8241 = vlaneseq
  %v8242 = vshrl.u32 %v8241, 7
  %v8243 = vsub.s32 %v8240, %v8242
  %v8244 = vrot.slane %v8230, %v8243
  %v8245 = vcombine.high %v8237, %v8237
  %v8246 = vcombine.high %v8244, %v8244
  %v8247 = vcombine.high %v8007, %v8007
  %v8249 = vunpack.c.l.s4 1983009808
  %v8250 = vunpack.c.0.s8 %v8249
  %v8251 = vlaneseq
  %v8252 = vshrl.u32 %v8251, 7
  %v8253 = vsub.s32 %v8250, %v8252
  %v8254 = vrot.slane %v8007, %v8253
  %v8256 = vunpack.c.l.s4 1983009808
  %v8257 = vunpack.c.0.s8 %v8256
  %v8258 = vlaneseq
  %v8259 = vshrl.u32 %v8258, 7
  %v8260 = vsub.s32 %v8257, %v8259
  %v8261 = vrot.slane %v8247, %v8260
  %v8262 = vcombine.high %v8254, %v8254
  %v8263 = vcombine.high %v8261, %v8261
  %v8264 = vcombine.high %v8008, %v8008
  %v8266 = vunpack.c.l.s4 1983009808
  %v8267 = vunpack.c.0.s8 %v8266
  %v8268 = vlaneseq
  %v8269 = vshrl.u32 %v8268, 7
  %v8270 = vsub.s32 %v8267, %v8269
  %v8271 = vrot.slane %v8008, %v8270
  %v8273 = vunpack.c.l.s4 1983009808
  %v8274 = vunpack.c.0.s8 %v8273
  %v8275 = vlaneseq
  %v8276 = vshrl.u32 %v8275, 7
  %v8277 = vsub.s32 %v8274, %v8276
  %v8278 = vrot.slane %v8264, %v8277
  %v8279 = vcombine.high %v8271, %v8271
  %v8280 = vcombine.high %v8278, %v8278
  %v8281 = vcombine.high %v8009, %v8009
  %v8283 = vunpack.c.l.s4 1983009808
  %v8284 = vunpack.c.0.s8 %v8283
  %v8285 = vlaneseq
  %v8286 = vshrl.u32 %v8285, 7
  %v8287 = vsub.s32 %v8284, %v8286
  %v8288 = vrot.slane %v8009, %v8287
  %v8290 = vunpack.c.l.s4 1983009808
  %v8291 = vunpack.c.0.s8 %v8290
  %v8292 = vlaneseq
  %v8293 = vshrl.u32 %v8292, 7
  %v8294 = vsub.s32 %v8291, %v8293
  %v8295 = vrot.slane %v8281, %v8294
  %v8296 = vcombine.high %v8288, %v8288
  %v8297 = vcombine.high %v8295, %v8295
  %v8298 = vcombine.high %v8010, %v8010
  %v8300 = vunpack.c.l.s4 1983009808
  %v8301 = vunpack.c.0.s8 %v8300
  %v8302 = vlaneseq
  %v8303 = vshrl.u32 %v8302, 7
  %v8304 = vsub.s32 %v8301, %v8303
  %v8305 = vrot.slane %v8010, %v8304
  %v8307 = vunpack.c.l.s4 1983009808
  %v8308 = vunpack.c.0.s8 %v8307
  %v8309 = vlaneseq
  %v8310 = vshrl.u32 %v8309, 7
  %v8311 = vsub.s32 %v8308, %v8310
  %v8312 = vrot.slane %v8298, %v8311
  %v8313 = vcombine.high %v8305, %v8305
  %v8314 = vcombine.high %v8312, %v8312
  %v8315 = vcombine.high %v8011, %v8011
  %v8317 = vunpack.c.l.s4 1983009808
  %v8318 = vunpack.c.0.s8 %v8317
  %v8319 = vlaneseq
  %v8320 = vshrl.u32 %v8319, 7
  %v8321 = vsub.s32 %v8318, %v8320
  %v8322 = vrot.slane %v8011, %v8321
  %v8324 = vunpack.c.l.s4 1983009808
  %v8325 = vunpack.c.0.s8 %v8324
  %v8326 = vlaneseq
  %v8327 = vshrl.u32 %v8326, 7
  %v8328 = vsub.s32 %v8325, %v8327
  %v8329 = vrot.slane %v8315, %v8328
  %v8330 = vcombine.high %v8322, %v8322
  %v8331 = vcombine.high %v8329, %v8329
  %v8332 = vcombine.high %v8012, %v8012
  %v8334 = vunpack.c.l.s4 1983009808
  %v8335 = vunpack.c.0.s8 %v8334
  %v8336 = vlaneseq
  %v8337 = vshrl.u32 %v8336, 7
  %v8338 = vsub.s32 %v8335, %v8337
  %v8339 = vrot.slane %v8012, %v8338
  %v8341 = vunpack.c.l.s4 1983009808
  %v8342 = vunpack.c.0.s8 %v8341
  %v8343 = vlaneseq
  %v8344 = vshrl.u32 %v8343, 7
  %v8345 = vsub.s32 %v8342, %v8344
  %v8346 = vrot.slane %v8332, %v8345
  %v8347 = vcombine.high %v8339, %v8339
  %v8348 = vcombine.high %v8346, %v8346
  %v8349 = vcombine.high %v8013, %v8013
  %v8351 = vunpack.c.l.s4 1983009808
  %v8352 = vunpack.c.0.s8 %v8351
  %v8353 = vlaneseq
  %v8354 = vshrl.u32 %v8353, 7
  %v8355 = vsub.s32 %v8352, %v8354
  %v8356 = vrot.slane %v8013, %v8355
  %v8358 = vunpack.c.l.s4 1983009808
  %v8359 = vunpack.c.0.s8 %v8358
  %v8360 = vlaneseq
  %v8361 = vshrl.u32 %v8360, 7
  %v8362 = vsub.s32 %v8359, %v8361
  %v8363 = vrot.slane %v8349, %v8362
  %v8364 = vcombine.high %v8356, %v8356
  %v8365 = vcombine.high %v8363, %v8363
  %v8366 = vcombine.high %v8014, %v8014
  %v8368 = vunpack.c.l.s4 1983009808
  %v8369 = vunpack.c.0.s8 %v8368
  %v8370 = vlaneseq
  %v8371 = vshrl.u32 %v8370, 7
  %v8372 = vsub.s32 %v8369, %v8371
  %v8373 = vrot.slane %v8014, %v8372
  %v8375 = vunpack.c.l.s4 1983009808
  %v8376 = vunpack.c.0.s8 %v8375
  %v8377 = vlaneseq
  %v8378 = vshrl.u32 %v8377, 7
  %v8379 = vsub.s32 %v8376, %v8378
  %v8380 = vrot.slane %v8366, %v8379
  %v8381 = vcombine.high %v8373, %v8373
  %v8382 = vcombine.high %v8380, %v8380
  %v8383 = vcombine.high %v8015, %v8015
  %v8385 = vunpack.c.l.s4 1983009808
  %v8386 = vunpack.c.0.s8 %v8385
  %v8387 = vlaneseq
  %v8388 = vshrl.u32 %v8387, 7
  %v8389 = vsub.s32 %v8386, %v8388
  %v8390 = vrot.slane %v8015, %v8389
  %v8392 = vunpack.c.l.s4 1983009808
  %v8393 = vunpack.c.0.s8 %v8392
  %v8394 = vlaneseq
  %v8395 = vshrl.u32 %v8394, 7
  %v8396 = vsub.s32 %v8393, %v8395
  %v8397 = vrot.slane %v8383, %v8396
  %v8398 = vcombine.high %v8390, %v8390
  %v8399 = vcombine.high %v8397, %v8397
  %v8400 = vcombine.high %v8016, %v8016
  %v8402 = vunpack.c.l.s4 1983009808
  %v8403 = vunpack.c.0.s8 %v8402
  %v8404 = vlaneseq
  %v8405 = vshrl.u32 %v8404, 7
  %v8406 = vsub.s32 %v8403, %v8405
  %v8407 = vrot.slane %v8016, %v8406
  %v8409 = vunpack.c.l.s4 1983009808
  %v8410 = vunpack.c.0.s8 %v8409
  %v8411 = vlaneseq
  %v8412 = vshrl.u32 %v8411, 7
  %v8413 = vsub.s32 %v8410, %v8412
  %v8414 = vrot.slane %v8400, %v8413
  %v8415 = vcombine.high %v8407, %v8407
  %v8416 = vcombine.high %v8414, %v8414
  %v8417 = vcombine.high %v8017, %v8017
  %v8419 = vunpack.c.l.s4 1983009808
  %v8420 = vunpack.c.0.s8 %v8419
  %v8421 = vlaneseq
  %v8422 = vshrl.u32 %v8421, 7
  %v8423 = vsub.s32 %v8420, %v8422
  %v8424 = vrot.slane %v8017, %v8423
  %v8426 = vunpack.c.l.s4 1983009808
  %v8427 = vunpack.c.0.s8 %v8426
  %v8428 = vlaneseq
  %v8429 = vshrl.u32 %v8428, 7
  %v8430 = vsub.s32 %v8427, %v8429
  %v8431 = vrot.slane %v8417, %v8430
  %v8432 = vcombine.high %v8424, %v8424
  %v8433 = vcombine.high %v8431, %v8431
  %v8434 = vcombine.high %v8018, %v8018
  %v8436 = vunpack.c.l.s4 1983009808
  %v8437 = vunpack.c.0.s8 %v8436
  %v8438 = vlaneseq
  %v8439 = vshrl.u32 %v8438, 7
  %v8440 = vsub.s32 %v8437, %v8439
  %v8441 = vrot.slane %v8018, %v8440
  %v8443 = vunpack.c.l.s4 1983009808
  %v8444 = vunpack.c.0.s8 %v8443
  %v8445 = vlaneseq
  %v8446 = vshrl.u32 %v8445, 7
  %v8447 = vsub.s32 %v8444, %v8446
  %v8448 = vrot.slane %v8434, %v8447
  %v8449 = vcombine.high %v8441, %v8441
  %v8450 = vcombine.high %v8448, %v8448
  %v8451 = vcombine.high %v8019, %v8019
  %v8453 = vunpack.c.l.s4 1983009808
  %v8454 = vunpack.c.0.s8 %v8453
  %v8455 = vlaneseq
  %v8456 = vshrl.u32 %v8455, 7
  %v8457 = vsub.s32 %v8454, %v8456
  %v8458 = vrot.slane %v8019, %v8457
  %v8460 = vunpack.c.l.s4 1983009808
  %v8461 = vunpack.c.0.s8 %v8460
  %v8462 = vlaneseq
  %v8463 = vshrl.u32 %v8462, 7
  %v8464 = vsub.s32 %v8461, %v8463
  %v8465 = vrot.slane %v8451, %v8464
  %v8466 = vcombine.high %v8458, %v8458
  %v8467 = vcombine.high %v8465, %v8465
  %v8468 = vcombine.high %v8020, %v8020
  %v8470 = vunpack.c.l.s4 1983009808
  %v8471 = vunpack.c.0.s8 %v8470
  %v8472 = vlaneseq
  %v8473 = vshrl.u32 %v8472, 7
  %v8474 = vsub.s32 %v8471, %v8473
  %v8475 = vrot.slane %v8020, %v8474
  %v8477 = vunpack.c.l.s4 1983009808
  %v8478 = vunpack.c.0.s8 %v8477
  %v8479 = vlaneseq
  %v8480 = vshrl.u32 %v8479, 7
  %v8481 = vsub.s32 %v8478, %v8480
  %v8482 = vrot.slane %v8468, %v8481
  %v8483 = vcombine.high %v8475, %v8475
  %v8484 = vcombine.high %v8482, %v8482
  %v8485 = vcombine.high %v8021, %v8021
  %v8487 = vunpack.c.l.s4 1983009808
  %v8488 = vunpack.c.0.s8 %v8487
  %v8489 = vlaneseq
  %v8490 = vshrl.u32 %v8489, 7
  %v8491 = vsub.s32 %v8488, %v8490
  %v8492 = vrot.slane %v8021, %v8491
  %v8494 = vunpack.c.l.s4 1983009808
  %v8495 = vunpack.c.0.s8 %v8494
  %v8496 = vlaneseq
  %v8497 = vshrl.u32 %v8496, 7
  %v8498 = vsub.s32 %v8495, %v8497
  %v8499 = vrot.slane %v8485, %v8498
  %v8500 = vcombine.high %v8492, %v8492
  %v8501 = vcombine.high %v8499, %v8499
  %v8502 = vcombine.high %v8022, %v8022
  %v8504 = vunpack.c.l.s4 1983009808
  %v8505 = vunpack.c.0.s8 %v8504
  %v8506 = vlaneseq
  %v8507 = vshrl.u32 %v8506, 7
  %v8508 = vsub.s32 %v8505, %v8507
  %v8509 = vrot.slane %v8022, %v8508
  %v8511 = vunpack.c.l.s4 1983009808
  %v8512 = vunpack.c.0.s8 %v8511
  %v8513 = vlaneseq
  %v8514 = vshrl.u32 %v8513, 7
  %v8515 = vsub.s32 %v8512, %v8514
  %v8516 = vrot.slane %v8502, %v8515
  %v8517 = vcombine.high %v8509, %v8509
  %v8518 = vcombine.high %v8516, %v8516
  %v8519 = vcombine.high %v8023, %v8023
  %v8521 = vunpack.c.l.s4 1983009808
  %v8522 = vunpack.c.0.s8 %v8521
  %v8523 = vlaneseq
  %v8524 = vshrl.u32 %v8523, 7
  %v8525 = vsub.s32 %v8522, %v8524
  %v8526 = vrot.slane %v8023, %v8525
  %v8528 = vunpack.c.l.s4 1983009808
  %v8529 = vunpack.c.0.s8 %v8528
  %v8530 = vlaneseq
  %v8531 = vshrl.u32 %v8530, 7
  %v8532 = vsub.s32 %v8529, %v8531
  %v8533 = vrot.slane %v8519, %v8532
  %v8534 = vcombine.high %v8526, %v8526
  %v8535 = vcombine.high %v8533, %v8533
  %v8536 = vcombine.high %v8024, %v8024
  %v8538 = vunpack.c.l.s4 1983009808
  %v8539 = vunpack.c.0.s8 %v8538
  %v8540 = vlaneseq
  %v8541 = vshrl.u32 %v8540, 7
  %v8542 = vsub.s32 %v8539, %v8541
  %v8543 = vrot.slane %v8024, %v8542
  %v8545 = vunpack.c.l.s4 1983009808
  %v8546 = vunpack.c.0.s8 %v8545
  %v8547 = vlaneseq
  %v8548 = vshrl.u32 %v8547, 7
  %v8549 = vsub.s32 %v8546, %v8548
  %v8550 = vrot.slane %v8536, %v8549
  %v8551 = vcombine.high %v8543, %v8543
  %v8552 = vcombine.high %v8550, %v8550
  %v8553 = vcombine.high %v8025, %v8025
  %v8555 = vunpack.c.l.s4 1983009808
  %v8556 = vunpack.c.0.s8 %v8555
  %v8557 = vlaneseq
  %v8558 = vshrl.u32 %v8557, 7
  %v8559 = vsub.s32 %v8556, %v8558
  %v8560 = vrot.slane %v8025, %v8559
  %v8562 = vunpack.c.l.s4 1983009808
  %v8563 = vunpack.c.0.s8 %v8562
  %v8564 = vlaneseq
  %v8565 = vshrl.u32 %v8564, 7
  %v8566 = vsub.s32 %v8563, %v8565
  %v8567 = vrot.slane %v8553, %v8566
  %v8568 = vcombine.high %v8560, %v8560
  %v8569 = vcombine.high %v8567, %v8567
  %v8570 = vcombine.high %v8026, %v8026
  %v8572 = vunpack.c.l.s4 1983009808
  %v8573 = vunpack.c.0.s8 %v8572
  %v8574 = vlaneseq
  %v8575 = vshrl.u32 %v8574, 7
  %v8576 = vsub.s32 %v8573, %v8575
  %v8577 = vrot.slane %v8026, %v8576
  %v8579 = vunpack.c.l.s4 1983009808
  %v8580 = vunpack.c.0.s8 %v8579
  %v8581 = vlaneseq
  %v8582 = vshrl.u32 %v8581, 7
  %v8583 = vsub.s32 %v8580, %v8582
  %v8584 = vrot.slane %v8570, %v8583
  %v8585 = vcombine.high %v8577, %v8577
  %v8586 = vcombine.high %v8584, %v8584
  %v8587 = vcombine.high %v8027, %v8027
  %v8589 = vunpack.c.l.s4 1983009808
  %v8590 = vunpack.c.0.s8 %v8589
  %v8591 = vlaneseq
  %v8592 = vshrl.u32 %v8591, 7
  %v8593 = vsub.s32 %v8590, %v8592
  %v8594 = vrot.slane %v8027, %v8593
  %v8596 = vunpack.c.l.s4 1983009808
  %v8597 = vunpack.c.0.s8 %v8596
  %v8598 = vlaneseq
  %v8599 = vshrl.u32 %v8598, 7
  %v8600 = vsub.s32 %v8597, %v8599
  %v8601 = vrot.slane %v8587, %v8600
  %v8602 = vcombine.high %v8594, %v8594
  %v8603 = vcombine.high %v8601, %v8601
  %v8732 = vrot.slane %v8067, 7
  %v8733 = vrot.slane %v8732, 2
  %v8734 = vrot.slane %v8075, 7
  %v8735 = vrot.slane %v8734, 2
  %v8736 = vrot.slane %v8074, 7
  %v8737 = vrot.slane %v8736, 2
  %v8738 = vrot.slane %v8076, 7
  %v8739 = vrot.slane %v8738, 2
  %v8740 = vrot.slane %v8084, 7
  %v8741 = vrot.slane %v8740, 2
  %v8742 = vrot.slane %v8092, 7
  %v8743 = vrot.slane %v8742, 2
  %v8744 = vrot.slane %v8091, 7
  %v8745 = vrot.slane %v8744, 2
  %v8746 = vrot.slane %v8093, 7
  %v8747 = vrot.slane %v8746, 2
  %v8748 = vrot.slane %v8101, 7
  %v8749 = vrot.slane %v8748, 2
  %v8750 = vrot.slane %v8109, 7
  %v8751 = vrot.slane %v8750, 2
  %v8752 = vrot.slane %v8108, 7
  %v8753 = vrot.slane %v8752, 2
  %v8754 = vrot.slane %v8110, 7
  %v8755 = vrot.slane %v8754, 2
  %v8756 = vrot.slane %v8118, 7
  %v8757 = vrot.slane %v8756, 2
  %v8758 = vrot.slane %v8126, 7
  %v8759 = vrot.slane %v8758, 2
  %v8760 = vrot.slane %v8125, 7
  %v8761 = vrot.slane %v8760, 2
  %v8762 = vrot.slane %v8127, 7
  %v8763 = vrot.slane %v8762, 2
  %v8764 = vrot.slane %v8135, 7
  %v8765 = vrot.slane %v8764, 2
  %v8766 = vrot.slane %v8143, 7
  %v8767 = vrot.slane %v8766, 2
  %v8768 = vrot.slane %v8142, 7
  %v8769 = vrot.slane %v8768, 2
  %v8770 = vrot.slane %v8144, 7
  %v8771 = vrot.slane %v8770, 2
  %v8772 = vrot.slane %v8152, 7
  %v8773 = vrot.slane %v8772, 2
  %v8774 = vrot.slane %v8160, 7
  %v8775 = vrot.slane %v8774, 2
  %v8776 = vrot.slane %v8159, 7
  %v8777 = vrot.slane %v8776, 2
  %v8778 = vrot.slane %v8161, 7
  %v8779 = vrot.slane %v8778, 2
  %v8780 = vrot.slane %v8169, 7
  %v8781 = vrot.slane %v8780, 2
  %v8782 = vrot.slane %v8177, 7
  %v8783 = vrot.slane %v8782, 2
  %v8784 = vrot.slane %v8176, 7
  %v8785 = vrot.slane %v8784, 2
  %v8786 = vrot.slane %v8178, 7
  %v8787 = vrot.slane %v8786, 2
  %v8788 = vrot.slane %v8186, 7
  %v8789 = vrot.slane %v8788, 2
  %v8790 = vrot.slane %v8194, 7
  %v8791 = vrot.slane %v8790, 2
  %v8792 = vrot.slane %v8193, 7
  %v8793 = vrot.slane %v8792, 2
  %v8794 = vrot.slane %v8195, 7
  %v8795 = vrot.slane %v8794, 2
  %v8796 = vrot.slane %v8203, 7
  %v8797 = vrot.slane %v8796, 2
  %v8798 = vrot.slane %v8211, 7
  %v8799 = vrot.slane %v8798, 2
  %v8800 = vrot.slane %v8210, 7
  %v8801 = vrot.slane %v8800, 2
  %v8802 = vrot.slane %v8212, 7
  %v8803 = vrot.slane %v8802, 2
  %v8804 = vrot.slane %v8220, 7
  %v8805 = vrot.slane %v8804, 2
  %v8806 = vrot.slane %v8228, 7
  %v8807 = vrot.slane %v8806, 2
  %v8808 = vrot.slane %v8227, 7
  %v8809 = vrot.slane %v8808, 2
  %v8810 = vrot.slane %v8229, 7
  %v8811 = vrot.slane %v8810, 2
  %v8812 = vrot.slane %v8237, 7
  %v8813 = vrot.slane %v8812, 2
  %v8814 = vrot.slane %v8245, 7
  %v8815 = vrot.slane %v8814, 2
  %v8816 = vrot.slane %v8244, 7
  %v8817 = vrot.slane %v8816, 2
  %v8818 = vrot.slane %v8246, 7
  %v8819 = vrot.slane %v8818, 2
  %v8820 = vrot.slane %v8254, 7
  %v8821 = vrot.slane %v8820, 2
  %v8822 = vrot.slane %v8262, 7
  %v8823 = vrot.slane %v8822, 2
  %v8824 = vrot.slane %v8261, 7
  %v8825 = vrot.slane %v8824, 2
  %v8826 = vrot.slane %v8263, 7
  %v8827 = vrot.slane %v8826, 2
  %v8828 = vrot.slane %v8271, 7
  %v8829 = vrot.slane %v8828, 2
  %v8830 = vrot.slane %v8279, 7
  %v8831 = vrot.slane %v8830, 2
  %v8832 = vrot.slane %v8278, 7
  %v8833 = vrot.slane %v8832, 2
  %v8834 = vrot.slane %v8280, 7
  %v8835 = vrot.slane %v8834, 2
  %v8836 = vrot.slane %v8288, 7
  %v8837 = vrot.slane %v8836, 2
  %v8838 = vrot.slane %v8296, 7
  %v8839 = vrot.slane %v8838, 2
  %v8840 = vrot.slane %v8295, 7
  %v8841 = vrot.slane %v8840, 2
  %v8842 = vrot.slane %v8297, 7
  %v8843 = vrot.slane %v8842, 2
  %v8844 = vrot.slane %v8305, 7
  %v8845 = vrot.slane %v8844, 2
  %v8846 = vrot.slane %v8313, 7
  %v8847 = vrot.slane %v8846, 2
  %v8848 = vrot.slane %v8312, 7
  %v8849 = vrot.slane %v8848, 2
  %v8850 = vrot.slane %v8314, 7
  %v8851 = vrot.slane %v8850, 2
  %v8852 = vrot.slane %v8322, 7
  %v8853 = vrot.slane %v8852, 2
  %v8854 = vrot.slane %v8330, 7
  %v8855 = vrot.slane %v8854, 2
  %v8856 = vrot.slane %v8329, 7
  %v8857 = vrot.slane %v8856, 2
  %v8858 = vrot.slane %v8331, 7
  %v8859 = vrot.slane %v8858, 2
  %v8860 = vrot.slane %v8339, 7
  %v8861 = vrot.slane %v8860, 2
  %v8862 = vrot.slane %v8347, 7
  %v8863 = vrot.slane %v8862, 2
  %v8864 = vrot.slane %v8346, 7
  %v8865 = vrot.slane %v8864, 2
  %v8866 = vrot.slane %v8348, 7
  %v8867 = vrot.slane %v8866, 2
  %v8868 = vrot.slane %v8356, 7
  %v8869 = vrot.slane %v8868, 2
  %v8870 = vrot.slane %v8364, 7
  %v8871 = vrot.slane %v8870, 2
  %v8872 = vrot.slane %v8363, 7
  %v8873 = vrot.slane %v8872, 2
  %v8874 = vrot.slane %v8365, 7
  %v8875 = vrot.slane %v8874, 2
  %v8876 = vrot.slane %v8373, 7
  %v8877 = vrot.slane %v8876, 2
  %v8878 = vrot.slane %v8381, 7
  %v8879 = vrot.slane %v8878, 2
  %v8880 = vrot.slane %v8380, 7
  %v8881 = vrot.slane %v8880, 2
  %v8882 = vrot.slane %v8382, 7
  %v8883 = vrot.slane %v8882, 2
  %v8884 = vrot.slane %v8390, 7
  %v8885 = vrot.slane %v8884, 2
  %v8886 = vrot.slane %v8398, 7
  %v8887 = vrot.slane %v8886, 2
  %v8888 = vrot.slane %v8397, 7
  %v8889 = vrot.slane %v8888, 2
  %v8890 = vrot.slane %v8399, 7
  %v8891 = vrot.slane %v8890, 2
  %v8892 = vrot.slane %v8407, 7
  %v8893 = vrot.slane %v8892, 2
  %v8894 = vrot.slane %v8415, 7
  %v8895 = vrot.slane %v8894, 2
  %v8896 = vrot.slane %v8414, 7
  %v8897 = vrot.slane %v8896, 2
  %v8898 = vrot.slane %v8416, 7
  %v8899 = vrot.slane %v8898, 2
  %v8900 = vrot.slane %v8424, 7
  %v8901 = vrot.slane %v8900, 2
  %v8902 = vrot.slane %v8432, 7
  %v8903 = vrot.slane %v8902, 2
  %v8904 = vrot.slane %v8431, 7
  %v8905 = vrot.slane %v8904, 2
  %v8906 = vrot.slane %v8433, 7
  %v8907 = vrot.slane %v8906, 2
  %v8908 = vrot.slane %v8441, 7
  %v8909 = vrot.slane %v8908, 2
  %v8910 = vrot.slane %v8449, 7
  %v8911 = vrot.slane %v8910, 2
  %v8912 = vrot.slane %v8448, 7
  %v8913 = vrot.slane %v8912, 2
  %v8914 = vrot.slane %v8450, 7
  %v8915 = vrot.slane %v8914, 2
  %v8916 = vrot.slane %v8458, 7
  %v8917 = vrot.slane %v8916, 2
  %v8918 = vrot.slane %v8466, 7
  %v8919 = vrot.slane %v8918, 2
  %v8920 = vrot.slane %v8465, 7
  %v8921 = vrot.slane %v8920, 2
  %v8922 = vrot.slane %v8467, 7
  %v8923 = vrot.slane %v8922, 2
  %v8924 = vrot.slane %v8475, 7
  %v8925 = vrot.slane %v8924, 2
  %v8926 = vrot.slane %v8483, 7
  %v8927 = vrot.slane %v8926, 2
  %v8928 = vrot.slane %v8482, 7
  %v8929 = vrot.slane %v8928, 2
  %v8930 = vrot.slane %v8484, 7
  %v8931 = vrot.slane %v8930, 2
  %v8932 = vrot.slane %v8492, 7
  %v8933 = vrot.slane %v8932, 2
  %v8934 = vrot.slane %v8500, 7
  %v8935 = vrot.slane %v8934, 2
  %v8936 = vrot.slane %v8499, 7
  %v8937 = vrot.slane %v8936, 2
  %v8938 = vrot.slane %v8501, 7
  %v8939 = vrot.slane %v8938, 2
  %v8940 = vrot.slane %v8509, 7
  %v8941 = vrot.slane %v8940, 2
  %v8942 = vrot.slane %v8517, 7
  %v8943 = vrot.slane %v8942, 2
  %v8944 = vrot.slane %v8516, 7
  %v8945 = vrot.slane %v8944, 2
  %v8946 = vrot.slane %v8518, 7
  %v8947 = vrot.slane %v8946, 2
  %v8948 = vrot.slane %v8526, 7
  %v8949 = vrot.slane %v8948, 2
  %v8950 = vrot.slane %v8534, 7
  %v8951 = vrot.slane %v8950, 2
  %v8952 = vrot.slane %v8533, 7
  %v8953 = vrot.slane %v8952, 2
  %v8954 = vrot.slane %v8535, 7
  %v8955 = vrot.slane %v8954, 2
  %v8956 = vrot.slane %v8543, 7
  %v8957 = vrot.slane %v8956, 2
  %v8958 = vrot.slane %v8551, 7
  %v8959 = vrot.slane %v8958, 2
  %v8960 = vrot.slane %v8550, 7
  %v8961 = vrot.slane %v8960, 2
  %v8962 = vrot.slane %v8552, 7
  %v8963 = vrot.slane %v8962, 2
  %v8964 = vrot.slane %v8560, 7
  %v8965 = vrot.slane %v8964, 2
  %v8966 = vrot.slane %v8568, 7
  %v8967 = vrot.slane %v8966, 2
  %v8968 = vrot.slane %v8567, 7
  %v8969 = vrot.slane %v8968, 2
  %v8970 = vrot.slane %v8569, 7
  %v8971 = vrot.slane %v8970, 2
  %v8972 = vrot.slane %v8577, 7
  %v8973 = vrot.slane %v8972, 2
  %v8974 = vrot.slane %v8585, 7
  %v8975 = vrot.slane %v8974, 2
  %v8976 = vrot.slane %v8584, 7
  %v8977 = vrot.slane %v8976, 2
  %v8978 = vrot.slane %v8586, 7
  %v8979 = vrot.slane %v8978, 2
  %v8980 = vrot.slane %v8594, 7
  %v8981 = vrot.slane %v8980, 2
  %v8982 = vrot.slane %v8602, 7
  %v8983 = vrot.slane %v8982, 2
  %v8984 = vrot.slane %v8601, 7
  %v8985 = vrot.slane %v8984, 2
  %v8986 = vrot.slane %v8603, 7
  %v8987 = vrot.slane %v8986, 2
  %v9116 = vadd.f32 %v8067, %v8733
  %v9117 = vadd.f32 %v8075, %v8735
  %v9118 = vadd.f32 %v8074, %v8737
  %v9119 = vadd.f32 %v8076, %v8739
  %v9120 = vadd.f32 %v8084, %v8741
  %v9121 = vadd.f32 %v8092, %v8743
  %v9122 = vadd.f32 %v8091, %v8745
  %v9123 = vadd.f32 %v8093, %v8747
  %v9124 = vadd.f32 %v8101, %v8749
  %v9125 = vadd.f32 %v8109, %v8751
  %v9126 = vadd.f32 %v8108, %v8753
  %v9127 = vadd.f32 %v8110, %v8755
  %v9128 = vadd.f32 %v8118, %v8757
  %v9129 = vadd.f32 %v8126, %v8759
  %v9130 = vadd.f32 %v8125, %v8761
  %v9131 = vadd.f32 %v8127, %v8763
  %v9132 = vadd.f32 %v8135, %v8765
  %v9133 = vadd.f32 %v8143, %v8767
  %v9134 = vadd.f32 %v8142, %v8769
  %v9135 = vadd.f32 %v8144, %v8771
  %v9136 = vadd.f32 %v8152, %v8773
  %v9137 = vadd.f32 %v8160, %v8775
  %v9138 = vadd.f32 %v8159, %v8777
  %v9139 = vadd.f32 %v8161, %v8779
  %v9140 = vadd.f32 %v8169, %v8781
  %v9141 = vadd.f32 %v8177, %v8783
  %v9142 = vadd.f32 %v8176, %v8785
  %v9143 = vadd.f32 %v8178, %v8787
  %v9144 = vadd.f32 %v8186, %v8789
  %v9145 = vadd.f32 %v8194, %v8791
  %v9146 = vadd.f32 %v8193, %v8793
  %v9147 = vadd.f32 %v8195, %v8795
  %v9148 = vadd.f32 %v8203, %v8797
  %v9149 = vadd.f32 %v8211, %v8799
  %v9150 = vadd.f32 %v8210, %v8801
  %v9151 = vadd.f32 %v8212, %v8803
  %v9152 = vadd.f32 %v8220, %v8805
  %v9153 = vadd.f32 %v8228, %v8807
  %v9154 = vadd.f32 %v8227, %v8809
  %v9155 = vadd.f32 %v8229, %v8811
  %v9156 = vadd.f32 %v8237, %v8813
  %v9157 = vadd.f32 %v8245, %v8815
  %v9158 = vadd.f32 %v8244, %v8817
  %v9159 = vadd.f32 %v8246, %v8819
  %v9160 = vadd.f32 %v8254, %v8821
  %v9161 = vadd.f32 %v8262, %v8823
  %v9162 = vadd.f32 %v8261, %v8825
  %v9163 = vadd.f32 %v8263, %v8827
  %v9164 = vadd.f32 %v8271, %v8829
  %v9165 = vadd.f32 %v8279, %v8831
  %v9166 = vadd.f32 %v8278, %v8833
  %v9167 = vadd.f32 %v8280, %v8835
  %v9168 = vadd.f32 %v8288, %v8837
  %v9169 = vadd.f32 %v8296, %v8839
  %v9170 = vadd.f32 %v8295, %v8841
  %v9171 = vadd.f32 %v8297, %v8843
  %v9172 = vadd.f32 %v8305, %v8845
  %v9173 = vadd.f32 %v8313, %v8847
  %v9174 = vadd.f32 %v8312, %v8849
  %v9175 = vadd.f32 %v8314, %v8851
  %v9176 = vadd.f32 %v8322, %v8853
  %v9177 = vadd.f32 %v8330, %v8855
  %v9178 = vadd.f32 %v8329, %v8857
  %v9179 = vadd.f32 %v8331, %v8859
  %v9180 = vadd.f32 %v8339, %v8861
  %v9181 = vadd.f32 %v8347, %v8863
  %v9182 = vadd.f32 %v8346, %v8865
  %v9183 = vadd.f32 %v8348, %v8867
  %v9184 = vadd.f32 %v8356, %v8869
  %v9185 = vadd.f32 %v8364, %v8871
  %v9186 = vadd.f32 %v8363, %v8873
  %v9187 = vadd.f32 %v8365, %v8875
  %v9188 = vadd.f32 %v8373, %v8877
  %v9189 = vadd.f32 %v8381, %v8879
  %v9190 = vadd.f32 %v8380, %v8881
  %v9191 = vadd.f32 %v8382, %v8883
  %v9192 = vadd.f32 %v8390, %v8885
  %v9193 = vadd.f32 %v8398, %v8887
  %v9194 = vadd.f32 %v8397, %v8889
  %v9195 = vadd.f32 %v8399, %v8891
  %v9196 = vadd.f32 %v8407, %v8893
  %v9197 = vadd.f32 %v8415, %v8895
  %v9198 = vadd.f32 %v8414, %v8897
  %v9199 = vadd.f32 %v8416, %v8899
  %v9200 = vadd.f32 %v8424, %v8901
  %v9201 = vadd.f32 %v8432, %v8903
  %v9202 = vadd.f32 %v8431, %v8905
  %v9203 = vadd.f32 %v8433, %v8907
  %v9204 = vadd.f32 %v8441, %v8909
  %v9205 = vadd.f32 %v8449, %v8911
  %v9206 = vadd.f32 %v8448, %v8913
  %v9207 = vadd.f32 %v8450, %v8915
  %v9208 = vadd.f32 %v8458, %v8917
  %v9209 = vadd.f32 %v8466, %v8919
  %v9210 = vadd.f32 %v8465, %v8921
  %v9211 = vadd.f32 %v8467, %v8923
  %v9212 = vadd.f32 %v8475, %v8925
  %v9213 = vadd.f32 %v8483, %v8927
  %v9214 = vadd.f32 %v8482, %v8929
  %v9215 = vadd.f32 %v8484, %v8931
  %v9216 = vadd.f32 %v8492, %v8933
  %v9217 = vadd.f32 %v8500, %v8935
  %v9218 = vadd.f32 %v8499, %v8937
  %v9219 = vadd.f32 %v8501, %v8939
  %v9220 = vadd.f32 %v8509, %v8941
  %v9221 = vadd.f32 %v8517, %v8943
  %v9222 = vadd.f32 %v8516, %v8945
  %v9223 = vadd.f32 %v8518, %v8947
  %v9224 = vadd.f32 %v8526, %v8949
  %v9225 = vadd.f32 %v8534, %v8951
  %v9226 = vadd.f32 %v8533, %v8953
  %v9227 = vadd.f32 %v8535, %v8955
  %v9228 = vadd.f32 %v8543, %v8957
  %v9229 = vadd.f32 %v8551, %v8959
  %v9230 = vadd.f32 %v8550, %v8961
  %v9231 = vadd.f32 %v8552, %v8963
  %v9232 = vadd.f32 %v8560, %v8965
  %v9233 = vadd.f32 %v8568, %v8967
  %v9234 = vadd.f32 %v8567, %v8969
  %v9235 = vadd.f32 %v8569, %v8971
  %v9236 = vadd.f32 %v8577, %v8973
  %v9237 = vadd.f32 %v8585, %v8975
  %v9238 = vadd.f32 %v8584, %v8977
  %v9239 = vadd.f32 %v8586, %v8979
  %v9240 = vadd.f32 %v8594, %v8981
  %v9241 = vadd.f32 %v8602, %v8983
  %v9242 = vadd.f32 %v8601, %v8985
  %v9243 = vadd.f32 %v8603, %v8987
  %v9244 = vmul.f32 %v9116, 0.25
  %v9245 = vmul.f32 %v9117, 0.25
  %v9246 = vmul.f32 %v9118, 0.25
  %v9247 = vmul.f32 %v9119, 0.25
  %v9248 = vmul.f32 %v9120, 0.25
  %v9249 = vmul.f32 %v9121, 0.25
  %v9250 = vmul.f32 %v9122, 0.25
  %v9251 = vmul.f32 %v9123, 0.25
  %v9252 = vmul.f32 %v9124, 0.25
  %v9253 = vmul.f32 %v9125, 0.25
  %v9254 = vmul.f32 %v9126, 0.25
  %v9255 = vmul.f32 %v9127, 0.25
  %v9256 = vmul.f32 %v9128, 0.25
  %v9257 = vmul.f32 %v9129, 0.25
  %v9258 = vmul.f32 %v9130, 0.25
  %v9259 = vmul.f32 %v9131, 0.25
  %v9260 = vmul.f32 %v9132, 0.25
  %v9261 = vmul.f32 %v9133, 0.25
  %v9262 = vmul.f32 %v9134, 0.25
  %v9263 = vmul.f32 %v9135, 0.25
  %v9264 = vmul.f32 %v9136, 0.25
  %v9265 = vmul.f32 %v9137, 0.25
  %v9266 = vmul.f32 %v9138, 0.25
  %v9267 = vmul.f32 %v9139, 0.25
  %v9268 = vmul.f32 %v9140, 0.25
  %v9269 = vmul.f32 %v9141, 0.25
  %v9270 = vmul.f32 %v9142, 0.25
  %v9271 = vmul.f32 %v9143, 0.25
  %v9272 = vmul.f32 %v9144, 0.25
  %v9273 = vmul.f32 %v9145, 0.25
  %v9274 = vmul.f32 %v9146, 0.25
  %v9275 = vmul.f32 %v9147, 0.25
  %v9276 = vmul.f32 %v9148, 0.25
  %v9277 = vmul.f32 %v9149, 0.25
  %v9278 = vmul.f32 %v9150, 0.25
  %v9279 = vmul.f32 %v9151, 0.25
  %v9280 = vmul.f32 %v9152, 0.25
  %v9281 = vmul.f32 %v9153, 0.25
  %v9282 = vmul.f32 %v9154, 0.25
  %v9283 = vmul.f32 %v9155, 0.25
  %v9284 = vmul.f32 %v9156, 0.25
  %v9285 = vmul.f32 %v9157, 0.25
  %v9286 = vmul.f32 %v9158, 0.25
  %v9287 = vmul.f32 %v9159, 0.25
  %v9288 = vmul.f32 %v9160, 0.25
  %v9289 = vmul.f32 %v9161, 0.25
  %v9290 = vmul.f32 %v9162, 0.25
  %v9291 = vmul.f32 %v9163, 0.25
  %v9292 = vmul.f32 %v9164, 0.25
  %v9293 = vmul.f32 %v9165, 0.25
  %v9294 = vmul.f32 %v9166, 0.25
  %v9295 = vmul.f32 %v9167, 0.25
  %v9296 = vmul.f32 %v9168, 0.25
  %v9297 = vmul.f32 %v9169, 0.25
  %v9298 = vmul.f32 %v9170, 0.25
  %v9299 = vmul.f32 %v9171, 0.25
  %v9300 = vmul.f32 %v9172, 0.25
  %v9301 = vmul.f32 %v9173, 0.25
  %v9302 = vmul.f32 %v9174, 0.25
  %v9303 = vmul.f32 %v9175, 0.25
  %v9304 = vmul.f32 %v9176, 0.25
  %v9305 = vmul.f32 %v9177, 0.25
  %v9306 = vmul.f32 %v9178, 0.25
  %v9307 = vmul.f32 %v9179, 0.25
  %v9308 = vmul.f32 %v9180, 0.25
  %v9309 = vmul.f32 %v9181, 0.25
  %v9310 = vmul.f32 %v9182, 0.25
  %v9311 = vmul.f32 %v9183, 0.25
  %v9312 = vmul.f32 %v9184, 0.25
  %v9313 = vmul.f32 %v9185, 0.25
  %v9314 = vmul.f32 %v9186, 0.25
  %v9315 = vmul.f32 %v9187, 0.25
  %v9316 = vmul.f32 %v9188, 0.25
  %v9317 = vmul.f32 %v9189, 0.25
  %v9318 = vmul.f32 %v9190, 0.25
  %v9319 = vmul.f32 %v9191, 0.25
  %v9320 = vmul.f32 %v9192, 0.25
  %v9321 = vmul.f32 %v9193, 0.25
  %v9322 = vmul.f32 %v9194, 0.25
  %v9323 = vmul.f32 %v9195, 0.25
  %v9324 = vmul.f32 %v9196, 0.25
  %v9325 = vmul.f32 %v9197, 0.25
  %v9326 = vmul.f32 %v9198, 0.25
  %v9327 = vmul.f32 %v9199, 0.25
  %v9328 = vmul.f32 %v9200, 0.25
  %v9329 = vmul.f32 %v9201, 0.25
  %v9330 = vmul.f32 %v9202, 0.25
  %v9331 = vmul.f32 %v9203, 0.25
  %v9332 = vmul.f32 %v9204, 0.25
  %v9333 = vmul.f32 %v9205, 0.25
  %v9334 = vmul.f32 %v9206, 0.25
  %v9335 = vmul.f32 %v9207, 0.25
  %v9336 = vmul.f32 %v9208, 0.25
  %v9337 = vmul.f32 %v9209, 0.25
  %v9338 = vmul.f32 %v9210, 0.25
  %v9339 = vmul.f32 %v9211, 0.25
  %v9340 = vmul.f32 %v9212, 0.25
  %v9341 = vmul.f32 %v9213, 0.25
  %v9342 = vmul.f32 %v9214, 0.25
  %v9343 = vmul.f32 %v9215, 0.25
  %v9344 = vmul.f32 %v9216, 0.25
  %v9345 = vmul.f32 %v9217, 0.25
  %v9346 = vmul.f32 %v9218, 0.25
  %v9347 = vmul.f32 %v9219, 0.25
  %v9348 = vmul.f32 %v9220, 0.25
  %v9349 = vmul.f32 %v9221, 0.25
  %v9350 = vmul.f32 %v9222, 0.25
  %v9351 = vmul.f32 %v9223, 0.25
  %v9352 = vmul.f32 %v9224, 0.25
  %v9353 = vmul.f32 %v9225, 0.25
  %v9354 = vmul.f32 %v9226, 0.25
  %v9355 = vmul.f32 %v9227, 0.25
  %v9356 = vmul.f32 %v9228, 0.25
  %v9357 = vmul.f32 %v9229, 0.25
  %v9358 = vmul.f32 %v9230, 0.25
  %v9359 = vmul.f32 %v9231, 0.25
  %v9360 = vmul.f32 %v9232, 0.25
  %v9361 = vmul.f32 %v9233, 0.25
  %v9362 = vmul.f32 %v9234, 0.25
  %v9363 = vmul.f32 %v9235, 0.25
  %v9364 = vmul.f32 %v9236, 0.25
  %v9365 = vmul.f32 %v9237, 0.25
  %v9366 = vmul.f32 %v9238, 0.25
  %v9367 = vmul.f32 %v9239, 0.25
  %v9368 = vmul.f32 %v9240, 0.25
  %v9369 = vmul.f32 %v9241, 0.25
  %v9370 = vmul.f32 %v9242, 0.25
  %v9371 = vmul.f32 %v9243, 0.25
  %v9372 = vpack.c.bf16 %v9244, %v9244
  %v9373 = vpack.c.bf16 %v9245, %v9245
  %v9374 = vpack.c.bf16 %v9246, %v9246
  %v9375 = vpack.c.bf16 %v9247, %v9247
  %v9376 = vpack.c.bf16 %v9248, %v9248
  %v9377 = vpack.c.bf16 %v9249, %v9249
  %v9378 = vpack.c.bf16 %v9250, %v9250
  %v9379 = vpack.c.bf16 %v9251, %v9251
  %v9380 = vpack.c.bf16 %v9252, %v9252
  %v9381 = vpack.c.bf16 %v9253, %v9253
  %v9382 = vpack.c.bf16 %v9254, %v9254
  %v9383 = vpack.c.bf16 %v9255, %v9255
  %v9384 = vpack.c.bf16 %v9256, %v9256
  %v9385 = vpack.c.bf16 %v9257, %v9257
  %v9386 = vpack.c.bf16 %v9258, %v9258
  %v9387 = vpack.c.bf16 %v9259, %v9259
  %v9388 = vpack.c.bf16 %v9260, %v9260
  %v9389 = vpack.c.bf16 %v9261, %v9261
  %v9390 = vpack.c.bf16 %v9262, %v9262
  %v9391 = vpack.c.bf16 %v9263, %v9263
  %v9392 = vpack.c.bf16 %v9264, %v9264
  %v9393 = vpack.c.bf16 %v9265, %v9265
  %v9394 = vpack.c.bf16 %v9266, %v9266
  %v9395 = vpack.c.bf16 %v9267, %v9267
  %v9396 = vpack.c.bf16 %v9268, %v9268
  %v9397 = vpack.c.bf16 %v9269, %v9269
  %v9398 = vpack.c.bf16 %v9270, %v9270
  %v9399 = vpack.c.bf16 %v9271, %v9271
  %v9400 = vpack.c.bf16 %v9272, %v9272
  %v9401 = vpack.c.bf16 %v9273, %v9273
  %v9402 = vpack.c.bf16 %v9274, %v9274
  %v9403 = vpack.c.bf16 %v9275, %v9275
  %v9404 = vpack.c.bf16 %v9276, %v9276
  %v9405 = vpack.c.bf16 %v9277, %v9277
  %v9406 = vpack.c.bf16 %v9278, %v9278
  %v9407 = vpack.c.bf16 %v9279, %v9279
  %v9408 = vpack.c.bf16 %v9280, %v9280
  %v9409 = vpack.c.bf16 %v9281, %v9281
  %v9410 = vpack.c.bf16 %v9282, %v9282
  %v9411 = vpack.c.bf16 %v9283, %v9283
  %v9412 = vpack.c.bf16 %v9284, %v9284
  %v9413 = vpack.c.bf16 %v9285, %v9285
  %v9414 = vpack.c.bf16 %v9286, %v9286
  %v9415 = vpack.c.bf16 %v9287, %v9287
  %v9416 = vpack.c.bf16 %v9288, %v9288
  %v9417 = vpack.c.bf16 %v9289, %v9289
  %v9418 = vpack.c.bf16 %v9290, %v9290
  %v9419 = vpack.c.bf16 %v9291, %v9291
  %v9420 = vpack.c.bf16 %v9292, %v9292
  %v9421 = vpack.c.bf16 %v9293, %v9293
  %v9422 = vpack.c.bf16 %v9294, %v9294
  %v9423 = vpack.c.bf16 %v9295, %v9295
  %v9424 = vpack.c.bf16 %v9296, %v9296
  %v9425 = vpack.c.bf16 %v9297, %v9297
  %v9426 = vpack.c.bf16 %v9298, %v9298
  %v9427 = vpack.c.bf16 %v9299, %v9299
  %v9428 = vpack.c.bf16 %v9300, %v9300
  %v9429 = vpack.c.bf16 %v9301, %v9301
  %v9430 = vpack.c.bf16 %v9302, %v9302
  %v9431 = vpack.c.bf16 %v9303, %v9303
  %v9432 = vpack.c.bf16 %v9304, %v9304
  %v9433 = vpack.c.bf16 %v9305, %v9305
  %v9434 = vpack.c.bf16 %v9306, %v9306
  %v9435 = vpack.c.bf16 %v9307, %v9307
  %v9436 = vpack.c.bf16 %v9308, %v9308
  %v9437 = vpack.c.bf16 %v9309, %v9309
  %v9438 = vpack.c.bf16 %v9310, %v9310
  %v9439 = vpack.c.bf16 %v9311, %v9311
  %v9440 = vpack.c.bf16 %v9312, %v9312
  %v9441 = vpack.c.bf16 %v9313, %v9313
  %v9442 = vpack.c.bf16 %v9314, %v9314
  %v9443 = vpack.c.bf16 %v9315, %v9315
  %v9444 = vpack.c.bf16 %v9316, %v9316
  %v9445 = vpack.c.bf16 %v9317, %v9317
  %v9446 = vpack.c.bf16 %v9318, %v9318
  %v9447 = vpack.c.bf16 %v9319, %v9319
  %v9448 = vpack.c.bf16 %v9320, %v9320
  %v9449 = vpack.c.bf16 %v9321, %v9321
  %v9450 = vpack.c.bf16 %v9322, %v9322
  %v9451 = vpack.c.bf16 %v9323, %v9323
  %v9452 = vpack.c.bf16 %v9324, %v9324
  %v9453 = vpack.c.bf16 %v9325, %v9325
  %v9454 = vpack.c.bf16 %v9326, %v9326
  %v9455 = vpack.c.bf16 %v9327, %v9327
  %v9456 = vpack.c.bf16 %v9328, %v9328
  %v9457 = vpack.c.bf16 %v9329, %v9329
  %v9458 = vpack.c.bf16 %v9330, %v9330
  %v9459 = vpack.c.bf16 %v9331, %v9331
  %v9460 = vpack.c.bf16 %v9332, %v9332
  %v9461 = vpack.c.bf16 %v9333, %v9333
  %v9462 = vpack.c.bf16 %v9334, %v9334
  %v9463 = vpack.c.bf16 %v9335, %v9335
  %v9464 = vpack.c.bf16 %v9336, %v9336
  %v9465 = vpack.c.bf16 %v9337, %v9337
  %v9466 = vpack.c.bf16 %v9338, %v9338
  %v9467 = vpack.c.bf16 %v9339, %v9339
  %v9468 = vpack.c.bf16 %v9340, %v9340
  %v9469 = vpack.c.bf16 %v9341, %v9341
  %v9470 = vpack.c.bf16 %v9342, %v9342
  %v9471 = vpack.c.bf16 %v9343, %v9343
  %v9472 = vpack.c.bf16 %v9344, %v9344
  %v9473 = vpack.c.bf16 %v9345, %v9345
  %v9474 = vpack.c.bf16 %v9346, %v9346
  %v9475 = vpack.c.bf16 %v9347, %v9347
  %v9476 = vpack.c.bf16 %v9348, %v9348
  %v9477 = vpack.c.bf16 %v9349, %v9349
  %v9478 = vpack.c.bf16 %v9350, %v9350
  %v9479 = vpack.c.bf16 %v9351, %v9351
  %v9480 = vpack.c.bf16 %v9352, %v9352
  %v9481 = vpack.c.bf16 %v9353, %v9353
  %v9482 = vpack.c.bf16 %v9354, %v9354
  %v9483 = vpack.c.bf16 %v9355, %v9355
  %v9484 = vpack.c.bf16 %v9356, %v9356
  %v9485 = vpack.c.bf16 %v9357, %v9357
  %v9486 = vpack.c.bf16 %v9358, %v9358
  %v9487 = vpack.c.bf16 %v9359, %v9359
  %v9488 = vpack.c.bf16 %v9360, %v9360
  %v9489 = vpack.c.bf16 %v9361, %v9361
  %v9490 = vpack.c.bf16 %v9362, %v9362
  %v9491 = vpack.c.bf16 %v9363, %v9363
  %v9492 = vpack.c.bf16 %v9364, %v9364
  %v9493 = vpack.c.bf16 %v9365, %v9365
  %v9494 = vpack.c.bf16 %v9366, %v9366
  %v9495 = vpack.c.bf16 %v9367, %v9367
  %v9496 = vpack.c.bf16 %v9368, %v9368
  %v9497 = vpack.c.bf16 %v9369, %v9369
  %v9498 = vpack.c.bf16 %v9370, %v9370
  %v9499 = vpack.c.bf16 %v9371, %v9371
  %v9500 = vld [vmem:[%s5] sm:$0x3]
  %v9501 = vld [vmem:[%s6] sm:$0x1]
  %v9503 = vlaneseq
  %v9504 = vshrl.u32 %v9503, 7
  %v9505 = vsub.s32 0, %v9504
  %v9506 = vrot.slane %v9501, %v9505
  %v9636 = vunpack.c.l.b16 %v9372
  %v9637 = vunpack.c.l.b16 %v9373
  %v9638 = vunpack.c.l.b16 %v9374
  %v9639 = vunpack.c.l.b16 %v9375
  %v9640 = vunpack.c.l.b16 %v9376
  %v9641 = vunpack.c.l.b16 %v9377
  %v9642 = vunpack.c.l.b16 %v9378
  %v9643 = vunpack.c.l.b16 %v9379
  %v9644 = vunpack.c.l.b16 %v9380
  %v9645 = vunpack.c.l.b16 %v9381
  %v9646 = vunpack.c.l.b16 %v9382
  %v9647 = vunpack.c.l.b16 %v9383
  %v9648 = vunpack.c.l.b16 %v9384
  %v9649 = vunpack.c.l.b16 %v9385
  %v9650 = vunpack.c.l.b16 %v9386
  %v9651 = vunpack.c.l.b16 %v9387
  %v9652 = vunpack.c.l.b16 %v9388
  %v9653 = vunpack.c.l.b16 %v9389
  %v9654 = vunpack.c.l.b16 %v9390
  %v9655 = vunpack.c.l.b16 %v9391
  %v9656 = vunpack.c.l.b16 %v9392
  %v9657 = vunpack.c.l.b16 %v9393
  %v9658 = vunpack.c.l.b16 %v9394
  %v9659 = vunpack.c.l.b16 %v9395
  %v9660 = vunpack.c.l.b16 %v9396
  %v9661 = vunpack.c.l.b16 %v9397
  %v9662 = vunpack.c.l.b16 %v9398
  %v9663 = vunpack.c.l.b16 %v9399
  %v9664 = vunpack.c.l.b16 %v9400
  %v9665 = vunpack.c.l.b16 %v9401
  %v9666 = vunpack.c.l.b16 %v9402
  %v9667 = vunpack.c.l.b16 %v9403
  %v9668 = vunpack.c.l.b16 %v9404
  %v9669 = vunpack.c.l.b16 %v9405
  %v9670 = vunpack.c.l.b16 %v9406
  %v9671 = vunpack.c.l.b16 %v9407
  %v9672 = vunpack.c.l.b16 %v9408
  %v9673 = vunpack.c.l.b16 %v9409
  %v9674 = vunpack.c.l.b16 %v9410
  %v9675 = vunpack.c.l.b16 %v9411
  %v9676 = vunpack.c.l.b16 %v9412
  %v9677 = vunpack.c.l.b16 %v9413
  %v9678 = vunpack.c.l.b16 %v9414
  %v9679 = vunpack.c.l.b16 %v9415
  %v9680 = vunpack.c.l.b16 %v9416
  %v9681 = vunpack.c.l.b16 %v9417
  %v9682 = vunpack.c.l.b16 %v9418
  %v9683 = vunpack.c.l.b16 %v9419
  %v9684 = vunpack.c.l.b16 %v9420
  %v9685 = vunpack.c.l.b16 %v9421
  %v9686 = vunpack.c.l.b16 %v9422
  %v9687 = vunpack.c.l.b16 %v9423
  %v9688 = vunpack.c.l.b16 %v9424
  %v9689 = vunpack.c.l.b16 %v9425
  %v9690 = vunpack.c.l.b16 %v9426
  %v9691 = vunpack.c.l.b16 %v9427
  %v9692 = vunpack.c.l.b16 %v9428
  %v9693 = vunpack.c.l.b16 %v9429
  %v9694 = vunpack.c.l.b16 %v9430
  %v9695 = vunpack.c.l.b16 %v9431
  %v9696 = vunpack.c.l.b16 %v9432
  %v9697 = vunpack.c.l.b16 %v9433
  %v9698 = vunpack.c.l.b16 %v9434
  %v9699 = vunpack.c.l.b16 %v9435
  %v9700 = vunpack.c.l.b16 %v9436
  %v9701 = vunpack.c.l.b16 %v9437
  %v9702 = vunpack.c.l.b16 %v9438
  %v9703 = vunpack.c.l.b16 %v9439
  %v9704 = vunpack.c.l.b16 %v9440
  %v9705 = vunpack.c.l.b16 %v9441
  %v9706 = vunpack.c.l.b16 %v9442
  %v9707 = vunpack.c.l.b16 %v9443
  %v9708 = vunpack.c.l.b16 %v9444
  %v9709 = vunpack.c.l.b16 %v9445
  %v9710 = vunpack.c.l.b16 %v9446
  %v9711 = vunpack.c.l.b16 %v9447
  %v9712 = vunpack.c.l.b16 %v9448
  %v9713 = vunpack.c.l.b16 %v9449
  %v9714 = vunpack.c.l.b16 %v9450
  %v9715 = vunpack.c.l.b16 %v9451
  %v9716 = vunpack.c.l.b16 %v9452
  %v9717 = vunpack.c.l.b16 %v9453
  %v9718 = vunpack.c.l.b16 %v9454
  %v9719 = vunpack.c.l.b16 %v9455
  %v9720 = vunpack.c.l.b16 %v9456
  %v9721 = vunpack.c.l.b16 %v9457
  %v9722 = vunpack.c.l.b16 %v9458
  %v9723 = vunpack.c.l.b16 %v9459
  %v9724 = vunpack.c.l.b16 %v9460
  %v9725 = vunpack.c.l.b16 %v9461
  %v9726 = vunpack.c.l.b16 %v9462
  %v9727 = vunpack.c.l.b16 %v9463
  %v9728 = vunpack.c.l.b16 %v9464
  %v9729 = vunpack.c.l.b16 %v9465
  %v9730 = vunpack.c.l.b16 %v9466
  %v9731 = vunpack.c.l.b16 %v9467
  %v9732 = vunpack.c.l.b16 %v9468
  %v9733 = vunpack.c.l.b16 %v9469
  %v9734 = vunpack.c.l.b16 %v9470
  %v9735 = vunpack.c.l.b16 %v9471
  %v9736 = vunpack.c.l.b16 %v9472
  %v9737 = vunpack.c.l.b16 %v9473
  %v9738 = vunpack.c.l.b16 %v9474
  %v9739 = vunpack.c.l.b16 %v9475
  %v9740 = vunpack.c.l.b16 %v9476
  %v9741 = vunpack.c.l.b16 %v9477
  %v9742 = vunpack.c.l.b16 %v9478
  %v9743 = vunpack.c.l.b16 %v9479
  %v9744 = vunpack.c.l.b16 %v9480
  %v9745 = vunpack.c.l.b16 %v9481
  %v9746 = vunpack.c.l.b16 %v9482
  %v9747 = vunpack.c.l.b16 %v9483
  %v9748 = vunpack.c.l.b16 %v9484
  %v9749 = vunpack.c.l.b16 %v9485
  %v9750 = vunpack.c.l.b16 %v9486
  %v9751 = vunpack.c.l.b16 %v9487
  %v9752 = vunpack.c.l.b16 %v9488
  %v9753 = vunpack.c.l.b16 %v9489
  %v9754 = vunpack.c.l.b16 %v9490
  %v9755 = vunpack.c.l.b16 %v9491
  %v9756 = vunpack.c.l.b16 %v9492
  %v9757 = vunpack.c.l.b16 %v9493
  %v9758 = vunpack.c.l.b16 %v9494
  %v9759 = vunpack.c.l.b16 %v9495
  %v9760 = vunpack.c.l.b16 %v9496
  %v9761 = vunpack.c.l.b16 %v9497
  %v9762 = vunpack.c.l.b16 %v9498
  %v9763 = vunpack.c.l.b16 %v9499
  %v9764 = vrot.slane %v9637, 7
  %vm9765 = vcmask 1041409
  %v9766 = vsel %vm9765, %v9764, %v9636
  %v9767 = vrot.slane %v9638, 6
  %vm9768 = vcmask 1042434
  %v9769 = vsel %vm9768, %v9767, %v9766
  %v9770 = vrot.slane %v9639, 5
  %vm9771 = vcmask 1043459
  %v9772 = vsel %vm9771, %v9770, %v9769
  %v9773 = vrot.slane %v9640, 4
  %vm9774 = vcmask 1044484
  %v9775 = vsel %vm9774, %v9773, %v9772
  %v9776 = vrot.slane %v9641, 3
  %vm9777 = vcmask 1045509
  %v9778 = vsel %vm9777, %v9776, %v9775
  %v9779 = vrot.slane %v9642, 2
  %vm9780 = vcmask 1046534
  %v9781 = vsel %vm9780, %v9779, %v9778
  %v9782 = vrot.slane %v9643, 1
  %vm9783 = vcmask 1047559
  %v9784 = vsel %vm9783, %v9782, %v9781
  %v9785 = vrot.slane %v9645, 7
  %v9786 = vsel %vm9765, %v9785, %v9644
  %v9787 = vrot.slane %v9646, 6
  %v9788 = vsel %vm9768, %v9787, %v9786
  %v9789 = vrot.slane %v9647, 5
  %v9790 = vsel %vm9771, %v9789, %v9788
  %v9791 = vrot.slane %v9648, 4
  %v9792 = vsel %vm9774, %v9791, %v9790
  %v9793 = vrot.slane %v9649, 3
  %v9794 = vsel %vm9777, %v9793, %v9792
  %v9795 = vrot.slane %v9650, 2
  %v9796 = vsel %vm9780, %v9795, %v9794
  %v9797 = vrot.slane %v9651, 1
  %v9798 = vsel %vm9783, %v9797, %v9796
  %v9799 = vrot.slane %v9653, 7
  %v9800 = vsel %vm9765, %v9799, %v9652
  %v9801 = vrot.slane %v9654, 6
  %v9802 = vsel %vm9768, %v9801, %v9800
  %v9803 = vrot.slane %v9655, 5
  %v9804 = vsel %vm9771, %v9803, %v9802
  %v9805 = vrot.slane %v9656, 4
  %v9806 = vsel %vm9774, %v9805, %v9804
  %v9807 = vrot.slane %v9657, 3
  %v9808 = vsel %vm9777, %v9807, %v9806
  %v9809 = vrot.slane %v9658, 2
  %v9810 = vsel %vm9780, %v9809, %v9808
  %v9811 = vrot.slane %v9659, 1
  %v9812 = vsel %vm9783, %v9811, %v9810
  %v9813 = vrot.slane %v9661, 7
  %v9814 = vsel %vm9765, %v9813, %v9660
  %v9815 = vrot.slane %v9662, 6
  %v9816 = vsel %vm9768, %v9815, %v9814
  %v9817 = vrot.slane %v9663, 5
  %v9818 = vsel %vm9771, %v9817, %v9816
  %v9819 = vrot.slane %v9664, 4
  %v9820 = vsel %vm9774, %v9819, %v9818
  %v9821 = vrot.slane %v9665, 3
  %v9822 = vsel %vm9777, %v9821, %v9820
  %v9823 = vrot.slane %v9666, 2
  %v9824 = vsel %vm9780, %v9823, %v9822
  %v9825 = vrot.slane %v9667, 1
  %v9826 = vsel %vm9783, %v9825, %v9824
  %v9827 = vrot.slane %v9669, 7
  %v9828 = vsel %vm9765, %v9827, %v9668
  %v9829 = vrot.slane %v9670, 6
  %v9830 = vsel %vm9768, %v9829, %v9828
  %v9831 = vrot.slane %v9671, 5
  %v9832 = vsel %vm9771, %v9831, %v9830
  %v9833 = vrot.slane %v9672, 4
  %v9834 = vsel %vm9774, %v9833, %v9832
  %v9835 = vrot.slane %v9673, 3
  %v9836 = vsel %vm9777, %v9835, %v9834
  %v9837 = vrot.slane %v9674, 2
  %v9838 = vsel %vm9780, %v9837, %v9836
  %v9839 = vrot.slane %v9675, 1
  %v9840 = vsel %vm9783, %v9839, %v9838
  %v9841 = vrot.slane %v9677, 7
  %v9842 = vsel %vm9765, %v9841, %v9676
  %v9843 = vrot.slane %v9678, 6
  %v9844 = vsel %vm9768, %v9843, %v9842
  %v9845 = vrot.slane %v9679, 5
  %v9846 = vsel %vm9771, %v9845, %v9844
  %v9847 = vrot.slane %v9680, 4
  %v9848 = vsel %vm9774, %v9847, %v9846
  %v9849 = vrot.slane %v9681, 3
  %v9850 = vsel %vm9777, %v9849, %v9848
  %v9851 = vrot.slane %v9682, 2
  %v9852 = vsel %vm9780, %v9851, %v9850
  %v9853 = vrot.slane %v9683, 1
  %v9854 = vsel %vm9783, %v9853, %v9852
  %v9855 = vrot.slane %v9685, 7
  %v9856 = vsel %vm9765, %v9855, %v9684
  %v9857 = vrot.slane %v9686, 6
  %v9858 = vsel %vm9768, %v9857, %v9856
  %v9859 = vrot.slane %v9687, 5
  %v9860 = vsel %vm9771, %v9859, %v9858
  %v9861 = vrot.slane %v9688, 4
  %v9862 = vsel %vm9774, %v9861, %v9860
  %v9863 = vrot.slane %v9689, 3
  %v9864 = vsel %vm9777, %v9863, %v9862
  %v9865 = vrot.slane %v9690, 2
  %v9866 = vsel %vm9780, %v9865, %v9864
  %v9867 = vrot.slane %v9691, 1
  %v9868 = vsel %vm9783, %v9867, %v9866
  %v9869 = vrot.slane %v9693, 7
  %v9870 = vsel %vm9765, %v9869, %v9692
  %v9871 = vrot.slane %v9694, 6
  %v9872 = vsel %vm9768, %v9871, %v9870
  %v9873 = vrot.slane %v9695, 5
  %v9874 = vsel %vm9771, %v9873, %v9872
  %v9875 = vrot.slane %v9696, 4
  %v9876 = vsel %vm9774, %v9875, %v9874
  %v9877 = vrot.slane %v9697, 3
  %v9878 = vsel %vm9777, %v9877, %v9876
  %v9879 = vrot.slane %v9698, 2
  %v9880 = vsel %vm9780, %v9879, %v9878
  %v9881 = vrot.slane %v9699, 1
  %v9882 = vsel %vm9783, %v9881, %v9880
  %v9883 = vrot.slane %v9701, 7
  %v9884 = vsel %vm9765, %v9883, %v9700
  %v9885 = vrot.slane %v9702, 6
  %v9886 = vsel %vm9768, %v9885, %v9884
  %v9887 = vrot.slane %v9703, 5
  %v9888 = vsel %vm9771, %v9887, %v9886
  %v9889 = vrot.slane %v9704, 4
  %v9890 = vsel %vm9774, %v9889, %v9888
  %v9891 = vrot.slane %v9705, 3
  %v9892 = vsel %vm9777, %v9891, %v9890
  %v9893 = vrot.slane %v9706, 2
  %v9894 = vsel %vm9780, %v9893, %v9892
  %v9895 = vrot.slane %v9707, 1
  %v9896 = vsel %vm9783, %v9895, %v9894
  %v9897 = vrot.slane %v9709, 7
  %v9898 = vsel %vm9765, %v9897, %v9708
  %v9899 = vrot.slane %v9710, 6
  %v9900 = vsel %vm9768, %v9899, %v9898
  %v9901 = vrot.slane %v9711, 5
  %v9902 = vsel %vm9771, %v9901, %v9900
  %v9903 = vrot.slane %v9712, 4
  %v9904 = vsel %vm9774, %v9903, %v9902
  %v9905 = vrot.slane %v9713, 3
  %v9906 = vsel %vm9777, %v9905, %v9904
  %v9907 = vrot.slane %v9714, 2
  %v9908 = vsel %vm9780, %v9907, %v9906
  %v9909 = vrot.slane %v9715, 1
  %v9910 = vsel %vm9783, %v9909, %v9908
  %v9911 = vrot.slane %v9717, 7
  %v9912 = vsel %vm9765, %v9911, %v9716
  %v9913 = vrot.slane %v9718, 6
  %v9914 = vsel %vm9768, %v9913, %v9912
  %v9915 = vrot.slane %v9719, 5
  %v9916 = vsel %vm9771, %v9915, %v9914
  %v9917 = vrot.slane %v9720, 4
  %v9918 = vsel %vm9774, %v9917, %v9916
  %v9919 = vrot.slane %v9721, 3
  %v9920 = vsel %vm9777, %v9919, %v9918
  %v9921 = vrot.slane %v9722, 2
  %v9922 = vsel %vm9780, %v9921, %v9920
  %v9923 = vrot.slane %v9723, 1
  %v9924 = vsel %vm9783, %v9923, %v9922
  %v9925 = vrot.slane %v9725, 7
  %v9926 = vsel %vm9765, %v9925, %v9724
  %v9927 = vrot.slane %v9726, 6
  %v9928 = vsel %vm9768, %v9927, %v9926
  %v9929 = vrot.slane %v9727, 5
  %v9930 = vsel %vm9771, %v9929, %v9928
  %v9931 = vrot.slane %v9728, 4
  %v9932 = vsel %vm9774, %v9931, %v9930
  %v9933 = vrot.slane %v9729, 3
  %v9934 = vsel %vm9777, %v9933, %v9932
  %v9935 = vrot.slane %v9730, 2
  %v9936 = vsel %vm9780, %v9935, %v9934
  %v9937 = vrot.slane %v9731, 1
  %v9938 = vsel %vm9783, %v9937, %v9936
  %v9939 = vrot.slane %v9733, 7
  %v9940 = vsel %vm9765, %v9939, %v9732
  %v9941 = vrot.slane %v9734, 6
  %v9942 = vsel %vm9768, %v9941, %v9940
  %v9943 = vrot.slane %v9735, 5
  %v9944 = vsel %vm9771, %v9943, %v9942
  %v9945 = vrot.slane %v9736, 4
  %v9946 = vsel %vm9774, %v9945, %v9944
  %v9947 = vrot.slane %v9737, 3
  %v9948 = vsel %vm9777, %v9947, %v9946
  %v9949 = vrot.slane %v9738, 2
  %v9950 = vsel %vm9780, %v9949, %v9948
  %v9951 = vrot.slane %v9739, 1
  %v9952 = vsel %vm9783, %v9951, %v9950
  %v9953 = vrot.slane %v9741, 7
  %v9954 = vsel %vm9765, %v9953, %v9740
  %v9955 = vrot.slane %v9742, 6
  %v9956 = vsel %vm9768, %v9955, %v9954
  %v9957 = vrot.slane %v9743, 5
  %v9958 = vsel %vm9771, %v9957, %v9956
  %v9959 = vrot.slane %v9744, 4
  %v9960 = vsel %vm9774, %v9959, %v9958
  %v9961 = vrot.slane %v9745, 3
  %v9962 = vsel %vm9777, %v9961, %v9960
  %v9963 = vrot.slane %v9746, 2
  %v9964 = vsel %vm9780, %v9963, %v9962
  %v9965 = vrot.slane %v9747, 1
  %v9966 = vsel %vm9783, %v9965, %v9964
  %v9967 = vrot.slane %v9749, 7
  %v9968 = vsel %vm9765, %v9967, %v9748
  %v9969 = vrot.slane %v9750, 6
  %v9970 = vsel %vm9768, %v9969, %v9968
  %v9971 = vrot.slane %v9751, 5
  %v9972 = vsel %vm9771, %v9971, %v9970
  %v9973 = vrot.slane %v9752, 4
  %v9974 = vsel %vm9774, %v9973, %v9972
  %v9975 = vrot.slane %v9753, 3
  %v9976 = vsel %vm9777, %v9975, %v9974
  %v9977 = vrot.slane %v9754, 2
  %v9978 = vsel %vm9780, %v9977, %v9976
  %v9979 = vrot.slane %v9755, 1
  %v9980 = vsel %vm9783, %v9979, %v9978
  %v9981 = vrot.slane %v9757, 7
  %v9982 = vsel %vm9765, %v9981, %v9756
  %v9983 = vrot.slane %v9758, 6
  %v9984 = vsel %vm9768, %v9983, %v9982
  %v9985 = vrot.slane %v9759, 5
  %v9986 = vsel %vm9771, %v9985, %v9984
  %v9987 = vrot.slane %v9760, 4
  %v9988 = vsel %vm9774, %v9987, %v9986
  %v9989 = vrot.slane %v9761, 3
  %v9990 = vsel %vm9777, %v9989, %v9988
  %v9991 = vrot.slane %v9762, 2
  %v9992 = vsel %vm9780, %v9991, %v9990
  %v9993 = vrot.slane %v9763, 1
  %v9994 = vsel %vm9783, %v9993, %v9992
  %v9995 = vpack.c.b16 %v9798, %v9784
  %v9996 = vpack.c.b16 %v9826, %v9812
  %v9997 = vpack.c.b16 %v9854, %v9840
  %v9998 = vpack.c.b16 %v9882, %v9868
  %v9999 = vpack.c.b16 %v9910, %v9896
  %v10000 = vpack.c.b16 %v9938, %v9924
  %v10001 = vpack.c.b16 %v9966, %v9952
  %v10002 = vpack.c.b16 %v9994, %v9980
  %v10004 = vsel %vm2342, %v9995, 0
  %v10007 = vsel %vm2342, %v9996, 0
  %v10010 = vsel %vm2342, %v9997, 0
  %v10013 = vsel %vm2342, %v9998, 0
  %v10016 = vsel %vm2342, %v9999, 0
  %v10019 = vsel %vm2342, %v10000, 0
  %v10022 = vsel %vm2342, %v10001, 0
  %v10025 = vsel %vm2342, %v10002, 0
  %v10028 = vsel %vm3008, %v9500, 0
  %10030 = vmatprep.subr.bf16.mxu0 0
  %10031 = vmatpush1.bf16.msra.mxu0 %v10028
  %10032 = vmatprep.subr.bf16.mxu0 0
  %10033 = vmatpush1.bf16.msra.mxu0 0
  %10034 = vmatprep.subr.bf16.mxu0 0
  %10035 = vmatpush1.bf16.msra.mxu0 0
  %10036 = vmatprep.subr.bf16.mxu0 0
  %10037 = vmatpush1.bf16.msra.mxu0 0
  %10038 = vmatprep.subr.bf16.mxu0 0
  %10039 = vmatpush1.bf16.msra.mxu0 0
  %10040 = vmatprep.subr.bf16.mxu0 0
  %10041 = vmatpush1.bf16.msra.mxu0 0
  %10042 = vmatprep.subr.bf16.mxu0 0
  %10043 = vmatpush1.bf16.msra.mxu0 0
  %10044 = vmatprep.subr.bf16.mxu0 0
  %10045 = vmatpush1.bf16.msra.mxu0 0
  %10046 = vmatprep.subr.bf16.mxu0 0
  %10047 = vmatpush1.bf16.msra.mxu0 0
  %10048 = vmatprep.subr.bf16.mxu0 0
  %10049 = vmatpush1.bf16.msra.mxu0 0
  %10050 = vmatprep.subr.bf16.mxu0 0
  %10051 = vmatpush1.bf16.msra.mxu0 0
  %10052 = vmatprep.subr.bf16.mxu0 0
  %10053 = vmatpush1.bf16.msra.mxu0 0
  %10054 = vmatprep.subr.bf16.mxu0 0
  %10055 = vmatpush1.bf16.msra.mxu0 0
  %10056 = vmatprep.subr.bf16.mxu0 0
  %10057 = vmatpush1.bf16.msra.mxu0 0
  %10058 = vmatprep.subr.bf16.mxu0 0
  %10059 = vmatpush1.bf16.msra.mxu0 0
  %10060 = vmatprep.subr.bf16.mxu0 0
  %10061 = vmatpush1.bf16.msra.mxu0 0
  %10062 = vmatprep.mubr.bf16.mxu0 0
  %10063 = vmatmul.mubr.bf16.gmra.mrb[0].mxu0 %v10004
  %v10064 = vpop.f32.mrb[0].mxu0
  %v10065 = vadd.f32 %v9506, %v10064
  %v10066 = vpop.f32.mrb[0].mxu0
  %v10067 = vpop.f32.mrb[0].mxu0
  %v10068 = vadd.f32 %v9506, %v10067
  %v10069 = vpop.f32.mrb[0].mxu0
  %10070 = vmatprep.mubr.bf16.mxu0 0
  %10071 = vmatmul.mubr.bf16.gmra.mrb[0].mxu0 %v10007
  %v10072 = vpop.f32.mrb[0].mxu0
  %v10073 = vadd.f32 %v9506, %v10072
  %v10074 = vpop.f32.mrb[0].mxu0
  %v10075 = vpop.f32.mrb[0].mxu0
  %v10076 = vadd.f32 %v9506, %v10075
  %v10077 = vpop.f32.mrb[0].mxu0
  %10078 = vmatprep.mubr.bf16.mxu0 0
  %10079 = vmatmul.mubr.bf16.gmra.mrb[0].mxu0 %v10010
  %v10080 = vpop.f32.mrb[0].mxu0
  %v10081 = vadd.f32 %v9506, %v10080
  %v10082 = vpop.f32.mrb[0].mxu0
  %v10083 = vpop.f32.mrb[0].mxu0
  %v10084 = vadd.f32 %v9506, %v10083
  %v10085 = vpop.f32.mrb[0].mxu0
  %10086 = vmatprep.mubr.bf16.mxu0 0
  %10087 = vmatmul.mubr.bf16.gmra.mrb[0].mxu0 %v10013
  %v10088 = vpop.f32.mrb[0].mxu0
  %v10089 = vadd.f32 %v9506, %v10088
  %v10090 = vpop.f32.mrb[0].mxu0
  %v10091 = vpop.f32.mrb[0].mxu0
  %v10092 = vadd.f32 %v9506, %v10091
  %v10093 = vpop.f32.mrb[0].mxu0
  %10094 = vmatprep.mubr.bf16.mxu0 0
  %10095 = vmatmul.mubr.bf16.gmra.mrb[0].mxu0 %v10016
  %v10096 = vpop.f32.mrb[0].mxu0
  %v10097 = vadd.f32 %v9506, %v10096
  %v10098 = vpop.f32.mrb[0].mxu0
  %v10099 = vpop.f32.mrb[0].mxu0
  %v10100 = vadd.f32 %v9506, %v10099
  %v10101 = vpop.f32.mrb[0].mxu0
  %10102 = vmatprep.mubr.bf16.mxu0 0
  %10103 = vmatmul.mubr.bf16.gmra.mrb[0].mxu0 %v10019
  %v10104 = vpop.f32.mrb[0].mxu0
  %v10105 = vadd.f32 %v9506, %v10104
  %v10106 = vpop.f32.mrb[0].mxu0
  %v10107 = vpop.f32.mrb[0].mxu0
  %v10108 = vadd.f32 %v9506, %v10107
  %v10109 = vpop.f32.mrb[0].mxu0
  %10110 = vmatprep.mubr.bf16.mxu0 0
  %10111 = vmatmul.mubr.bf16.gmra.mrb[0].mxu0 %v10022
  %v10112 = vpop.f32.mrb[0].mxu0
  %v10113 = vadd.f32 %v9506, %v10112
  %v10114 = vpop.f32.mrb[0].mxu0
  %v10115 = vpop.f32.mrb[0].mxu0
  %v10116 = vadd.f32 %v9506, %v10115
  %v10117 = vpop.f32.mrb[0].mxu0
  %10118 = vmatprep.mubr.bf16.mxu0 0
  %10119 = vmatmul.mubr.bf16.gmra.mrb[0].mxu0 %v10025
  %v10120 = vpop.f32.mrb[0].mxu0
  %v10121 = vadd.f32 %v9506, %v10120
  %v10122 = vpop.f32.mrb[0].mxu0
  %v10123 = vpop.f32.mrb[0].mxu0
  %v10124 = vadd.f32 %v9506, %v10123
  %v10125 = vpop.f32.mrb[0].mxu0
  %10126 = vdwg.mxu0
  %v10143 = vcombine.high %v10065, %v10065
  %v10145 = vunpack.c.l.s4 1983009808
  %v10146 = vunpack.c.0.s8 %v10145
  %v10147 = vlaneseq
  %v10148 = vshrl.u32 %v10147, 7
  %v10149 = vsub.s32 %v10146, %v10148
  %v10150 = vrot.slane %v10065, %v10149
  %v10152 = vunpack.c.l.s4 1983009808
  %v10153 = vunpack.c.0.s8 %v10152
  %v10154 = vlaneseq
  %v10155 = vshrl.u32 %v10154, 7
  %v10156 = vsub.s32 %v10153, %v10155
  %v10157 = vrot.slane %v10143, %v10156
  %v10158 = vcombine.high %v10150, %v10150
  %v10159 = vcombine.high %v10157, %v10157
  %v10160 = vcombine.high %v10068, %v10068
  %v10162 = vunpack.c.l.s4 1983009808
  %v10163 = vunpack.c.0.s8 %v10162
  %v10164 = vlaneseq
  %v10165 = vshrl.u32 %v10164, 7
  %v10166 = vsub.s32 %v10163, %v10165
  %v10167 = vrot.slane %v10068, %v10166
  %v10169 = vunpack.c.l.s4 1983009808
  %v10170 = vunpack.c.0.s8 %v10169
  %v10171 = vlaneseq
  %v10172 = vshrl.u32 %v10171, 7
  %v10173 = vsub.s32 %v10170, %v10172
  %v10174 = vrot.slane %v10160, %v10173
  %v10175 = vcombine.high %v10167, %v10167
  %v10176 = vcombine.high %v10174, %v10174
  %v10177 = vcombine.high %v10073, %v10073
  %v10179 = vunpack.c.l.s4 1983009808
  %v10180 = vunpack.c.0.s8 %v10179
  %v10181 = vlaneseq
  %v10182 = vshrl.u32 %v10181, 7
  %v10183 = vsub.s32 %v10180, %v10182
  %v10184 = vrot.slane %v10073, %v10183
  %v10186 = vunpack.c.l.s4 1983009808
  %v10187 = vunpack.c.0.s8 %v10186
  %v10188 = vlaneseq
  %v10189 = vshrl.u32 %v10188, 7
  %v10190 = vsub.s32 %v10187, %v10189
  %v10191 = vrot.slane %v10177, %v10190
  %v10192 = vcombine.high %v10184, %v10184
  %v10193 = vcombine.high %v10191, %v10191
  %v10194 = vcombine.high %v10076, %v10076
  %v10196 = vunpack.c.l.s4 1983009808
  %v10197 = vunpack.c.0.s8 %v10196
  %v10198 = vlaneseq
  %v10199 = vshrl.u32 %v10198, 7
  %v10200 = vsub.s32 %v10197, %v10199
  %v10201 = vrot.slane %v10076, %v10200
  %v10203 = vunpack.c.l.s4 1983009808
  %v10204 = vunpack.c.0.s8 %v10203
  %v10205 = vlaneseq
  %v10206 = vshrl.u32 %v10205, 7
  %v10207 = vsub.s32 %v10204, %v10206
  %v10208 = vrot.slane %v10194, %v10207
  %v10209 = vcombine.high %v10201, %v10201
  %v10210 = vcombine.high %v10208, %v10208
  %v10211 = vcombine.high %v10081, %v10081
  %v10213 = vunpack.c.l.s4 1983009808
  %v10214 = vunpack.c.0.s8 %v10213
  %v10215 = vlaneseq
  %v10216 = vshrl.u32 %v10215, 7
  %v10217 = vsub.s32 %v10214, %v10216
  %v10218 = vrot.slane %v10081, %v10217
  %v10220 = vunpack.c.l.s4 1983009808
  %v10221 = vunpack.c.0.s8 %v10220
  %v10222 = vlaneseq
  %v10223 = vshrl.u32 %v10222, 7
  %v10224 = vsub.s32 %v10221, %v10223
  %v10225 = vrot.slane %v10211, %v10224
  %v10226 = vcombine.high %v10218, %v10218
  %v10227 = vcombine.high %v10225, %v10225
  %v10228 = vcombine.high %v10084, %v10084
  %v10230 = vunpack.c.l.s4 1983009808
  %v10231 = vunpack.c.0.s8 %v10230
  %v10232 = vlaneseq
  %v10233 = vshrl.u32 %v10232, 7
  %v10234 = vsub.s32 %v10231, %v10233
  %v10235 = vrot.slane %v10084, %v10234
  %v10237 = vunpack.c.l.s4 1983009808
  %v10238 = vunpack.c.0.s8 %v10237
  %v10239 = vlaneseq
  %v10240 = vshrl.u32 %v10239, 7
  %v10241 = vsub.s32 %v10238, %v10240
  %v10242 = vrot.slane %v10228, %v10241
  %v10243 = vcombine.high %v10235, %v10235
  %v10244 = vcombine.high %v10242, %v10242
  %v10245 = vcombine.high %v10089, %v10089
  %v10247 = vunpack.c.l.s4 1983009808
  %v10248 = vunpack.c.0.s8 %v10247
  %v10249 = vlaneseq
  %v10250 = vshrl.u32 %v10249, 7
  %v10251 = vsub.s32 %v10248, %v10250
  %v10252 = vrot.slane %v10089, %v10251
  %v10254 = vunpack.c.l.s4 1983009808
  %v10255 = vunpack.c.0.s8 %v10254
  %v10256 = vlaneseq
  %v10257 = vshrl.u32 %v10256, 7
  %v10258 = vsub.s32 %v10255, %v10257
  %v10259 = vrot.slane %v10245, %v10258
  %v10260 = vcombine.high %v10252, %v10252
  %v10261 = vcombine.high %v10259, %v10259
  %v10262 = vcombine.high %v10092, %v10092
  %v10264 = vunpack.c.l.s4 1983009808
  %v10265 = vunpack.c.0.s8 %v10264
  %v10266 = vlaneseq
  %v10267 = vshrl.u32 %v10266, 7
  %v10268 = vsub.s32 %v10265, %v10267
  %v10269 = vrot.slane %v10092, %v10268
  %v10271 = vunpack.c.l.s4 1983009808
  %v10272 = vunpack.c.0.s8 %v10271
  %v10273 = vlaneseq
  %v10274 = vshrl.u32 %v10273, 7
  %v10275 = vsub.s32 %v10272, %v10274
  %v10276 = vrot.slane %v10262, %v10275
  %v10277 = vcombine.high %v10269, %v10269
  %v10278 = vcombine.high %v10276, %v10276
  %v10279 = vcombine.high %v10097, %v10097
  %v10281 = vunpack.c.l.s4 1983009808
  %v10282 = vunpack.c.0.s8 %v10281
  %v10283 = vlaneseq
  %v10284 = vshrl.u32 %v10283, 7
  %v10285 = vsub.s32 %v10282, %v10284
  %v10286 = vrot.slane %v10097, %v10285
  %v10288 = vunpack.c.l.s4 1983009808
  %v10289 = vunpack.c.0.s8 %v10288
  %v10290 = vlaneseq
  %v10291 = vshrl.u32 %v10290, 7
  %v10292 = vsub.s32 %v10289, %v10291
  %v10293 = vrot.slane %v10279, %v10292
  %v10294 = vcombine.high %v10286, %v10286
  %v10295 = vcombine.high %v10293, %v10293
  %v10296 = vcombine.high %v10100, %v10100
  %v10298 = vunpack.c.l.s4 1983009808
  %v10299 = vunpack.c.0.s8 %v10298
  %v10300 = vlaneseq
  %v10301 = vshrl.u32 %v10300, 7
  %v10302 = vsub.s32 %v10299, %v10301
  %v10303 = vrot.slane %v10100, %v10302
  %v10305 = vunpack.c.l.s4 1983009808
  %v10306 = vunpack.c.0.s8 %v10305
  %v10307 = vlaneseq
  %v10308 = vshrl.u32 %v10307, 7
  %v10309 = vsub.s32 %v10306, %v10308
  %v10310 = vrot.slane %v10296, %v10309
  %v10311 = vcombine.high %v10303, %v10303
  %v10312 = vcombine.high %v10310, %v10310
  %v10313 = vcombine.high %v10105, %v10105
  %v10315 = vunpack.c.l.s4 1983009808
  %v10316 = vunpack.c.0.s8 %v10315
  %v10317 = vlaneseq
  %v10318 = vshrl.u32 %v10317, 7
  %v10319 = vsub.s32 %v10316, %v10318
  %v10320 = vrot.slane %v10105, %v10319
  %v10322 = vunpack.c.l.s4 1983009808
  %v10323 = vunpack.c.0.s8 %v10322
  %v10324 = vlaneseq
  %v10325 = vshrl.u32 %v10324, 7
  %v10326 = vsub.s32 %v10323, %v10325
  %v10327 = vrot.slane %v10313, %v10326
  %v10328 = vcombine.high %v10320, %v10320
  %v10329 = vcombine.high %v10327, %v10327
  %v10330 = vcombine.high %v10108, %v10108
  %v10332 = vunpack.c.l.s4 1983009808
  %v10333 = vunpack.c.0.s8 %v10332
  %v10334 = vlaneseq
  %v10335 = vshrl.u32 %v10334, 7
  %v10336 = vsub.s32 %v10333, %v10335
  %v10337 = vrot.slane %v10108, %v10336
  %v10339 = vunpack.c.l.s4 1983009808
  %v10340 = vunpack.c.0.s8 %v10339
  %v10341 = vlaneseq
  %v10342 = vshrl.u32 %v10341, 7
  %v10343 = vsub.s32 %v10340, %v10342
  %v10344 = vrot.slane %v10330, %v10343
  %v10345 = vcombine.high %v10337, %v10337
  %v10346 = vcombine.high %v10344, %v10344
  %v10347 = vcombine.high %v10113, %v10113
  %v10349 = vunpack.c.l.s4 1983009808
  %v10350 = vunpack.c.0.s8 %v10349
  %v10351 = vlaneseq
  %v10352 = vshrl.u32 %v10351, 7
  %v10353 = vsub.s32 %v10350, %v10352
  %v10354 = vrot.slane %v10113, %v10353
  %v10356 = vunpack.c.l.s4 1983009808
  %v10357 = vunpack.c.0.s8 %v10356
  %v10358 = vlaneseq
  %v10359 = vshrl.u32 %v10358, 7
  %v10360 = vsub.s32 %v10357, %v10359
  %v10361 = vrot.slane %v10347, %v10360
  %v10362 = vcombine.high %v10354, %v10354
  %v10363 = vcombine.high %v10361, %v10361
  %v10364 = vcombine.high %v10116, %v10116
  %v10366 = vunpack.c.l.s4 1983009808
  %v10367 = vunpack.c.0.s8 %v10366
  %v10368 = vlaneseq
  %v10369 = vshrl.u32 %v10368, 7
  %v10370 = vsub.s32 %v10367, %v10369
  %v10371 = vrot.slane %v10116, %v10370
  %v10373 = vunpack.c.l.s4 1983009808
  %v10374 = vunpack.c.0.s8 %v10373
  %v10375 = vlaneseq
  %v10376 = vshrl.u32 %v10375, 7
  %v10377 = vsub.s32 %v10374, %v10376
  %v10378 = vrot.slane %v10364, %v10377
  %v10379 = vcombine.high %v10371, %v10371
  %v10380 = vcombine.high %v10378, %v10378
  %v10381 = vcombine.high %v10121, %v10121
  %v10383 = vunpack.c.l.s4 1983009808
  %v10384 = vunpack.c.0.s8 %v10383
  %v10385 = vlaneseq
  %v10386 = vshrl.u32 %v10385, 7
  %v10387 = vsub.s32 %v10384, %v10386
  %v10388 = vrot.slane %v10121, %v10387
  %v10390 = vunpack.c.l.s4 1983009808
  %v10391 = vunpack.c.0.s8 %v10390
  %v10392 = vlaneseq
  %v10393 = vshrl.u32 %v10392, 7
  %v10394 = vsub.s32 %v10391, %v10393
  %v10395 = vrot.slane %v10381, %v10394
  %v10396 = vcombine.high %v10388, %v10388
  %v10397 = vcombine.high %v10395, %v10395
  %v10398 = vcombine.high %v10124, %v10124
  %v10400 = vunpack.c.l.s4 1983009808
  %v10401 = vunpack.c.0.s8 %v10400
  %v10402 = vlaneseq
  %v10403 = vshrl.u32 %v10402, 7
  %v10404 = vsub.s32 %v10401, %v10403
  %v10405 = vrot.slane %v10124, %v10404
  %v10407 = vunpack.c.l.s4 1983009808
  %v10408 = vunpack.c.0.s8 %v10407
  %v10409 = vlaneseq
  %v10410 = vshrl.u32 %v10409, 7
  %v10411 = vsub.s32 %v10408, %v10410
  %v10412 = vrot.slane %v10398, %v10411
  %v10413 = vcombine.high %v10405, %v10405
  %v10414 = vcombine.high %v10412, %v10412
  %v10415 = vrot.slane %v10150, 1
  %v10416 = vrot.slane %v10158, 1
  %v10417 = vrot.slane %v10157, 1
  %v10418 = vrot.slane %v10159, 1
  %v10419 = vrot.slane %v10167, 1
  %v10420 = vrot.slane %v10175, 1
  %v10421 = vrot.slane %v10174, 1
  %v10422 = vrot.slane %v10176, 1
  %v10423 = vrot.slane %v10184, 1
  %v10424 = vrot.slane %v10192, 1
  %v10425 = vrot.slane %v10191, 1
  %v10426 = vrot.slane %v10193, 1
  %v10427 = vrot.slane %v10201, 1
  %v10428 = vrot.slane %v10209, 1
  %v10429 = vrot.slane %v10208, 1
  %v10430 = vrot.slane %v10210, 1
  %v10431 = vrot.slane %v10218, 1
  %v10432 = vrot.slane %v10226, 1
  %v10433 = vrot.slane %v10225, 1
  %v10434 = vrot.slane %v10227, 1
  %v10435 = vrot.slane %v10235, 1
  %v10436 = vrot.slane %v10243, 1
  %v10437 = vrot.slane %v10242, 1
  %v10438 = vrot.slane %v10244, 1
  %v10439 = vrot.slane %v10252, 1
  %v10440 = vrot.slane %v10260, 1
  %v10441 = vrot.slane %v10259, 1
  %v10442 = vrot.slane %v10261, 1
  %v10443 = vrot.slane %v10269, 1
  %v10444 = vrot.slane %v10277, 1
  %v10445 = vrot.slane %v10276, 1
  %v10446 = vrot.slane %v10278, 1
  %v10447 = vrot.slane %v10286, 1
  %v10448 = vrot.slane %v10294, 1
  %v10449 = vrot.slane %v10293, 1
  %v10450 = vrot.slane %v10295, 1
  %v10451 = vrot.slane %v10303, 1
  %v10452 = vrot.slane %v10311, 1
  %v10453 = vrot.slane %v10310, 1
  %v10454 = vrot.slane %v10312, 1
  %v10455 = vrot.slane %v10320, 1
  %v10456 = vrot.slane %v10328, 1
  %v10457 = vrot.slane %v10327, 1
  %v10458 = vrot.slane %v10329, 1
  %v10459 = vrot.slane %v10337, 1
  %v10460 = vrot.slane %v10345, 1
  %v10461 = vrot.slane %v10344, 1
  %v10462 = vrot.slane %v10346, 1
  %v10463 = vrot.slane %v10354, 1
  %v10464 = vrot.slane %v10362, 1
  %v10465 = vrot.slane %v10361, 1
  %v10466 = vrot.slane %v10363, 1
  %v10467 = vrot.slane %v10371, 1
  %v10468 = vrot.slane %v10379, 1
  %v10469 = vrot.slane %v10378, 1
  %v10470 = vrot.slane %v10380, 1
  %v10471 = vrot.slane %v10388, 1
  %v10472 = vrot.slane %v10396, 1
  %v10473 = vrot.slane %v10395, 1
  %v10474 = vrot.slane %v10397, 1
  %v10475 = vrot.slane %v10405, 1
  %v10476 = vrot.slane %v10413, 1
  %v10477 = vrot.slane %v10412, 1
  %v10478 = vrot.slane %v10414, 1
  %v10607 = vadd.f32 %v7868, %v10150
  %v10608 = vadd.f32 %v7869, %v10415
  %v10609 = vadd.f32 %v7870, %v10158
  %v10610 = vadd.f32 %v7871, %v10416
  %v10611 = vadd.f32 %v7872, %v10157
  %v10612 = vadd.f32 %v7873, %v10417
  %v10613 = vadd.f32 %v7874, %v10159
  %v10614 = vadd.f32 %v7875, %v10418
  %v10615 = vadd.f32 %v7876, %v10167
  %v10616 = vadd.f32 %v7877, %v10419
  %v10617 = vadd.f32 %v7878, %v10175
  %v10618 = vadd.f32 %v7879, %v10420
  %v10619 = vadd.f32 %v7880, %v10174
  %v10620 = vadd.f32 %v7881, %v10421
  %v10621 = vadd.f32 %v7882, %v10176
  %v10622 = vadd.f32 %v7883, %v10422
  %v10623 = vadd.f32 %v7884, %v10184
  %v10624 = vadd.f32 %v7885, %v10423
  %v10625 = vadd.f32 %v7886, %v10192
  %v10626 = vadd.f32 %v7887, %v10424
  %v10627 = vadd.f32 %v7888, %v10191
  %v10628 = vadd.f32 %v7889, %v10425
  %v10629 = vadd.f32 %v7890, %v10193
  %v10630 = vadd.f32 %v7891, %v10426
  %v10631 = vadd.f32 %v7892, %v10201
  %v10632 = vadd.f32 %v7893, %v10427
  %v10633 = vadd.f32 %v7894, %v10209
  %v10634 = vadd.f32 %v7895, %v10428
  %v10635 = vadd.f32 %v7896, %v10208
  %v10636 = vadd.f32 %v7897, %v10429
  %v10637 = vadd.f32 %v7898, %v10210
  %v10638 = vadd.f32 %v7899, %v10430
  %v10639 = vadd.f32 %v7900, %v10218
  %v10640 = vadd.f32 %v7901, %v10431
  %v10641 = vadd.f32 %v7902, %v10226
  %v10642 = vadd.f32 %v7903, %v10432
  %v10643 = vadd.f32 %v7904, %v10225
  %v10644 = vadd.f32 %v7905, %v10433
  %v10645 = vadd.f32 %v7906, %v10227
  %v10646 = vadd.f32 %v7907, %v10434
  %v10647 = vadd.f32 %v7908, %v10235
  %v10648 = vadd.f32 %v7909, %v10435
  %v10649 = vadd.f32 %v7910, %v10243
  %v10650 = vadd.f32 %v7911, %v10436
  %v10651 = vadd.f32 %v7912, %v10242
  %v10652 = vadd.f32 %v7913, %v10437
  %v10653 = vadd.f32 %v7914, %v10244
  %v10654 = vadd.f32 %v7915, %v10438
  %v10655 = vadd.f32 %v7916, %v10252
  %v10656 = vadd.f32 %v7917, %v10439
  %v10657 = vadd.f32 %v7918, %v10260
  %v10658 = vadd.f32 %v7919, %v10440
  %v10659 = vadd.f32 %v7920, %v10259
  %v10660 = vadd.f32 %v7921, %v10441
  %v10661 = vadd.f32 %v7922, %v10261
  %v10662 = vadd.f32 %v7923, %v10442
  %v10663 = vadd.f32 %v7924, %v10269
  %v10664 = vadd.f32 %v7925, %v10443
  %v10665 = vadd.f32 %v7926, %v10277
  %v10666 = vadd.f32 %v7927, %v10444
  %v10667 = vadd.f32 %v7928, %v10276
  %v10668 = vadd.f32 %v7929, %v10445
  %v10669 = vadd.f32 %v7930, %v10278
  %v10670 = vadd.f32 %v7931, %v10446
  %v10671 = vadd.f32 %v7932, %v10286
  %v10672 = vadd.f32 %v7933, %v10447
  %v10673 = vadd.f32 %v7934, %v10294
  %v10674 = vadd.f32 %v7935, %v10448
  %v10675 = vadd.f32 %v7936, %v10293
  %v10676 = vadd.f32 %v7937, %v10449
  %v10677 = vadd.f32 %v7938, %v10295
  %v10678 = vadd.f32 %v7939, %v10450
  %v10679 = vadd.f32 %v7940, %v10303
  %v10680 = vadd.f32 %v7941, %v10451
  %v10681 = vadd.f32 %v7942, %v10311
  %v10682 = vadd.f32 %v7943, %v10452
  %v10683 = vadd.f32 %v7944, %v10310
  %v10684 = vadd.f32 %v7945, %v10453
  %v10685 = vadd.f32 %v7946, %v10312
  %v10686 = vadd.f32 %v7947, %v10454
  %v10687 = vadd.f32 %v7948, %v10320
  %v10688 = vadd.f32 %v7949, %v10455
  %v10689 = vadd.f32 %v7950, %v10328
  %v10690 = vadd.f32 %v7951, %v10456
  %v10691 = vadd.f32 %v7952, %v10327
  %v10692 = vadd.f32 %v7953, %v10457
  %v10693 = vadd.f32 %v7954, %v10329
  %v10694 = vadd.f32 %v7955, %v10458
  %v10695 = vadd.f32 %v7956, %v10337
  %v10696 = vadd.f32 %v7957, %v10459
  %v10697 = vadd.f32 %v7958, %v10345
  %v10698 = vadd.f32 %v7959, %v10460
  %v10699 = vadd.f32 %v7960, %v10344
  %v10700 = vadd.f32 %v7961, %v10461
  %v10701 = vadd.f32 %v7962, %v10346
  %v10702 = vadd.f32 %v7963, %v10462
  %v10703 = vadd.f32 %v7964, %v10354
  %v10704 = vadd.f32 %v7965, %v10463
  %v10705 = vadd.f32 %v7966, %v10362
  %v10706 = vadd.f32 %v7967, %v10464
  %v10707 = vadd.f32 %v7968, %v10361
  %v10708 = vadd.f32 %v7969, %v10465
  %v10709 = vadd.f32 %v7970, %v10363
  %v10710 = vadd.f32 %v7971, %v10466
  %v10711 = vadd.f32 %v7972, %v10371
  %v10712 = vadd.f32 %v7973, %v10467
  %v10713 = vadd.f32 %v7974, %v10379
  %v10714 = vadd.f32 %v7975, %v10468
  %v10715 = vadd.f32 %v7976, %v10378
  %v10716 = vadd.f32 %v7977, %v10469
  %v10717 = vadd.f32 %v7978, %v10380
  %v10718 = vadd.f32 %v7979, %v10470
  %v10719 = vadd.f32 %v7980, %v10388
  %v10720 = vadd.f32 %v7981, %v10471
  %v10721 = vadd.f32 %v7982, %v10396
  %v10722 = vadd.f32 %v7983, %v10472
  %v10723 = vadd.f32 %v7984, %v10395
  %v10724 = vadd.f32 %v7985, %v10473
  %v10725 = vadd.f32 %v7986, %v10397
  %v10726 = vadd.f32 %v7987, %v10474
  %v10727 = vadd.f32 %v7988, %v10405
  %v10728 = vadd.f32 %v7989, %v10475
  %v10729 = vadd.f32 %v7990, %v10413
  %v10730 = vadd.f32 %v7991, %v10476
  %v10731 = vadd.f32 %v7992, %v10412
  %v10732 = vadd.f32 %v7993, %v10477
  %v10733 = vadd.f32 %v7994, %v10414
  %v10734 = vadd.f32 %v7995, %v10478
  %v10735 = vld [vmem:[%s7] sm:$0xf]
  %v10736 = vld [vmem:[%s7 + $0x4] sm:$0xf]
  %v10737 = vld [vmem:[%s7 + $0x8] sm:$0xf]
  %v10738 = vld [vmem:[%s7 + $0xc] sm:$0xf]
  %v10739 = vld [vmem:[%s7 + $0x10] sm:$0xf]
  %v10740 = vld [vmem:[%s7 + $0x14] sm:$0xf]
  %v10741 = vld [vmem:[%s7 + $0x18] sm:$0xf]
  %v10742 = vld [vmem:[%s7 + $0x1c] sm:$0xf]
  %v10743 = vld [vmem:[%s7 + $0x20] sm:$0xf]
  %v10744 = vld [vmem:[%s7 + $0x24] sm:$0xf]
  %v10745 = vld [vmem:[%s7 + $0x28] sm:$0xf]
  %v10746 = vld [vmem:[%s7 + $0x2c] sm:$0xf]
  %v10747 = vld [vmem:[%s7 + $0x30] sm:$0xf]
  %v10748 = vld [vmem:[%s7 + $0x34] sm:$0xf]
  %v10749 = vld [vmem:[%s7 + $0x38] sm:$0xf]
  %v10750 = vld [vmem:[%s7 + $0x3c] sm:$0xf]
  %v10751 = vld [vmem:[%s7 + $0x40] sm:$0xf]
  %v10752 = vld [vmem:[%s7 + $0x44] sm:$0xf]
  %v10753 = vld [vmem:[%s7 + $0x48] sm:$0xf]
  %v10754 = vld [vmem:[%s7 + $0x4c] sm:$0xf]
  %v10755 = vld [vmem:[%s7 + $0x50] sm:$0xf]
  %v10756 = vld [vmem:[%s7 + $0x54] sm:$0xf]
  %v10757 = vld [vmem:[%s7 + $0x58] sm:$0xf]
  %v10758 = vld [vmem:[%s7 + $0x5c] sm:$0xf]
  %v10759 = vld [vmem:[%s7 + $0x60] sm:$0xf]
  %v10760 = vld [vmem:[%s7 + $0x64] sm:$0xf]
  %v10761 = vld [vmem:[%s7 + $0x68] sm:$0xf]
  %v10762 = vld [vmem:[%s7 + $0x6c] sm:$0xf]
  %v10763 = vld [vmem:[%s7 + $0x70] sm:$0xf]
  %v10764 = vld [vmem:[%s7 + $0x74] sm:$0xf]
  %v10765 = vld [vmem:[%s7 + $0x78] sm:$0xf]
  %v10766 = vld [vmem:[%s7 + $0x7c] sm:$0xf]
  %v10767 = vld [vmem:[%s7 + $0x80] sm:$0xf]
  %v10768 = vld [vmem:[%s7 + $0x84] sm:$0xf]
  %v10769 = vld [vmem:[%s7 + $0x88] sm:$0xf]
  %v10770 = vld [vmem:[%s7 + $0x8c] sm:$0xf]
  %v10771 = vld [vmem:[%s8] sm:$0x1]
  %v10772 = vmax.f32 %v10607, 0.0
  %v10773 = vmax.f32 %v10608, 0.0
  %v10774 = vmax.f32 %v10609, 0.0
  %v10775 = vmax.f32 %v10610, 0.0
  %v10776 = vmax.f32 %v10611, 0.0
  %v10777 = vmax.f32 %v10612, 0.0
  %v10778 = vmax.f32 %v10613, 0.0
  %v10779 = vmax.f32 %v10614, 0.0
  %v10780 = vmax.f32 %v10615, 0.0
  %v10781 = vmax.f32 %v10616, 0.0
  %v10782 = vmax.f32 %v10617, 0.0
  %v10783 = vmax.f32 %v10618, 0.0
  %v10784 = vmax.f32 %v10619, 0.0
  %v10785 = vmax.f32 %v10620, 0.0
  %v10786 = vmax.f32 %v10621, 0.0
  %v10787 = vmax.f32 %v10622, 0.0
  %v10788 = vmax.f32 %v10623, 0.0
  %v10789 = vmax.f32 %v10624, 0.0
  %v10790 = vmax.f32 %v10625, 0.0
  %v10791 = vmax.f32 %v10626, 0.0
  %v10792 = vmax.f32 %v10627, 0.0
  %v10793 = vmax.f32 %v10628, 0.0
  %v10794 = vmax.f32 %v10629, 0.0
  %v10795 = vmax.f32 %v10630, 0.0
  %v10796 = vmax.f32 %v10631, 0.0
  %v10797 = vmax.f32 %v10632, 0.0
  %v10798 = vmax.f32 %v10633, 0.0
  %v10799 = vmax.f32 %v10634, 0.0
  %v10800 = vmax.f32 %v10635, 0.0
  %v10801 = vmax.f32 %v10636, 0.0
  %v10802 = vmax.f32 %v10637, 0.0
  %v10803 = vmax.f32 %v10638, 0.0
  %v10804 = vmax.f32 %v10639, 0.0
  %v10805 = vmax.f32 %v10640, 0.0
  %v10806 = vmax.f32 %v10641, 0.0
  %v10807 = vmax.f32 %v10642, 0.0
  %v10808 = vmax.f32 %v10643, 0.0
  %v10809 = vmax.f32 %v10644, 0.0
  %v10810 = vmax.f32 %v10645, 0.0
  %v10811 = vmax.f32 %v10646, 0.0
  %v10812 = vmax.f32 %v10647, 0.0
  %v10813 = vmax.f32 %v10648, 0.0
  %v10814 = vmax.f32 %v10649, 0.0
  %v10815 = vmax.f32 %v10650, 0.0
  %v10816 = vmax.f32 %v10651, 0.0
  %v10817 = vmax.f32 %v10652, 0.0
  %v10818 = vmax.f32 %v10653, 0.0
  %v10819 = vmax.f32 %v10654, 0.0
  %v10820 = vmax.f32 %v10655, 0.0
  %v10821 = vmax.f32 %v10656, 0.0
  %v10822 = vmax.f32 %v10657, 0.0
  %v10823 = vmax.f32 %v10658, 0.0
  %v10824 = vmax.f32 %v10659, 0.0
  %v10825 = vmax.f32 %v10660, 0.0
  %v10826 = vmax.f32 %v10661, 0.0
  %v10827 = vmax.f32 %v10662, 0.0
  %v10828 = vmax.f32 %v10663, 0.0
  %v10829 = vmax.f32 %v10664, 0.0
  %v10830 = vmax.f32 %v10665, 0.0
  %v10831 = vmax.f32 %v10666, 0.0
  %v10832 = vmax.f32 %v10667, 0.0
  %v10833 = vmax.f32 %v10668, 0.0
  %v10834 = vmax.f32 %v10669, 0.0
  %v10835 = vmax.f32 %v10670, 0.0
  %v10836 = vmax.f32 %v10671, 0.0
  %v10837 = vmax.f32 %v10672, 0.0
  %v10838 = vmax.f32 %v10673, 0.0
  %v10839 = vmax.f32 %v10674, 0.0
  %v10840 = vmax.f32 %v10675, 0.0
  %v10841 = vmax.f32 %v10676, 0.0
  %v10842 = vmax.f32 %v10677, 0.0
  %v10843 = vmax.f32 %v10678, 0.0
  %v10844 = vmax.f32 %v10679, 0.0
  %v10845 = vmax.f32 %v10680, 0.0
  %v10846 = vmax.f32 %v10681, 0.0
  %v10847 = vmax.f32 %v10682, 0.0
  %v10848 = vmax.f32 %v10683, 0.0
  %v10849 = vmax.f32 %v10684, 0.0
  %v10850 = vmax.f32 %v10685, 0.0
  %v10851 = vmax.f32 %v10686, 0.0
  %v10852 = vmax.f32 %v10687, 0.0
  %v10853 = vmax.f32 %v10688, 0.0
  %v10854 = vmax.f32 %v10689, 0.0
  %v10855 = vmax.f32 %v10690, 0.0
  %v10856 = vmax.f32 %v10691, 0.0
  %v10857 = vmax.f32 %v10692, 0.0
  %v10858 = vmax.f32 %v10693, 0.0
  %v10859 = vmax.f32 %v10694, 0.0
  %v10860 = vmax.f32 %v10695, 0.0
  %v10861 = vmax.f32 %v10696, 0.0
  %v10862 = vmax.f32 %v10697, 0.0
  %v10863 = vmax.f32 %v10698, 0.0
  %v10864 = vmax.f32 %v10699, 0.0
  %v10865 = vmax.f32 %v10700, 0.0
  %v10866 = vmax.f32 %v10701, 0.0
  %v10867 = vmax.f32 %v10702, 0.0
  %v10868 = vmax.f32 %v10703, 0.0
  %v10869 = vmax.f32 %v10704, 0.0
  %v10870 = vmax.f32 %v10705, 0.0
  %v10871 = vmax.f32 %v10706, 0.0
  %v10872 = vmax.f32 %v10707, 0.0
  %v10873 = vmax.f32 %v10708, 0.0
  %v10874 = vmax.f32 %v10709, 0.0
  %v10875 = vmax.f32 %v10710, 0.0
  %v10876 = vmax.f32 %v10711, 0.0
  %v10877 = vmax.f32 %v10712, 0.0
  %v10878 = vmax.f32 %v10713, 0.0
  %v10879 = vmax.f32 %v10714, 0.0
  %v10880 = vmax.f32 %v10715, 0.0
  %v10881 = vmax.f32 %v10716, 0.0
  %v10882 = vmax.f32 %v10717, 0.0
  %v10883 = vmax.f32 %v10718, 0.0
  %v10884 = vmax.f32 %v10719, 0.0
  %v10885 = vmax.f32 %v10720, 0.0
  %v10886 = vmax.f32 %v10721, 0.0
  %v10887 = vmax.f32 %v10722, 0.0
  %v10888 = vmax.f32 %v10723, 0.0
  %v10889 = vmax.f32 %v10724, 0.0
  %v10890 = vmax.f32 %v10725, 0.0
  %v10891 = vmax.f32 %v10726, 0.0
  %v10892 = vmax.f32 %v10727, 0.0
  %v10893 = vmax.f32 %v10728, 0.0
  %v10894 = vmax.f32 %v10729, 0.0
  %v10895 = vmax.f32 %v10730, 0.0
  %v10896 = vmax.f32 %v10731, 0.0
  %v10897 = vmax.f32 %v10732, 0.0
  %v10898 = vmax.f32 %v10733, 0.0
  %v10899 = vmax.f32 %v10734, 0.0
  %v11028 = vlaneseq
  %v11029 = vshrl.u32 %v11028, 7
  %v11030 = vsub.s32 0, %v11029
  %v11031 = vrot.slane %v10772, %v11030
  %v11032 = vlaneseq
  %v11033 = vshrl.u32 %v11032, 7
  %v11034 = vsub.s32 0, %v11033
  %v11035 = vrot.slane %v10773, %v11034
  %v11036 = vlaneseq
  %v11037 = vshrl.u32 %v11036, 7
  %v11038 = vsub.s32 0, %v11037
  %v11039 = vrot.slane %v10774, %v11038
  %v11040 = vlaneseq
  %v11041 = vshrl.u32 %v11040, 7
  %v11042 = vsub.s32 0, %v11041
  %v11043 = vrot.slane %v10775, %v11042
  %v11044 = vlaneseq
  %v11045 = vshrl.u32 %v11044, 7
  %v11046 = vsub.s32 0, %v11045
  %v11047 = vrot.slane %v10776, %v11046
  %v11048 = vlaneseq
  %v11049 = vshrl.u32 %v11048, 7
  %v11050 = vsub.s32 0, %v11049
  %v11051 = vrot.slane %v10777, %v11050
  %v11052 = vlaneseq
  %v11053 = vshrl.u32 %v11052, 7
  %v11054 = vsub.s32 0, %v11053
  %v11055 = vrot.slane %v10778, %v11054
  %v11056 = vlaneseq
  %v11057 = vshrl.u32 %v11056, 7
  %v11058 = vsub.s32 0, %v11057
  %v11059 = vrot.slane %v10779, %v11058
  %v11060 = vlaneseq
  %v11061 = vshrl.u32 %v11060, 7
  %v11062 = vsub.s32 0, %v11061
  %v11063 = vrot.slane %v10780, %v11062
  %v11064 = vlaneseq
  %v11065 = vshrl.u32 %v11064, 7
  %v11066 = vsub.s32 0, %v11065
  %v11067 = vrot.slane %v10781, %v11066
  %v11068 = vlaneseq
  %v11069 = vshrl.u32 %v11068, 7
  %v11070 = vsub.s32 0, %v11069
  %v11071 = vrot.slane %v10782, %v11070
  %v11072 = vlaneseq
  %v11073 = vshrl.u32 %v11072, 7
  %v11074 = vsub.s32 0, %v11073
  %v11075 = vrot.slane %v10783, %v11074
  %v11076 = vlaneseq
  %v11077 = vshrl.u32 %v11076, 7
  %v11078 = vsub.s32 0, %v11077
  %v11079 = vrot.slane %v10784, %v11078
  %v11080 = vlaneseq
  %v11081 = vshrl.u32 %v11080, 7
  %v11082 = vsub.s32 0, %v11081
  %v11083 = vrot.slane %v10785, %v11082
  %v11084 = vlaneseq
  %v11085 = vshrl.u32 %v11084, 7
  %v11086 = vsub.s32 0, %v11085
  %v11087 = vrot.slane %v10786, %v11086
  %v11088 = vlaneseq
  %v11089 = vshrl.u32 %v11088, 7
  %v11090 = vsub.s32 0, %v11089
  %v11091 = vrot.slane %v10787, %v11090
  %v11092 = vlaneseq
  %v11093 = vshrl.u32 %v11092, 7
  %v11094 = vsub.s32 0, %v11093
  %v11095 = vrot.slane %v10788, %v11094
  %v11096 = vlaneseq
  %v11097 = vshrl.u32 %v11096, 7
  %v11098 = vsub.s32 0, %v11097
  %v11099 = vrot.slane %v10789, %v11098
  %v11100 = vlaneseq
  %v11101 = vshrl.u32 %v11100, 7
  %v11102 = vsub.s32 0, %v11101
  %v11103 = vrot.slane %v10790, %v11102
  %v11104 = vlaneseq
  %v11105 = vshrl.u32 %v11104, 7
  %v11106 = vsub.s32 0, %v11105
  %v11107 = vrot.slane %v10791, %v11106
  %v11108 = vlaneseq
  %v11109 = vshrl.u32 %v11108, 7
  %v11110 = vsub.s32 0, %v11109
  %v11111 = vrot.slane %v10792, %v11110
  %v11112 = vlaneseq
  %v11113 = vshrl.u32 %v11112, 7
  %v11114 = vsub.s32 0, %v11113
  %v11115 = vrot.slane %v10793, %v11114
  %v11116 = vlaneseq
  %v11117 = vshrl.u32 %v11116, 7
  %v11118 = vsub.s32 0, %v11117
  %v11119 = vrot.slane %v10794, %v11118
  %v11120 = vlaneseq
  %v11121 = vshrl.u32 %v11120, 7
  %v11122 = vsub.s32 0, %v11121
  %v11123 = vrot.slane %v10795, %v11122
  %v11124 = vlaneseq
  %v11125 = vshrl.u32 %v11124, 7
  %v11126 = vsub.s32 0, %v11125
  %v11127 = vrot.slane %v10796, %v11126
  %v11128 = vlaneseq
  %v11129 = vshrl.u32 %v11128, 7
  %v11130 = vsub.s32 0, %v11129
  %v11131 = vrot.slane %v10797, %v11130
  %v11132 = vlaneseq
  %v11133 = vshrl.u32 %v11132, 7
  %v11134 = vsub.s32 0, %v11133
  %v11135 = vrot.slane %v10798, %v11134
  %v11136 = vlaneseq
  %v11137 = vshrl.u32 %v11136, 7
  %v11138 = vsub.s32 0, %v11137
  %v11139 = vrot.slane %v10799, %v11138
  %v11140 = vlaneseq
  %v11141 = vshrl.u32 %v11140, 7
  %v11142 = vsub.s32 0, %v11141
  %v11143 = vrot.slane %v10800, %v11142
  %v11144 = vlaneseq
  %v11145 = vshrl.u32 %v11144, 7
  %v11146 = vsub.s32 0, %v11145
  %v11147 = vrot.slane %v10801, %v11146
  %v11148 = vlaneseq
  %v11149 = vshrl.u32 %v11148, 7
  %v11150 = vsub.s32 0, %v11149
  %v11151 = vrot.slane %v10802, %v11150
  %v11152 = vlaneseq
  %v11153 = vshrl.u32 %v11152, 7
  %v11154 = vsub.s32 0, %v11153
  %v11155 = vrot.slane %v10803, %v11154
  %v11156 = vlaneseq
  %v11157 = vshrl.u32 %v11156, 7
  %v11158 = vsub.s32 0, %v11157
  %v11159 = vrot.slane %v10804, %v11158
  %v11160 = vlaneseq
  %v11161 = vshrl.u32 %v11160, 7
  %v11162 = vsub.s32 0, %v11161
  %v11163 = vrot.slane %v10805, %v11162
  %v11164 = vlaneseq
  %v11165 = vshrl.u32 %v11164, 7
  %v11166 = vsub.s32 0, %v11165
  %v11167 = vrot.slane %v10806, %v11166
  %v11168 = vlaneseq
  %v11169 = vshrl.u32 %v11168, 7
  %v11170 = vsub.s32 0, %v11169
  %v11171 = vrot.slane %v10807, %v11170
  %v11172 = vlaneseq
  %v11173 = vshrl.u32 %v11172, 7
  %v11174 = vsub.s32 0, %v11173
  %v11175 = vrot.slane %v10808, %v11174
  %v11176 = vlaneseq
  %v11177 = vshrl.u32 %v11176, 7
  %v11178 = vsub.s32 0, %v11177
  %v11179 = vrot.slane %v10809, %v11178
  %v11180 = vlaneseq
  %v11181 = vshrl.u32 %v11180, 7
  %v11182 = vsub.s32 0, %v11181
  %v11183 = vrot.slane %v10810, %v11182
  %v11184 = vlaneseq
  %v11185 = vshrl.u32 %v11184, 7
  %v11186 = vsub.s32 0, %v11185
  %v11187 = vrot.slane %v10811, %v11186
  %v11188 = vlaneseq
  %v11189 = vshrl.u32 %v11188, 7
  %v11190 = vsub.s32 0, %v11189
  %v11191 = vrot.slane %v10812, %v11190
  %v11192 = vlaneseq
  %v11193 = vshrl.u32 %v11192, 7
  %v11194 = vsub.s32 0, %v11193
  %v11195 = vrot.slane %v10813, %v11194
  %v11196 = vlaneseq
  %v11197 = vshrl.u32 %v11196, 7
  %v11198 = vsub.s32 0, %v11197
  %v11199 = vrot.slane %v10814, %v11198
  %v11200 = vlaneseq
  %v11201 = vshrl.u32 %v11200, 7
  %v11202 = vsub.s32 0, %v11201
  %v11203 = vrot.slane %v10815, %v11202
  %v11204 = vlaneseq
  %v11205 = vshrl.u32 %v11204, 7
  %v11206 = vsub.s32 0, %v11205
  %v11207 = vrot.slane %v10816, %v11206
  %v11208 = vlaneseq
  %v11209 = vshrl.u32 %v11208, 7
  %v11210 = vsub.s32 0, %v11209
  %v11211 = vrot.slane %v10817, %v11210
  %v11212 = vlaneseq
  %v11213 = vshrl.u32 %v11212, 7
  %v11214 = vsub.s32 0, %v11213
  %v11215 = vrot.slane %v10818, %v11214
  %v11216 = vlaneseq
  %v11217 = vshrl.u32 %v11216, 7
  %v11218 = vsub.s32 0, %v11217
  %v11219 = vrot.slane %v10819, %v11218
  %v11220 = vlaneseq
  %v11221 = vshrl.u32 %v11220, 7
  %v11222 = vsub.s32 0, %v11221
  %v11223 = vrot.slane %v10820, %v11222
  %v11224 = vlaneseq
  %v11225 = vshrl.u32 %v11224, 7
  %v11226 = vsub.s32 0, %v11225
  %v11227 = vrot.slane %v10821, %v11226
  %v11228 = vlaneseq
  %v11229 = vshrl.u32 %v11228, 7
  %v11230 = vsub.s32 0, %v11229
  %v11231 = vrot.slane %v10822, %v11230
  %v11232 = vlaneseq
  %v11233 = vshrl.u32 %v11232, 7
  %v11234 = vsub.s32 0, %v11233
  %v11235 = vrot.slane %v10823, %v11234
  %v11236 = vlaneseq
  %v11237 = vshrl.u32 %v11236, 7
  %v11238 = vsub.s32 0, %v11237
  %v11239 = vrot.slane %v10824, %v11238
  %v11240 = vlaneseq
  %v11241 = vshrl.u32 %v11240, 7
  %v11242 = vsub.s32 0, %v11241
  %v11243 = vrot.slane %v10825, %v11242
  %v11244 = vlaneseq
  %v11245 = vshrl.u32 %v11244, 7
  %v11246 = vsub.s32 0, %v11245
  %v11247 = vrot.slane %v10826, %v11246
  %v11248 = vlaneseq
  %v11249 = vshrl.u32 %v11248, 7
  %v11250 = vsub.s32 0, %v11249
  %v11251 = vrot.slane %v10827, %v11250
  %v11252 = vlaneseq
  %v11253 = vshrl.u32 %v11252, 7
  %v11254 = vsub.s32 0, %v11253
  %v11255 = vrot.slane %v10828, %v11254
  %v11256 = vlaneseq
  %v11257 = vshrl.u32 %v11256, 7
  %v11258 = vsub.s32 0, %v11257
  %v11259 = vrot.slane %v10829, %v11258
  %v11260 = vlaneseq
  %v11261 = vshrl.u32 %v11260, 7
  %v11262 = vsub.s32 0, %v11261
  %v11263 = vrot.slane %v10830, %v11262
  %v11264 = vlaneseq
  %v11265 = vshrl.u32 %v11264, 7
  %v11266 = vsub.s32 0, %v11265
  %v11267 = vrot.slane %v10831, %v11266
  %v11268 = vlaneseq
  %v11269 = vshrl.u32 %v11268, 7
  %v11270 = vsub.s32 0, %v11269
  %v11271 = vrot.slane %v10832, %v11270
  %v11272 = vlaneseq
  %v11273 = vshrl.u32 %v11272, 7
  %v11274 = vsub.s32 0, %v11273
  %v11275 = vrot.slane %v10833, %v11274
  %v11276 = vlaneseq
  %v11277 = vshrl.u32 %v11276, 7
  %v11278 = vsub.s32 0, %v11277
  %v11279 = vrot.slane %v10834, %v11278
  %v11280 = vlaneseq
  %v11281 = vshrl.u32 %v11280, 7
  %v11282 = vsub.s32 0, %v11281
  %v11283 = vrot.slane %v10835, %v11282
  %v11284 = vlaneseq
  %v11285 = vshrl.u32 %v11284, 7
  %v11286 = vsub.s32 0, %v11285
  %v11287 = vrot.slane %v10836, %v11286
  %v11288 = vlaneseq
  %v11289 = vshrl.u32 %v11288, 7
  %v11290 = vsub.s32 0, %v11289
  %v11291 = vrot.slane %v10837, %v11290
  %v11292 = vlaneseq
  %v11293 = vshrl.u32 %v11292, 7
  %v11294 = vsub.s32 0, %v11293
  %v11295 = vrot.slane %v10838, %v11294
  %v11296 = vlaneseq
  %v11297 = vshrl.u32 %v11296, 7
  %v11298 = vsub.s32 0, %v11297
  %v11299 = vrot.slane %v10839, %v11298
  %v11300 = vlaneseq
  %v11301 = vshrl.u32 %v11300, 7
  %v11302 = vsub.s32 0, %v11301
  %v11303 = vrot.slane %v10840, %v11302
  %v11304 = vlaneseq
  %v11305 = vshrl.u32 %v11304, 7
  %v11306 = vsub.s32 0, %v11305
  %v11307 = vrot.slane %v10841, %v11306
  %v11308 = vlaneseq
  %v11309 = vshrl.u32 %v11308, 7
  %v11310 = vsub.s32 0, %v11309
  %v11311 = vrot.slane %v10842, %v11310
  %v11312 = vlaneseq
  %v11313 = vshrl.u32 %v11312, 7
  %v11314 = vsub.s32 0, %v11313
  %v11315 = vrot.slane %v10843, %v11314
  %v11316 = vlaneseq
  %v11317 = vshrl.u32 %v11316, 7
  %v11318 = vsub.s32 0, %v11317
  %v11319 = vrot.slane %v10844, %v11318
  %v11320 = vlaneseq
  %v11321 = vshrl.u32 %v11320, 7
  %v11322 = vsub.s32 0, %v11321
  %v11323 = vrot.slane %v10845, %v11322
  %v11324 = vlaneseq
  %v11325 = vshrl.u32 %v11324, 7
  %v11326 = vsub.s32 0, %v11325
  %v11327 = vrot.slane %v10846, %v11326
  %v11328 = vlaneseq
  %v11329 = vshrl.u32 %v11328, 7
  %v11330 = vsub.s32 0, %v11329
  %v11331 = vrot.slane %v10847, %v11330
  %v11332 = vlaneseq
  %v11333 = vshrl.u32 %v11332, 7
  %v11334 = vsub.s32 0, %v11333
  %v11335 = vrot.slane %v10848, %v11334
  %v11336 = vlaneseq
  %v11337 = vshrl.u32 %v11336, 7
  %v11338 = vsub.s32 0, %v11337
  %v11339 = vrot.slane %v10849, %v11338
  %v11340 = vlaneseq
  %v11341 = vshrl.u32 %v11340, 7
  %v11342 = vsub.s32 0, %v11341
  %v11343 = vrot.slane %v10850, %v11342
  %v11344 = vlaneseq
  %v11345 = vshrl.u32 %v11344, 7
  %v11346 = vsub.s32 0, %v11345
  %v11347 = vrot.slane %v10851, %v11346
  %v11348 = vlaneseq
  %v11349 = vshrl.u32 %v11348, 7
  %v11350 = vsub.s32 0, %v11349
  %v11351 = vrot.slane %v10852, %v11350
  %v11352 = vlaneseq
  %v11353 = vshrl.u32 %v11352, 7
  %v11354 = vsub.s32 0, %v11353
  %v11355 = vrot.slane %v10853, %v11354
  %v11356 = vlaneseq
  %v11357 = vshrl.u32 %v11356, 7
  %v11358 = vsub.s32 0, %v11357
  %v11359 = vrot.slane %v10854, %v11358
  %v11360 = vlaneseq
  %v11361 = vshrl.u32 %v11360, 7
  %v11362 = vsub.s32 0, %v11361
  %v11363 = vrot.slane %v10855, %v11362
  %v11364 = vlaneseq
  %v11365 = vshrl.u32 %v11364, 7
  %v11366 = vsub.s32 0, %v11365
  %v11367 = vrot.slane %v10856, %v11366
  %v11368 = vlaneseq
  %v11369 = vshrl.u32 %v11368, 7
  %v11370 = vsub.s32 0, %v11369
  %v11371 = vrot.slane %v10857, %v11370
  %v11372 = vlaneseq
  %v11373 = vshrl.u32 %v11372, 7
  %v11374 = vsub.s32 0, %v11373
  %v11375 = vrot.slane %v10858, %v11374
  %v11376 = vlaneseq
  %v11377 = vshrl.u32 %v11376, 7
  %v11378 = vsub.s32 0, %v11377
  %v11379 = vrot.slane %v10859, %v11378
  %v11380 = vlaneseq
  %v11381 = vshrl.u32 %v11380, 7
  %v11382 = vsub.s32 0, %v11381
  %v11383 = vrot.slane %v10860, %v11382
  %v11384 = vlaneseq
  %v11385 = vshrl.u32 %v11384, 7
  %v11386 = vsub.s32 0, %v11385
  %v11387 = vrot.slane %v10861, %v11386
  %v11388 = vlaneseq
  %v11389 = vshrl.u32 %v11388, 7
  %v11390 = vsub.s32 0, %v11389
  %v11391 = vrot.slane %v10862, %v11390
  %v11392 = vlaneseq
  %v11393 = vshrl.u32 %v11392, 7
  %v11394 = vsub.s32 0, %v11393
  %v11395 = vrot.slane %v10863, %v11394
  %v11396 = vlaneseq
  %v11397 = vshrl.u32 %v11396, 7
  %v11398 = vsub.s32 0, %v11397
  %v11399 = vrot.slane %v10864, %v11398
  %v11400 = vlaneseq
  %v11401 = vshrl.u32 %v11400, 7
  %v11402 = vsub.s32 0, %v11401
  %v11403 = vrot.slane %v10865, %v11402
  %v11404 = vlaneseq
  %v11405 = vshrl.u32 %v11404, 7
  %v11406 = vsub.s32 0, %v11405
  %v11407 = vrot.slane %v10866, %v11406
  %v11408 = vlaneseq
  %v11409 = vshrl.u32 %v11408, 7
  %v11410 = vsub.s32 0, %v11409
  %v11411 = vrot.slane %v10867, %v11410
  %v11412 = vlaneseq
  %v11413 = vshrl.u32 %v11412, 7
  %v11414 = vsub.s32 0, %v11413
  %v11415 = vrot.slane %v10868, %v11414
  %v11416 = vlaneseq
  %v11417 = vshrl.u32 %v11416, 7
  %v11418 = vsub.s32 0, %v11417
  %v11419 = vrot.slane %v10869, %v11418
  %v11420 = vlaneseq
  %v11421 = vshrl.u32 %v11420, 7
  %v11422 = vsub.s32 0, %v11421
  %v11423 = vrot.slane %v10870, %v11422
  %v11424 = vlaneseq
  %v11425 = vshrl.u32 %v11424, 7
  %v11426 = vsub.s32 0, %v11425
  %v11427 = vrot.slane %v10871, %v11426
  %v11428 = vlaneseq
  %v11429 = vshrl.u32 %v11428, 7
  %v11430 = vsub.s32 0, %v11429
  %v11431 = vrot.slane %v10872, %v11430
  %v11432 = vlaneseq
  %v11433 = vshrl.u32 %v11432, 7
  %v11434 = vsub.s32 0, %v11433
  %v11435 = vrot.slane %v10873, %v11434
  %v11436 = vlaneseq
  %v11437 = vshrl.u32 %v11436, 7
  %v11438 = vsub.s32 0, %v11437
  %v11439 = vrot.slane %v10874, %v11438
  %v11440 = vlaneseq
  %v11441 = vshrl.u32 %v11440, 7
  %v11442 = vsub.s32 0, %v11441
  %v11443 = vrot.slane %v10875, %v11442
  %v11444 = vlaneseq
  %v11445 = vshrl.u32 %v11444, 7
  %v11446 = vsub.s32 0, %v11445
  %v11447 = vrot.slane %v10876, %v11446
  %v11448 = vlaneseq
  %v11449 = vshrl.u32 %v11448, 7
  %v11450 = vsub.s32 0, %v11449
  %v11451 = vrot.slane %v10877, %v11450
  %v11452 = vlaneseq
  %v11453 = vshrl.u32 %v11452, 7
  %v11454 = vsub.s32 0, %v11453
  %v11455 = vrot.slane %v10878, %v11454
  %v11456 = vlaneseq
  %v11457 = vshrl.u32 %v11456, 7
  %v11458 = vsub.s32 0, %v11457
  %v11459 = vrot.slane %v10879, %v11458
  %v11460 = vlaneseq
  %v11461 = vshrl.u32 %v11460, 7
  %v11462 = vsub.s32 0, %v11461
  %v11463 = vrot.slane %v10880, %v11462
  %v11464 = vlaneseq
  %v11465 = vshrl.u32 %v11464, 7
  %v11466 = vsub.s32 0, %v11465
  %v11467 = vrot.slane %v10881, %v11466
  %v11468 = vlaneseq
  %v11469 = vshrl.u32 %v11468, 7
  %v11470 = vsub.s32 0, %v11469
  %v11471 = vrot.slane %v10882, %v11470
  %v11472 = vlaneseq
  %v11473 = vshrl.u32 %v11472, 7
  %v11474 = vsub.s32 0, %v11473
  %v11475 = vrot.slane %v10883, %v11474
  %v11476 = vlaneseq
  %v11477 = vshrl.u32 %v11476, 7
  %v11478 = vsub.s32 0, %v11477
  %v11479 = vrot.slane %v10884, %v11478
  %v11480 = vlaneseq
  %v11481 = vshrl.u32 %v11480, 7
  %v11482 = vsub.s32 0, %v11481
  %v11483 = vrot.slane %v10885, %v11482
  %v11484 = vlaneseq
  %v11485 = vshrl.u32 %v11484, 7
  %v11486 = vsub.s32 0, %v11485
  %v11487 = vrot.slane %v10886, %v11486
  %v11488 = vlaneseq
  %v11489 = vshrl.u32 %v11488, 7
  %v11490 = vsub.s32 0, %v11489
  %v11491 = vrot.slane %v10887, %v11490
  %v11492 = vlaneseq
  %v11493 = vshrl.u32 %v11492, 7
  %v11494 = vsub.s32 0, %v11493
  %v11495 = vrot.slane %v10888, %v11494
  %v11496 = vlaneseq
  %v11497 = vshrl.u32 %v11496, 7
  %v11498 = vsub.s32 0, %v11497
  %v11499 = vrot.slane %v10889, %v11498
  %v11500 = vlaneseq
  %v11501 = vshrl.u32 %v11500, 7
  %v11502 = vsub.s32 0, %v11501
  %v11503 = vrot.slane %v10890, %v11502
  %v11504 = vlaneseq
  %v11505 = vshrl.u32 %v11504, 7
  %v11506 = vsub.s32 0, %v11505
  %v11507 = vrot.slane %v10891, %v11506
  %v11508 = vlaneseq
  %v11509 = vshrl.u32 %v11508, 7
  %v11510 = vsub.s32 0, %v11509
  %v11511 = vrot.slane %v10892, %v11510
  %v11512 = vlaneseq
  %v11513 = vshrl.u32 %v11512, 7
  %v11514 = vsub.s32 0, %v11513
  %v11515 = vrot.slane %v10893, %v11514
  %v11516 = vlaneseq
  %v11517 = vshrl.u32 %v11516, 7
  %v11518 = vsub.s32 0, %v11517
  %v11519 = vrot.slane %v10894, %v11518
  %v11520 = vlaneseq
  %v11521 = vshrl.u32 %v11520, 7
  %v11522 = vsub.s32 0, %v11521
  %v11523 = vrot.slane %v10895, %v11522
  %v11524 = vlaneseq
  %v11525 = vshrl.u32 %v11524, 7
  %v11526 = vsub.s32 0, %v11525
  %v11527 = vrot.slane %v10896, %v11526
  %v11528 = vlaneseq
  %v11529 = vshrl.u32 %v11528, 7
  %v11530 = vsub.s32 0, %v11529
  %v11531 = vrot.slane %v10897, %v11530
  %v11532 = vlaneseq
  %v11533 = vshrl.u32 %v11532, 7
  %v11534 = vsub.s32 0, %v11533
  %v11535 = vrot.slane %v10898, %v11534
  %v11536 = vlaneseq
  %v11537 = vshrl.u32 %v11536, 7
  %v11538 = vsub.s32 0, %v11537
  %v11539 = vrot.slane %v10899, %v11538
  %v11540 = vsel %vm9765, %v11035, %v11031
  %v11541 = vsel %vm9768, %v11039, %v11540
  %v11542 = vsel %vm9771, %v11043, %v11541
  %v11543 = vsel %vm9774, %v11047, %v11542
  %v11544 = vsel %vm9777, %v11051, %v11543
  %v11545 = vsel %vm9780, %v11055, %v11544
  %v11546 = vsel %vm9783, %v11059, %v11545
  %v11547 = vsel %vm9765, %v11067, %v11063
  %v11548 = vsel %vm9768, %v11071, %v11547
  %v11549 = vsel %vm9771, %v11075, %v11548
  %v11550 = vsel %vm9774, %v11079, %v11549
  %v11551 = vsel %vm9777, %v11083, %v11550
  %v11552 = vsel %vm9780, %v11087, %v11551
  %v11553 = vsel %vm9783, %v11091, %v11552
  %v11554 = vsel %vm9765, %v11099, %v11095
  %v11555 = vsel %vm9768, %v11103, %v11554
  %v11556 = vsel %vm9771, %v11107, %v11555
  %v11557 = vsel %vm9774, %v11111, %v11556
  %v11558 = vsel %vm9777, %v11115, %v11557
  %v11559 = vsel %vm9780, %v11119, %v11558
  %v11560 = vsel %vm9783, %v11123, %v11559
  %v11561 = vsel %vm9765, %v11131, %v11127
  %v11562 = vsel %vm9768, %v11135, %v11561
  %v11563 = vsel %vm9771, %v11139, %v11562
  %v11564 = vsel %vm9774, %v11143, %v11563
  %v11565 = vsel %vm9777, %v11147, %v11564
  %v11566 = vsel %vm9780, %v11151, %v11565
  %v11567 = vsel %vm9783, %v11155, %v11566
  %v11568 = vsel %vm9765, %v11163, %v11159
  %v11569 = vsel %vm9768, %v11167, %v11568
  %v11570 = vsel %vm9771, %v11171, %v11569
  %v11571 = vsel %vm9774, %v11175, %v11570
  %v11572 = vsel %vm9777, %v11179, %v11571
  %v11573 = vsel %vm9780, %v11183, %v11572
  %v11574 = vsel %vm9783, %v11187, %v11573
  %v11575 = vsel %vm9765, %v11195, %v11191
  %v11576 = vsel %vm9768, %v11199, %v11575
  %v11577 = vsel %vm9771, %v11203, %v11576
  %v11578 = vsel %vm9774, %v11207, %v11577
  %v11579 = vsel %vm9777, %v11211, %v11578
  %v11580 = vsel %vm9780, %v11215, %v11579
  %v11581 = vsel %vm9783, %v11219, %v11580
  %v11582 = vsel %vm9765, %v11227, %v11223
  %v11583 = vsel %vm9768, %v11231, %v11582
  %v11584 = vsel %vm9771, %v11235, %v11583
  %v11585 = vsel %vm9774, %v11239, %v11584
  %v11586 = vsel %vm9777, %v11243, %v11585
  %v11587 = vsel %vm9780, %v11247, %v11586
  %v11588 = vsel %vm9783, %v11251, %v11587
  %v11589 = vsel %vm9765, %v11259, %v11255
  %v11590 = vsel %vm9768, %v11263, %v11589
  %v11591 = vsel %vm9771, %v11267, %v11590
  %v11592 = vsel %vm9774, %v11271, %v11591
  %v11593 = vsel %vm9777, %v11275, %v11592
  %v11594 = vsel %vm9780, %v11279, %v11593
  %v11595 = vsel %vm9783, %v11283, %v11594
  %v11596 = vsel %vm9765, %v11291, %v11287
  %v11597 = vsel %vm9768, %v11295, %v11596
  %v11598 = vsel %vm9771, %v11299, %v11597
  %v11599 = vsel %vm9774, %v11303, %v11598
  %v11600 = vsel %vm9777, %v11307, %v11599
  %v11601 = vsel %vm9780, %v11311, %v11600
  %v11602 = vsel %vm9783, %v11315, %v11601
  %v11603 = vsel %vm9765, %v11323, %v11319
  %v11604 = vsel %vm9768, %v11327, %v11603
  %v11605 = vsel %vm9771, %v11331, %v11604
  %v11606 = vsel %vm9774, %v11335, %v11605
  %v11607 = vsel %vm9777, %v11339, %v11606
  %v11608 = vsel %vm9780, %v11343, %v11607
  %v11609 = vsel %vm9783, %v11347, %v11608
  %v11610 = vsel %vm9765, %v11355, %v11351
  %v11611 = vsel %vm9768, %v11359, %v11610
  %v11612 = vsel %vm9771, %v11363, %v11611
  %v11613 = vsel %vm9774, %v11367, %v11612
  %v11614 = vsel %vm9777, %v11371, %v11613
  %v11615 = vsel %vm9780, %v11375, %v11614
  %v11616 = vsel %vm9783, %v11379, %v11615
  %v11617 = vsel %vm9765, %v11387, %v11383
  %v11618 = vsel %vm9768, %v11391, %v11617
  %v11619 = vsel %vm9771, %v11395, %v11618
  %v11620 = vsel %vm9774, %v11399, %v11619
  %v11621 = vsel %vm9777, %v11403, %v11620
  %v11622 = vsel %vm9780, %v11407, %v11621
  %v11623 = vsel %vm9783, %v11411, %v11622
  %v11624 = vsel %vm9765, %v11419, %v11415
  %v11625 = vsel %vm9768, %v11423, %v11624
  %v11626 = vsel %vm9771, %v11427, %v11625
  %v11627 = vsel %vm9774, %v11431, %v11626
  %v11628 = vsel %vm9777, %v11435, %v11627
  %v11629 = vsel %vm9780, %v11439, %v11628
  %v11630 = vsel %vm9783, %v11443, %v11629
  %v11631 = vsel %vm9765, %v11451, %v11447
  %v11632 = vsel %vm9768, %v11455, %v11631
  %v11633 = vsel %vm9771, %v11459, %v11632
  %v11634 = vsel %vm9774, %v11463, %v11633
  %v11635 = vsel %vm9777, %v11467, %v11634
  %v11636 = vsel %vm9780, %v11471, %v11635
  %v11637 = vsel %vm9783, %v11475, %v11636
  %v11638 = vsel %vm9765, %v11483, %v11479
  %v11639 = vsel %vm9768, %v11487, %v11638
  %v11640 = vsel %vm9771, %v11491, %v11639
  %v11641 = vsel %vm9774, %v11495, %v11640
  %v11642 = vsel %vm9777, %v11499, %v11641
  %v11643 = vsel %vm9780, %v11503, %v11642
  %v11644 = vsel %vm9783, %v11507, %v11643
  %v11645 = vsel %vm9765, %v11515, %v11511
  %v11646 = vsel %vm9768, %v11519, %v11645
  %v11647 = vsel %vm9771, %v11523, %v11646
  %v11648 = vsel %vm9774, %v11527, %v11647
  %v11649 = vsel %vm9777, %v11531, %v11648
  %v11650 = vsel %vm9780, %v11535, %v11649
  %v11651 = vsel %vm9783, %v11539, %v11650
  %v11652 = vrot.slane %v11546, 7
  %v11653 = vrot.slane %v11553, 7
  %v11654 = vrot.slane %v11560, 7
  %v11655 = vrot.slane %v11567, 7
  %v11656 = vrot.slane %v11574, 7
  %v11657 = vrot.slane %v11581, 7
  %v11658 = vrot.slane %v11588, 7
  %v11659 = vrot.slane %v11595, 7
  %v11660 = vrot.slane %v11602, 7
  %v11661 = vrot.slane %v11609, 7
  %v11662 = vrot.slane %v11616, 7
  %v11663 = vrot.slane %v11623, 7
  %v11664 = vrot.slane %v11630, 7
  %v11665 = vrot.slane %v11637, 7
  %v11666 = vrot.slane %v11644, 7
  %v11667 = vrot.slane %v11651, 7
  %v11684 = vsel %vm177, 0.0, %v11652
  %v11685 = vsel %vm177, 0.0, %v11653
  %v11686 = vsel %vm177, 0.0, %v11654
  %v11687 = vsel %vm177, 0.0, %v11655
  %v11688 = vsel %vm177, 0.0, %v11656
  %v11689 = vsel %vm177, 0.0, %v11657
  %v11690 = vsel %vm177, 0.0, %v11658
  %v11691 = vsel %vm177, 0.0, %v11659
  %v11692 = vsel %vm177, 0.0, %v11660
  %v11693 = vsel %vm177, 0.0, %v11661
  %v11694 = vsel %vm177, 0.0, %v11662
  %v11695 = vsel %vm177, 0.0, %v11663
  %v11696 = vsel %vm177, 0.0, %v11664
  %v11697 = vsel %vm177, 0.0, %v11665
  %v11698 = vsel %vm177, 0.0, %v11666
  %v11699 = vsel %vm177, 0.0, %v11667
  %v11700 = vsel %vm177, %v11652, 0.0
  %v11701 = vsel %vm177, %v11653, 0.0
  %v11702 = vsel %vm177, %v11654, 0.0
  %v11703 = vsel %vm177, %v11655, 0.0
  %v11704 = vsel %vm177, %v11656, 0.0
  %v11705 = vsel %vm177, %v11657, 0.0
  %v11706 = vsel %vm177, %v11658, 0.0
  %v11707 = vsel %vm177, %v11659, 0.0
  %v11708 = vsel %vm177, %v11660, 0.0
  %v11709 = vsel %vm177, %v11661, 0.0
  %v11710 = vsel %vm177, %v11662, 0.0
  %v11711 = vsel %vm177, %v11663, 0.0
  %v11712 = vsel %vm177, %v11664, 0.0
  %v11713 = vsel %vm177, %v11665, 0.0
  %v11714 = vsel %vm177, %v11666, 0.0
  %v11715 = vsel %vm177, %v11667, 0.0
  %v11744 = vsel %vm500, %v501, %v504
  %v11745 = vrot.slane %v11684, 1
  %v11746 = vrot.slane %v11700, 1
  %v11747 = vsel %vm500, %v11745, %v11746
  %v11748 = vrot.slane %v11685, 1
  %v11749 = vrot.slane %v11701, 1
  %v11750 = vsel %vm500, %v11748, %v11749
  %v11751 = vrot.slane %v11686, 1
  %v11752 = vrot.slane %v11702, 1
  %v11753 = vsel %vm500, %v11751, %v11752
  %v11754 = vrot.slane %v11687, 1
  %v11755 = vrot.slane %v11703, 1
  %v11756 = vsel %vm500, %v11754, %v11755
  %v11757 = vrot.slane %v11688, 1
  %v11758 = vrot.slane %v11704, 1
  %v11759 = vsel %vm500, %v11757, %v11758
  %v11760 = vrot.slane %v11689, 1
  %v11761 = vrot.slane %v11705, 1
  %v11762 = vsel %vm500, %v11760, %v11761
  %v11763 = vrot.slane %v11690, 1
  %v11764 = vrot.slane %v11706, 1
  %v11765 = vsel %vm500, %v11763, %v11764
  %v11766 = vrot.slane %v11692, 1
  %v11767 = vrot.slane %v11708, 1
  %v11768 = vsel %vm500, %v11766, %v11767
  %v11769 = vrot.slane %v11693, 1
  %v11770 = vrot.slane %v11709, 1
  %v11771 = vsel %vm500, %v11769, %v11770
  %v11772 = vrot.slane %v11694, 1
  %v11773 = vrot.slane %v11710, 1
  %v11774 = vsel %vm500, %v11772, %v11773
  %v11775 = vrot.slane %v11695, 1
  %v11776 = vrot.slane %v11711, 1
  %v11777 = vsel %vm500, %v11775, %v11776
  %v11778 = vrot.slane %v11696, 1
  %v11779 = vrot.slane %v11712, 1
  %v11780 = vsel %vm500, %v11778, %v11779
  %v11781 = vrot.slane %v11697, 1
  %v11782 = vrot.slane %v11713, 1
  %v11783 = vsel %vm500, %v11781, %v11782
  %v11784 = vrot.slane %v11698, 1
  %v11785 = vrot.slane %v11714, 1
  %v11786 = vsel %vm500, %v11784, %v11785
  %11787 = vrot.lane.b32.xlu0 %v11744, 32
  %v11788 = vpop.permute.xlu0 %11787
  %11789 = vrot.lane.b32.xlu0 %v11747, 32
  %v11790 = vpop.permute.xlu0 %11789
  %11791 = vrot.lane.b32.xlu0 %v11750, 32
  %v11792 = vpop.permute.xlu0 %11791
  %11793 = vrot.lane.b32.xlu0 %v11753, 32
  %v11794 = vpop.permute.xlu0 %11793
  %11795 = vrot.lane.b32.xlu0 %v11756, 32
  %v11796 = vpop.permute.xlu0 %11795
  %11797 = vrot.lane.b32.xlu0 %v11759, 32
  %v11798 = vpop.permute.xlu0 %11797
  %11799 = vrot.lane.b32.xlu0 %v11762, 32
  %v11800 = vpop.permute.xlu0 %11799
  %11801 = vrot.lane.b32.xlu0 %v11765, 32
  %v11802 = vpop.permute.xlu0 %11801
  %11803 = vrot.lane.b32.xlu0 %v11768, 32
  %v11804 = vpop.permute.xlu0 %11803
  %11805 = vrot.lane.b32.xlu0 %v11771, 32
  %v11806 = vpop.permute.xlu0 %11805
  %11807 = vrot.lane.b32.xlu0 %v11774, 32
  %v11808 = vpop.permute.xlu0 %11807
  %11809 = vrot.lane.b32.xlu0 %v11777, 32
  %v11810 = vpop.permute.xlu0 %11809
  %11811 = vrot.lane.b32.xlu0 %v11780, 32
  %v11812 = vpop.permute.xlu0 %11811
  %11813 = vrot.lane.b32.xlu0 %v11783, 32
  %v11814 = vpop.permute.xlu0 %11813
  %11815 = vrot.lane.b32.xlu0 %v11786, 32
  %v11816 = vpop.permute.xlu0 %11815
  %v11832 = vsel %vm842, %v843, %v846
  %v11833 = vrot.slane %v11684, 2
  %v11834 = vrot.slane %v11700, 2
  %v11835 = vsel %vm842, %v11833, %v11834
  %v11836 = vrot.slane %v11685, 2
  %v11837 = vrot.slane %v11701, 2
  %v11838 = vsel %vm842, %v11836, %v11837
  %v11839 = vrot.slane %v11686, 2
  %v11840 = vrot.slane %v11702, 2
  %v11841 = vsel %vm842, %v11839, %v11840
  %v11842 = vrot.slane %v11687, 2
  %v11843 = vrot.slane %v11703, 2
  %v11844 = vsel %vm842, %v11842, %v11843
  %v11845 = vrot.slane %v11688, 2
  %v11846 = vrot.slane %v11704, 2
  %v11847 = vsel %vm842, %v11845, %v11846
  %v11848 = vrot.slane %v11689, 2
  %v11849 = vrot.slane %v11705, 2
  %v11850 = vsel %vm842, %v11848, %v11849
  %v11851 = vrot.slane %v11690, 2
  %v11852 = vrot.slane %v11706, 2
  %v11853 = vsel %vm842, %v11851, %v11852
  %v11854 = vrot.slane %v11692, 2
  %v11855 = vrot.slane %v11708, 2
  %v11856 = vsel %vm842, %v11854, %v11855
  %v11857 = vrot.slane %v11693, 2
  %v11858 = vrot.slane %v11709, 2
  %v11859 = vsel %vm842, %v11857, %v11858
  %v11860 = vrot.slane %v11694, 2
  %v11861 = vrot.slane %v11710, 2
  %v11862 = vsel %vm842, %v11860, %v11861
  %v11863 = vrot.slane %v11695, 2
  %v11864 = vrot.slane %v11711, 2
  %v11865 = vsel %vm842, %v11863, %v11864
  %v11866 = vrot.slane %v11696, 2
  %v11867 = vrot.slane %v11712, 2
  %v11868 = vsel %vm842, %v11866, %v11867
  %v11869 = vrot.slane %v11697, 2
  %v11870 = vrot.slane %v11713, 2
  %v11871 = vsel %vm842, %v11869, %v11870
  %v11872 = vrot.slane %v11698, 2
  %v11873 = vrot.slane %v11714, 2
  %v11874 = vsel %vm842, %v11872, %v11873
  %11875 = vrot.lane.b32.xlu0 %v11832, 64
  %v11876 = vpop.permute.xlu0 %11875
  %11877 = vrot.lane.b32.xlu0 %v11835, 64
  %v11878 = vpop.permute.xlu0 %11877
  %11879 = vrot.lane.b32.xlu0 %v11838, 64
  %v11880 = vpop.permute.xlu0 %11879
  %11881 = vrot.lane.b32.xlu0 %v11841, 64
  %v11882 = vpop.permute.xlu0 %11881
  %11883 = vrot.lane.b32.xlu0 %v11844, 64
  %v11884 = vpop.permute.xlu0 %11883
  %11885 = vrot.lane.b32.xlu0 %v11847, 64
  %v11886 = vpop.permute.xlu0 %11885
  %11887 = vrot.lane.b32.xlu0 %v11850, 64
  %v11888 = vpop.permute.xlu0 %11887
  %11889 = vrot.lane.b32.xlu0 %v11853, 64
  %v11890 = vpop.permute.xlu0 %11889
  %11891 = vrot.lane.b32.xlu0 %v11856, 64
  %v11892 = vpop.permute.xlu0 %11891
  %11893 = vrot.lane.b32.xlu0 %v11859, 64
  %v11894 = vpop.permute.xlu0 %11893
  %11895 = vrot.lane.b32.xlu0 %v11862, 64
  %v11896 = vpop.permute.xlu0 %11895
  %11897 = vrot.lane.b32.xlu0 %v11865, 64
  %v11898 = vpop.permute.xlu0 %11897
  %11899 = vrot.lane.b32.xlu0 %v11868, 64
  %v11900 = vpop.permute.xlu0 %11899
  %11901 = vrot.lane.b32.xlu0 %v11871, 64
  %v11902 = vpop.permute.xlu0 %11901
  %11903 = vrot.lane.b32.xlu0 %v11874, 64
  %v11904 = vpop.permute.xlu0 %11903
  %11922 = vrot.lane.b32.xlu0 %v11684, 96
  %v11923 = vpop.permute.xlu0 %11922
  %11924 = vrot.lane.b32.xlu0 %v11685, 96
  %v11925 = vpop.permute.xlu0 %11924
  %11926 = vrot.lane.b32.xlu0 %v11686, 96
  %v11927 = vpop.permute.xlu0 %11926
  %11928 = vrot.lane.b32.xlu0 %v11687, 96
  %v11929 = vpop.permute.xlu0 %11928
  %11930 = vrot.lane.b32.xlu0 %v11688, 96
  %v11931 = vpop.permute.xlu0 %11930
  %11932 = vrot.lane.b32.xlu0 %v11689, 96
  %v11933 = vpop.permute.xlu0 %11932
  %11934 = vrot.lane.b32.xlu0 %v11690, 96
  %v11935 = vpop.permute.xlu0 %11934
  %11936 = vrot.lane.b32.xlu0 %v11691, 96
  %v11937 = vpop.permute.xlu0 %11936
  %11938 = vrot.lane.b32.xlu0 %v11692, 96
  %v11939 = vpop.permute.xlu0 %11938
  %11940 = vrot.lane.b32.xlu0 %v11693, 96
  %v11941 = vpop.permute.xlu0 %11940
  %11942 = vrot.lane.b32.xlu0 %v11694, 96
  %v11943 = vpop.permute.xlu0 %11942
  %11944 = vrot.lane.b32.xlu0 %v11695, 96
  %v11945 = vpop.permute.xlu0 %11944
  %11946 = vrot.lane.b32.xlu0 %v11696, 96
  %v11947 = vpop.permute.xlu0 %11946
  %11948 = vrot.lane.b32.xlu0 %v11697, 96
  %v11949 = vpop.permute.xlu0 %11948
  %11950 = vrot.lane.b32.xlu0 %v11698, 96
  %v11951 = vpop.permute.xlu0 %11950
  %11952 = vrot.lane.b32.xlu0 %v11699, 96
  %v11953 = vpop.permute.xlu0 %11952
  %v11972 = vrot.slane %v11691, 1
  %v11973 = vrot.slane %v11707, 1
  %v11974 = vsel %vm500, %v11972, %v11973
  %v11975 = vrot.slane %v11699, 1
  %v11976 = vrot.slane %v11715, 1
  %v11977 = vsel %vm500, %v11975, %v11976
  %v11994 = vrot.slane %v11691, 2
  %v11995 = vrot.slane %v11707, 2
  %v11996 = vsel %vm842, %v11994, %v11995
  %v11997 = vrot.slane %v11699, 2
  %v11998 = vrot.slane %v11715, 2
  %v11999 = vsel %vm842, %v11997, %v11998
  %12000 = vrot.lane.b32.xlu0 %v11835, 32
  %v12001 = vpop.permute.xlu0 %12000
  %12002 = vrot.lane.b32.xlu0 %v11838, 32
  %v12003 = vpop.permute.xlu0 %12002
  %12004 = vrot.lane.b32.xlu0 %v11841, 32
  %v12005 = vpop.permute.xlu0 %12004
  %12006 = vrot.lane.b32.xlu0 %v11844, 32
  %v12007 = vpop.permute.xlu0 %12006
  %12008 = vrot.lane.b32.xlu0 %v11847, 32
  %v12009 = vpop.permute.xlu0 %12008
  %12010 = vrot.lane.b32.xlu0 %v11850, 32
  %v12011 = vpop.permute.xlu0 %12010
  %12012 = vrot.lane.b32.xlu0 %v11853, 32
  %v12013 = vpop.permute.xlu0 %12012
  %12014 = vrot.lane.b32.xlu0 %v11996, 32
  %v12015 = vpop.permute.xlu0 %12014
  %12016 = vrot.lane.b32.xlu0 %v11856, 32
  %v12017 = vpop.permute.xlu0 %12016
  %12018 = vrot.lane.b32.xlu0 %v11859, 32
  %v12019 = vpop.permute.xlu0 %12018
  %12020 = vrot.lane.b32.xlu0 %v11862, 32
  %v12021 = vpop.permute.xlu0 %12020
  %12022 = vrot.lane.b32.xlu0 %v11865, 32
  %v12023 = vpop.permute.xlu0 %12022
  %12024 = vrot.lane.b32.xlu0 %v11868, 32
  %v12025 = vpop.permute.xlu0 %12024
  %12026 = vrot.lane.b32.xlu0 %v11871, 32
  %v12027 = vpop.permute.xlu0 %12026
  %12028 = vrot.lane.b32.xlu0 %v11874, 32
  %v12029 = vpop.permute.xlu0 %12028
  %12030 = vrot.lane.b32.xlu0 %v11999, 32
  %v12031 = vpop.permute.xlu0 %12030
  %12048 = vrot.lane.b32.xlu0 %v11685, 64
  %v12049 = vpop.permute.xlu0 %12048
  %12050 = vrot.lane.b32.xlu0 %v11686, 64
  %v12051 = vpop.permute.xlu0 %12050
  %12052 = vrot.lane.b32.xlu0 %v11687, 64
  %v12053 = vpop.permute.xlu0 %12052
  %12054 = vrot.lane.b32.xlu0 %v11688, 64
  %v12055 = vpop.permute.xlu0 %12054
  %12056 = vrot.lane.b32.xlu0 %v11689, 64
  %v12057 = vpop.permute.xlu0 %12056
  %12058 = vrot.lane.b32.xlu0 %v11690, 64
  %v12059 = vpop.permute.xlu0 %12058
  %12060 = vrot.lane.b32.xlu0 %v11691, 64
  %v12061 = vpop.permute.xlu0 %12060
  %12062 = vrot.lane.b32.xlu0 %v11693, 64
  %v12063 = vpop.permute.xlu0 %12062
  %12064 = vrot.lane.b32.xlu0 %v11694, 64
  %v12065 = vpop.permute.xlu0 %12064
  %12066 = vrot.lane.b32.xlu0 %v11695, 64
  %v12067 = vpop.permute.xlu0 %12066
  %12068 = vrot.lane.b32.xlu0 %v11696, 64
  %v12069 = vpop.permute.xlu0 %12068
  %12070 = vrot.lane.b32.xlu0 %v11697, 64
  %v12071 = vpop.permute.xlu0 %12070
  %12072 = vrot.lane.b32.xlu0 %v11698, 64
  %v12073 = vpop.permute.xlu0 %12072
  %12074 = vrot.lane.b32.xlu0 %v11699, 64
  %v12075 = vpop.permute.xlu0 %12074
  %12090 = vrot.lane.b32.xlu0 %v11750, 96
  %v12091 = vpop.permute.xlu0 %12090
  %12092 = vrot.lane.b32.xlu0 %v11753, 96
  %v12093 = vpop.permute.xlu0 %12092
  %12094 = vrot.lane.b32.xlu0 %v11756, 96
  %v12095 = vpop.permute.xlu0 %12094
  %12096 = vrot.lane.b32.xlu0 %v11759, 96
  %v12097 = vpop.permute.xlu0 %12096
  %12098 = vrot.lane.b32.xlu0 %v11762, 96
  %v12099 = vpop.permute.xlu0 %12098
  %12100 = vrot.lane.b32.xlu0 %v11765, 96
  %v12101 = vpop.permute.xlu0 %12100
  %12102 = vrot.lane.b32.xlu0 %v11974, 96
  %v12103 = vpop.permute.xlu0 %12102
  %12104 = vrot.lane.b32.xlu0 %v11744, 96
  %v12105 = vpop.permute.xlu0 %12104
  %12106 = vrot.lane.b32.xlu0 %v11771, 96
  %v12107 = vpop.permute.xlu0 %12106
  %12108 = vrot.lane.b32.xlu0 %v11774, 96
  %v12109 = vpop.permute.xlu0 %12108
  %12110 = vrot.lane.b32.xlu0 %v11777, 96
  %v12111 = vpop.permute.xlu0 %12110
  %12112 = vrot.lane.b32.xlu0 %v11780, 96
  %v12113 = vpop.permute.xlu0 %12112
  %12114 = vrot.lane.b32.xlu0 %v11783, 96
  %v12115 = vpop.permute.xlu0 %12114
  %12116 = vrot.lane.b32.xlu0 %v11786, 96
  %v12117 = vpop.permute.xlu0 %12116
  %12118 = vrot.lane.b32.xlu0 %v11977, 96
  %v12119 = vpop.permute.xlu0 %12118
  %v12150 = vsel %vm2793, %v372, %v11788
  %v12151 = vsel %vm2793, %v11684, %v11790
  %v12152 = vsel %vm2793, %v11685, %v11792
  %v12153 = vsel %vm2793, %v11686, %v11794
  %v12154 = vsel %vm2793, %v11687, %v11796
  %v12155 = vsel %vm2793, %v11688, %v11798
  %v12156 = vsel %vm2793, %v11689, %v11800
  %v12157 = vsel %vm2793, %v11690, %v11802
  %v12158 = vsel %vm2793, %v11692, %v11804
  %v12159 = vsel %vm2793, %v11693, %v11806
  %v12160 = vsel %vm2793, %v11694, %v11808
  %v12161 = vsel %vm2793, %v11695, %v11810
  %v12162 = vsel %vm2793, %v11696, %v11812
  %v12163 = vsel %vm2793, %v11697, %v11814
  %v12164 = vsel %vm2793, %v11698, %v11816
  %v12165 = vsel %vm5420, %v12150, %v11876
  %v12166 = vsel %vm5420, %v12151, %v11878
  %v12167 = vsel %vm5420, %v12152, %v11880
  %v12168 = vsel %vm5420, %v12153, %v11882
  %v12169 = vsel %vm5420, %v12154, %v11884
  %v12170 = vsel %vm5420, %v12155, %v11886
  %v12171 = vsel %vm5420, %v12156, %v11888
  %v12172 = vsel %vm5420, %v12157, %v11890
  %v12173 = vsel %vm5420, %v12158, %v11892
  %v12174 = vsel %vm5420, %v12159, %v11894
  %v12175 = vsel %vm5420, %v12160, %v11896
  %v12176 = vsel %vm5420, %v12161, %v11898
  %v12177 = vsel %vm5420, %v12162, %v11900
  %v12178 = vsel %vm5420, %v12163, %v11902
  %v12179 = vsel %vm5420, %v12164, %v11904
  %v12180 = vsel %vm5483, %v12165, %v11923
  %v12181 = vsel %vm5483, %v12166, %v11925
  %v12182 = vsel %vm5483, %v12167, %v11927
  %v12183 = vsel %vm5483, %v12168, %v11929
  %v12184 = vsel %vm5483, %v12169, %v11931
  %v12185 = vsel %vm5483, %v12170, %v11933
  %v12186 = vsel %vm5483, %v12171, %v11935
  %v12187 = vsel %vm5483, %v12172, %v11937
  %v12188 = vsel %vm5483, %v12165, %v11939
  %v12189 = vsel %vm5483, %v12173, %v11941
  %v12190 = vsel %vm5483, %v12174, %v11943
  %v12191 = vsel %vm5483, %v12175, %v11945
  %v12192 = vsel %vm5483, %v12176, %v11947
  %v12193 = vsel %vm5483, %v12177, %v11949
  %v12194 = vsel %vm5483, %v12178, %v11951
  %v12195 = vsel %vm5483, %v12179, %v11953
  %v12196 = vsel %vm2793, %v11747, %v12001
  %v12197 = vsel %vm2793, %v11750, %v12003
  %v12198 = vsel %vm2793, %v11753, %v12005
  %v12199 = vsel %vm2793, %v11756, %v12007
  %v12200 = vsel %vm2793, %v11759, %v12009
  %v12201 = vsel %vm2793, %v11762, %v12011
  %v12202 = vsel %vm2793, %v11765, %v12013
  %v12203 = vsel %vm2793, %v11974, %v12015
  %v12204 = vsel %vm2793, %v11768, %v12017
  %v12205 = vsel %vm2793, %v11771, %v12019
  %v12206 = vsel %vm2793, %v11774, %v12021
  %v12207 = vsel %vm2793, %v11777, %v12023
  %v12208 = vsel %vm2793, %v11780, %v12025
  %v12209 = vsel %vm2793, %v11783, %v12027
  %v12210 = vsel %vm2793, %v11786, %v12029
  %v12211 = vsel %vm2793, %v11977, %v12031
  %v12212 = vsel %vm5420, %v12196, %v12049
  %v12213 = vsel %vm5420, %v12197, %v12051
  %v12214 = vsel %vm5420, %v12198, %v12053
  %v12215 = vsel %vm5420, %v12199, %v12055
  %v12216 = vsel %vm5420, %v12200, %v12057
  %v12217 = vsel %vm5420, %v12201, %v12059
  %v12218 = vsel %vm5420, %v12202, %v12061
  %v12219 = vsel %vm5420, %v12203, %v4985
  %v12220 = vsel %vm5420, %v12204, %v12063
  %v12221 = vsel %vm5420, %v12205, %v12065
  %v12222 = vsel %vm5420, %v12206, %v12067
  %v12223 = vsel %vm5420, %v12207, %v12069
  %v12224 = vsel %vm5420, %v12208, %v12071
  %v12225 = vsel %vm5420, %v12209, %v12073
  %v12226 = vsel %vm5420, %v12210, %v12075
  %v12227 = vsel %vm5420, %v12211, %v4985
  %v12228 = vsel %vm5483, %v12212, %v12091
  %v12229 = vsel %vm5483, %v12213, %v12093
  %v12230 = vsel %vm5483, %v12214, %v12095
  %v12231 = vsel %vm5483, %v12215, %v12097
  %v12232 = vsel %vm5483, %v12216, %v12099
  %v12233 = vsel %vm5483, %v12217, %v12101
  %v12234 = vsel %vm5483, %v12218, %v12103
  %v12235 = vsel %vm5483, %v12219, %v12105
  %v12236 = vsel %vm5483, %v12220, %v12107
  %v12237 = vsel %vm5483, %v12221, %v12109
  %v12238 = vsel %vm5483, %v12222, %v12111
  %v12239 = vsel %vm5483, %v12223, %v12113
  %v12240 = vsel %vm5483, %v12224, %v12115
  %v12241 = vsel %vm5483, %v12225, %v12117
  %v12242 = vsel %vm5483, %v12226, %v12119
  %v12243 = vsel %vm5483, %v12227, %v12105
  %v12244 = vpack.c.bf16 %v12181, %v12180
  %v12245 = vpack.c.bf16 %v12229, %v12228
  %v12246 = vpack.c.bf16 %v11841, %v11838
  %v12247 = vpack.c.bf16 %v12183, %v12182
  %v12248 = vpack.c.bf16 %v12231, %v12230
  %v12249 = vpack.c.bf16 %v11847, %v11844
  %v12250 = vpack.c.bf16 %v12185, %v12184
  %v12251 = vpack.c.bf16 %v12233, %v12232
  %v12252 = vpack.c.bf16 %v11853, %v11850
  %v12253 = vpack.c.bf16 %v12187, %v12186
  %v12254 = vpack.c.bf16 %v12235, %v12234
  %v12255 = vpack.c.bf16 %v11832, %v11996
  %v12256 = vpack.c.bf16 %v12189, %v12188
  %v12257 = vpack.c.bf16 %v12237, %v12236
  %v12258 = vpack.c.bf16 %v11862, %v11859
  %v12259 = vpack.c.bf16 %v12191, %v12190
  %v12260 = vpack.c.bf16 %v12239, %v12238
  %v12261 = vpack.c.bf16 %v11868, %v11865
  %v12262 = vpack.c.bf16 %v12193, %v12192
  %v12263 = vpack.c.bf16 %v12241, %v12240
  %v12264 = vpack.c.bf16 %v11874, %v11871
  %v12265 = vpack.c.bf16 %v12195, %v12194
  %v12266 = vpack.c.bf16 %v12243, %v12242
  %v12267 = vpack.c.bf16 %v11832, %v11999
  %v12269 = vlaneseq
  %v12270 = vshrl.u32 %v12269, 7
  %v12271 = vsub.s32 0, %v12270
  %v12272 = vrot.slane %v10771, %v12271
  %v12310 = vunpack.c.l.b16 %v10735
  %v12311 = vunpack.c.l.b16 %v10736
  %v12312 = vunpack.c.l.b16 %v10737
  %v12313 = vunpack.c.l.b16 %v10738
  %v12314 = vunpack.c.l.b16 %v10739
  %v12315 = vunpack.c.l.b16 %v10740
  %v12316 = vunpack.c.l.b16 %v10741
  %v12317 = vunpack.c.l.b16 %v10742
  %v12318 = vunpack.c.l.b16 %v10743
  %v12319 = vunpack.c.l.b16 %v10744
  %v12320 = vunpack.c.l.b16 %v10745
  %v12321 = vunpack.c.l.b16 %v10746
  %v12322 = vunpack.c.l.b16 %v10747
  %v12323 = vunpack.c.l.b16 %v10748
  %v12324 = vunpack.c.l.b16 %v10749
  %v12325 = vunpack.c.l.b16 %v10750
  %v12326 = vunpack.c.l.b16 %v10751
  %v12327 = vunpack.c.l.b16 %v10752
  %v12328 = vunpack.c.l.b16 %v10753
  %v12329 = vunpack.c.l.b16 %v10754
  %v12330 = vunpack.c.l.b16 %v10755
  %v12331 = vunpack.c.l.b16 %v10756
  %v12332 = vunpack.c.l.b16 %v10757
  %v12333 = vunpack.c.l.b16 %v10758
  %v12334 = vunpack.c.l.b16 %v10759
  %v12335 = vunpack.c.l.b16 %v10760
  %v12336 = vunpack.c.l.b16 %v10761
  %v12337 = vunpack.c.l.b16 %v10762
  %v12338 = vunpack.c.l.b16 %v10763
  %v12339 = vunpack.c.l.b16 %v10764
  %v12340 = vunpack.c.l.b16 %v10765
  %v12341 = vunpack.c.l.b16 %v10766
  %v12342 = vunpack.c.l.b16 %v10767
  %v12343 = vunpack.c.l.b16 %v10768
  %v12344 = vunpack.c.l.b16 %v10769
  %v12345 = vunpack.c.l.b16 %v10770
  %v12346 = vpack.c.b16 %v12311, %v12310
  %v12347 = vpack.c.b16 %v12313, %v12312
  %v12348 = vpack.c.b16 %v12315, %v12314
  %v12349 = vpack.c.b16 %v12317, %v12316
  %v12350 = vpack.c.b16 %v12319, %v12318
  %v12351 = vpack.c.b16 %v12321, %v12320
  %v12352 = vpack.c.b16 %v12323, %v12322
  %v12353 = vpack.c.b16 %v12325, %v12324
  %v12354 = vpack.c.b16 %v12327, %v12326
  %v12355 = vpack.c.b16 %v12329, %v12328
  %v12356 = vpack.c.b16 %v12331, %v12330
  %v12357 = vpack.c.b16 %v12333, %v12332
  %v12358 = vpack.c.b16 %v12335, %v12334
  %v12359 = vpack.c.b16 %v12337, %v12336
  %v12360 = vpack.c.b16 %v12339, %v12338
  %v12361 = vpack.c.b16 %v12341, %v12340
  %v12362 = vpack.c.b16 %v12343, %v12342
  %v12363 = vpack.c.b16 %v12345, %v12344
  %v12383 = vsel %vm2793, %v12246, 0
  %v12386 = vsel %vm2793, %v12249, 0
  %v12389 = vsel %vm2793, %v12252, 0
  %v12392 = vsel %vm2793, %v12255, 0
  %v12395 = vsel %vm2793, %v12258, 0
  %v12398 = vsel %vm2793, %v12261, 0
  %v12401 = vsel %vm2793, %v12264, 0
  %v12404 = vsel %vm2793, %v12267, 0
  %12406 = vmatprep.subr.bf16.mxu0 0
  %12407 = vmatpush1.bf16.msra.mxu0 %v12346
  %12408 = vmatprep.subr.bf16.mxu0 0
  %12409 = vmatpush1.bf16.msra.mxu0 %v12347
  %12410 = vmatprep.subr.bf16.mxu0 0
  %12411 = vmatpush1.bf16.msra.mxu0 %v12348
  %12412 = vmatprep.subr.bf16.mxu0 0
  %12413 = vmatpush1.bf16.msra.mxu0 %v12349
  %12414 = vmatprep.subr.bf16.mxu0 0
  %12415 = vmatpush1.bf16.msra.mxu0 %v12350
  %12416 = vmatprep.subr.bf16.mxu0 0
  %12417 = vmatpush1.bf16.msra.mxu0 %v12351
  %12418 = vmatprep.subr.bf16.mxu0 0
  %12419 = vmatpush1.bf16.msra.mxu0 %v12352
  %12420 = vmatprep.subr.bf16.mxu0 0
  %12421 = vmatpush1.bf16.msra.mxu0 %v12353
  %12422 = vmatprep.subr.bf16.mxu0 0
  %12423 = vmatpush1.bf16.msra.mxu0 %v12354
  %12424 = vmatprep.subr.bf16.mxu0 0
  %12425 = vmatpush1.bf16.msra.mxu0 %v12355
  %12426 = vmatprep.subr.bf16.mxu0 0
  %12427 = vmatpush1.bf16.msra.mxu0 %v12356
  %12428 = vmatprep.subr.bf16.mxu0 0
  %12429 = vmatpush1.bf16.msra.mxu0 %v12357
  %12430 = vmatprep.subr.bf16.mxu0 0
  %12431 = vmatpush1.bf16.msra.mxu0 %v12358
  %12432 = vmatprep.subr.bf16.mxu0 0
  %12433 = vmatpush1.bf16.msra.mxu0 %v12359
  %12434 = vmatprep.subr.bf16.mxu0 0
  %12435 = vmatpush1.bf16.msra.mxu0 %v12360
  %12436 = vmatprep.subr.bf16.mxu0 0
  %12437 = vmatpush1.bf16.msra.mxu0 %v12361
  %12438 = vmatprep.mubr.bf16.mxu0 %v12245
  %12439 = vmatmul.mubr.bf16.gmra.mrb[0].mxu0 %v12244
  %v12440 = vpop.f32.mrb[0].mxu0
  %v12441 = vadd.f32 %v12272, %v12440
  %v12442 = vpop.f32.mrb[0].mxu0
  %v12443 = vpop.f32.mrb[0].mxu0
  %v12444 = vadd.f32 %v12272, %v12443
  %v12445 = vpop.f32.mrb[0].mxu0
  %12446 = vmatprep.mubr.bf16.mxu0 %v12248
  %12447 = vmatmul.mubr.bf16.gmra.mrb[0].mxu0 %v12247
  %v12448 = vpop.f32.mrb[0].mxu0
  %v12449 = vadd.f32 %v12272, %v12448
  %v12450 = vpop.f32.mrb[0].mxu0
  %v12451 = vpop.f32.mrb[0].mxu0
  %v12452 = vadd.f32 %v12272, %v12451
  %v12453 = vpop.f32.mrb[0].mxu0
  %12454 = vmatprep.mubr.bf16.mxu0 %v12251
  %12455 = vmatmul.mubr.bf16.gmra.mrb[0].mxu0 %v12250
  %v12456 = vpop.f32.mrb[0].mxu0
  %v12457 = vadd.f32 %v12272, %v12456
  %v12458 = vpop.f32.mrb[0].mxu0
  %v12459 = vpop.f32.mrb[0].mxu0
  %v12460 = vadd.f32 %v12272, %v12459
  %v12461 = vpop.f32.mrb[0].mxu0
  %12462 = vmatprep.mubr.bf16.mxu0 %v12254
  %12463 = vmatmul.mubr.bf16.gmra.mrb[0].mxu0 %v12253
  %v12464 = vpop.f32.mrb[0].mxu0
  %v12465 = vadd.f32 %v12272, %v12464
  %v12466 = vpop.f32.mrb[0].mxu0
  %v12467 = vpop.f32.mrb[0].mxu0
  %v12468 = vadd.f32 %v12272, %v12467
  %v12469 = vpop.f32.mrb[0].mxu0
  %12470 = vmatprep.mubr.bf16.mxu0 %v12257
  %12471 = vmatmul.mubr.bf16.gmra.mrb[0].mxu0 %v12256
  %v12472 = vpop.f32.mrb[0].mxu0
  %v12473 = vadd.f32 %v12272, %v12472
  %v12474 = vpop.f32.mrb[0].mxu0
  %v12475 = vpop.f32.mrb[0].mxu0
  %v12476 = vadd.f32 %v12272, %v12475
  %v12477 = vpop.f32.mrb[0].mxu0
  %12478 = vmatprep.mubr.bf16.mxu0 %v12260
  %12479 = vmatmul.mubr.bf16.gmra.mrb[0].mxu0 %v12259
  %v12480 = vpop.f32.mrb[0].mxu0
  %v12481 = vadd.f32 %v12272, %v12480
  %v12482 = vpop.f32.mrb[0].mxu0
  %v12483 = vpop.f32.mrb[0].mxu0
  %v12484 = vadd.f32 %v12272, %v12483
  %v12485 = vpop.f32.mrb[0].mxu0
  %12486 = vmatprep.mubr.bf16.mxu0 %v12263
  %12487 = vmatmul.mubr.bf16.gmra.mrb[0].mxu0 %v12262
  %v12488 = vpop.f32.mrb[0].mxu0
  %v12489 = vadd.f32 %v12272, %v12488
  %v12490 = vpop.f32.mrb[0].mxu0
  %v12491 = vpop.f32.mrb[0].mxu0
  %v12492 = vadd.f32 %v12272, %v12491
  %v12493 = vpop.f32.mrb[0].mxu0
  %12494 = vmatprep.mubr.bf16.mxu0 %v12266
  %12495 = vmatmul.mubr.bf16.gmra.mrb[0].mxu0 %v12265
  %v12496 = vpop.f32.mrb[0].mxu0
  %v12497 = vadd.f32 %v12272, %v12496
  %v12498 = vpop.f32.mrb[0].mxu0
  %v12499 = vpop.f32.mrb[0].mxu0
  %v12500 = vadd.f32 %v12272, %v12499
  %v12501 = vpop.f32.mrb[0].mxu0
  %12502 = vdwg.mxu0
  %12503 = vmatprep.subr.bf16.mxu0 0
  %12504 = vmatpush1.bf16.msra.mxu0 %v12362
  %12505 = vmatprep.subr.bf16.mxu0 0
  %12506 = vmatpush1.bf16.msra.mxu0 %v12363
  %12507 = vmatprep.subr.bf16.mxu0 0
  %12508 = vmatpush1.bf16.msra.mxu0 0
  %12509 = vmatprep.subr.bf16.mxu0 0
  %12510 = vmatpush1.bf16.msra.mxu0 0
  %12511 = vmatprep.subr.bf16.mxu0 0
  %12512 = vmatpush1.bf16.msra.mxu0 0
  %12513 = vmatprep.subr.bf16.mxu0 0
  %12514 = vmatpush1.bf16.msra.mxu0 0
  %12515 = vmatprep.subr.bf16.mxu0 0
  %12516 = vmatpush1.bf16.msra.mxu0 0
  %12517 = vmatprep.subr.bf16.mxu0 0
  %12518 = vmatpush1.bf16.msra.mxu0 0
  %12519 = vmatprep.subr.bf16.mxu0 0
  %12520 = vmatpush1.bf16.msra.mxu0 0
  %12521 = vmatprep.subr.bf16.mxu0 0
  %12522 = vmatpush1.bf16.msra.mxu0 0
  %12523 = vmatprep.subr.bf16.mxu0 0
  %12524 = vmatpush1.bf16.msra.mxu0 0
  %12525 = vmatprep.subr.bf16.mxu0 0
  %12526 = vmatpush1.bf16.msra.mxu0 0
  %12527 = vmatprep.subr.bf16.mxu0 0
  %12528 = vmatpush1.bf16.msra.mxu0 0
  %12529 = vmatprep.subr.bf16.mxu0 0
  %12530 = vmatpush1.bf16.msra.mxu0 0
  %12531 = vmatprep.subr.bf16.mxu0 0
  %12532 = vmatpush1.bf16.msra.mxu0 0
  %12533 = vmatprep.subr.bf16.mxu0 0
  %12534 = vmatpush1.bf16.msra.mxu0 0
  %12535 = vmatprep.mubr.bf16.mxu0 0
  %12536 = vmatmul.mubr.bf16.gmra.mrb[0].mxu0 %v12383
  %v12537 = vpop.f32.mrb[0].mxu0
  %v12538 = vadd.f32 %v12441, %v12537
  %v12539 = vpop.f32.mrb[0].mxu0
  %v12540 = vpop.f32.mrb[0].mxu0
  %v12541 = vadd.f32 %v12444, %v12540
  %v12542 = vpop.f32.mrb[0].mxu0
  %12543 = vmatprep.mubr.bf16.mxu0 0
  %12544 = vmatmul.mubr.bf16.gmra.mrb[0].mxu0 %v12386
  %v12545 = vpop.f32.mrb[0].mxu0
  %v12546 = vadd.f32 %v12449, %v12545
  %v12547 = vpop.f32.mrb[0].mxu0
  %v12548 = vpop.f32.mrb[0].mxu0
  %v12549 = vadd.f32 %v12452, %v12548
  %v12550 = vpop.f32.mrb[0].mxu0
  %12551 = vmatprep.mubr.bf16.mxu0 0
  %12552 = vmatmul.mubr.bf16.gmra.mrb[0].mxu0 %v12389
  %v12553 = vpop.f32.mrb[0].mxu0
  %v12554 = vadd.f32 %v12457, %v12553
  %v12555 = vpop.f32.mrb[0].mxu0
  %v12556 = vpop.f32.mrb[0].mxu0
  %v12557 = vadd.f32 %v12460, %v12556
  %v12558 = vpop.f32.mrb[0].mxu0
  %12559 = vmatprep.mubr.bf16.mxu0 0
  %12560 = vmatmul.mubr.bf16.gmra.mrb[0].mxu0 %v12392
  %v12561 = vpop.f32.mrb[0].mxu0
  %v12562 = vadd.f32 %v12465, %v12561
  %v12563 = vpop.f32.mrb[0].mxu0
  %v12564 = vpop.f32.mrb[0].mxu0
  %v12565 = vadd.f32 %v12468, %v12564
  %v12566 = vpop.f32.mrb[0].mxu0
  %12567 = vmatprep.mubr.bf16.mxu0 0
  %12568 = vmatmul.mubr.bf16.gmra.mrb[0].mxu0 %v12395
  %v12569 = vpop.f32.mrb[0].mxu0
  %v12570 = vadd.f32 %v12473, %v12569
  %v12571 = vpop.f32.mrb[0].mxu0
  %v12572 = vpop.f32.mrb[0].mxu0
  %v12573 = vadd.f32 %v12476, %v12572
  %v12574 = vpop.f32.mrb[0].mxu0
  %12575 = vmatprep.mubr.bf16.mxu0 0
  %12576 = vmatmul.mubr.bf16.gmra.mrb[0].mxu0 %v12398
  %v12577 = vpop.f32.mrb[0].mxu0
  %v12578 = vadd.f32 %v12481, %v12577
  %v12579 = vpop.f32.mrb[0].mxu0
  %v12580 = vpop.f32.mrb[0].mxu0
  %v12581 = vadd.f32 %v12484, %v12580
  %v12582 = vpop.f32.mrb[0].mxu0
  %12583 = vmatprep.mubr.bf16.mxu0 0
  %12584 = vmatmul.mubr.bf16.gmra.mrb[0].mxu0 %v12401
  %v12585 = vpop.f32.mrb[0].mxu0
  %v12586 = vadd.f32 %v12489, %v12585
  %v12587 = vpop.f32.mrb[0].mxu0
  %v12588 = vpop.f32.mrb[0].mxu0
  %v12589 = vadd.f32 %v12492, %v12588
  %v12590 = vpop.f32.mrb[0].mxu0
  %12591 = vmatprep.mubr.bf16.mxu0 0
  %12592 = vmatmul.mubr.bf16.gmra.mrb[0].mxu0 %v12404
  %v12593 = vpop.f32.mrb[0].mxu0
  %v12594 = vadd.f32 %v12497, %v12593
  %v12595 = vpop.f32.mrb[0].mxu0
  %v12596 = vpop.f32.mrb[0].mxu0
  %v12597 = vadd.f32 %v12500, %v12596
  %v12598 = vpop.f32.mrb[0].mxu0
  %12599 = vdwg.mxu0
  %v12600 = vld [vmem:[%s9] sm:$0xf]
  %v12601 = vld [vmem:[%s9 + $0x4] sm:$0xf]
  %v12602 = vld [vmem:[%s9 + $0x8] sm:$0xf]
  %v12603 = vld [vmem:[%s9 + $0xc] sm:$0xf]
  %v12604 = vld [vmem:[%s9 + $0x10] sm:$0xf]
  %v12605 = vld [vmem:[%s9 + $0x14] sm:$0xf]
  %v12606 = vld [vmem:[%s9 + $0x18] sm:$0xf]
  %v12607 = vld [vmem:[%s9 + $0x1c] sm:$0xf]
  %v12608 = vld [vmem:[%s9 + $0x20] sm:$0xf]
  %v12609 = vld [vmem:[%s9 + $0x24] sm:$0xf]
  %v12610 = vld [vmem:[%s9 + $0x28] sm:$0xf]
  %v12611 = vld [vmem:[%s9 + $0x2c] sm:$0xf]
  %v12612 = vld [vmem:[%s9 + $0x30] sm:$0xf]
  %v12613 = vld [vmem:[%s9 + $0x34] sm:$0xf]
  %v12614 = vld [vmem:[%s9 + $0x38] sm:$0xf]
  %v12615 = vld [vmem:[%s9 + $0x3c] sm:$0xf]
  %v12616 = vld [vmem:[%s9 + $0x40] sm:$0xf]
  %v12617 = vld [vmem:[%s9 + $0x44] sm:$0xf]
  %v12618 = vld [vmem:[%s9 + $0x48] sm:$0xf]
  %v12619 = vld [vmem:[%s9 + $0x4c] sm:$0xf]
  %v12620 = vld [vmem:[%s9 + $0x50] sm:$0xf]
  %v12621 = vld [vmem:[%s9 + $0x54] sm:$0xf]
  %v12622 = vld [vmem:[%s9 + $0x58] sm:$0xf]
  %v12623 = vld [vmem:[%s9 + $0x5c] sm:$0xf]
  %v12624 = vld [vmem:[%s9 + $0x60] sm:$0xf]
  %v12625 = vld [vmem:[%s9 + $0x64] sm:$0xf]
  %v12626 = vld [vmem:[%s9 + $0x68] sm:$0xf]
  %v12627 = vld [vmem:[%s9 + $0x6c] sm:$0xf]
  %v12628 = vld [vmem:[%s9 + $0x70] sm:$0xf]
  %v12629 = vld [vmem:[%s9 + $0x74] sm:$0xf]
  %v12630 = vld [vmem:[%s9 + $0x78] sm:$0xf]
  %v12631 = vld [vmem:[%s9 + $0x7c] sm:$0xf]
  %v12632 = vld [vmem:[%s9 + $0x80] sm:$0xf]
  %v12633 = vld [vmem:[%s9 + $0x84] sm:$0xf]
  %v12634 = vld [vmem:[%s9 + $0x88] sm:$0xf]
  %v12635 = vld [vmem:[%s9 + $0x8c] sm:$0xf]
  %v12636 = vld [vmem:[%s10] sm:$0x1]
  %v12637 = vmax.f32 %v12538, 0.0
  %v12638 = vmax.f32 %v12541, 0.0
  %v12639 = vmax.f32 %v12546, 0.0
  %v12640 = vmax.f32 %v12549, 0.0
  %v12641 = vmax.f32 %v12554, 0.0
  %v12642 = vmax.f32 %v12557, 0.0
  %v12643 = vmax.f32 %v12562, 0.0
  %v12644 = vmax.f32 %v12565, 0.0
  %v12645 = vmax.f32 %v12570, 0.0
  %v12646 = vmax.f32 %v12573, 0.0
  %v12647 = vmax.f32 %v12578, 0.0
  %v12648 = vmax.f32 %v12581, 0.0
  %v12649 = vmax.f32 %v12586, 0.0
  %v12650 = vmax.f32 %v12589, 0.0
  %v12651 = vmax.f32 %v12594, 0.0
  %v12652 = vmax.f32 %v12597, 0.0
  %v12669 = vrot.slane %v12637, 7
  %v12670 = vrot.slane %v12638, 7
  %v12671 = vrot.slane %v12639, 7
  %v12672 = vrot.slane %v12640, 7
  %v12673 = vrot.slane %v12641, 7
  %v12674 = vrot.slane %v12642, 7
  %v12675 = vrot.slane %v12643, 7
  %v12676 = vrot.slane %v12644, 7
  %v12677 = vrot.slane %v12645, 7
  %v12678 = vrot.slane %v12646, 7
  %v12679 = vrot.slane %v12647, 7
  %v12680 = vrot.slane %v12648, 7
  %v12681 = vrot.slane %v12649, 7
  %v12682 = vrot.slane %v12650, 7
  %v12683 = vrot.slane %v12651, 7
  %v12684 = vrot.slane %v12652, 7
  %v12701 = vsel %vm177, 0.0, %v12669
  %v12702 = vsel %vm177, 0.0, %v12670
  %v12703 = vsel %vm177, 0.0, %v12671
  %v12704 = vsel %vm177, 0.0, %v12672
  %v12705 = vsel %vm177, 0.0, %v12673
  %v12706 = vsel %vm177, 0.0, %v12674
  %v12707 = vsel %vm177, 0.0, %v12675
  %v12708 = vsel %vm177, 0.0, %v12676
  %v12709 = vsel %vm177, 0.0, %v12677
  %v12710 = vsel %vm177, 0.0, %v12678
  %v12711 = vsel %vm177, 0.0, %v12679
  %v12712 = vsel %vm177, 0.0, %v12680
  %v12713 = vsel %vm177, 0.0, %v12681
  %v12714 = vsel %vm177, 0.0, %v12682
  %v12715 = vsel %vm177, 0.0, %v12683
  %v12716 = vsel %vm177, 0.0, %v12684
  %v12717 = vsel %vm177, %v12669, 0.0
  %v12718 = vsel %vm177, %v12670, 0.0
  %v12719 = vsel %vm177, %v12671, 0.0
  %v12720 = vsel %vm177, %v12672, 0.0
  %v12721 = vsel %vm177, %v12673, 0.0
  %v12722 = vsel %vm177, %v12674, 0.0
  %v12723 = vsel %vm177, %v12675, 0.0
  %v12724 = vsel %vm177, %v12676, 0.0
  %v12725 = vsel %vm177, %v12677, 0.0
  %v12726 = vsel %vm177, %v12678, 0.0
  %v12727 = vsel %vm177, %v12679, 0.0
  %v12728 = vsel %vm177, %v12680, 0.0
  %v12729 = vsel %vm177, %v12681, 0.0
  %v12730 = vsel %vm177, %v12682, 0.0
  %v12731 = vsel %vm177, %v12683, 0.0
  %v12732 = vsel %vm177, %v12684, 0.0
  %v12761 = vrot.slane %v12701, 1
  %v12762 = vrot.slane %v12717, 1
  %v12763 = vsel %vm500, %v12761, %v12762
  %v12764 = vrot.slane %v12702, 1
  %v12765 = vrot.slane %v12718, 1
  %v12766 = vsel %vm500, %v12764, %v12765
  %v12767 = vrot.slane %v12703, 1
  %v12768 = vrot.slane %v12719, 1
  %v12769 = vsel %vm500, %v12767, %v12768
  %v12770 = vrot.slane %v12704, 1
  %v12771 = vrot.slane %v12720, 1
  %v12772 = vsel %vm500, %v12770, %v12771
  %v12773 = vrot.slane %v12705, 1
  %v12774 = vrot.slane %v12721, 1
  %v12775 = vsel %vm500, %v12773, %v12774
  %v12776 = vrot.slane %v12706, 1
  %v12777 = vrot.slane %v12722, 1
  %v12778 = vsel %vm500, %v12776, %v12777
  %v12779 = vrot.slane %v12707, 1
  %v12780 = vrot.slane %v12723, 1
  %v12781 = vsel %vm500, %v12779, %v12780
  %v12782 = vrot.slane %v12709, 1
  %v12783 = vrot.slane %v12725, 1
  %v12784 = vsel %vm500, %v12782, %v12783
  %v12785 = vrot.slane %v12710, 1
  %v12786 = vrot.slane %v12726, 1
  %v12787 = vsel %vm500, %v12785, %v12786
  %v12788 = vrot.slane %v12711, 1
  %v12789 = vrot.slane %v12727, 1
  %v12790 = vsel %vm500, %v12788, %v12789
  %v12791 = vrot.slane %v12712, 1
  %v12792 = vrot.slane %v12728, 1
  %v12793 = vsel %vm500, %v12791, %v12792
  %v12794 = vrot.slane %v12713, 1
  %v12795 = vrot.slane %v12729, 1
  %v12796 = vsel %vm500, %v12794, %v12795
  %v12797 = vrot.slane %v12714, 1
  %v12798 = vrot.slane %v12730, 1
  %v12799 = vsel %vm500, %v12797, %v12798
  %v12800 = vrot.slane %v12715, 1
  %v12801 = vrot.slane %v12731, 1
  %v12802 = vsel %vm500, %v12800, %v12801
  %12803 = vrot.lane.b32.xlu0 %v12763, 32
  %v12804 = vpop.permute.xlu0 %12803
  %12805 = vrot.lane.b32.xlu0 %v12766, 32
  %v12806 = vpop.permute.xlu0 %12805
  %12807 = vrot.lane.b32.xlu0 %v12769, 32
  %v12808 = vpop.permute.xlu0 %12807
  %12809 = vrot.lane.b32.xlu0 %v12772, 32
  %v12810 = vpop.permute.xlu0 %12809
  %12811 = vrot.lane.b32.xlu0 %v12775, 32
  %v12812 = vpop.permute.xlu0 %12811
  %12813 = vrot.lane.b32.xlu0 %v12778, 32
  %v12814 = vpop.permute.xlu0 %12813
  %12815 = vrot.lane.b32.xlu0 %v12781, 32
  %v12816 = vpop.permute.xlu0 %12815
  %12817 = vrot.lane.b32.xlu0 %v12784, 32
  %v12818 = vpop.permute.xlu0 %12817
  %12819 = vrot.lane.b32.xlu0 %v12787, 32
  %v12820 = vpop.permute.xlu0 %12819
  %12821 = vrot.lane.b32.xlu0 %v12790, 32
  %v12822 = vpop.permute.xlu0 %12821
  %12823 = vrot.lane.b32.xlu0 %v12793, 32
  %v12824 = vpop.permute.xlu0 %12823
  %12825 = vrot.lane.b32.xlu0 %v12796, 32
  %v12826 = vpop.permute.xlu0 %12825
  %12827 = vrot.lane.b32.xlu0 %v12799, 32
  %v12828 = vpop.permute.xlu0 %12827
  %12829 = vrot.lane.b32.xlu0 %v12802, 32
  %v12830 = vpop.permute.xlu0 %12829
  %v12845 = vrot.slane %v12701, 2
  %v12846 = vrot.slane %v12717, 2
  %v12847 = vsel %vm842, %v12845, %v12846
  %v12848 = vrot.slane %v12702, 2
  %v12849 = vrot.slane %v12718, 2
  %v12850 = vsel %vm842, %v12848, %v12849
  %v12851 = vrot.slane %v12703, 2
  %v12852 = vrot.slane %v12719, 2
  %v12853 = vsel %vm842, %v12851, %v12852
  %v12854 = vrot.slane %v12704, 2
  %v12855 = vrot.slane %v12720, 2
  %v12856 = vsel %vm842, %v12854, %v12855
  %v12857 = vrot.slane %v12705, 2
  %v12858 = vrot.slane %v12721, 2
  %v12859 = vsel %vm842, %v12857, %v12858
  %v12860 = vrot.slane %v12706, 2
  %v12861 = vrot.slane %v12722, 2
  %v12862 = vsel %vm842, %v12860, %v12861
  %v12863 = vrot.slane %v12707, 2
  %v12864 = vrot.slane %v12723, 2
  %v12865 = vsel %vm842, %v12863, %v12864
  %v12866 = vrot.slane %v12709, 2
  %v12867 = vrot.slane %v12725, 2
  %v12868 = vsel %vm842, %v12866, %v12867
  %v12869 = vrot.slane %v12710, 2
  %v12870 = vrot.slane %v12726, 2
  %v12871 = vsel %vm842, %v12869, %v12870
  %v12872 = vrot.slane %v12711, 2
  %v12873 = vrot.slane %v12727, 2
  %v12874 = vsel %vm842, %v12872, %v12873
  %v12875 = vrot.slane %v12712, 2
  %v12876 = vrot.slane %v12728, 2
  %v12877 = vsel %vm842, %v12875, %v12876
  %v12878 = vrot.slane %v12713, 2
  %v12879 = vrot.slane %v12729, 2
  %v12880 = vsel %vm842, %v12878, %v12879
  %v12881 = vrot.slane %v12714, 2
  %v12882 = vrot.slane %v12730, 2
  %v12883 = vsel %vm842, %v12881, %v12882
  %v12884 = vrot.slane %v12715, 2
  %v12885 = vrot.slane %v12731, 2
  %v12886 = vsel %vm842, %v12884, %v12885
  %12887 = vrot.lane.b32.xlu0 %v12847, 64
  %v12888 = vpop.permute.xlu0 %12887
  %12889 = vrot.lane.b32.xlu0 %v12850, 64
  %v12890 = vpop.permute.xlu0 %12889
  %12891 = vrot.lane.b32.xlu0 %v12853, 64
  %v12892 = vpop.permute.xlu0 %12891
  %12893 = vrot.lane.b32.xlu0 %v12856, 64
  %v12894 = vpop.permute.xlu0 %12893
  %12895 = vrot.lane.b32.xlu0 %v12859, 64
  %v12896 = vpop.permute.xlu0 %12895
  %12897 = vrot.lane.b32.xlu0 %v12862, 64
  %v12898 = vpop.permute.xlu0 %12897
  %12899 = vrot.lane.b32.xlu0 %v12865, 64
  %v12900 = vpop.permute.xlu0 %12899
  %12901 = vrot.lane.b32.xlu0 %v12868, 64
  %v12902 = vpop.permute.xlu0 %12901
  %12903 = vrot.lane.b32.xlu0 %v12871, 64
  %v12904 = vpop.permute.xlu0 %12903
  %12905 = vrot.lane.b32.xlu0 %v12874, 64
  %v12906 = vpop.permute.xlu0 %12905
  %12907 = vrot.lane.b32.xlu0 %v12877, 64
  %v12908 = vpop.permute.xlu0 %12907
  %12909 = vrot.lane.b32.xlu0 %v12880, 64
  %v12910 = vpop.permute.xlu0 %12909
  %12911 = vrot.lane.b32.xlu0 %v12883, 64
  %v12912 = vpop.permute.xlu0 %12911
  %12913 = vrot.lane.b32.xlu0 %v12886, 64
  %v12914 = vpop.permute.xlu0 %12913
  %12931 = vrot.lane.b32.xlu0 %v12701, 96
  %v12932 = vpop.permute.xlu0 %12931
  %12933 = vrot.lane.b32.xlu0 %v12702, 96
  %v12934 = vpop.permute.xlu0 %12933
  %12935 = vrot.lane.b32.xlu0 %v12703, 96
  %v12936 = vpop.permute.xlu0 %12935
  %12937 = vrot.lane.b32.xlu0 %v12704, 96
  %v12938 = vpop.permute.xlu0 %12937
  %12939 = vrot.lane.b32.xlu0 %v12705, 96
  %v12940 = vpop.permute.xlu0 %12939
  %12941 = vrot.lane.b32.xlu0 %v12706, 96
  %v12942 = vpop.permute.xlu0 %12941
  %12943 = vrot.lane.b32.xlu0 %v12707, 96
  %v12944 = vpop.permute.xlu0 %12943
  %12945 = vrot.lane.b32.xlu0 %v12708, 96
  %v12946 = vpop.permute.xlu0 %12945
  %12947 = vrot.lane.b32.xlu0 %v12709, 96
  %v12948 = vpop.permute.xlu0 %12947
  %12949 = vrot.lane.b32.xlu0 %v12710, 96
  %v12950 = vpop.permute.xlu0 %12949
  %12951 = vrot.lane.b32.xlu0 %v12711, 96
  %v12952 = vpop.permute.xlu0 %12951
  %12953 = vrot.lane.b32.xlu0 %v12712, 96
  %v12954 = vpop.permute.xlu0 %12953
  %12955 = vrot.lane.b32.xlu0 %v12713, 96
  %v12956 = vpop.permute.xlu0 %12955
  %12957 = vrot.lane.b32.xlu0 %v12714, 96
  %v12958 = vpop.permute.xlu0 %12957
  %12959 = vrot.lane.b32.xlu0 %v12715, 96
  %v12960 = vpop.permute.xlu0 %12959
  %12961 = vrot.lane.b32.xlu0 %v12716, 96
  %v12962 = vpop.permute.xlu0 %12961
  %v12981 = vrot.slane %v12708, 1
  %v12982 = vrot.slane %v12724, 1
  %v12983 = vsel %vm500, %v12981, %v12982
  %v12984 = vrot.slane %v12716, 1
  %v12985 = vrot.slane %v12732, 1
  %v12986 = vsel %vm500, %v12984, %v12985
  %v13003 = vrot.slane %v12708, 2
  %v13004 = vrot.slane %v12724, 2
  %v13005 = vsel %vm842, %v13003, %v13004
  %v13006 = vrot.slane %v12716, 2
  %v13007 = vrot.slane %v12732, 2
  %v13008 = vsel %vm842, %v13006, %v13007
  %13009 = vrot.lane.b32.xlu0 %v12847, 32
  %v13010 = vpop.permute.xlu0 %13009
  %13011 = vrot.lane.b32.xlu0 %v12850, 32
  %v13012 = vpop.permute.xlu0 %13011
  %13013 = vrot.lane.b32.xlu0 %v12853, 32
  %v13014 = vpop.permute.xlu0 %13013
  %13015 = vrot.lane.b32.xlu0 %v12856, 32
  %v13016 = vpop.permute.xlu0 %13015
  %13017 = vrot.lane.b32.xlu0 %v12859, 32
  %v13018 = vpop.permute.xlu0 %13017
  %13019 = vrot.lane.b32.xlu0 %v12862, 32
  %v13020 = vpop.permute.xlu0 %13019
  %13021 = vrot.lane.b32.xlu0 %v12865, 32
  %v13022 = vpop.permute.xlu0 %13021
  %13023 = vrot.lane.b32.xlu0 %v13005, 32
  %v13024 = vpop.permute.xlu0 %13023
  %13025 = vrot.lane.b32.xlu0 %v12868, 32
  %v13026 = vpop.permute.xlu0 %13025
  %13027 = vrot.lane.b32.xlu0 %v12871, 32
  %v13028 = vpop.permute.xlu0 %13027
  %13029 = vrot.lane.b32.xlu0 %v12874, 32
  %v13030 = vpop.permute.xlu0 %13029
  %13031 = vrot.lane.b32.xlu0 %v12877, 32
  %v13032 = vpop.permute.xlu0 %13031
  %13033 = vrot.lane.b32.xlu0 %v12880, 32
  %v13034 = vpop.permute.xlu0 %13033
  %13035 = vrot.lane.b32.xlu0 %v12883, 32
  %v13036 = vpop.permute.xlu0 %13035
  %13037 = vrot.lane.b32.xlu0 %v12886, 32
  %v13038 = vpop.permute.xlu0 %13037
  %13039 = vrot.lane.b32.xlu0 %v13008, 32
  %v13040 = vpop.permute.xlu0 %13039
  %13057 = vrot.lane.b32.xlu0 %v12702, 64
  %v13058 = vpop.permute.xlu0 %13057
  %13059 = vrot.lane.b32.xlu0 %v12703, 64
  %v13060 = vpop.permute.xlu0 %13059
  %13061 = vrot.lane.b32.xlu0 %v12704, 64
  %v13062 = vpop.permute.xlu0 %13061
  %13063 = vrot.lane.b32.xlu0 %v12705, 64
  %v13064 = vpop.permute.xlu0 %13063
  %13065 = vrot.lane.b32.xlu0 %v12706, 64
  %v13066 = vpop.permute.xlu0 %13065
  %13067 = vrot.lane.b32.xlu0 %v12707, 64
  %v13068 = vpop.permute.xlu0 %13067
  %13069 = vrot.lane.b32.xlu0 %v12708, 64
  %v13070 = vpop.permute.xlu0 %13069
  %13071 = vrot.lane.b32.xlu0 %v12710, 64
  %v13072 = vpop.permute.xlu0 %13071
  %13073 = vrot.lane.b32.xlu0 %v12711, 64
  %v13074 = vpop.permute.xlu0 %13073
  %13075 = vrot.lane.b32.xlu0 %v12712, 64
  %v13076 = vpop.permute.xlu0 %13075
  %13077 = vrot.lane.b32.xlu0 %v12713, 64
  %v13078 = vpop.permute.xlu0 %13077
  %13079 = vrot.lane.b32.xlu0 %v12714, 64
  %v13080 = vpop.permute.xlu0 %13079
  %13081 = vrot.lane.b32.xlu0 %v12715, 64
  %v13082 = vpop.permute.xlu0 %13081
  %13083 = vrot.lane.b32.xlu0 %v12716, 64
  %v13084 = vpop.permute.xlu0 %13083
  %13099 = vrot.lane.b32.xlu0 %v12766, 96
  %v13100 = vpop.permute.xlu0 %13099
  %13101 = vrot.lane.b32.xlu0 %v12769, 96
  %v13102 = vpop.permute.xlu0 %13101
  %13103 = vrot.lane.b32.xlu0 %v12772, 96
  %v13104 = vpop.permute.xlu0 %13103
  %13105 = vrot.lane.b32.xlu0 %v12775, 96
  %v13106 = vpop.permute.xlu0 %13105
  %13107 = vrot.lane.b32.xlu0 %v12778, 96
  %v13108 = vpop.permute.xlu0 %13107
  %13109 = vrot.lane.b32.xlu0 %v12781, 96
  %v13110 = vpop.permute.xlu0 %13109
  %13111 = vrot.lane.b32.xlu0 %v12983, 96
  %v13112 = vpop.permute.xlu0 %13111
  %13113 = vrot.lane.b32.xlu0 %v12787, 96
  %v13114 = vpop.permute.xlu0 %13113
  %13115 = vrot.lane.b32.xlu0 %v12790, 96
  %v13116 = vpop.permute.xlu0 %13115
  %13117 = vrot.lane.b32.xlu0 %v12793, 96
  %v13118 = vpop.permute.xlu0 %13117
  %13119 = vrot.lane.b32.xlu0 %v12796, 96
  %v13120 = vpop.permute.xlu0 %13119
  %13121 = vrot.lane.b32.xlu0 %v12799, 96
  %v13122 = vpop.permute.xlu0 %13121
  %13123 = vrot.lane.b32.xlu0 %v12802, 96
  %v13124 = vpop.permute.xlu0 %13123
  %13125 = vrot.lane.b32.xlu0 %v12986, 96
  %v13126 = vpop.permute.xlu0 %13125
  %v13155 = vsel %vm2793, %v12701, %v12804
  %v13156 = vsel %vm2793, %v12702, %v12806
  %v13157 = vsel %vm2793, %v12703, %v12808
  %v13158 = vsel %vm2793, %v12704, %v12810
  %v13159 = vsel %vm2793, %v12705, %v12812
  %v13160 = vsel %vm2793, %v12706, %v12814
  %v13161 = vsel %vm2793, %v12707, %v12816
  %v13162 = vsel %vm2793, %v12709, %v12818
  %v13163 = vsel %vm2793, %v12710, %v12820
  %v13164 = vsel %vm2793, %v12711, %v12822
  %v13165 = vsel %vm2793, %v12712, %v12824
  %v13166 = vsel %vm2793, %v12713, %v12826
  %v13167 = vsel %vm2793, %v12714, %v12828
  %v13168 = vsel %vm2793, %v12715, %v12830
  %v13169 = vsel %vm5420, %v13155, %v12888
  %v13170 = vsel %vm5420, %v13156, %v12890
  %v13171 = vsel %vm5420, %v13157, %v12892
  %v13172 = vsel %vm5420, %v13158, %v12894
  %v13173 = vsel %vm5420, %v13159, %v12896
  %v13174 = vsel %vm5420, %v13160, %v12898
  %v13175 = vsel %vm5420, %v13161, %v12900
  %v13176 = vsel %vm5420, %v13162, %v12902
  %v13177 = vsel %vm5420, %v13163, %v12904
  %v13178 = vsel %vm5420, %v13164, %v12906
  %v13179 = vsel %vm5420, %v13165, %v12908
  %v13180 = vsel %vm5420, %v13166, %v12910
  %v13181 = vsel %vm5420, %v13167, %v12912
  %v13182 = vsel %vm5420, %v13168, %v12914
  %v13183 = vsel %vm5483, %v12165, %v12932
  %v13184 = vsel %vm5483, %v13169, %v12934
  %v13185 = vsel %vm5483, %v13170, %v12936
  %v13186 = vsel %vm5483, %v13171, %v12938
  %v13187 = vsel %vm5483, %v13172, %v12940
  %v13188 = vsel %vm5483, %v13173, %v12942
  %v13189 = vsel %vm5483, %v13174, %v12944
  %v13190 = vsel %vm5483, %v13175, %v12946
  %v13191 = vsel %vm5483, %v12165, %v12948
  %v13192 = vsel %vm5483, %v13176, %v12950
  %v13193 = vsel %vm5483, %v13177, %v12952
  %v13194 = vsel %vm5483, %v13178, %v12954
  %v13195 = vsel %vm5483, %v13179, %v12956
  %v13196 = vsel %vm5483, %v13180, %v12958
  %v13197 = vsel %vm5483, %v13181, %v12960
  %v13198 = vsel %vm5483, %v13182, %v12962
  %v13199 = vsel %vm2793, %v12763, %v13010
  %v13200 = vsel %vm2793, %v12766, %v13012
  %v13201 = vsel %vm2793, %v12769, %v13014
  %v13202 = vsel %vm2793, %v12772, %v13016
  %v13203 = vsel %vm2793, %v12775, %v13018
  %v13204 = vsel %vm2793, %v12778, %v13020
  %v13205 = vsel %vm2793, %v12781, %v13022
  %v13206 = vsel %vm2793, %v12983, %v13024
  %v13207 = vsel %vm2793, %v12784, %v13026
  %v13208 = vsel %vm2793, %v12787, %v13028
  %v13209 = vsel %vm2793, %v12790, %v13030
  %v13210 = vsel %vm2793, %v12793, %v13032
  %v13211 = vsel %vm2793, %v12796, %v13034
  %v13212 = vsel %vm2793, %v12799, %v13036
  %v13213 = vsel %vm2793, %v12802, %v13038
  %v13214 = vsel %vm2793, %v12986, %v13040
  %v13215 = vsel %vm5420, %v13199, %v13058
  %v13216 = vsel %vm5420, %v13200, %v13060
  %v13217 = vsel %vm5420, %v13201, %v13062
  %v13218 = vsel %vm5420, %v13202, %v13064
  %v13219 = vsel %vm5420, %v13203, %v13066
  %v13220 = vsel %vm5420, %v13204, %v13068
  %v13221 = vsel %vm5420, %v13205, %v13070
  %v13222 = vsel %vm5420, %v13206, %v4985
  %v13223 = vsel %vm5420, %v13207, %v13072
  %v13224 = vsel %vm5420, %v13208, %v13074
  %v13225 = vsel %vm5420, %v13209, %v13076
  %v13226 = vsel %vm5420, %v13210, %v13078
  %v13227 = vsel %vm5420, %v13211, %v13080
  %v13228 = vsel %vm5420, %v13212, %v13082
  %v13229 = vsel %vm5420, %v13213, %v13084
  %v13230 = vsel %vm5420, %v13214, %v4985
  %v13231 = vsel %vm5483, %v13215, %v13100
  %v13232 = vsel %vm5483, %v13216, %v13102
  %v13233 = vsel %vm5483, %v13217, %v13104
  %v13234 = vsel %vm5483, %v13218, %v13106
  %v13235 = vsel %vm5483, %v13219, %v13108
  %v13236 = vsel %vm5483, %v13220, %v13110
  %v13237 = vsel %vm5483, %v13221, %v13112
  %v13238 = vsel %vm5483, %v13222, %v12105
  %v13239 = vsel %vm5483, %v13223, %v13114
  %v13240 = vsel %vm5483, %v13224, %v13116
  %v13241 = vsel %vm5483, %v13225, %v13118
  %v13242 = vsel %vm5483, %v13226, %v13120
  %v13243 = vsel %vm5483, %v13227, %v13122
  %v13244 = vsel %vm5483, %v13228, %v13124
  %v13245 = vsel %vm5483, %v13229, %v13126
  %v13246 = vsel %vm5483, %v13230, %v12105
  %v13247 = vpack.c.bf16 %v13184, %v13183
  %v13248 = vpack.c.bf16 %v13232, %v13231
  %v13249 = vpack.c.bf16 %v12853, %v12850
  %v13250 = vpack.c.bf16 %v13186, %v13185
  %v13251 = vpack.c.bf16 %v13234, %v13233
  %v13252 = vpack.c.bf16 %v12859, %v12856
  %v13253 = vpack.c.bf16 %v13188, %v13187
  %v13254 = vpack.c.bf16 %v13236, %v13235
  %v13255 = vpack.c.bf16 %v12865, %v12862
  %v13256 = vpack.c.bf16 %v13190, %v13189
  %v13257 = vpack.c.bf16 %v13238, %v13237
  %v13258 = vpack.c.bf16 %v11832, %v13005
  %v13259 = vpack.c.bf16 %v13192, %v13191
  %v13260 = vpack.c.bf16 %v13240, %v13239
  %v13261 = vpack.c.bf16 %v12874, %v12871
  %v13262 = vpack.c.bf16 %v13194, %v13193
  %v13263 = vpack.c.bf16 %v13242, %v13241
  %v13264 = vpack.c.bf16 %v12880, %v12877
  %v13265 = vpack.c.bf16 %v13196, %v13195
  %v13266 = vpack.c.bf16 %v13244, %v13243
  %v13267 = vpack.c.bf16 %v12886, %v12883
  %v13268 = vpack.c.bf16 %v13198, %v13197
  %v13269 = vpack.c.bf16 %v13246, %v13245
  %v13270 = vpack.c.bf16 %v11832, %v13008
  %v13272 = vlaneseq
  %v13273 = vshrl.u32 %v13272, 7
  %v13274 = vsub.s32 0, %v13273
  %v13275 = vrot.slane %v12636, %v13274
  %v13313 = vunpack.c.l.b16 %v12600
  %v13314 = vunpack.c.l.b16 %v12601
  %v13315 = vunpack.c.l.b16 %v12602
  %v13316 = vunpack.c.l.b16 %v12603
  %v13317 = vunpack.c.l.b16 %v12604
  %v13318 = vunpack.c.l.b16 %v12605
  %v13319 = vunpack.c.l.b16 %v12606
  %v13320 = vunpack.c.l.b16 %v12607
  %v13321 = vunpack.c.l.b16 %v12608
  %v13322 = vunpack.c.l.b16 %v12609
  %v13323 = vunpack.c.l.b16 %v12610
  %v13324 = vunpack.c.l.b16 %v12611
  %v13325 = vunpack.c.l.b16 %v12612
  %v13326 = vunpack.c.l.b16 %v12613
  %v13327 = vunpack.c.l.b16 %v12614
  %v13328 = vunpack.c.l.b16 %v12615
  %v13329 = vunpack.c.l.b16 %v12616
  %v13330 = vunpack.c.l.b16 %v12617
  %v13331 = vunpack.c.l.b16 %v12618
  %v13332 = vunpack.c.l.b16 %v12619
  %v13333 = vunpack.c.l.b16 %v12620
  %v13334 = vunpack.c.l.b16 %v12621
  %v13335 = vunpack.c.l.b16 %v12622
  %v13336 = vunpack.c.l.b16 %v12623
  %v13337 = vunpack.c.l.b16 %v12624
  %v13338 = vunpack.c.l.b16 %v12625
  %v13339 = vunpack.c.l.b16 %v12626
  %v13340 = vunpack.c.l.b16 %v12627
  %v13341 = vunpack.c.l.b16 %v12628
  %v13342 = vunpack.c.l.b16 %v12629
  %v13343 = vunpack.c.l.b16 %v12630
  %v13344 = vunpack.c.l.b16 %v12631
  %v13345 = vunpack.c.l.b16 %v12632
  %v13346 = vunpack.c.l.b16 %v12633
  %v13347 = vunpack.c.l.b16 %v12634
  %v13348 = vunpack.c.l.b16 %v12635
  %v13349 = vpack.c.b16 %v13314, %v13313
  %v13350 = vpack.c.b16 %v13316, %v13315
  %v13351 = vpack.c.b16 %v13318, %v13317
  %v13352 = vpack.c.b16 %v13320, %v13319
  %v13353 = vpack.c.b16 %v13322, %v13321
  %v13354 = vpack.c.b16 %v13324, %v13323
  %v13355 = vpack.c.b16 %v13326, %v13325
  %v13356 = vpack.c.b16 %v13328, %v13327
  %v13357 = vpack.c.b16 %v13330, %v13329
  %v13358 = vpack.c.b16 %v13332, %v13331
  %v13359 = vpack.c.b16 %v13334, %v13333
  %v13360 = vpack.c.b16 %v13336, %v13335
  %v13361 = vpack.c.b16 %v13338, %v13337
  %v13362 = vpack.c.b16 %v13340, %v13339
  %v13363 = vpack.c.b16 %v13342, %v13341
  %v13364 = vpack.c.b16 %v13344, %v13343
  %v13365 = vpack.c.b16 %v13346, %v13345
  %v13366 = vpack.c.b16 %v13348, %v13347
  %v13386 = vsel %vm2793, %v13249, 0
  %v13389 = vsel %vm2793, %v13252, 0
  %v13392 = vsel %vm2793, %v13255, 0
  %v13395 = vsel %vm2793, %v13258, 0
  %v13398 = vsel %vm2793, %v13261, 0
  %v13401 = vsel %vm2793, %v13264, 0
  %v13404 = vsel %vm2793, %v13267, 0
  %v13407 = vsel %vm2793, %v13270, 0
  %13409 = vmatprep.subr.bf16.mxu0 0
  %13410 = vmatpush1.bf16.msra.mxu0 %v13349
  %13411 = vmatprep.subr.bf16.mxu0 0
  %13412 = vmatpush1.bf16.msra.mxu0 %v13350
  %13413 = vmatprep.subr.bf16.mxu0 0
  %13414 = vmatpush1.bf16.msra.mxu0 %v13351
  %13415 = vmatprep.subr.bf16.mxu0 0
  %13416 = vmatpush1.bf16.msra.mxu0 %v13352
  %13417 = vmatprep.subr.bf16.mxu0 0
  %13418 = vmatpush1.bf16.msra.mxu0 %v13353
  %13419 = vmatprep.subr.bf16.mxu0 0
  %13420 = vmatpush1.bf16.msra.mxu0 %v13354
  %13421 = vmatprep.subr.bf16.mxu0 0
  %13422 = vmatpush1.bf16.msra.mxu0 %v13355
  %13423 = vmatprep.subr.bf16.mxu0 0
  %13424 = vmatpush1.bf16.msra.mxu0 %v13356
  %13425 = vmatprep.subr.bf16.mxu0 0
  %13426 = vmatpush1.bf16.msra.mxu0 %v13357
  %13427 = vmatprep.subr.bf16.mxu0 0
  %13428 = vmatpush1.bf16.msra.mxu0 %v13358
  %13429 = vmatprep.subr.bf16.mxu0 0
  %13430 = vmatpush1.bf16.msra.mxu0 %v13359
  %13431 = vmatprep.subr.bf16.mxu0 0
  %13432 = vmatpush1.bf16.msra.mxu0 %v13360
  %13433 = vmatprep.subr.bf16.mxu0 0
  %13434 = vmatpush1.bf16.msra.mxu0 %v13361
  %13435 = vmatprep.subr.bf16.mxu0 0
  %13436 = vmatpush1.bf16.msra.mxu0 %v13362
  %13437 = vmatprep.subr.bf16.mxu0 0
  %13438 = vmatpush1.bf16.msra.mxu0 %v13363
  %13439 = vmatprep.subr.bf16.mxu0 0
  %13440 = vmatpush1.bf16.msra.mxu0 %v13364
  %13441 = vmatprep.mubr.bf16.mxu0 %v13248
  %13442 = vmatmul.mubr.bf16.gmra.mrb[0].mxu0 %v13247
  %v13443 = vpop.f32.mrb[0].mxu0
  %v13444 = vadd.f32 %v13275, %v13443
  %v13445 = vpop.f32.mrb[0].mxu0
  %v13446 = vpop.f32.mrb[0].mxu0
  %v13447 = vadd.f32 %v13275, %v13446
  %v13448 = vpop.f32.mrb[0].mxu0
  %13449 = vmatprep.mubr.bf16.mxu0 %v13251
  %13450 = vmatmul.mubr.bf16.gmra.mrb[0].mxu0 %v13250
  %v13451 = vpop.f32.mrb[0].mxu0
  %v13452 = vadd.f32 %v13275, %v13451
  %v13453 = vpop.f32.mrb[0].mxu0
  %v13454 = vpop.f32.mrb[0].mxu0
  %v13455 = vadd.f32 %v13275, %v13454
  %v13456 = vpop.f32.mrb[0].mxu0
  %13457 = vmatprep.mubr.bf16.mxu0 %v13254
  %13458 = vmatmul.mubr.bf16.gmra.mrb[0].mxu0 %v13253
  %v13459 = vpop.f32.mrb[0].mxu0
  %v13460 = vadd.f32 %v13275, %v13459
  %v13461 = vpop.f32.mrb[0].mxu0
  %v13462 = vpop.f32.mrb[0].mxu0
  %v13463 = vadd.f32 %v13275, %v13462
  %v13464 = vpop.f32.mrb[0].mxu0
  %13465 = vmatprep.mubr.bf16.mxu0 %v13257
  %13466 = vmatmul.mubr.bf16.gmra.mrb[0].mxu0 %v13256
  %v13467 = vpop.f32.mrb[0].mxu0
  %v13468 = vadd.f32 %v13275, %v13467
  %v13469 = vpop.f32.mrb[0].mxu0
  %v13470 = vpop.f32.mrb[0].mxu0
  %v13471 = vadd.f32 %v13275, %v13470
  %v13472 = vpop.f32.mrb[0].mxu0
  %13473 = vmatprep.mubr.bf16.mxu0 %v13260
  %13474 = vmatmul.mubr.bf16.gmra.mrb[0].mxu0 %v13259
  %v13475 = vpop.f32.mrb[0].mxu0
  %v13476 = vadd.f32 %v13275, %v13475
  %v13477 = vpop.f32.mrb[0].mxu0
  %v13478 = vpop.f32.mrb[0].mxu0
  %v13479 = vadd.f32 %v13275, %v13478
  %v13480 = vpop.f32.mrb[0].mxu0
  %13481 = vmatprep.mubr.bf16.mxu0 %v13263
  %13482 = vmatmul.mubr.bf16.gmra.mrb[0].mxu0 %v13262
  %v13483 = vpop.f32.mrb[0].mxu0
  %v13484 = vadd.f32 %v13275, %v13483
  %v13485 = vpop.f32.mrb[0].mxu0
  %v13486 = vpop.f32.mrb[0].mxu0
  %v13487 = vadd.f32 %v13275, %v13486
  %v13488 = vpop.f32.mrb[0].mxu0
  %13489 = vmatprep.mubr.bf16.mxu0 %v13266
  %13490 = vmatmul.mubr.bf16.gmra.mrb[0].mxu0 %v13265
  %v13491 = vpop.f32.mrb[0].mxu0
  %v13492 = vadd.f32 %v13275, %v13491
  %v13493 = vpop.f32.mrb[0].mxu0
  %v13494 = vpop.f32.mrb[0].mxu0
  %v13495 = vadd.f32 %v13275, %v13494
  %v13496 = vpop.f32.mrb[0].mxu0
  %13497 = vmatprep.mubr.bf16.mxu0 %v13269
  %13498 = vmatmul.mubr.bf16.gmra.mrb[0].mxu0 %v13268
  %v13499 = vpop.f32.mrb[0].mxu0
  %v13500 = vadd.f32 %v13275, %v13499
  %v13501 = vpop.f32.mrb[0].mxu0
  %v13502 = vpop.f32.mrb[0].mxu0
  %v13503 = vadd.f32 %v13275, %v13502
  %v13504 = vpop.f32.mrb[0].mxu0
  %13505 = vdwg.mxu0
  %13506 = vmatprep.subr.bf16.mxu0 0
  %13507 = vmatpush1.bf16.msra.mxu0 %v13365
  %13508 = vmatprep.subr.bf16.mxu0 0
  %13509 = vmatpush1.bf16.msra.mxu0 %v13366
  %13510 = vmatprep.subr.bf16.mxu0 0
  %13511 = vmatpush1.bf16.msra.mxu0 0
  %13512 = vmatprep.subr.bf16.mxu0 0
  %13513 = vmatpush1.bf16.msra.mxu0 0
  %13514 = vmatprep.subr.bf16.mxu0 0
  %13515 = vmatpush1.bf16.msra.mxu0 0
  %13516 = vmatprep.subr.bf16.mxu0 0
  %13517 = vmatpush1.bf16.msra.mxu0 0
  %13518 = vmatprep.subr.bf16.mxu0 0
  %13519 = vmatpush1.bf16.msra.mxu0 0
  %13520 = vmatprep.subr.bf16.mxu0 0
  %13521 = vmatpush1.bf16.msra.mxu0 0
  %13522 = vmatprep.subr.bf16.mxu0 0
  %13523 = vmatpush1.bf16.msra.mxu0 0
  %13524 = vmatprep.subr.bf16.mxu0 0
  %13525 = vmatpush1.bf16.msra.mxu0 0
  %13526 = vmatprep.subr.bf16.mxu0 0
  %13527 = vmatpush1.bf16.msra.mxu0 0
  %13528 = vmatprep.subr.bf16.mxu0 0
  %13529 = vmatpush1.bf16.msra.mxu0 0
  %13530 = vmatprep.subr.bf16.mxu0 0
  %13531 = vmatpush1.bf16.msra.mxu0 0
  %13532 = vmatprep.subr.bf16.mxu0 0
  %13533 = vmatpush1.bf16.msra.mxu0 0
  %13534 = vmatprep.subr.bf16.mxu0 0
  %13535 = vmatpush1.bf16.msra.mxu0 0
  %13536 = vmatprep.subr.bf16.mxu0 0
  %13537 = vmatpush1.bf16.msra.mxu0 0
  %13538 = vmatprep.mubr.bf16.mxu0 0
  %13539 = vmatmul.mubr.bf16.gmra.mrb[0].mxu0 %v13386
  %v13540 = vpop.f32.mrb[0].mxu0
  %v13541 = vadd.f32 %v13444, %v13540
  %v13542 = vpop.f32.mrb[0].mxu0
  %v13543 = vpop.f32.mrb[0].mxu0
  %v13544 = vadd.f32 %v13447, %v13543
  %v13545 = vpop.f32.mrb[0].mxu0
  %13546 = vmatprep.mubr.bf16.mxu0 0
  %13547 = vmatmul.mubr.bf16.gmra.mrb[0].mxu0 %v13389
  %v13548 = vpop.f32.mrb[0].mxu0
  %v13549 = vadd.f32 %v13452, %v13548
  %v13550 = vpop.f32.mrb[0].mxu0
  %v13551 = vpop.f32.mrb[0].mxu0
  %v13552 = vadd.f32 %v13455, %v13551
  %v13553 = vpop.f32.mrb[0].mxu0
  %13554 = vmatprep.mubr.bf16.mxu0 0
  %13555 = vmatmul.mubr.bf16.gmra.mrb[0].mxu0 %v13392
  %v13556 = vpop.f32.mrb[0].mxu0
  %v13557 = vadd.f32 %v13460, %v13556
  %v13558 = vpop.f32.mrb[0].mxu0
  %v13559 = vpop.f32.mrb[0].mxu0
  %v13560 = vadd.f32 %v13463, %v13559
  %v13561 = vpop.f32.mrb[0].mxu0
  %13562 = vmatprep.mubr.bf16.mxu0 0
  %13563 = vmatmul.mubr.bf16.gmra.mrb[0].mxu0 %v13395
  %v13564 = vpop.f32.mrb[0].mxu0
  %v13565 = vadd.f32 %v13468, %v13564
  %v13566 = vpop.f32.mrb[0].mxu0
  %v13567 = vpop.f32.mrb[0].mxu0
  %v13568 = vadd.f32 %v13471, %v13567
  %v13569 = vpop.f32.mrb[0].mxu0
  %13570 = vmatprep.mubr.bf16.mxu0 0
  %13571 = vmatmul.mubr.bf16.gmra.mrb[0].mxu0 %v13398
  %v13572 = vpop.f32.mrb[0].mxu0
  %v13573 = vadd.f32 %v13476, %v13572
  %v13574 = vpop.f32.mrb[0].mxu0
  %v13575 = vpop.f32.mrb[0].mxu0
  %v13576 = vadd.f32 %v13479, %v13575
  %v13577 = vpop.f32.mrb[0].mxu0
  %13578 = vmatprep.mubr.bf16.mxu0 0
  %13579 = vmatmul.mubr.bf16.gmra.mrb[0].mxu0 %v13401
  %v13580 = vpop.f32.mrb[0].mxu0
  %v13581 = vadd.f32 %v13484, %v13580
  %v13582 = vpop.f32.mrb[0].mxu0
  %v13583 = vpop.f32.mrb[0].mxu0
  %v13584 = vadd.f32 %v13487, %v13583
  %v13585 = vpop.f32.mrb[0].mxu0
  %13586 = vmatprep.mubr.bf16.mxu0 0
  %13587 = vmatmul.mubr.bf16.gmra.mrb[0].mxu0 %v13404
  %v13588 = vpop.f32.mrb[0].mxu0
  %v13589 = vadd.f32 %v13492, %v13588
  %v13590 = vpop.f32.mrb[0].mxu0
  %v13591 = vpop.f32.mrb[0].mxu0
  %v13592 = vadd.f32 %v13495, %v13591
  %v13593 = vpop.f32.mrb[0].mxu0
  %13594 = vmatprep.mubr.bf16.mxu0 0
  %13595 = vmatmul.mubr.bf16.gmra.mrb[0].mxu0 %v13407
  %v13596 = vpop.f32.mrb[0].mxu0
  %v13597 = vadd.f32 %v13500, %v13596
  %v13598 = vpop.f32.mrb[0].mxu0
  %v13599 = vpop.f32.mrb[0].mxu0
  %v13600 = vadd.f32 %v13503, %v13599
  %v13601 = vpop.f32.mrb[0].mxu0
  %13602 = vdwg.mxu0
  %v13619 = vcombine.high %v13541, %v13541
  %v13621 = vunpack.c.l.s4 1983009808
  %v13622 = vunpack.c.0.s8 %v13621
  %v13623 = vlaneseq
  %v13624 = vshrl.u32 %v13623, 7
  %v13625 = vsub.s32 %v13622, %v13624
  %v13626 = vrot.slane %v13541, %v13625
  %v13628 = vunpack.c.l.s4 1983009808
  %v13629 = vunpack.c.0.s8 %v13628
  %v13630 = vlaneseq
  %v13631 = vshrl.u32 %v13630, 7
  %v13632 = vsub.s32 %v13629, %v13631
  %v13633 = vrot.slane %v13619, %v13632
  %v13634 = vcombine.high %v13626, %v13626
  %v13635 = vcombine.high %v13633, %v13633
  %v13636 = vcombine.high %v13544, %v13544
  %v13638 = vunpack.c.l.s4 1983009808
  %v13639 = vunpack.c.0.s8 %v13638
  %v13640 = vlaneseq
  %v13641 = vshrl.u32 %v13640, 7
  %v13642 = vsub.s32 %v13639, %v13641
  %v13643 = vrot.slane %v13544, %v13642
  %v13645 = vunpack.c.l.s4 1983009808
  %v13646 = vunpack.c.0.s8 %v13645
  %v13647 = vlaneseq
  %v13648 = vshrl.u32 %v13647, 7
  %v13649 = vsub.s32 %v13646, %v13648
  %v13650 = vrot.slane %v13636, %v13649
  %v13651 = vcombine.high %v13643, %v13643
  %v13652 = vcombine.high %v13650, %v13650
  %v13653 = vcombine.high %v13549, %v13549
  %v13655 = vunpack.c.l.s4 1983009808
  %v13656 = vunpack.c.0.s8 %v13655
  %v13657 = vlaneseq
  %v13658 = vshrl.u32 %v13657, 7
  %v13659 = vsub.s32 %v13656, %v13658
  %v13660 = vrot.slane %v13549, %v13659
  %v13662 = vunpack.c.l.s4 1983009808
  %v13663 = vunpack.c.0.s8 %v13662
  %v13664 = vlaneseq
  %v13665 = vshrl.u32 %v13664, 7
  %v13666 = vsub.s32 %v13663, %v13665
  %v13667 = vrot.slane %v13653, %v13666
  %v13668 = vcombine.high %v13660, %v13660
  %v13669 = vcombine.high %v13667, %v13667
  %v13670 = vcombine.high %v13552, %v13552
  %v13672 = vunpack.c.l.s4 1983009808
  %v13673 = vunpack.c.0.s8 %v13672
  %v13674 = vlaneseq
  %v13675 = vshrl.u32 %v13674, 7
  %v13676 = vsub.s32 %v13673, %v13675
  %v13677 = vrot.slane %v13552, %v13676
  %v13679 = vunpack.c.l.s4 1983009808
  %v13680 = vunpack.c.0.s8 %v13679
  %v13681 = vlaneseq
  %v13682 = vshrl.u32 %v13681, 7
  %v13683 = vsub.s32 %v13680, %v13682
  %v13684 = vrot.slane %v13670, %v13683
  %v13685 = vcombine.high %v13677, %v13677
  %v13686 = vcombine.high %v13684, %v13684
  %v13687 = vcombine.high %v13557, %v13557
  %v13689 = vunpack.c.l.s4 1983009808
  %v13690 = vunpack.c.0.s8 %v13689
  %v13691 = vlaneseq
  %v13692 = vshrl.u32 %v13691, 7
  %v13693 = vsub.s32 %v13690, %v13692
  %v13694 = vrot.slane %v13557, %v13693
  %v13696 = vunpack.c.l.s4 1983009808
  %v13697 = vunpack.c.0.s8 %v13696
  %v13698 = vlaneseq
  %v13699 = vshrl.u32 %v13698, 7
  %v13700 = vsub.s32 %v13697, %v13699
  %v13701 = vrot.slane %v13687, %v13700
  %v13702 = vcombine.high %v13694, %v13694
  %v13703 = vcombine.high %v13701, %v13701
  %v13704 = vcombine.high %v13560, %v13560
  %v13706 = vunpack.c.l.s4 1983009808
  %v13707 = vunpack.c.0.s8 %v13706
  %v13708 = vlaneseq
  %v13709 = vshrl.u32 %v13708, 7
  %v13710 = vsub.s32 %v13707, %v13709
  %v13711 = vrot.slane %v13560, %v13710
  %v13713 = vunpack.c.l.s4 1983009808
  %v13714 = vunpack.c.0.s8 %v13713
  %v13715 = vlaneseq
  %v13716 = vshrl.u32 %v13715, 7
  %v13717 = vsub.s32 %v13714, %v13716
  %v13718 = vrot.slane %v13704, %v13717
  %v13719 = vcombine.high %v13711, %v13711
  %v13720 = vcombine.high %v13718, %v13718
  %v13721 = vcombine.high %v13565, %v13565
  %v13723 = vunpack.c.l.s4 1983009808
  %v13724 = vunpack.c.0.s8 %v13723
  %v13725 = vlaneseq
  %v13726 = vshrl.u32 %v13725, 7
  %v13727 = vsub.s32 %v13724, %v13726
  %v13728 = vrot.slane %v13565, %v13727
  %v13730 = vunpack.c.l.s4 1983009808
  %v13731 = vunpack.c.0.s8 %v13730
  %v13732 = vlaneseq
  %v13733 = vshrl.u32 %v13732, 7
  %v13734 = vsub.s32 %v13731, %v13733
  %v13735 = vrot.slane %v13721, %v13734
  %v13736 = vcombine.high %v13728, %v13728
  %v13737 = vcombine.high %v13735, %v13735
  %v13738 = vcombine.high %v13568, %v13568
  %v13740 = vunpack.c.l.s4 1983009808
  %v13741 = vunpack.c.0.s8 %v13740
  %v13742 = vlaneseq
  %v13743 = vshrl.u32 %v13742, 7
  %v13744 = vsub.s32 %v13741, %v13743
  %v13745 = vrot.slane %v13568, %v13744
  %v13747 = vunpack.c.l.s4 1983009808
  %v13748 = vunpack.c.0.s8 %v13747
  %v13749 = vlaneseq
  %v13750 = vshrl.u32 %v13749, 7
  %v13751 = vsub.s32 %v13748, %v13750
  %v13752 = vrot.slane %v13738, %v13751
  %v13753 = vcombine.high %v13745, %v13745
  %v13754 = vcombine.high %v13752, %v13752
  %v13755 = vcombine.high %v13573, %v13573
  %v13757 = vunpack.c.l.s4 1983009808
  %v13758 = vunpack.c.0.s8 %v13757
  %v13759 = vlaneseq
  %v13760 = vshrl.u32 %v13759, 7
  %v13761 = vsub.s32 %v13758, %v13760
  %v13762 = vrot.slane %v13573, %v13761
  %v13764 = vunpack.c.l.s4 1983009808
  %v13765 = vunpack.c.0.s8 %v13764
  %v13766 = vlaneseq
  %v13767 = vshrl.u32 %v13766, 7
  %v13768 = vsub.s32 %v13765, %v13767
  %v13769 = vrot.slane %v13755, %v13768
  %v13770 = vcombine.high %v13762, %v13762
  %v13771 = vcombine.high %v13769, %v13769
  %v13772 = vcombine.high %v13576, %v13576
  %v13774 = vunpack.c.l.s4 1983009808
  %v13775 = vunpack.c.0.s8 %v13774
  %v13776 = vlaneseq
  %v13777 = vshrl.u32 %v13776, 7
  %v13778 = vsub.s32 %v13775, %v13777
  %v13779 = vrot.slane %v13576, %v13778
  %v13781 = vunpack.c.l.s4 1983009808
  %v13782 = vunpack.c.0.s8 %v13781
  %v13783 = vlaneseq
  %v13784 = vshrl.u32 %v13783, 7
  %v13785 = vsub.s32 %v13782, %v13784
  %v13786 = vrot.slane %v13772, %v13785
  %v13787 = vcombine.high %v13779, %v13779
  %v13788 = vcombine.high %v13786, %v13786
  %v13789 = vcombine.high %v13581, %v13581
  %v13791 = vunpack.c.l.s4 1983009808
  %v13792 = vunpack.c.0.s8 %v13791
  %v13793 = vlaneseq
  %v13794 = vshrl.u32 %v13793, 7
  %v13795 = vsub.s32 %v13792, %v13794
  %v13796 = vrot.slane %v13581, %v13795
  %v13798 = vunpack.c.l.s4 1983009808
  %v13799 = vunpack.c.0.s8 %v13798
  %v13800 = vlaneseq
  %v13801 = vshrl.u32 %v13800, 7
  %v13802 = vsub.s32 %v13799, %v13801
  %v13803 = vrot.slane %v13789, %v13802
  %v13804 = vcombine.high %v13796, %v13796
  %v13805 = vcombine.high %v13803, %v13803
  %v13806 = vcombine.high %v13584, %v13584
  %v13808 = vunpack.c.l.s4 1983009808
  %v13809 = vunpack.c.0.s8 %v13808
  %v13810 = vlaneseq
  %v13811 = vshrl.u32 %v13810, 7
  %v13812 = vsub.s32 %v13809, %v13811
  %v13813 = vrot.slane %v13584, %v13812
  %v13815 = vunpack.c.l.s4 1983009808
  %v13816 = vunpack.c.0.s8 %v13815
  %v13817 = vlaneseq
  %v13818 = vshrl.u32 %v13817, 7
  %v13819 = vsub.s32 %v13816, %v13818
  %v13820 = vrot.slane %v13806, %v13819
  %v13821 = vcombine.high %v13813, %v13813
  %v13822 = vcombine.high %v13820, %v13820
  %v13823 = vcombine.high %v13589, %v13589
  %v13825 = vunpack.c.l.s4 1983009808
  %v13826 = vunpack.c.0.s8 %v13825
  %v13827 = vlaneseq
  %v13828 = vshrl.u32 %v13827, 7
  %v13829 = vsub.s32 %v13826, %v13828
  %v13830 = vrot.slane %v13589, %v13829
  %v13832 = vunpack.c.l.s4 1983009808
  %v13833 = vunpack.c.0.s8 %v13832
  %v13834 = vlaneseq
  %v13835 = vshrl.u32 %v13834, 7
  %v13836 = vsub.s32 %v13833, %v13835
  %v13837 = vrot.slane %v13823, %v13836
  %v13838 = vcombine.high %v13830, %v13830
  %v13839 = vcombine.high %v13837, %v13837
  %v13840 = vcombine.high %v13592, %v13592
  %v13842 = vunpack.c.l.s4 1983009808
  %v13843 = vunpack.c.0.s8 %v13842
  %v13844 = vlaneseq
  %v13845 = vshrl.u32 %v13844, 7
  %v13846 = vsub.s32 %v13843, %v13845
  %v13847 = vrot.slane %v13592, %v13846
  %v13849 = vunpack.c.l.s4 1983009808
  %v13850 = vunpack.c.0.s8 %v13849
  %v13851 = vlaneseq
  %v13852 = vshrl.u32 %v13851, 7
  %v13853 = vsub.s32 %v13850, %v13852
  %v13854 = vrot.slane %v13840, %v13853
  %v13855 = vcombine.high %v13847, %v13847
  %v13856 = vcombine.high %v13854, %v13854
  %v13857 = vcombine.high %v13597, %v13597
  %v13859 = vunpack.c.l.s4 1983009808
  %v13860 = vunpack.c.0.s8 %v13859
  %v13861 = vlaneseq
  %v13862 = vshrl.u32 %v13861, 7
  %v13863 = vsub.s32 %v13860, %v13862
  %v13864 = vrot.slane %v13597, %v13863
  %v13866 = vunpack.c.l.s4 1983009808
  %v13867 = vunpack.c.0.s8 %v13866
  %v13868 = vlaneseq
  %v13869 = vshrl.u32 %v13868, 7
  %v13870 = vsub.s32 %v13867, %v13869
  %v13871 = vrot.slane %v13857, %v13870
  %v13872 = vcombine.high %v13864, %v13864
  %v13873 = vcombine.high %v13871, %v13871
  %v13874 = vcombine.high %v13600, %v13600
  %v13876 = vunpack.c.l.s4 1983009808
  %v13877 = vunpack.c.0.s8 %v13876
  %v13878 = vlaneseq
  %v13879 = vshrl.u32 %v13878, 7
  %v13880 = vsub.s32 %v13877, %v13879
  %v13881 = vrot.slane %v13600, %v13880
  %v13883 = vunpack.c.l.s4 1983009808
  %v13884 = vunpack.c.0.s8 %v13883
  %v13885 = vlaneseq
  %v13886 = vshrl.u32 %v13885, 7
  %v13887 = vsub.s32 %v13884, %v13886
  %v13888 = vrot.slane %v13874, %v13887
  %v13889 = vcombine.high %v13881, %v13881
  %v13890 = vcombine.high %v13888, %v13888
  %v13891 = vrot.slane %v13626, 1
  %v13892 = vrot.slane %v13634, 1
  %v13893 = vrot.slane %v13633, 1
  %v13894 = vrot.slane %v13635, 1
  %v13895 = vrot.slane %v13643, 1
  %v13896 = vrot.slane %v13651, 1
  %v13897 = vrot.slane %v13650, 1
  %v13898 = vrot.slane %v13652, 1
  %v13899 = vrot.slane %v13660, 1
  %v13900 = vrot.slane %v13668, 1
  %v13901 = vrot.slane %v13667, 1
  %v13902 = vrot.slane %v13669, 1
  %v13903 = vrot.slane %v13677, 1
  %v13904 = vrot.slane %v13685, 1
  %v13905 = vrot.slane %v13684, 1
  %v13906 = vrot.slane %v13686, 1
  %v13907 = vrot.slane %v13694, 1
  %v13908 = vrot.slane %v13702, 1
  %v13909 = vrot.slane %v13701, 1
  %v13910 = vrot.slane %v13703, 1
  %v13911 = vrot.slane %v13711, 1
  %v13912 = vrot.slane %v13719, 1
  %v13913 = vrot.slane %v13718, 1
  %v13914 = vrot.slane %v13720, 1
  %v13915 = vrot.slane %v13728, 1
  %v13916 = vrot.slane %v13736, 1
  %v13917 = vrot.slane %v13735, 1
  %v13918 = vrot.slane %v13737, 1
  %v13919 = vrot.slane %v13745, 1
  %v13920 = vrot.slane %v13753, 1
  %v13921 = vrot.slane %v13752, 1
  %v13922 = vrot.slane %v13754, 1
  %v13923 = vrot.slane %v13762, 1
  %v13924 = vrot.slane %v13770, 1
  %v13925 = vrot.slane %v13769, 1
  %v13926 = vrot.slane %v13771, 1
  %v13927 = vrot.slane %v13779, 1
  %v13928 = vrot.slane %v13787, 1
  %v13929 = vrot.slane %v13786, 1
  %v13930 = vrot.slane %v13788, 1
  %v13931 = vrot.slane %v13796, 1
  %v13932 = vrot.slane %v13804, 1
  %v13933 = vrot.slane %v13803, 1
  %v13934 = vrot.slane %v13805, 1
  %v13935 = vrot.slane %v13813, 1
  %v13936 = vrot.slane %v13821, 1
  %v13937 = vrot.slane %v13820, 1
  %v13938 = vrot.slane %v13822, 1
  %v13939 = vrot.slane %v13830, 1
  %v13940 = vrot.slane %v13838, 1
  %v13941 = vrot.slane %v13837, 1
  %v13942 = vrot.slane %v13839, 1
  %v13943 = vrot.slane %v13847, 1
  %v13944 = vrot.slane %v13855, 1
  %v13945 = vrot.slane %v13854, 1
  %v13946 = vrot.slane %v13856, 1
  %v13947 = vrot.slane %v13864, 1
  %v13948 = vrot.slane %v13872, 1
  %v13949 = vrot.slane %v13871, 1
  %v13950 = vrot.slane %v13873, 1
  %v13951 = vrot.slane %v13881, 1
  %v13952 = vrot.slane %v13889, 1
  %v13953 = vrot.slane %v13888, 1
  %v13954 = vrot.slane %v13890, 1
  %v14083 = vadd.f32 %v10607, %v13626
  %v14084 = vadd.f32 %v10608, %v13891
  %v14085 = vadd.f32 %v10609, %v13634
  %v14086 = vadd.f32 %v10610, %v13892
  %v14087 = vadd.f32 %v10611, %v13633
  %v14088 = vadd.f32 %v10612, %v13893
  %v14089 = vadd.f32 %v10613, %v13635
  %v14090 = vadd.f32 %v10614, %v13894
  %v14091 = vadd.f32 %v10615, %v13643
  %v14092 = vadd.f32 %v10616, %v13895
  %v14093 = vadd.f32 %v10617, %v13651
  %v14094 = vadd.f32 %v10618, %v13896
  %v14095 = vadd.f32 %v10619, %v13650
  %v14096 = vadd.f32 %v10620, %v13897
  %v14097 = vadd.f32 %v10621, %v13652
  %v14098 = vadd.f32 %v10622, %v13898
  %v14099 = vadd.f32 %v10623, %v13660
  %v14100 = vadd.f32 %v10624, %v13899
  %v14101 = vadd.f32 %v10625, %v13668
  %v14102 = vadd.f32 %v10626, %v13900
  %v14103 = vadd.f32 %v10627, %v13667
  %v14104 = vadd.f32 %v10628, %v13901
  %v14105 = vadd.f32 %v10629, %v13669
  %v14106 = vadd.f32 %v10630, %v13902
  %v14107 = vadd.f32 %v10631, %v13677
  %v14108 = vadd.f32 %v10632, %v13903
  %v14109 = vadd.f32 %v10633, %v13685
  %v14110 = vadd.f32 %v10634, %v13904
  %v14111 = vadd.f32 %v10635, %v13684
  %v14112 = vadd.f32 %v10636, %v13905
  %v14113 = vadd.f32 %v10637, %v13686
  %v14114 = vadd.f32 %v10638, %v13906
  %v14115 = vadd.f32 %v10639, %v13694
  %v14116 = vadd.f32 %v10640, %v13907
  %v14117 = vadd.f32 %v10641, %v13702
  %v14118 = vadd.f32 %v10642, %v13908
  %v14119 = vadd.f32 %v10643, %v13701
  %v14120 = vadd.f32 %v10644, %v13909
  %v14121 = vadd.f32 %v10645, %v13703
  %v14122 = vadd.f32 %v10646, %v13910
  %v14123 = vadd.f32 %v10647, %v13711
  %v14124 = vadd.f32 %v10648, %v13911
  %v14125 = vadd.f32 %v10649, %v13719
  %v14126 = vadd.f32 %v10650, %v13912
  %v14127 = vadd.f32 %v10651, %v13718
  %v14128 = vadd.f32 %v10652, %v13913
  %v14129 = vadd.f32 %v10653, %v13720
  %v14130 = vadd.f32 %v10654, %v13914
  %v14131 = vadd.f32 %v10655, %v13728
  %v14132 = vadd.f32 %v10656, %v13915
  %v14133 = vadd.f32 %v10657, %v13736
  %v14134 = vadd.f32 %v10658, %v13916
  %v14135 = vadd.f32 %v10659, %v13735
  %v14136 = vadd.f32 %v10660, %v13917
  %v14137 = vadd.f32 %v10661, %v13737
  %v14138 = vadd.f32 %v10662, %v13918
  %v14139 = vadd.f32 %v10663, %v13745
  %v14140 = vadd.f32 %v10664, %v13919
  %v14141 = vadd.f32 %v10665, %v13753
  %v14142 = vadd.f32 %v10666, %v13920
  %v14143 = vadd.f32 %v10667, %v13752
  %v14144 = vadd.f32 %v10668, %v13921
  %v14145 = vadd.f32 %v10669, %v13754
  %v14146 = vadd.f32 %v10670, %v13922
  %v14147 = vadd.f32 %v10671, %v13762
  %v14148 = vadd.f32 %v10672, %v13923
  %v14149 = vadd.f32 %v10673, %v13770
  %v14150 = vadd.f32 %v10674, %v13924
  %v14151 = vadd.f32 %v10675, %v13769
  %v14152 = vadd.f32 %v10676, %v13925
  %v14153 = vadd.f32 %v10677, %v13771
  %v14154 = vadd.f32 %v10678, %v13926
  %v14155 = vadd.f32 %v10679, %v13779
  %v14156 = vadd.f32 %v10680, %v13927
  %v14157 = vadd.f32 %v10681, %v13787
  %v14158 = vadd.f32 %v10682, %v13928
  %v14159 = vadd.f32 %v10683, %v13786
  %v14160 = vadd.f32 %v10684, %v13929
  %v14161 = vadd.f32 %v10685, %v13788
  %v14162 = vadd.f32 %v10686, %v13930
  %v14163 = vadd.f32 %v10687, %v13796
  %v14164 = vadd.f32 %v10688, %v13931
  %v14165 = vadd.f32 %v10689, %v13804
  %v14166 = vadd.f32 %v10690, %v13932
  %v14167 = vadd.f32 %v10691, %v13803
  %v14168 = vadd.f32 %v10692, %v13933
  %v14169 = vadd.f32 %v10693, %v13805
  %v14170 = vadd.f32 %v10694, %v13934
  %v14171 = vadd.f32 %v10695, %v13813
  %v14172 = vadd.f32 %v10696, %v13935
  %v14173 = vadd.f32 %v10697, %v13821
  %v14174 = vadd.f32 %v10698, %v13936
  %v14175 = vadd.f32 %v10699, %v13820
  %v14176 = vadd.f32 %v10700, %v13937
  %v14177 = vadd.f32 %v10701, %v13822
  %v14178 = vadd.f32 %v10702, %v13938
  %v14179 = vadd.f32 %v10703, %v13830
  %v14180 = vadd.f32 %v10704, %v13939
  %v14181 = vadd.f32 %v10705, %v13838
  %v14182 = vadd.f32 %v10706, %v13940
  %v14183 = vadd.f32 %v10707, %v13837
  %v14184 = vadd.f32 %v10708, %v13941
  %v14185 = vadd.f32 %v10709, %v13839
  %v14186 = vadd.f32 %v10710, %v13942
  %v14187 = vadd.f32 %v10711, %v13847
  %v14188 = vadd.f32 %v10712, %v13943
  %v14189 = vadd.f32 %v10713, %v13855
  %v14190 = vadd.f32 %v10714, %v13944
  %v14191 = vadd.f32 %v10715, %v13854
  %v14192 = vadd.f32 %v10716, %v13945
  %v14193 = vadd.f32 %v10717, %v13856
  %v14194 = vadd.f32 %v10718, %v13946
  %v14195 = vadd.f32 %v10719, %v13864
  %v14196 = vadd.f32 %v10720, %v13947
  %v14197 = vadd.f32 %v10721, %v13872
  %v14198 = vadd.f32 %v10722, %v13948
  %v14199 = vadd.f32 %v10723, %v13871
  %v14200 = vadd.f32 %v10724, %v13949
  %v14201 = vadd.f32 %v10725, %v13873
  %v14202 = vadd.f32 %v10726, %v13950
  %v14203 = vadd.f32 %v10727, %v13881
  %v14204 = vadd.f32 %v10728, %v13951
  %v14205 = vadd.f32 %v10729, %v13889
  %v14206 = vadd.f32 %v10730, %v13952
  %v14207 = vadd.f32 %v10731, %v13888
  %v14208 = vadd.f32 %v10732, %v13953
  %v14209 = vadd.f32 %v10733, %v13890
  %v14210 = vadd.f32 %v10734, %v13954
  %v14211 = vmax.f32 %v14083, 0.0
  %v14212 = vmax.f32 %v14084, 0.0
  %v14213 = vmax.f32 %v14085, 0.0
  %v14214 = vmax.f32 %v14086, 0.0
  %v14215 = vmax.f32 %v14087, 0.0
  %v14216 = vmax.f32 %v14088, 0.0
  %v14217 = vmax.f32 %v14089, 0.0
  %v14218 = vmax.f32 %v14090, 0.0
  %v14219 = vmax.f32 %v14091, 0.0
  %v14220 = vmax.f32 %v14092, 0.0
  %v14221 = vmax.f32 %v14093, 0.0
  %v14222 = vmax.f32 %v14094, 0.0
  %v14223 = vmax.f32 %v14095, 0.0
  %v14224 = vmax.f32 %v14096, 0.0
  %v14225 = vmax.f32 %v14097, 0.0
  %v14226 = vmax.f32 %v14098, 0.0
  %v14227 = vmax.f32 %v14099, 0.0
  %v14228 = vmax.f32 %v14100, 0.0
  %v14229 = vmax.f32 %v14101, 0.0
  %v14230 = vmax.f32 %v14102, 0.0
  %v14231 = vmax.f32 %v14103, 0.0
  %v14232 = vmax.f32 %v14104, 0.0
  %v14233 = vmax.f32 %v14105, 0.0
  %v14234 = vmax.f32 %v14106, 0.0
  %v14235 = vmax.f32 %v14107, 0.0
  %v14236 = vmax.f32 %v14108, 0.0
  %v14237 = vmax.f32 %v14109, 0.0
  %v14238 = vmax.f32 %v14110, 0.0
  %v14239 = vmax.f32 %v14111, 0.0
  %v14240 = vmax.f32 %v14112, 0.0
  %v14241 = vmax.f32 %v14113, 0.0
  %v14242 = vmax.f32 %v14114, 0.0
  %v14243 = vmax.f32 %v14115, 0.0
  %v14244 = vmax.f32 %v14116, 0.0
  %v14245 = vmax.f32 %v14117, 0.0
  %v14246 = vmax.f32 %v14118, 0.0
  %v14247 = vmax.f32 %v14119, 0.0
  %v14248 = vmax.f32 %v14120, 0.0
  %v14249 = vmax.f32 %v14121, 0.0
  %v14250 = vmax.f32 %v14122, 0.0
  %v14251 = vmax.f32 %v14123, 0.0
  %v14252 = vmax.f32 %v14124, 0.0
  %v14253 = vmax.f32 %v14125, 0.0
  %v14254 = vmax.f32 %v14126, 0.0
  %v14255 = vmax.f32 %v14127, 0.0
  %v14256 = vmax.f32 %v14128, 0.0
  %v14257 = vmax.f32 %v14129, 0.0
  %v14258 = vmax.f32 %v14130, 0.0
  %v14259 = vmax.f32 %v14131, 0.0
  %v14260 = vmax.f32 %v14132, 0.0
  %v14261 = vmax.f32 %v14133, 0.0
  %v14262 = vmax.f32 %v14134, 0.0
  %v14263 = vmax.f32 %v14135, 0.0
  %v14264 = vmax.f32 %v14136, 0.0
  %v14265 = vmax.f32 %v14137, 0.0
  %v14266 = vmax.f32 %v14138, 0.0
  %v14267 = vmax.f32 %v14139, 0.0
  %v14268 = vmax.f32 %v14140, 0.0
  %v14269 = vmax.f32 %v14141, 0.0
  %v14270 = vmax.f32 %v14142, 0.0
  %v14271 = vmax.f32 %v14143, 0.0
  %v14272 = vmax.f32 %v14144, 0.0
  %v14273 = vmax.f32 %v14145, 0.0
  %v14274 = vmax.f32 %v14146, 0.0
  %v14275 = vmax.f32 %v14147, 0.0
  %v14276 = vmax.f32 %v14148, 0.0
  %v14277 = vmax.f32 %v14149, 0.0
  %v14278 = vmax.f32 %v14150, 0.0
  %v14279 = vmax.f32 %v14151, 0.0
  %v14280 = vmax.f32 %v14152, 0.0
  %v14281 = vmax.f32 %v14153, 0.0
  %v14282 = vmax.f32 %v14154, 0.0
  %v14283 = vmax.f32 %v14155, 0.0
  %v14284 = vmax.f32 %v14156, 0.0
  %v14285 = vmax.f32 %v14157, 0.0
  %v14286 = vmax.f32 %v14158, 0.0
  %v14287 = vmax.f32 %v14159, 0.0
  %v14288 = vmax.f32 %v14160, 0.0
  %v14289 = vmax.f32 %v14161, 0.0
  %v14290 = vmax.f32 %v14162, 0.0
  %v14291 = vmax.f32 %v14163, 0.0
  %v14292 = vmax.f32 %v14164, 0.0
  %v14293 = vmax.f32 %v14165, 0.0
  %v14294 = vmax.f32 %v14166, 0.0
  %v14295 = vmax.f32 %v14167, 0.0
  %v14296 = vmax.f32 %v14168, 0.0
  %v14297 = vmax.f32 %v14169, 0.0
  %v14298 = vmax.f32 %v14170, 0.0
  %v14299 = vmax.f32 %v14171, 0.0
  %v14300 = vmax.f32 %v14172, 0.0
  %v14301 = vmax.f32 %v14173, 0.0
  %v14302 = vmax.f32 %v14174, 0.0
  %v14303 = vmax.f32 %v14175, 0.0
  %v14304 = vmax.f32 %v14176, 0.0
  %v14305 = vmax.f32 %v14177, 0.0
  %v14306 = vmax.f32 %v14178, 0.0
  %v14307 = vmax.f32 %v14179, 0.0
  %v14308 = vmax.f32 %v14180, 0.0
  %v14309 = vmax.f32 %v14181, 0.0
  %v14310 = vmax.f32 %v14182, 0.0
  %v14311 = vmax.f32 %v14183, 0.0
  %v14312 = vmax.f32 %v14184, 0.0
  %v14313 = vmax.f32 %v14185, 0.0
  %v14314 = vmax.f32 %v14186, 0.0
  %v14315 = vmax.f32 %v14187, 0.0
  %v14316 = vmax.f32 %v14188, 0.0
  %v14317 = vmax.f32 %v14189, 0.0
  %v14318 = vmax.f32 %v14190, 0.0
  %v14319 = vmax.f32 %v14191, 0.0
  %v14320 = vmax.f32 %v14192, 0.0
  %v14321 = vmax.f32 %v14193, 0.0
  %v14322 = vmax.f32 %v14194, 0.0
  %v14323 = vmax.f32 %v14195, 0.0
  %v14324 = vmax.f32 %v14196, 0.0
  %v14325 = vmax.f32 %v14197, 0.0
  %v14326 = vmax.f32 %v14198, 0.0
  %v14327 = vmax.f32 %v14199, 0.0
  %v14328 = vmax.f32 %v14200, 0.0
  %v14329 = vmax.f32 %v14201, 0.0
  %v14330 = vmax.f32 %v14202, 0.0
  %v14331 = vmax.f32 %v14203, 0.0
  %v14332 = vmax.f32 %v14204, 0.0
  %v14333 = vmax.f32 %v14205, 0.0
  %v14334 = vmax.f32 %v14206, 0.0
  %v14335 = vmax.f32 %v14207, 0.0
  %v14336 = vmax.f32 %v14208, 0.0
  %v14337 = vmax.f32 %v14209, 0.0
  %v14338 = vmax.f32 %v14210, 0.0
  %v14467 = vlaneseq
  %v14468 = vshrl.u32 %v14467, 7
  %v14469 = vsub.s32 0, %v14468
  %v14470 = vrot.slane %v14211, %v14469
  %v14471 = vlaneseq
  %v14472 = vshrl.u32 %v14471, 7
  %v14473 = vsub.s32 0, %v14472
  %v14474 = vrot.slane %v14212, %v14473
  %v14475 = vlaneseq
  %v14476 = vshrl.u32 %v14475, 7
  %v14477 = vsub.s32 0, %v14476
  %v14478 = vrot.slane %v14213, %v14477
  %v14479 = vlaneseq
  %v14480 = vshrl.u32 %v14479, 7
  %v14481 = vsub.s32 0, %v14480
  %v14482 = vrot.slane %v14214, %v14481
  %v14483 = vlaneseq
  %v14484 = vshrl.u32 %v14483, 7
  %v14485 = vsub.s32 0, %v14484
  %v14486 = vrot.slane %v14215, %v14485
  %v14487 = vlaneseq
  %v14488 = vshrl.u32 %v14487, 7
  %v14489 = vsub.s32 0, %v14488
  %v14490 = vrot.slane %v14216, %v14489
  %v14491 = vlaneseq
  %v14492 = vshrl.u32 %v14491, 7
  %v14493 = vsub.s32 0, %v14492
  %v14494 = vrot.slane %v14217, %v14493
  %v14495 = vlaneseq
  %v14496 = vshrl.u32 %v14495, 7
  %v14497 = vsub.s32 0, %v14496
  %v14498 = vrot.slane %v14218, %v14497
  %v14499 = vlaneseq
  %v14500 = vshrl.u32 %v14499, 7
  %v14501 = vsub.s32 0, %v14500
  %v14502 = vrot.slane %v14219, %v14501
  %v14503 = vlaneseq
  %v14504 = vshrl.u32 %v14503, 7
  %v14505 = vsub.s32 0, %v14504
  %v14506 = vrot.slane %v14220, %v14505
  %v14507 = vlaneseq
  %v14508 = vshrl.u32 %v14507, 7
  %v14509 = vsub.s32 0, %v14508
  %v14510 = vrot.slane %v14221, %v14509
  %v14511 = vlaneseq
  %v14512 = vshrl.u32 %v14511, 7
  %v14513 = vsub.s32 0, %v14512
  %v14514 = vrot.slane %v14222, %v14513
  %v14515 = vlaneseq
  %v14516 = vshrl.u32 %v14515, 7
  %v14517 = vsub.s32 0, %v14516
  %v14518 = vrot.slane %v14223, %v14517
  %v14519 = vlaneseq
  %v14520 = vshrl.u32 %v14519, 7
  %v14521 = vsub.s32 0, %v14520
  %v14522 = vrot.slane %v14224, %v14521
  %v14523 = vlaneseq
  %v14524 = vshrl.u32 %v14523, 7
  %v14525 = vsub.s32 0, %v14524
  %v14526 = vrot.slane %v14225, %v14525
  %v14527 = vlaneseq
  %v14528 = vshrl.u32 %v14527, 7
  %v14529 = vsub.s32 0, %v14528
  %v14530 = vrot.slane %v14226, %v14529
  %v14531 = vlaneseq
  %v14532 = vshrl.u32 %v14531, 7
  %v14533 = vsub.s32 0, %v14532
  %v14534 = vrot.slane %v14227, %v14533
  %v14535 = vlaneseq
  %v14536 = vshrl.u32 %v14535, 7
  %v14537 = vsub.s32 0, %v14536
  %v14538 = vrot.slane %v14228, %v14537
  %v14539 = vlaneseq
  %v14540 = vshrl.u32 %v14539, 7
  %v14541 = vsub.s32 0, %v14540
  %v14542 = vrot.slane %v14229, %v14541
  %v14543 = vlaneseq
  %v14544 = vshrl.u32 %v14543, 7
  %v14545 = vsub.s32 0, %v14544
  %v14546 = vrot.slane %v14230, %v14545
  %v14547 = vlaneseq
  %v14548 = vshrl.u32 %v14547, 7
  %v14549 = vsub.s32 0, %v14548
  %v14550 = vrot.slane %v14231, %v14549
  %v14551 = vlaneseq
  %v14552 = vshrl.u32 %v14551, 7
  %v14553 = vsub.s32 0, %v14552
  %v14554 = vrot.slane %v14232, %v14553
  %v14555 = vlaneseq
  %v14556 = vshrl.u32 %v14555, 7
  %v14557 = vsub.s32 0, %v14556
  %v14558 = vrot.slane %v14233, %v14557
  %v14559 = vlaneseq
  %v14560 = vshrl.u32 %v14559, 7
  %v14561 = vsub.s32 0, %v14560
  %v14562 = vrot.slane %v14234, %v14561
  %v14563 = vlaneseq
  %v14564 = vshrl.u32 %v14563, 7
  %v14565 = vsub.s32 0, %v14564
  %v14566 = vrot.slane %v14235, %v14565
  %v14567 = vlaneseq
  %v14568 = vshrl.u32 %v14567, 7
  %v14569 = vsub.s32 0, %v14568
  %v14570 = vrot.slane %v14236, %v14569
  %v14571 = vlaneseq
  %v14572 = vshrl.u32 %v14571, 7
  %v14573 = vsub.s32 0, %v14572
  %v14574 = vrot.slane %v14237, %v14573
  %v14575 = vlaneseq
  %v14576 = vshrl.u32 %v14575, 7
  %v14577 = vsub.s32 0, %v14576
  %v14578 = vrot.slane %v14238, %v14577
  %v14579 = vlaneseq
  %v14580 = vshrl.u32 %v14579, 7
  %v14581 = vsub.s32 0, %v14580
  %v14582 = vrot.slane %v14239, %v14581
  %v14583 = vlaneseq
  %v14584 = vshrl.u32 %v14583, 7
  %v14585 = vsub.s32 0, %v14584
  %v14586 = vrot.slane %v14240, %v14585
  %v14587 = vlaneseq
  %v14588 = vshrl.u32 %v14587, 7
  %v14589 = vsub.s32 0, %v14588
  %v14590 = vrot.slane %v14241, %v14589
  %v14591 = vlaneseq
  %v14592 = vshrl.u32 %v14591, 7
  %v14593 = vsub.s32 0, %v14592
  %v14594 = vrot.slane %v14242, %v14593
  %v14595 = vlaneseq
  %v14596 = vshrl.u32 %v14595, 7
  %v14597 = vsub.s32 0, %v14596
  %v14598 = vrot.slane %v14243, %v14597
  %v14599 = vlaneseq
  %v14600 = vshrl.u32 %v14599, 7
  %v14601 = vsub.s32 0, %v14600
  %v14602 = vrot.slane %v14244, %v14601
  %v14603 = vlaneseq
  %v14604 = vshrl.u32 %v14603, 7
  %v14605 = vsub.s32 0, %v14604
  %v14606 = vrot.slane %v14245, %v14605
  %v14607 = vlaneseq
  %v14608 = vshrl.u32 %v14607, 7
  %v14609 = vsub.s32 0, %v14608
  %v14610 = vrot.slane %v14246, %v14609
  %v14611 = vlaneseq
  %v14612 = vshrl.u32 %v14611, 7
  %v14613 = vsub.s32 0, %v14612
  %v14614 = vrot.slane %v14247, %v14613
  %v14615 = vlaneseq
  %v14616 = vshrl.u32 %v14615, 7
  %v14617 = vsub.s32 0, %v14616
  %v14618 = vrot.slane %v14248, %v14617
  %v14619 = vlaneseq
  %v14620 = vshrl.u32 %v14619, 7
  %v14621 = vsub.s32 0, %v14620
  %v14622 = vrot.slane %v14249, %v14621
  %v14623 = vlaneseq
  %v14624 = vshrl.u32 %v14623, 7
  %v14625 = vsub.s32 0, %v14624
  %v14626 = vrot.slane %v14250, %v14625
  %v14627 = vlaneseq
  %v14628 = vshrl.u32 %v14627, 7
  %v14629 = vsub.s32 0, %v14628
  %v14630 = vrot.slane %v14251, %v14629
  %v14631 = vlaneseq
  %v14632 = vshrl.u32 %v14631, 7
  %v14633 = vsub.s32 0, %v14632
  %v14634 = vrot.slane %v14252, %v14633
  %v14635 = vlaneseq
  %v14636 = vshrl.u32 %v14635, 7
  %v14637 = vsub.s32 0, %v14636
  %v14638 = vrot.slane %v14253, %v14637
  %v14639 = vlaneseq
  %v14640 = vshrl.u32 %v14639, 7
  %v14641 = vsub.s32 0, %v14640
  %v14642 = vrot.slane %v14254, %v14641
  %v14643 = vlaneseq
  %v14644 = vshrl.u32 %v14643, 7
  %v14645 = vsub.s32 0, %v14644
  %v14646 = vrot.slane %v14255, %v14645
  %v14647 = vlaneseq
  %v14648 = vshrl.u32 %v14647, 7
  %v14649 = vsub.s32 0, %v14648
  %v14650 = vrot.slane %v14256, %v14649
  %v14651 = vlaneseq
  %v14652 = vshrl.u32 %v14651, 7
  %v14653 = vsub.s32 0, %v14652
  %v14654 = vrot.slane %v14257, %v14653
  %v14655 = vlaneseq
  %v14656 = vshrl.u32 %v14655, 7
  %v14657 = vsub.s32 0, %v14656
  %v14658 = vrot.slane %v14258, %v14657
  %v14659 = vlaneseq
  %v14660 = vshrl.u32 %v14659, 7
  %v14661 = vsub.s32 0, %v14660
  %v14662 = vrot.slane %v14259, %v14661
  %v14663 = vlaneseq
  %v14664 = vshrl.u32 %v14663, 7
  %v14665 = vsub.s32 0, %v14664
  %v14666 = vrot.slane %v14260, %v14665
  %v14667 = vlaneseq
  %v14668 = vshrl.u32 %v14667, 7
  %v14669 = vsub.s32 0, %v14668
  %v14670 = vrot.slane %v14261, %v14669
  %v14671 = vlaneseq
  %v14672 = vshrl.u32 %v14671, 7
  %v14673 = vsub.s32 0, %v14672
  %v14674 = vrot.slane %v14262, %v14673
  %v14675 = vlaneseq
  %v14676 = vshrl.u32 %v14675, 7
  %v14677 = vsub.s32 0, %v14676
  %v14678 = vrot.slane %v14263, %v14677
  %v14679 = vlaneseq
  %v14680 = vshrl.u32 %v14679, 7
  %v14681 = vsub.s32 0, %v14680
  %v14682 = vrot.slane %v14264, %v14681
  %v14683 = vlaneseq
  %v14684 = vshrl.u32 %v14683, 7
  %v14685 = vsub.s32 0, %v14684
  %v14686 = vrot.slane %v14265, %v14685
  %v14687 = vlaneseq
  %v14688 = vshrl.u32 %v14687, 7
  %v14689 = vsub.s32 0, %v14688
  %v14690 = vrot.slane %v14266, %v14689
  %v14691 = vlaneseq
  %v14692 = vshrl.u32 %v14691, 7
  %v14693 = vsub.s32 0, %v14692
  %v14694 = vrot.slane %v14267, %v14693
  %v14695 = vlaneseq
  %v14696 = vshrl.u32 %v14695, 7
  %v14697 = vsub.s32 0, %v14696
  %v14698 = vrot.slane %v14268, %v14697
  %v14699 = vlaneseq
  %v14700 = vshrl.u32 %v14699, 7
  %v14701 = vsub.s32 0, %v14700
  %v14702 = vrot.slane %v14269, %v14701
  %v14703 = vlaneseq
  %v14704 = vshrl.u32 %v14703, 7
  %v14705 = vsub.s32 0, %v14704
  %v14706 = vrot.slane %v14270, %v14705
  %v14707 = vlaneseq
  %v14708 = vshrl.u32 %v14707, 7
  %v14709 = vsub.s32 0, %v14708
  %v14710 = vrot.slane %v14271, %v14709
  %v14711 = vlaneseq
  %v14712 = vshrl.u32 %v14711, 7
  %v14713 = vsub.s32 0, %v14712
  %v14714 = vrot.slane %v14272, %v14713
  %v14715 = vlaneseq
  %v14716 = vshrl.u32 %v14715, 7
  %v14717 = vsub.s32 0, %v14716
  %v14718 = vrot.slane %v14273, %v14717
  %v14719 = vlaneseq
  %v14720 = vshrl.u32 %v14719, 7
  %v14721 = vsub.s32 0, %v14720
  %v14722 = vrot.slane %v14274, %v14721
  %v14723 = vlaneseq
  %v14724 = vshrl.u32 %v14723, 7
  %v14725 = vsub.s32 0, %v14724
  %v14726 = vrot.slane %v14275, %v14725
  %v14727 = vlaneseq
  %v14728 = vshrl.u32 %v14727, 7
  %v14729 = vsub.s32 0, %v14728
  %v14730 = vrot.slane %v14276, %v14729
  %v14731 = vlaneseq
  %v14732 = vshrl.u32 %v14731, 7
  %v14733 = vsub.s32 0, %v14732
  %v14734 = vrot.slane %v14277, %v14733
  %v14735 = vlaneseq
  %v14736 = vshrl.u32 %v14735, 7
  %v14737 = vsub.s32 0, %v14736
  %v14738 = vrot.slane %v14278, %v14737
  %v14739 = vlaneseq
  %v14740 = vshrl.u32 %v14739, 7
  %v14741 = vsub.s32 0, %v14740
  %v14742 = vrot.slane %v14279, %v14741
  %v14743 = vlaneseq
  %v14744 = vshrl.u32 %v14743, 7
  %v14745 = vsub.s32 0, %v14744
  %v14746 = vrot.slane %v14280, %v14745
  %v14747 = vlaneseq
  %v14748 = vshrl.u32 %v14747, 7
  %v14749 = vsub.s32 0, %v14748
  %v14750 = vrot.slane %v14281, %v14749
  %v14751 = vlaneseq
  %v14752 = vshrl.u32 %v14751, 7
  %v14753 = vsub.s32 0, %v14752
  %v14754 = vrot.slane %v14282, %v14753
  %v14755 = vlaneseq
  %v14756 = vshrl.u32 %v14755, 7
  %v14757 = vsub.s32 0, %v14756
  %v14758 = vrot.slane %v14283, %v14757
  %v14759 = vlaneseq
  %v14760 = vshrl.u32 %v14759, 7
  %v14761 = vsub.s32 0, %v14760
  %v14762 = vrot.slane %v14284, %v14761
  %v14763 = vlaneseq
  %v14764 = vshrl.u32 %v14763, 7
  %v14765 = vsub.s32 0, %v14764
  %v14766 = vrot.slane %v14285, %v14765
  %v14767 = vlaneseq
  %v14768 = vshrl.u32 %v14767, 7
  %v14769 = vsub.s32 0, %v14768
  %v14770 = vrot.slane %v14286, %v14769
  %v14771 = vlaneseq
  %v14772 = vshrl.u32 %v14771, 7
  %v14773 = vsub.s32 0, %v14772
  %v14774 = vrot.slane %v14287, %v14773
  %v14775 = vlaneseq
  %v14776 = vshrl.u32 %v14775, 7
  %v14777 = vsub.s32 0, %v14776
  %v14778 = vrot.slane %v14288, %v14777
  %v14779 = vlaneseq
  %v14780 = vshrl.u32 %v14779, 7
  %v14781 = vsub.s32 0, %v14780
  %v14782 = vrot.slane %v14289, %v14781
  %v14783 = vlaneseq
  %v14784 = vshrl.u32 %v14783, 7
  %v14785 = vsub.s32 0, %v14784
  %v14786 = vrot.slane %v14290, %v14785
  %v14787 = vlaneseq
  %v14788 = vshrl.u32 %v14787, 7
  %v14789 = vsub.s32 0, %v14788
  %v14790 = vrot.slane %v14291, %v14789
  %v14791 = vlaneseq
  %v14792 = vshrl.u32 %v14791, 7
  %v14793 = vsub.s32 0, %v14792
  %v14794 = vrot.slane %v14292, %v14793
  %v14795 = vlaneseq
  %v14796 = vshrl.u32 %v14795, 7
  %v14797 = vsub.s32 0, %v14796
  %v14798 = vrot.slane %v14293, %v14797
  %v14799 = vlaneseq
  %v14800 = vshrl.u32 %v14799, 7
  %v14801 = vsub.s32 0, %v14800
  %v14802 = vrot.slane %v14294, %v14801
  %v14803 = vlaneseq
  %v14804 = vshrl.u32 %v14803, 7
  %v14805 = vsub.s32 0, %v14804
  %v14806 = vrot.slane %v14295, %v14805
  %v14807 = vlaneseq
  %v14808 = vshrl.u32 %v14807, 7
  %v14809 = vsub.s32 0, %v14808
  %v14810 = vrot.slane %v14296, %v14809
  %v14811 = vlaneseq
  %v14812 = vshrl.u32 %v14811, 7
  %v14813 = vsub.s32 0, %v14812
  %v14814 = vrot.slane %v14297, %v14813
  %v14815 = vlaneseq
  %v14816 = vshrl.u32 %v14815, 7
  %v14817 = vsub.s32 0, %v14816
  %v14818 = vrot.slane %v14298, %v14817
  %v14819 = vlaneseq
  %v14820 = vshrl.u32 %v14819, 7
  %v14821 = vsub.s32 0, %v14820
  %v14822 = vrot.slane %v14299, %v14821
  %v14823 = vlaneseq
  %v14824 = vshrl.u32 %v14823, 7
  %v14825 = vsub.s32 0, %v14824
  %v14826 = vrot.slane %v14300, %v14825
  %v14827 = vlaneseq
  %v14828 = vshrl.u32 %v14827, 7
  %v14829 = vsub.s32 0, %v14828
  %v14830 = vrot.slane %v14301, %v14829
  %v14831 = vlaneseq
  %v14832 = vshrl.u32 %v14831, 7
  %v14833 = vsub.s32 0, %v14832
  %v14834 = vrot.slane %v14302, %v14833
  %v14835 = vlaneseq
  %v14836 = vshrl.u32 %v14835, 7
  %v14837 = vsub.s32 0, %v14836
  %v14838 = vrot.slane %v14303, %v14837
  %v14839 = vlaneseq
  %v14840 = vshrl.u32 %v14839, 7
  %v14841 = vsub.s32 0, %v14840
  %v14842 = vrot.slane %v14304, %v14841
  %v14843 = vlaneseq
  %v14844 = vshrl.u32 %v14843, 7
  %v14845 = vsub.s32 0, %v14844
  %v14846 = vrot.slane %v14305, %v14845
  %v14847 = vlaneseq
  %v14848 = vshrl.u32 %v14847, 7
  %v14849 = vsub.s32 0, %v14848
  %v14850 = vrot.slane %v14306, %v14849
  %v14851 = vlaneseq
  %v14852 = vshrl.u32 %v14851, 7
  %v14853 = vsub.s32 0, %v14852
  %v14854 = vrot.slane %v14307, %v14853
  %v14855 = vlaneseq
  %v14856 = vshrl.u32 %v14855, 7
  %v14857 = vsub.s32 0, %v14856
  %v14858 = vrot.slane %v14308, %v14857
  %v14859 = vlaneseq
  %v14860 = vshrl.u32 %v14859, 7
  %v14861 = vsub.s32 0, %v14860
  %v14862 = vrot.slane %v14309, %v14861
  %v14863 = vlaneseq
  %v14864 = vshrl.u32 %v14863, 7
  %v14865 = vsub.s32 0, %v14864
  %v14866 = vrot.slane %v14310, %v14865
  %v14867 = vlaneseq
  %v14868 = vshrl.u32 %v14867, 7
  %v14869 = vsub.s32 0, %v14868
  %v14870 = vrot.slane %v14311, %v14869
  %v14871 = vlaneseq
  %v14872 = vshrl.u32 %v14871, 7
  %v14873 = vsub.s32 0, %v14872
  %v14874 = vrot.slane %v14312, %v14873
  %v14875 = vlaneseq
  %v14876 = vshrl.u32 %v14875, 7
  %v14877 = vsub.s32 0, %v14876
  %v14878 = vrot.slane %v14313, %v14877
  %v14879 = vlaneseq
  %v14880 = vshrl.u32 %v14879, 7
  %v14881 = vsub.s32 0, %v14880
  %v14882 = vrot.slane %v14314, %v14881
  %v14883 = vlaneseq
  %v14884 = vshrl.u32 %v14883, 7
  %v14885 = vsub.s32 0, %v14884
  %v14886 = vrot.slane %v14315, %v14885
  %v14887 = vlaneseq
  %v14888 = vshrl.u32 %v14887, 7
  %v14889 = vsub.s32 0, %v14888
  %v14890 = vrot.slane %v14316, %v14889
  %v14891 = vlaneseq
  %v14892 = vshrl.u32 %v14891, 7
  %v14893 = vsub.s32 0, %v14892
  %v14894 = vrot.slane %v14317, %v14893
  %v14895 = vlaneseq
  %v14896 = vshrl.u32 %v14895, 7
  %v14897 = vsub.s32 0, %v14896
  %v14898 = vrot.slane %v14318, %v14897
  %v14899 = vlaneseq
  %v14900 = vshrl.u32 %v14899, 7
  %v14901 = vsub.s32 0, %v14900
  %v14902 = vrot.slane %v14319, %v14901
  %v14903 = vlaneseq
  %v14904 = vshrl.u32 %v14903, 7
  %v14905 = vsub.s32 0, %v14904
  %v14906 = vrot.slane %v14320, %v14905
  %v14907 = vlaneseq
  %v14908 = vshrl.u32 %v14907, 7
  %v14909 = vsub.s32 0, %v14908
  %v14910 = vrot.slane %v14321, %v14909
  %v14911 = vlaneseq
  %v14912 = vshrl.u32 %v14911, 7
  %v14913 = vsub.s32 0, %v14912
  %v14914 = vrot.slane %v14322, %v14913
  %v14915 = vlaneseq
  %v14916 = vshrl.u32 %v14915, 7
  %v14917 = vsub.s32 0, %v14916
  %v14918 = vrot.slane %v14323, %v14917
  %v14919 = vlaneseq
  %v14920 = vshrl.u32 %v14919, 7
  %v14921 = vsub.s32 0, %v14920
  %v14922 = vrot.slane %v14324, %v14921
  %v14923 = vlaneseq
  %v14924 = vshrl.u32 %v14923, 7
  %v14925 = vsub.s32 0, %v14924
  %v14926 = vrot.slane %v14325, %v14925
  %v14927 = vlaneseq
  %v14928 = vshrl.u32 %v14927, 7
  %v14929 = vsub.s32 0, %v14928
  %v14930 = vrot.slane %v14326, %v14929
  %v14931 = vlaneseq
  %v14932 = vshrl.u32 %v14931, 7
  %v14933 = vsub.s32 0, %v14932
  %v14934 = vrot.slane %v14327, %v14933
  %v14935 = vlaneseq
  %v14936 = vshrl.u32 %v14935, 7
  %v14937 = vsub.s32 0, %v14936
  %v14938 = vrot.slane %v14328, %v14937
  %v14939 = vlaneseq
  %v14940 = vshrl.u32 %v14939, 7
  %v14941 = vsub.s32 0, %v14940
  %v14942 = vrot.slane %v14329, %v14941
  %v14943 = vlaneseq
  %v14944 = vshrl.u32 %v14943, 7
  %v14945 = vsub.s32 0, %v14944
  %v14946 = vrot.slane %v14330, %v14945
  %v14947 = vlaneseq
  %v14948 = vshrl.u32 %v14947, 7
  %v14949 = vsub.s32 0, %v14948
  %v14950 = vrot.slane %v14331, %v14949
  %v14951 = vlaneseq
  %v14952 = vshrl.u32 %v14951, 7
  %v14953 = vsub.s32 0, %v14952
  %v14954 = vrot.slane %v14332, %v14953
  %v14955 = vlaneseq
  %v14956 = vshrl.u32 %v14955, 7
  %v14957 = vsub.s32 0, %v14956
  %v14958 = vrot.slane %v14333, %v14957
  %v14959 = vlaneseq
  %v14960 = vshrl.u32 %v14959, 7
  %v14961 = vsub.s32 0, %v14960
  %v14962 = vrot.slane %v14334, %v14961
  %v14963 = vlaneseq
  %v14964 = vshrl.u32 %v14963, 7
  %v14965 = vsub.s32 0, %v14964
  %v14966 = vrot.slane %v14335, %v14965
  %v14967 = vlaneseq
  %v14968 = vshrl.u32 %v14967, 7
  %v14969 = vsub.s32 0, %v14968
  %v14970 = vrot.slane %v14336, %v14969
  %v14971 = vlaneseq
  %v14972 = vshrl.u32 %v14971, 7
  %v14973 = vsub.s32 0, %v14972
  %v14974 = vrot.slane %v14337, %v14973
  %v14975 = vlaneseq
  %v14976 = vshrl.u32 %v14975, 7
  %v14977 = vsub.s32 0, %v14976
  %v14978 = vrot.slane %v14338, %v14977
  %v14979 = vsel %vm9765, %v14474, %v14470
  %v14980 = vsel %vm9768, %v14478, %v14979
  %v14981 = vsel %vm9771, %v14482, %v14980
  %v14982 = vsel %vm9774, %v14486, %v14981
  %v14983 = vsel %vm9777, %v14490, %v14982
  %v14984 = vsel %vm9780, %v14494, %v14983
  %v14985 = vsel %vm9783, %v14498, %v14984
  %v14986 = vsel %vm9765, %v14506, %v14502
  %v14987 = vsel %vm9768, %v14510, %v14986
  %v14988 = vsel %vm9771, %v14514, %v14987
  %v14989 = vsel %vm9774, %v14518, %v14988
  %v14990 = vsel %vm9777, %v14522, %v14989
  %v14991 = vsel %vm9780, %v14526, %v14990
  %v14992 = vsel %vm9783, %v14530, %v14991
  %v14993 = vsel %vm9765, %v14538, %v14534
  %v14994 = vsel %vm9768, %v14542, %v14993
  %v14995 = vsel %vm9771, %v14546, %v14994
  %v14996 = vsel %vm9774, %v14550, %v14995
  %v14997 = vsel %vm9777, %v14554, %v14996
  %v14998 = vsel %vm9780, %v14558, %v14997
  %v14999 = vsel %vm9783, %v14562, %v14998
  %v15000 = vsel %vm9765, %v14570, %v14566
  %v15001 = vsel %vm9768, %v14574, %v15000
  %v15002 = vsel %vm9771, %v14578, %v15001
  %v15003 = vsel %vm9774, %v14582, %v15002
  %v15004 = vsel %vm9777, %v14586, %v15003
  %v15005 = vsel %vm9780, %v14590, %v15004
  %v15006 = vsel %vm9783, %v14594, %v15005
  %v15007 = vsel %vm9765, %v14602, %v14598
  %v15008 = vsel %vm9768, %v14606, %v15007
  %v15009 = vsel %vm9771, %v14610, %v15008
  %v15010 = vsel %vm9774, %v14614, %v15009
  %v15011 = vsel %vm9777, %v14618, %v15010
  %v15012 = vsel %vm9780, %v14622, %v15011
  %v15013 = vsel %vm9783, %v14626, %v15012
  %v15014 = vsel %vm9765, %v14634, %v14630
  %v15015 = vsel %vm9768, %v14638, %v15014
  %v15016 = vsel %vm9771, %v14642, %v15015
  %v15017 = vsel %vm9774, %v14646, %v15016
  %v15018 = vsel %vm9777, %v14650, %v15017
  %v15019 = vsel %vm9780, %v14654, %v15018
  %v15020 = vsel %vm9783, %v14658, %v15019
  %v15021 = vsel %vm9765, %v14666, %v14662
  %v15022 = vsel %vm9768, %v14670, %v15021
  %v15023 = vsel %vm9771, %v14674, %v15022
  %v15024 = vsel %vm9774, %v14678, %v15023
  %v15025 = vsel %vm9777, %v14682, %v15024
  %v15026 = vsel %vm9780, %v14686, %v15025
  %v15027 = vsel %vm9783, %v14690, %v15026
  %v15028 = vsel %vm9765, %v14698, %v14694
  %v15029 = vsel %vm9768, %v14702, %v15028
  %v15030 = vsel %vm9771, %v14706, %v15029
  %v15031 = vsel %vm9774, %v14710, %v15030
  %v15032 = vsel %vm9777, %v14714, %v15031
  %v15033 = vsel %vm9780, %v14718, %v15032
  %v15034 = vsel %vm9783, %v14722, %v15033
  %v15035 = vsel %vm9765, %v14730, %v14726
  %v15036 = vsel %vm9768, %v14734, %v15035
  %v15037 = vsel %vm9771, %v14738, %v15036
  %v15038 = vsel %vm9774, %v14742, %v15037
  %v15039 = vsel %vm9777, %v14746, %v15038
  %v15040 = vsel %vm9780, %v14750, %v15039
  %v15041 = vsel %vm9783, %v14754, %v15040
  %v15042 = vsel %vm9765, %v14762, %v14758
  %v15043 = vsel %vm9768, %v14766, %v15042
  %v15044 = vsel %vm9771, %v14770, %v15043
  %v15045 = vsel %vm9774, %v14774, %v15044
  %v15046 = vsel %vm9777, %v14778, %v15045
  %v15047 = vsel %vm9780, %v14782, %v15046
  %v15048 = vsel %vm9783, %v14786, %v15047
  %v15049 = vsel %vm9765, %v14794, %v14790
  %v15050 = vsel %vm9768, %v14798, %v15049
  %v15051 = vsel %vm9771, %v14802, %v15050
  %v15052 = vsel %vm9774, %v14806, %v15051
  %v15053 = vsel %vm9777, %v14810, %v15052
  %v15054 = vsel %vm9780, %v14814, %v15053
  %v15055 = vsel %vm9783, %v14818, %v15054
  %v15056 = vsel %vm9765, %v14826, %v14822
  %v15057 = vsel %vm9768, %v14830, %v15056
  %v15058 = vsel %vm9771, %v14834, %v15057
  %v15059 = vsel %vm9774, %v14838, %v15058
  %v15060 = vsel %vm9777, %v14842, %v15059
  %v15061 = vsel %vm9780, %v14846, %v15060
  %v15062 = vsel %vm9783, %v14850, %v15061
  %v15063 = vsel %vm9765, %v14858, %v14854
  %v15064 = vsel %vm9768, %v14862, %v15063
  %v15065 = vsel %vm9771, %v14866, %v15064
  %v15066 = vsel %vm9774, %v14870, %v15065
  %v15067 = vsel %vm9777, %v14874, %v15066
  %v15068 = vsel %vm9780, %v14878, %v15067
  %v15069 = vsel %vm9783, %v14882, %v15068
  %v15070 = vsel %vm9765, %v14890, %v14886
  %v15071 = vsel %vm9768, %v14894, %v15070
  %v15072 = vsel %vm9771, %v14898, %v15071
  %v15073 = vsel %vm9774, %v14902, %v15072
  %v15074 = vsel %vm9777, %v14906, %v15073
  %v15075 = vsel %vm9780, %v14910, %v15074
  %v15076 = vsel %vm9783, %v14914, %v15075
  %v15077 = vsel %vm9765, %v14922, %v14918
  %v15078 = vsel %vm9768, %v14926, %v15077
  %v15079 = vsel %vm9771, %v14930, %v15078
  %v15080 = vsel %vm9774, %v14934, %v15079
  %v15081 = vsel %vm9777, %v14938, %v15080
  %v15082 = vsel %vm9780, %v14942, %v15081
  %v15083 = vsel %vm9783, %v14946, %v15082
  %v15084 = vsel %vm9765, %v14954, %v14950
  %v15085 = vsel %vm9768, %v14958, %v15084
  %v15086 = vsel %vm9771, %v14962, %v15085
  %v15087 = vsel %vm9774, %v14966, %v15086
  %v15088 = vsel %vm9777, %v14970, %v15087
  %v15089 = vsel %vm9780, %v14974, %v15088
  %v15090 = vsel %vm9783, %v14978, %v15089
  %v15107 = vsel %vm2793, %v14985, 0.0
  %v15108 = vsel %vm2793, %v14992, 0.0
  %v15109 = vadd.f32 %v15107, %v15108
  %v15110 = vsel %vm2793, %v14999, 0.0
  %v15111 = vadd.f32 %v15109, %v15110
  %v15112 = vsel %vm2793, %v15006, 0.0
  %v15113 = vadd.f32 %v15111, %v15112
  %v15114 = vsel %vm2793, %v15013, 0.0
  %v15115 = vadd.f32 %v15113, %v15114
  %v15116 = vsel %vm2793, %v15020, 0.0
  %v15117 = vadd.f32 %v15115, %v15116
  %v15118 = vsel %vm2793, %v15027, 0.0
  %v15119 = vadd.f32 %v15117, %v15118
  %v15120 = vsel %vm2793, %v15034, 0.0
  %v15121 = vadd.f32 %v15119, %v15120
  %v15122 = vrot.slane %v15121, 4
  %v15123 = vadd.f32 %v15121, %v15122
  %v15124 = vrot.slane %v15123, 2
  %v15125 = vadd.f32 %v15123, %v15124
  %v15126 = vrot.slane %v15125, 1
  %v15127 = vadd.f32 %v15125, %v15126
  %v15128 = vsel %vm2793, %v15041, 0.0
  %v15129 = vsel %vm2793, %v15048, 0.0
  %v15130 = vadd.f32 %v15128, %v15129
  %v15131 = vsel %vm2793, %v15055, 0.0
  %v15132 = vadd.f32 %v15130, %v15131
  %v15133 = vsel %vm2793, %v15062, 0.0
  %v15134 = vadd.f32 %v15132, %v15133
  %v15135 = vsel %vm2793, %v15069, 0.0
  %v15136 = vadd.f32 %v15134, %v15135
  %v15137 = vsel %vm2793, %v15076, 0.0
  %v15138 = vadd.f32 %v15136, %v15137
  %v15139 = vsel %vm2793, %v15083, 0.0
  %v15140 = vadd.f32 %v15138, %v15139
  %v15141 = vsel %vm2793, %v15090, 0.0
  %v15142 = vadd.f32 %v15140, %v15141
  %v15143 = vrot.slane %v15142, 4
  %v15144 = vadd.f32 %v15142, %v15143
  %v15145 = vrot.slane %v15144, 2
  %v15146 = vadd.f32 %v15144, %v15145
  %v15147 = vrot.slane %v15146, 1
  %v15148 = vadd.f32 %v15146, %v15147
  %v15149 = vld [vmem:[%s11] sm:$0xff]
  %v15150 = vld [vmem:[%s11 + $0x8] sm:$0xff]
  %v15151 = vld [vmem:[%s11 + $0x10] sm:$0xff]
  %v15152 = vld [vmem:[%s11 + $0x18] sm:$0xff]
  %v15155 = vrot.slane %v15148, 7
  %v15156 = vsel %vm9765, %v15155, %v15127
  %v15157 = vsel %vm2793, %v15156, 0
  %15159 = vmatprep.subr.mxu0 0.0
  %15160 = vmatpush1.msra.mxu0 %v15149
  %15161 = vmatprep.subr.mxu0 0.0
  %15162 = vmatpush1.msra.mxu0 %v15150
  %15163 = vmatprep.subr.mxu0 0.0
  %15164 = vmatpush1.msra.mxu0 %v15151
  %15165 = vmatprep.subr.mxu0 0.0
  %15166 = vmatpush1.msra.mxu0 %v15152
  %15167 = vmatprep.subr.mxu0 0.0
  %15168 = vmatpush1.msra.mxu0 0.0
  %15169 = vmatprep.subr.mxu0 0.0
  %15170 = vmatpush1.msra.mxu0 0.0
  %15171 = vmatprep.subr.mxu0 0.0
  %15172 = vmatpush1.msra.mxu0 0.0
  %15173 = vmatprep.subr.mxu0 0.0
  %15174 = vmatpush1.msra.mxu0 0.0
  %15175 = vmatprep.subr.mxu0 0.0
  %15176 = vmatpush1.msra.mxu0 0.0
  %15177 = vmatprep.subr.mxu0 0.0
  %15178 = vmatpush1.msra.mxu0 0.0
  %15179 = vmatprep.subr.mxu0 0.0
  %15180 = vmatpush1.msra.mxu0 0.0
  %15181 = vmatprep.subr.mxu0 0.0
  %15182 = vmatpush1.msra.mxu0 0.0
  %15183 = vmatprep.subr.mxu0 0.0
  %15184 = vmatpush1.msra.mxu0 0.0
  %15185 = vmatprep.subr.mxu0 0.0
  %15186 = vmatpush1.msra.mxu0 0.0
  %15187 = vmatprep.subr.mxu0 0.0
  %15188 = vmatpush1.msra.mxu0 0.0
  %15189 = vmatprep.subr.mxu0 0.0
  %15190 = vmatpush1.msra.mxu0 0.0
  %15191 = vmatprep.subr.mxu0 0.0
  %15192 = vmatpush1.msra.mxu0 0.0
  %15193 = vmatprep.subr.mxu0 0.0
  %15194 = vmatpush1.msra.mxu0 0.0
  %15195 = vmatprep.subr.mxu0 0.0
  %15196 = vmatpush1.msra.mxu0 0.0
  %15197 = vmatprep.subr.mxu0 0.0
  %15198 = vmatpush1.msra.mxu0 0.0
  %15199 = vmatprep.subr.mxu0 0.0
  %15200 = vmatpush1.msra.mxu0 0.0
  %15201 = vmatprep.subr.mxu0 0.0
  %15202 = vmatpush1.msra.mxu0 0.0
  %15203 = vmatprep.subr.mxu0 0.0
  %15204 = vmatpush1.msra.mxu0 0.0
  %15205 = vmatprep.subr.mxu0 0.0
  %15206 = vmatpush1.msra.mxu0 0.0
  %15207 = vmatprep.subr.mxu0 0.0
  %15208 = vmatpush1.msra.mxu0 0.0
  %15209 = vmatprep.subr.mxu0 0.0
  %15210 = vmatpush1.msra.mxu0 0.0
  %15211 = vmatprep.subr.mxu0 0.0
  %15212 = vmatpush1.msra.mxu0 0.0
  %15213 = vmatprep.subr.mxu0 0.0
  %15214 = vmatpush1.msra.mxu0 0.0
  %15215 = vmatprep.subr.mxu0 0.0
  %15216 = vmatpush1.msra.mxu0 0.0
  %15217 = vmatprep.subr.mxu0 0.0
  %15218 = vmatpush1.msra.mxu0 0.0
  %15219 = vmatprep.subr.mxu0 0.0
  %15220 = vmatpush1.msra.mxu0 0.0
  %15221 = vmatprep.subr.mxu0 0.0
  %15222 = vmatpush1.msra.mxu0 0.0
  %15223 = vmatprep.mubr.f32.mxu0 0.0
  %15224 = vmatmul.mubr.f32.gmra.mrb[0].mxu0 %v15157
  %v15225 = vpop.f32.mrb[0].mxu0
  %v15226 = vadd.f32 0.0, %v15225
  %v15227 = vpop.f32.mrb[0].mxu0
  %15228 = vdwg.mxu0
  %vm15229 = vcmask 1024
  %15230 = vst.msk [vmem:[%s12] sm:$0x3] %vm15229, %v15226
  // Predicated region
  $region50: #{discriminator_forward.1} parent=0 // pred_check
    _
  $region51: #{discriminator_forward.1} parent=0 // pred_check_branch
    %15232 = sbr.rel (0) target = $region53
  $region52: #{discriminator_forward.1} parent=0 // pred_region
    _
  $region53: #{discriminator_forward.1} parent=0 // pred_fallthru
    _
  // Predicated region
  $region54: #{discriminator_forward.1} parent=0 // pred_check
    _
  $region55: #{discriminator_forward.1} parent=0 // pred_check_branch
    %15234 = sbr.rel (0) target = $region57
  $region56: #{discriminator_forward.1} parent=0 // pred_region
    _
  $region57: #{discriminator_forward.1} parent=0 // pred_fallthru
    _

</llo_original>
